<compile_context>
chip_gen: v7x
topology: tpu7x:2x2x1
jax: 0.10.0
libtpu: 0.0.40
codegen_flags: <defaults>
</compile_context>

<pallas_src>
import jax
import jax.numpy as jnp
import numpy as np
from jax.experimental import pallas as pl
from jax.experimental.pallas import tpu as pltpu

L0 = 599          # input / final length
L1 = 592          # after Conv1d(1,16,8)  and after ConvTranspose1d(32,16,16)
L2 = 577          # after Conv1d(16,32,16)
K1, K2 = 8, 16
C1, C2 = 16, 32
EPS = 1e-5
F32 = jnp.float32
BF16 = jnp.bfloat16
TB_DEFAULT = 8    # samples per grid step

PARAM_ORDER = ("w1", "b1", "w2", "b2",
               "ln1_w", "ln1_b", "wt1", "bt1",
               "ln2_w", "ln2_b", "wt2", "bt2",
               "fw", "cb")


# ----------------------------------------------------------------------------
# In-kernel helpers
# ----------------------------------------------------------------------------
def _layer_norm(v, w, b, axes):
    """Single-pass LayerNorm over `axes` (per leading/batch index)."""
    n = 1.0
    for a in axes:
        n = n * v.shape[a]
    inv_n = 1.0 / n
    s = v
    ss = v * v
    for a in sorted(axes, reverse=True):          # sequential single-axis reduces
        s = jnp.sum(s, axis=a, keepdims=True)
        ss = jnp.sum(ss, axis=a, keepdims=True)
    mu = s * inv_n
    var = jnp.maximum(ss * inv_n - mu * mu, 0.0)
    return (v - mu) * jax.lax.rsqrt(var + EPS) * w + b


def _shift_lanes(v, left, right):
    """Pad `v` with `left`/`right` zero lanes on the last axis (value domain)."""
    parts = []
    if left > 0:
        parts.append(jnp.zeros(v.shape[:-1] + (left,), v.dtype))
    parts.append(v)
    if right > 0:
        parts.append(jnp.zeros(v.shape[:-1] + (right,), v.dtype))
    if len(parts) == 1:
        return v
    return jnp.concatenate(parts, axis=-1)


def _bmm(w2d, x3d):
    """(M, K) @ (B, K, N) -> (B, M, N); bf16 operands, f32 MXU accumulation."""
    outs = [jnp.dot(w2d, x3d[i], preferred_element_type=F32)
            for i in range(x3d.shape[0])]
    return jnp.stack(outs, axis=0)


# ----------------------------------------------------------------------------
# Kernel
# ----------------------------------------------------------------------------
def _disc_kernel(x_ref,
                 w1, b1, w2, b2, ln1_w, ln1_b, wt1, bt1,
                 ln2_w, ln2_b, wt2, bt2, fw, cb,
                 out_ref):
    tb = x_ref.shape[0]
    x = x_ref[...]                                           # (tb, 1, 599) f32

    # ---------------- encoder: ReLU -> [BN1] -> Conv1 -> ReLU -> [BN2] -> Conv2 -> [BN3]
    # (BatchNorms are pre-folded into w1/b1 and w2/b2 by the wrapper.)
    y = jnp.maximum(x, 0.0)

    # Conv1d(1,16,8): contraction of only 8 -> 8 VPU broadcast-MACs (no tiny MXU op).
    w1v = w1[...]                                            # (16, 8) f32
    h = jnp.broadcast_to(b1[...][None], (tb, C1, L1))        # (tb, 16, 592)
    for k in range(K1):
        h = h + y[:, :, k:k + L1] * w1v[None, :, k:k + 1]

    h = jnp.maximum(h, 0.0)

    # Conv1d(16,32,16): im2col -> single (32,256)@(256,577) bf16 matmul per sample.
    h_bf = h.astype(BF16)
    patches = jnp.concatenate([h_bf[:, :, k:k + L2] for k in range(K2)],
                              axis=1)                        # (tb, 256, 577)
    h2 = _bmm(w2[...], patches) + b2[...][None]              # (tb, 32, 577) f32

    # ---------------- decoder: ReLU -> LN -> ConvT1 -> ReLU -> LN -> ConvT2 -> LN
    h2 = _layer_norm(jnp.maximum(h2, 0.0),
                     ln1_w[...][None], ln1_b[...][None], (1, 2))

    # ConvTranspose1d(32,16,16): stacked (256,32)@(32,577) matmul, then 16
    # lane-shifted in-register accumulations (no VMEM scratch RMW).
    r = _bmm(wt1[...], h2.astype(BF16))                      # (tb, 256, 577) f32
    g = jnp.broadcast_to(bt1[...][None], (tb, C1, L1))
    for k in range(K2):
        g = g + _shift_lanes(r[:, k * C1:(k + 1) * C1, :], k, K2 - 1 - k)

    g = _layer_norm(jnp.maximum(g, 0.0),
                    ln2_w[...][None], ln2_b[...][None], (1, 2))

    # ConvTranspose1d(16,1,8): stacked (8,16)@(16,592) matmul, then shifted sums.
    r2 = _bmm(wt2[...], g.astype(BF16))                      # (tb, 8, 592) f32
    z = jnp.broadcast_to(bt2[...][None], (tb, 1, L0))
    for k in range(K1):
        z = z + _shift_lanes(r2[:, k:k + 1, :], k, K1 - 1 - k)

    # Fused LayerNorm([1, 599]) + Linear(599, 1):
    #   o = rstd * sum_l fw[l] * (z[l] - mu) + cb      (exact f32 algebra)
    inv_n = 1.0 / L0
    s = jnp.sum(z, axis=2, keepdims=True)                    # (tb, 1, 1)
    ss = jnp.sum(z * z, axis=2, keepdims=True)
    mu = s * inv_n
    var = jnp.maximum(ss * inv_n - mu * mu, 0.0)
    rstd = jax.lax.rsqrt(var + EPS)
    wsum = jnp.sum((z - mu) * fw[...][None], axis=2, keepdims=True)
    out_ref[...] = rstd * wsum + cb[...][None]               # (tb, 1, 1)


# ----------------------------------------------------------------------------
# Parameters (PyTorch-format) and kernel-format preparation
# ----------------------------------------------------------------------------
def make_params(key):
    keys = iter(jax.random.split(key, 32))
    nk = lambda: next(keys)

    def u(shape, bound):
        return jax.random.uniform(nk(), shape, F32, -bound, bound)

    def bn(c):
        return dict(g=1.0 + 0.1 * jax.random.normal(nk(), (c,), F32),
                    b=0.1 * jax.random.normal(nk(), (c,), F32),
                    rm=0.1 * jax.random.normal(nk(), (c,), F32),
                    rv=1.0 + 0.1 * jax.random.uniform(nk(), (c,), F32))

    def ln(shape):
        return (1.0 + 0.1 * jax.random.normal(nk(), shape, F32),
                0.1 * jax.random.normal(nk(), shape, F32))

    p = {}
    p["bn1"] = bn(1)
    bnd = 1.0 / np.sqrt(1 * K1)
    p["w1"], p["b1"] = u((C1, 1, K1), bnd), u((C1,), bnd)        # Conv1d(1,16,8)
    p["bn2"] = bn(C1)
    bnd = 1.0 / np.sqrt(C1 * K2)
    p["w2"], p["b2"] = u((C2, C1, K2), bnd), u((C2,), bnd)       # Conv1d(16,32,16)
    p["bn3"] = bn(C2)
    p["ln1_w"], p["ln1_b"] = ln((C2, L2))
    bnd = 1.0 / np.sqrt(C1 * K2)
    p["wt1"], p["bt1"] = u((C2, C1, K2), bnd), u((C1,), bnd)     # ConvT1d(32,16,16)
    p["ln2_w"], p["ln2_b"] = ln((C1, L1))
    bnd = 1.0 / np.sqrt(1 * K1)
    p["wt2"], p["bt2"] = u((C1, 1, K1), bnd), u((1,), bnd)       # ConvT1d(16,1,8)
    p["ln3_w"], p["ln3_b"] = ln((1, L0))
    bnd = 1.0 / np.sqrt(L0)
    p["fc_w"], p["fc_b"] = u((1, L0), bnd), u((1,), bnd)         # Linear(599,1)
    return p


def _prep_kernel_params(p):
    """Fold eval-mode BatchNorms into conv weights; fuse LN3 with the FC head."""
    def bn_scale_shift(d):
        s = d["g"] / jnp.sqrt(d["rv"] + EPS)
        return s, d["b"] - d["rm"] * s

    s1, sh1 = bn_scale_shift(p["bn1"])      # scalars (channel 1)
    s2, sh2 = bn_scale_shift(p["bn2"])      # (16,)
    s3, sh3 = bn_scale_shift(p["bn3"])      # (32,)

    q = {}
    # Conv1d(1,16,8) with BN1 (input-side affine) folded in:
    #   conv1(s1*v + sh1) = conv1_{s1*w1}(v) + (b1 + sh1*sum_k w1)
    w1 = p["w1"][:, 0, :]                                         # (16, 8)
    q["w1"] = (w1 * s1[0]).astype(F32)
    q["b1"] = (p["b1"] + sh1[0] * jnp.sum(w1, axis=1)).reshape(C1, 1).astype(F32)

    # Conv1d(16,32,16) with BN2 (input side) and BN3 (output side) folded:
    #   bn3(conv2(bn2(v))) = conv2_{s3[o]*s2[c]*w2}(v) + b2'
    w2f = p["w2"] * s2[None, :, None] * s3[:, None, None]         # (32,16,16)
    # (O,C,K) -> (O, K*C) matching im2col row order k*C1 + c.
    q["w2"] = jnp.transpose(w2f, (0, 2, 1)).reshape(C2, K2 * C1).astype(BF16)
    b2f = s3 * (p["b2"] + jnp.sum(p["w2"] * sh2[None, :, None], axis=(1, 2))) + sh3
    q["b2"] = b2f.reshape(C2, 1).astype(F32)

    q["ln1_w"], q["ln1_b"] = p["ln1_w"].astype(F32), p["ln1_b"].astype(F32)
    # ConvT1 weight (I,O,K) -> stacked (K*O, I): row index k*C1 + o.
    q["wt1"] = jnp.transpose(p["wt1"], (2, 1, 0)).reshape(K2 * C1, C2).astype(BF16)
    q["bt1"] = p["bt1"].reshape(C1, 1).astype(F32)
    q["ln2_w"], q["ln2_b"] = p["ln2_w"].astype(F32), p["ln2_b"].astype(F32)
    # ConvT2 weight (I,1,K) -> (K, I).
    q["wt2"] = jnp.transpose(p["wt2"][:, 0, :]).astype(BF16)      # (8, 16)
    q["bt2"] = p["bt2"].reshape(1, 1).astype(F32)

    # LayerNorm([1,599]) + Linear(599,1) fusion:
    #   fc(ln3(v)) = rstd * sum_l (fc_w*ln3_w)[l]*(v[l]-mu) + (sum(fc_w*ln3_b)+fc_b)
    q["fw"] = (p["fc_w"] * p["ln3_w"]).astype(F32)                # (1, 599)
    cb = jnp.sum(p["fc_w"] * p["ln3_b"]) + p["fc_b"][0]
    q["cb"] = cb.reshape(1, 1).astype(F32)
    return q


# ----------------------------------------------------------------------------
# Wrapper
# ----------------------------------------------------------------------------
def discriminator_forward(x, params, tb=TB_DEFAULT):
    B = x.shape[0]
    tb = int(max(1, min(tb, B)))
    num_blocks = -(-B // tb)
    b_pad = num_blocks * tb

    q = _prep_kernel_params(params)
    plist = [q[n] for n in PARAM_ORDER]

    x3 = x.reshape(B, 1, L0).astype(F32)
    if b_pad != B:
        x3 = jnp.concatenate([x3, jnp.zeros((b_pad - B, 1, L0), F32)], axis=0)

    def full_spec(a):
        zeros = (0,) * a.ndim
        return pl.BlockSpec(a.shape, lambda i, _z=zeros: _z)

    grid_spec = pltpu.PrefetchScalarGridSpec(
        num_scalar_prefetch=0,
        grid=(num_blocks,),
        in_specs=[pl.BlockSpec((tb, 1, L0), lambda i: (i, 0, 0))]
                 + [full_spec(a) for a in plist],
        out_specs=pl.BlockSpec((tb, 1, 1), lambda i: (i, 0, 0)),
    )
    out = pl.pallas_call(
        _disc_kernel,
        out_shape=jax.ShapeDtypeStruct((b_pad, 1, 1), F32),
        grid_spec=grid_spec,
        compiler_params=pltpu.CompilerParams(
            dimension_semantics=("parallel",),        # batch tiles are independent
            vmem_limit_bytes=32 * 1024 * 1024),
    )(x3, *plist)
    return out.reshape(b_pad, 1)[:B]


# ----------------------------------------------------------------------------
# Plain-JAX f32 reference with the PyTorch module's math (eval-mode BN)
# ----------------------------------------------------------------------------
def reference_forward(x, p):
    B = x.shape[0]
    hp = jax.lax.Precision.HIGHEST

    def bn(v, d):
        s = d["g"] / jnp.sqrt(d["rv"] + EPS)
        sh = d["b"] - d["rm"] * s
        return v * s[None, :, None] + sh[None, :, None]

    def ln(v, w, b):
        mu = jnp.mean(v, axis=(1, 2), keepdims=True)
        var = jnp.mean((v - mu) ** 2, axis=(1, 2), keepdims=True)
        return (v - mu) / jnp.sqrt(var + EPS) * w[None] + b[None]

    y = x.reshape(B, 1, L0)
    y = bn(jnp.maximum(y, 0.0), p["bn1"])
    h = p["b1"][None, :, None] + sum(
        jnp.einsum("oc,bcl->bol", p["w1"][:, :, k], y[:, :, k:k + L1],
                   precision=hp) for k in range(K1))
    h = bn(jnp.maximum(h, 0.0), p["bn2"])
    h2 = p["b2"][None, :, None] + sum(
        jnp.einsum("oc,bcl->bol", p["w2"][:, :, k], h[:, :, k:k + L2],
                   precision=hp) for k in range(K2))
    h2 = bn(h2, p["bn3"])

    h2 = ln(jnp.maximum(h2, 0.0), p["ln1_w"], p["ln1_b"])
    g = jnp.zeros((B, C1, L1), F32) + p["bt1"][None, :, None]
    for k in range(K2):
        g = g.at[:, :, k:k + L2].add(
            jnp.einsum("io,bil->bol", p["wt1"][:, :, k], h2, precision=hp))
    g = ln(jnp.maximum(g, 0.0), p["ln2_w"], p["ln2_b"])
    z = jnp.zeros((B, 1, L0), F32) + p["bt2"][None, :, None]
    for k in range(K1):
        z = z.at[:, :, k:k + L1].add(
            jnp.einsum("io,bil->bol", p["wt2"][:, :, k], g, precision=hp))
    z = ln(z, p["ln3_w"], p["ln3_b"])
    return z.reshape(B, L0) @ p["fc_w"].T + p["fc_b"][None, :]


if __name__ == "__main__":
    key = jax.random.PRNGKey(0)
    kx, kp = jax.random.split(key)
    B = 2
    x = jax.random.normal(kx, (B, L0), F32)
    params = make_params(kp)

    out = jax.block_until_ready(discriminator_forward(x, params))
    ref = jax.block_until_ready(reference_forward(x, params))
    # Kernel uses bf16 MXU operands (f32 accumulation); reference is all-f32,
    # so compare at a bf16-appropriate tolerance.
    np.testing.assert_allclose(np.asarray(out), np.asarray(ref),
                               rtol=2e-2, atol=2e-2)
    print("KERNEL_OK")
</pallas_src>

<mosaic_0001>
module attributes {stable_mosaic.version = 11 : i64} {
  func.func @_disc_kernel(%arg0: i32, %arg1: memref<2x1x599xf32, #tpu.memory_space<vmem>>, %arg2: memref<16x8xf32, #tpu.memory_space<vmem>>, %arg3: memref<16x1xf32, #tpu.memory_space<vmem>>, %arg4: memref<32x256xbf16, #tpu.memory_space<vmem>>, %arg5: memref<32x1xf32, #tpu.memory_space<vmem>>, %arg6: memref<32x577xf32, #tpu.memory_space<vmem>>, %arg7: memref<32x577xf32, #tpu.memory_space<vmem>>, %arg8: memref<256x32xbf16, #tpu.memory_space<vmem>>, %arg9: memref<16x1xf32, #tpu.memory_space<vmem>>, %arg10: memref<16x592xf32, #tpu.memory_space<vmem>>, %arg11: memref<16x592xf32, #tpu.memory_space<vmem>>, %arg12: memref<8x16xbf16, #tpu.memory_space<vmem>>, %arg13: memref<1x1xf32, #tpu.memory_space<vmem>>, %arg14: memref<1x599xf32, #tpu.memory_space<vmem>>, %arg15: memref<1x1xf32, #tpu.memory_space<vmem>>, %arg16: memref<2x1x1xf32, #tpu.memory_space<vmem>>) attributes {dimension_semantics = [#tpu.dimension_semantics<parallel>], iteration_bounds = array<i64: 1>, scalar_prefetch = 0 : i64, scratch_operands = 0 : i64, tpu.core_type = #tpu.core_type<tc>, window_params = [{transform_indices = @transform_0, window_bounds = array<i64: 2, 1, 599>}, {pipeline_mode = #tpu.pipeline_mode<synchronous>, transform_indices = @transform_1, window_bounds = array<i64: 16, 8>}, {pipeline_mode = #tpu.pipeline_mode<synchronous>, transform_indices = @transform_2, window_bounds = array<i64: 16, 1>}, {pipeline_mode = #tpu.pipeline_mode<synchronous>, transform_indices = @transform_3, window_bounds = array<i64: 32, 256>}, {pipeline_mode = #tpu.pipeline_mode<synchronous>, transform_indices = @transform_4, window_bounds = array<i64: 32, 1>}, {pipeline_mode = #tpu.pipeline_mode<synchronous>, transform_indices = @transform_5, window_bounds = array<i64: 32, 577>}, {pipeline_mode = #tpu.pipeline_mode<synchronous>, transform_indices = @transform_6, window_bounds = array<i64: 32, 577>}, {pipeline_mode = #tpu.pipeline_mode<synchronous>, transform_indices = @transform_7, window_bounds = array<i64: 256, 32>}, {pipeline_mode = #tpu.pipeline_mode<synchronous>, transform_indices = @transform_8, window_bounds = array<i64: 16, 1>}, {pipeline_mode = #tpu.pipeline_mode<synchronous>, transform_indices = @transform_9, window_bounds = array<i64: 16, 592>}, {pipeline_mode = #tpu.pipeline_mode<synchronous>, transform_indices = @transform_10, window_bounds = array<i64: 16, 592>}, {pipeline_mode = #tpu.pipeline_mode<synchronous>, transform_indices = @transform_11, window_bounds = array<i64: 8, 16>}, {pipeline_mode = #tpu.pipeline_mode<synchronous>, transform_indices = @transform_12, window_bounds = array<i64: 1, 1>}, {pipeline_mode = #tpu.pipeline_mode<synchronous>, transform_indices = @transform_13, window_bounds = array<i64: 1, 599>}, {pipeline_mode = #tpu.pipeline_mode<synchronous>, transform_indices = @transform_14, window_bounds = array<i64: 1, 1>}, {transform_indices = @transform_15, window_bounds = array<i64: 2, 1, 1>}]} {
    %c0 = arith.constant 0 : index
    %c0_0 = arith.constant 0 : index
    %c0_1 = arith.constant 0 : index
    %0 = vector.load %arg1[%c0, %c0_0, %c0_1] : memref<2x1x599xf32, #tpu.memory_space<vmem>>, vector<2x1x599xf32>
    %cst = arith.constant 0.000000e+00 : f32
    %1 = vector.broadcast %cst : f32 to vector<2x1x599xf32>
    %2 = arith.maximumf %0, %1 : vector<2x1x599xf32>
    %c0_2 = arith.constant 0 : index
    %c0_3 = arith.constant 0 : index
    %3 = vector.load %arg2[%c0_2, %c0_3] : memref<16x8xf32, #tpu.memory_space<vmem>>, vector<16x8xf32>
    %c0_4 = arith.constant 0 : index
    %c0_5 = arith.constant 0 : index
    %4 = vector.load %arg3[%c0_4, %c0_5] : memref<16x1xf32, #tpu.memory_space<vmem>>, vector<16x1xf32>
    %5 = vector.shape_cast %4 : vector<16x1xf32> to vector<1x16x1xf32>
    %6 = vector.shape_cast %5 : vector<1x16x1xf32> to vector<1x16x1xf32>
    %7 = vector.broadcast %6 : vector<1x16x1xf32> to vector<2x16x592xf32>
    %8 = vector.extract_strided_slice %2 {offsets = [0, 0, 0], sizes = [2, 1, 592], strides = [1, 1, 1]} : vector<2x1x599xf32> to vector<2x1x592xf32>
    %9 = vector.extract_strided_slice %3 {offsets = [0, 0], sizes = [16, 1], strides = [1, 1]} : vector<16x8xf32> to vector<16x1xf32>
    %10 = vector.shape_cast %9 : vector<16x1xf32> to vector<1x16x1xf32>
    %11 = vector.broadcast %8 : vector<2x1x592xf32> to vector<2x16x592xf32>
    %12 = vector.broadcast %10 : vector<1x16x1xf32> to vector<2x16x592xf32>
    %13 = arith.mulf %11, %12 : vector<2x16x592xf32>
    %14 = arith.addf %7, %13 : vector<2x16x592xf32>
    %15 = vector.extract_strided_slice %2 {offsets = [0, 0, 1], sizes = [2, 1, 592], strides = [1, 1, 1]} : vector<2x1x599xf32> to vector<2x1x592xf32>
    %16 = vector.extract_strided_slice %3 {offsets = [0, 1], sizes = [16, 1], strides = [1, 1]} : vector<16x8xf32> to vector<16x1xf32>
    %17 = vector.shape_cast %16 : vector<16x1xf32> to vector<1x16x1xf32>
    %18 = vector.broadcast %15 : vector<2x1x592xf32> to vector<2x16x592xf32>
    %19 = vector.broadcast %17 : vector<1x16x1xf32> to vector<2x16x592xf32>
    %20 = arith.mulf %18, %19 : vector<2x16x592xf32>
    %21 = arith.addf %14, %20 : vector<2x16x592xf32>
    %22 = vector.extract_strided_slice %2 {offsets = [0, 0, 2], sizes = [2, 1, 592], strides = [1, 1, 1]} : vector<2x1x599xf32> to vector<2x1x592xf32>
    %23 = vector.extract_strided_slice %3 {offsets = [0, 2], sizes = [16, 1], strides = [1, 1]} : vector<16x8xf32> to vector<16x1xf32>
    %24 = vector.shape_cast %23 : vector<16x1xf32> to vector<1x16x1xf32>
    %25 = vector.broadcast %22 : vector<2x1x592xf32> to vector<2x16x592xf32>
    %26 = vector.broadcast %24 : vector<1x16x1xf32> to vector<2x16x592xf32>
    %27 = arith.mulf %25, %26 : vector<2x16x592xf32>
    %28 = arith.addf %21, %27 : vector<2x16x592xf32>
    %29 = vector.extract_strided_slice %2 {offsets = [0, 0, 3], sizes = [2, 1, 592], strides = [1, 1, 1]} : vector<2x1x599xf32> to vector<2x1x592xf32>
    %30 = vector.extract_strided_slice %3 {offsets = [0, 3], sizes = [16, 1], strides = [1, 1]} : vector<16x8xf32> to vector<16x1xf32>
    %31 = vector.shape_cast %30 : vector<16x1xf32> to vector<1x16x1xf32>
    %32 = vector.broadcast %29 : vector<2x1x592xf32> to vector<2x16x592xf32>
    %33 = vector.broadcast %31 : vector<1x16x1xf32> to vector<2x16x592xf32>
    %34 = arith.mulf %32, %33 : vector<2x16x592xf32>
    %35 = arith.addf %28, %34 : vector<2x16x592xf32>
    %36 = vector.extract_strided_slice %2 {offsets = [0, 0, 4], sizes = [2, 1, 592], strides = [1, 1, 1]} : vector<2x1x599xf32> to vector<2x1x592xf32>
    %37 = vector.extract_strided_slice %3 {offsets = [0, 4], sizes = [16, 1], strides = [1, 1]} : vector<16x8xf32> to vector<16x1xf32>
    %38 = vector.shape_cast %37 : vector<16x1xf32> to vector<1x16x1xf32>
    %39 = vector.broadcast %36 : vector<2x1x592xf32> to vector<2x16x592xf32>
    %40 = vector.broadcast %38 : vector<1x16x1xf32> to vector<2x16x592xf32>
    %41 = arith.mulf %39, %40 : vector<2x16x592xf32>
    %42 = arith.addf %35, %41 : vector<2x16x592xf32>
    %43 = vector.extract_strided_slice %2 {offsets = [0, 0, 5], sizes = [2, 1, 592], strides = [1, 1, 1]} : vector<2x1x599xf32> to vector<2x1x592xf32>
    %44 = vector.extract_strided_slice %3 {offsets = [0, 5], sizes = [16, 1], strides = [1, 1]} : vector<16x8xf32> to vector<16x1xf32>
    %45 = vector.shape_cast %44 : vector<16x1xf32> to vector<1x16x1xf32>
    %46 = vector.broadcast %43 : vector<2x1x592xf32> to vector<2x16x592xf32>
    %47 = vector.broadcast %45 : vector<1x16x1xf32> to vector<2x16x592xf32>
    %48 = arith.mulf %46, %47 : vector<2x16x592xf32>
    %49 = arith.addf %42, %48 : vector<2x16x592xf32>
    %50 = vector.extract_strided_slice %2 {offsets = [0, 0, 6], sizes = [2, 1, 592], strides = [1, 1, 1]} : vector<2x1x599xf32> to vector<2x1x592xf32>
    %51 = vector.extract_strided_slice %3 {offsets = [0, 6], sizes = [16, 1], strides = [1, 1]} : vector<16x8xf32> to vector<16x1xf32>
    %52 = vector.shape_cast %51 : vector<16x1xf32> to vector<1x16x1xf32>
    %53 = vector.broadcast %50 : vector<2x1x592xf32> to vector<2x16x592xf32>
    %54 = vector.broadcast %52 : vector<1x16x1xf32> to vector<2x16x592xf32>
    %55 = arith.mulf %53, %54 : vector<2x16x592xf32>
    %56 = arith.addf %49, %55 : vector<2x16x592xf32>
    %57 = vector.extract_strided_slice %2 {offsets = [0, 0, 7], sizes = [2, 1, 592], strides = [1, 1, 1]} : vector<2x1x599xf32> to vector<2x1x592xf32>
    %58 = vector.extract_strided_slice %3 {offsets = [0, 7], sizes = [16, 1], strides = [1, 1]} : vector<16x8xf32> to vector<16x1xf32>
    %59 = vector.shape_cast %58 : vector<16x1xf32> to vector<1x16x1xf32>
    %60 = vector.broadcast %57 : vector<2x1x592xf32> to vector<2x16x592xf32>
    %61 = vector.broadcast %59 : vector<1x16x1xf32> to vector<2x16x592xf32>
    %62 = arith.mulf %60, %61 : vector<2x16x592xf32>
    %63 = arith.addf %56, %62 : vector<2x16x592xf32>
    %cst_6 = arith.constant 0.000000e+00 : f32
    %64 = vector.broadcast %cst_6 : f32 to vector<2x16x592xf32>
    %65 = arith.maximumf %63, %64 : vector<2x16x592xf32>
    %66 = arith.truncf %65 : vector<2x16x592xf32> to vector<2x16x592xbf16>
    %67 = vector.extract_strided_slice %66 {offsets = [0, 0, 0], sizes = [2, 16, 577], strides = [1, 1, 1]} : vector<2x16x592xbf16> to vector<2x16x577xbf16>
    %68 = vector.extract_strided_slice %66 {offsets = [0, 0, 1], sizes = [2, 16, 577], strides = [1, 1, 1]} : vector<2x16x592xbf16> to vector<2x16x577xbf16>
    %69 = vector.extract_strided_slice %66 {offsets = [0, 0, 2], sizes = [2, 16, 577], strides = [1, 1, 1]} : vector<2x16x592xbf16> to vector<2x16x577xbf16>
    %70 = vector.extract_strided_slice %66 {offsets = [0, 0, 3], sizes = [2, 16, 577], strides = [1, 1, 1]} : vector<2x16x592xbf16> to vector<2x16x577xbf16>
    %71 = vector.extract_strided_slice %66 {offsets = [0, 0, 4], sizes = [2, 16, 577], strides = [1, 1, 1]} : vector<2x16x592xbf16> to vector<2x16x577xbf16>
    %72 = vector.extract_strided_slice %66 {offsets = [0, 0, 5], sizes = [2, 16, 577], strides = [1, 1, 1]} : vector<2x16x592xbf16> to vector<2x16x577xbf16>
    %73 = vector.extract_strided_slice %66 {offsets = [0, 0, 6], sizes = [2, 16, 577], strides = [1, 1, 1]} : vector<2x16x592xbf16> to vector<2x16x577xbf16>
    %74 = vector.extract_strided_slice %66 {offsets = [0, 0, 7], sizes = [2, 16, 577], strides = [1, 1, 1]} : vector<2x16x592xbf16> to vector<2x16x577xbf16>
    %75 = vector.extract_strided_slice %66 {offsets = [0, 0, 8], sizes = [2, 16, 577], strides = [1, 1, 1]} : vector<2x16x592xbf16> to vector<2x16x577xbf16>
    %76 = vector.extract_strided_slice %66 {offsets = [0, 0, 9], sizes = [2, 16, 577], strides = [1, 1, 1]} : vector<2x16x592xbf16> to vector<2x16x577xbf16>
    %77 = vector.extract_strided_slice %66 {offsets = [0, 0, 10], sizes = [2, 16, 577], strides = [1, 1, 1]} : vector<2x16x592xbf16> to vector<2x16x577xbf16>
    %78 = vector.extract_strided_slice %66 {offsets = [0, 0, 11], sizes = [2, 16, 577], strides = [1, 1, 1]} : vector<2x16x592xbf16> to vector<2x16x577xbf16>
    %79 = vector.extract_strided_slice %66 {offsets = [0, 0, 12], sizes = [2, 16, 577], strides = [1, 1, 1]} : vector<2x16x592xbf16> to vector<2x16x577xbf16>
    %80 = vector.extract_strided_slice %66 {offsets = [0, 0, 13], sizes = [2, 16, 577], strides = [1, 1, 1]} : vector<2x16x592xbf16> to vector<2x16x577xbf16>
    %81 = vector.extract_strided_slice %66 {offsets = [0, 0, 14], sizes = [2, 16, 577], strides = [1, 1, 1]} : vector<2x16x592xbf16> to vector<2x16x577xbf16>
    %82 = vector.extract_strided_slice %66 {offsets = [0, 0, 15], sizes = [2, 16, 577], strides = [1, 1, 1]} : vector<2x16x592xbf16> to vector<2x16x577xbf16>
    %83 = tpu.concatenate %67, %68, %69, %70, %71, %72, %73, %74, %75, %76, %77, %78, %79, %80, %81, %82 in 1 : vector<2x16x577xbf16>, vector<2x16x577xbf16>, vector<2x16x577xbf16>, vector<2x16x577xbf16>, vector<2x16x577xbf16>, vector<2x16x577xbf16>, vector<2x16x577xbf16>, vector<2x16x577xbf16>, vector<2x16x577xbf16>, vector<2x16x577xbf16>, vector<2x16x577xbf16>, vector<2x16x577xbf16>, vector<2x16x577xbf16>, vector<2x16x577xbf16>, vector<2x16x577xbf16>, vector<2x16x577xbf16> -> vector<2x256x577xbf16>
    %c0_7 = arith.constant 0 : index
    %c0_8 = arith.constant 0 : index
    %84 = vector.load %arg4[%c0_7, %c0_8] : memref<32x256xbf16, #tpu.memory_space<vmem>>, vector<32x256xbf16>
    %85 = vector.extract_strided_slice %83 {offsets = [0, 0, 0], sizes = [1, 256, 577], strides = [1, 1, 1]} : vector<2x256x577xbf16> to vector<1x256x577xbf16>
    %86 = vector.shape_cast %85 : vector<1x256x577xbf16> to vector<256x577xbf16>
    %cst_9 = arith.constant dense<0.000000e+00> : vector<32x577xf32>
    %87 = tpu.matmul %84, %86, %cst_9 {dimension_numbers = #tpu.dot_dimension_numbers<[1], [0], [0], [1], [0, 0, 1, 1], [], []>} : vector<32x256xbf16>, vector<256x577xbf16>, vector<32x577xf32> -> vector<32x577xf32>
    %88 = vector.extract_strided_slice %83 {offsets = [1, 0, 0], sizes = [1, 256, 577], strides = [1, 1, 1]} : vector<2x256x577xbf16> to vector<1x256x577xbf16>
    %89 = vector.shape_cast %88 : vector<1x256x577xbf16> to vector<256x577xbf16>
    %cst_10 = arith.constant dense<0.000000e+00> : vector<32x577xf32>
    %90 = tpu.matmul %84, %89, %cst_10 {dimension_numbers = #tpu.dot_dimension_numbers<[1], [0], [0], [1], [0, 0, 1, 1], [], []>} : vector<32x256xbf16>, vector<256x577xbf16>, vector<32x577xf32> -> vector<32x577xf32>
    %91 = vector.shape_cast %87 : vector<32x577xf32> to vector<1x32x577xf32>
    %92 = vector.shape_cast %90 : vector<32x577xf32> to vector<1x32x577xf32>
    %93 = tpu.concatenate %91, %92 in 0 : vector<1x32x577xf32>, vector<1x32x577xf32> -> vector<2x32x577xf32>
    %c0_11 = arith.constant 0 : index
    %c0_12 = arith.constant 0 : index
    %94 = vector.load %arg5[%c0_11, %c0_12] : memref<32x1xf32, #tpu.memory_space<vmem>>, vector<32x1xf32>
    %95 = vector.shape_cast %94 : vector<32x1xf32> to vector<1x32x1xf32>
    %96 = vector.broadcast %95 : vector<1x32x1xf32> to vector<2x32x577xf32>
    %97 = arith.addf %93, %96 : vector<2x32x577xf32>
    %cst_13 = arith.constant 0.000000e+00 : f32
    %98 = vector.broadcast %cst_13 : f32 to vector<2x32x577xf32>
    %99 = arith.maximumf %97, %98 : vector<2x32x577xf32>
    %c0_14 = arith.constant 0 : index
    %c0_15 = arith.constant 0 : index
    %100 = vector.load %arg6[%c0_14, %c0_15] : memref<32x577xf32, #tpu.memory_space<vmem>>, vector<32x577xf32>
    %101 = vector.shape_cast %100 : vector<32x577xf32> to vector<1x32x577xf32>
    %c0_16 = arith.constant 0 : index
    %c0_17 = arith.constant 0 : index
    %102 = vector.load %arg7[%c0_16, %c0_17] : memref<32x577xf32, #tpu.memory_space<vmem>>, vector<32x577xf32>
    %103 = vector.shape_cast %102 : vector<32x577xf32> to vector<1x32x577xf32>
    %104 = arith.mulf %99, %99 : vector<2x32x577xf32>
    %cst_18 = arith.constant dense<0.000000e+00> : vector<2x32xf32>
    %105 = vector.multi_reduction <add>, %99, %cst_18 [2] : vector<2x32x577xf32> to vector<2x32xf32>
    %106 = vector.shape_cast %105 : vector<2x32xf32> to vector<2x32x1xf32>
    %cst_19 = arith.constant dense<0.000000e+00> : vector<2x32xf32>
    %107 = vector.multi_reduction <add>, %104, %cst_19 [2] : vector<2x32x577xf32> to vector<2x32xf32>
    %108 = vector.shape_cast %107 : vector<2x32xf32> to vector<2x32x1xf32>
    %cst_20 = arith.constant dense<0.000000e+00> : vector<2x1xf32>
    %109 = vector.multi_reduction <add>, %106, %cst_20 [1] : vector<2x32x1xf32> to vector<2x1xf32>
    %110 = vector.shape_cast %109 : vector<2x1xf32> to vector<2x1x1xf32>
    %cst_21 = arith.constant dense<0.000000e+00> : vector<2x1xf32>
    %111 = vector.multi_reduction <add>, %108, %cst_21 [1] : vector<2x32x1xf32> to vector<2x1xf32>
    %112 = vector.shape_cast %111 : vector<2x1xf32> to vector<2x1x1xf32>
    %cst_22 = arith.constant 5.41594454E-5 : f32
    %113 = vector.broadcast %cst_22 : f32 to vector<2x1x1xf32>
    %114 = arith.mulf %110, %113 : vector<2x1x1xf32>
    %cst_23 = arith.constant 5.41594454E-5 : f32
    %115 = vector.broadcast %cst_23 : f32 to vector<2x1x1xf32>
    %116 = arith.mulf %112, %115 : vector<2x1x1xf32>
    %117 = arith.mulf %114, %114 : vector<2x1x1xf32>
    %118 = arith.subf %116, %117 : vector<2x1x1xf32>
    %cst_24 = arith.constant 0.000000e+00 : f32
    %119 = vector.broadcast %cst_24 : f32 to vector<2x1x1xf32>
    %120 = arith.maximumf %118, %119 : vector<2x1x1xf32>
    %121 = vector.broadcast %114 : vector<2x1x1xf32> to vector<2x32x577xf32>
    %122 = arith.subf %99, %121 : vector<2x32x577xf32>
    %cst_25 = arith.constant 9.99999974E-6 : f32
    %123 = vector.broadcast %cst_25 : f32 to vector<2x1x1xf32>
    %124 = arith.addf %120, %123 : vector<2x1x1xf32>
    %125 = math.rsqrt %124 : vector<2x1x1xf32>
    %126 = vector.broadcast %125 : vector<2x1x1xf32> to vector<2x32x577xf32>
    %127 = arith.mulf %122, %126 : vector<2x32x577xf32>
    %128 = vector.broadcast %101 : vector<1x32x577xf32> to vector<2x32x577xf32>
    %129 = arith.mulf %127, %128 : vector<2x32x577xf32>
    %130 = vector.broadcast %103 : vector<1x32x577xf32> to vector<2x32x577xf32>
    %131 = arith.addf %129, %130 : vector<2x32x577xf32>
    %c0_26 = arith.constant 0 : index
    %c0_27 = arith.constant 0 : index
    %132 = vector.load %arg8[%c0_26, %c0_27] : memref<256x32xbf16, #tpu.memory_space<vmem>>, vector<256x32xbf16>
    %133 = arith.truncf %131 : vector<2x32x577xf32> to vector<2x32x577xbf16>
    %134 = vector.extract_strided_slice %133 {offsets = [0, 0, 0], sizes = [1, 32, 577], strides = [1, 1, 1]} : vector<2x32x577xbf16> to vector<1x32x577xbf16>
    %135 = vector.shape_cast %134 : vector<1x32x577xbf16> to vector<32x577xbf16>
    %cst_28 = arith.constant dense<0.000000e+00> : vector<256x577xf32>
    %136 = tpu.matmul %132, %135, %cst_28 {dimension_numbers = #tpu.dot_dimension_numbers<[1], [0], [0], [1], [0, 0, 1, 1], [], []>} : vector<256x32xbf16>, vector<32x577xbf16>, vector<256x577xf32> -> vector<256x577xf32>
    %137 = vector.extract_strided_slice %133 {offsets = [1, 0, 0], sizes = [1, 32, 577], strides = [1, 1, 1]} : vector<2x32x577xbf16> to vector<1x32x577xbf16>
    %138 = vector.shape_cast %137 : vector<1x32x577xbf16> to vector<32x577xbf16>
    %cst_29 = arith.constant dense<0.000000e+00> : vector<256x577xf32>
    %139 = tpu.matmul %132, %138, %cst_29 {dimension_numbers = #tpu.dot_dimension_numbers<[1], [0], [0], [1], [0, 0, 1, 1], [], []>} : vector<256x32xbf16>, vector<32x577xbf16>, vector<256x577xf32> -> vector<256x577xf32>
    %140 = vector.shape_cast %136 : vector<256x577xf32> to vector<1x256x577xf32>
    %141 = vector.shape_cast %139 : vector<256x577xf32> to vector<1x256x577xf32>
    %142 = tpu.concatenate %140, %141 in 0 : vector<1x256x577xf32>, vector<1x256x577xf32> -> vector<2x256x577xf32>
    %c0_30 = arith.constant 0 : index
    %c0_31 = arith.constant 0 : index
    %143 = vector.load %arg9[%c0_30, %c0_31] : memref<16x1xf32, #tpu.memory_space<vmem>>, vector<16x1xf32>
    %144 = vector.shape_cast %143 : vector<16x1xf32> to vector<1x16x1xf32>
    %145 = vector.shape_cast %144 : vector<1x16x1xf32> to vector<1x16x1xf32>
    %146 = vector.broadcast %145 : vector<1x16x1xf32> to vector<2x16x592xf32>
    %147 = vector.extract_strided_slice %142 {offsets = [0, 0, 0], sizes = [2, 16, 577], strides = [1, 1, 1]} : vector<2x256x577xf32> to vector<2x16x577xf32>
    %cst_32 = arith.constant 0.000000e+00 : f32
    %148 = vector.broadcast %cst_32 : f32 to vector<2x16x15xf32>
    %149 = tpu.concatenate %147, %148 in 2 : vector<2x16x577xf32>, vector<2x16x15xf32> -> vector<2x16x592xf32>
    %150 = arith.addf %146, %149 : vector<2x16x592xf32>
    %151 = vector.extract_strided_slice %142 {offsets = [0, 16, 0], sizes = [2, 16, 577], strides = [1, 1, 1]} : vector<2x256x577xf32> to vector<2x16x577xf32>
    %cst_33 = arith.constant 0.000000e+00 : f32
    %152 = vector.broadcast %cst_33 : f32 to vector<2x16x1xf32>
    %cst_34 = arith.constant 0.000000e+00 : f32
    %153 = vector.broadcast %cst_34 : f32 to vector<2x16x14xf32>
    %154 = tpu.concatenate %152, %151, %153 in 2 : vector<2x16x1xf32>, vector<2x16x577xf32>, vector<2x16x14xf32> -> vector<2x16x592xf32>
    %155 = arith.addf %150, %154 : vector<2x16x592xf32>
    %156 = vector.extract_strided_slice %142 {offsets = [0, 32, 0], sizes = [2, 16, 577], strides = [1, 1, 1]} : vector<2x256x577xf32> to vector<2x16x577xf32>
    %cst_35 = arith.constant 0.000000e+00 : f32
    %157 = vector.broadcast %cst_35 : f32 to vector<2x16x2xf32>
    %cst_36 = arith.constant 0.000000e+00 : f32
    %158 = vector.broadcast %cst_36 : f32 to vector<2x16x13xf32>
    %159 = tpu.concatenate %157, %156, %158 in 2 : vector<2x16x2xf32>, vector<2x16x577xf32>, vector<2x16x13xf32> -> vector<2x16x592xf32>
    %160 = arith.addf %155, %159 : vector<2x16x592xf32>
    %161 = vector.extract_strided_slice %142 {offsets = [0, 48, 0], sizes = [2, 16, 577], strides = [1, 1, 1]} : vector<2x256x577xf32> to vector<2x16x577xf32>
    %cst_37 = arith.constant 0.000000e+00 : f32
    %162 = vector.broadcast %cst_37 : f32 to vector<2x16x3xf32>
    %cst_38 = arith.constant 0.000000e+00 : f32
    %163 = vector.broadcast %cst_38 : f32 to vector<2x16x12xf32>
    %164 = tpu.concatenate %162, %161, %163 in 2 : vector<2x16x3xf32>, vector<2x16x577xf32>, vector<2x16x12xf32> -> vector<2x16x592xf32>
    %165 = arith.addf %160, %164 : vector<2x16x592xf32>
    %166 = vector.extract_strided_slice %142 {offsets = [0, 64, 0], sizes = [2, 16, 577], strides = [1, 1, 1]} : vector<2x256x577xf32> to vector<2x16x577xf32>
    %cst_39 = arith.constant 0.000000e+00 : f32
    %167 = vector.broadcast %cst_39 : f32 to vector<2x16x4xf32>
    %cst_40 = arith.constant 0.000000e+00 : f32
    %168 = vector.broadcast %cst_40 : f32 to vector<2x16x11xf32>
    %169 = tpu.concatenate %167, %166, %168 in 2 : vector<2x16x4xf32>, vector<2x16x577xf32>, vector<2x16x11xf32> -> vector<2x16x592xf32>
    %170 = arith.addf %165, %169 : vector<2x16x592xf32>
    %171 = vector.extract_strided_slice %142 {offsets = [0, 80, 0], sizes = [2, 16, 577], strides = [1, 1, 1]} : vector<2x256x577xf32> to vector<2x16x577xf32>
    %cst_41 = arith.constant 0.000000e+00 : f32
    %172 = vector.broadcast %cst_41 : f32 to vector<2x16x5xf32>
    %cst_42 = arith.constant 0.000000e+00 : f32
    %173 = vector.broadcast %cst_42 : f32 to vector<2x16x10xf32>
    %174 = tpu.concatenate %172, %171, %173 in 2 : vector<2x16x5xf32>, vector<2x16x577xf32>, vector<2x16x10xf32> -> vector<2x16x592xf32>
    %175 = arith.addf %170, %174 : vector<2x16x592xf32>
    %176 = vector.extract_strided_slice %142 {offsets = [0, 96, 0], sizes = [2, 16, 577], strides = [1, 1, 1]} : vector<2x256x577xf32> to vector<2x16x577xf32>
    %cst_43 = arith.constant 0.000000e+00 : f32
    %177 = vector.broadcast %cst_43 : f32 to vector<2x16x6xf32>
    %cst_44 = arith.constant 0.000000e+00 : f32
    %178 = vector.broadcast %cst_44 : f32 to vector<2x16x9xf32>
    %179 = tpu.concatenate %177, %176, %178 in 2 : vector<2x16x6xf32>, vector<2x16x577xf32>, vector<2x16x9xf32> -> vector<2x16x592xf32>
    %180 = arith.addf %175, %179 : vector<2x16x592xf32>
    %181 = vector.extract_strided_slice %142 {offsets = [0, 112, 0], sizes = [2, 16, 577], strides = [1, 1, 1]} : vector<2x256x577xf32> to vector<2x16x577xf32>
    %cst_45 = arith.constant 0.000000e+00 : f32
    %182 = vector.broadcast %cst_45 : f32 to vector<2x16x7xf32>
    %cst_46 = arith.constant 0.000000e+00 : f32
    %183 = vector.broadcast %cst_46 : f32 to vector<2x16x8xf32>
    %184 = tpu.concatenate %182, %181, %183 in 2 : vector<2x16x7xf32>, vector<2x16x577xf32>, vector<2x16x8xf32> -> vector<2x16x592xf32>
    %185 = arith.addf %180, %184 : vector<2x16x592xf32>
    %186 = vector.extract_strided_slice %142 {offsets = [0, 128, 0], sizes = [2, 16, 577], strides = [1, 1, 1]} : vector<2x256x577xf32> to vector<2x16x577xf32>
    %cst_47 = arith.constant 0.000000e+00 : f32
    %187 = vector.broadcast %cst_47 : f32 to vector<2x16x8xf32>
    %cst_48 = arith.constant 0.000000e+00 : f32
    %188 = vector.broadcast %cst_48 : f32 to vector<2x16x7xf32>
    %189 = tpu.concatenate %187, %186, %188 in 2 : vector<2x16x8xf32>, vector<2x16x577xf32>, vector<2x16x7xf32> -> vector<2x16x592xf32>
    %190 = arith.addf %185, %189 : vector<2x16x592xf32>
    %191 = vector.extract_strided_slice %142 {offsets = [0, 144, 0], sizes = [2, 16, 577], strides = [1, 1, 1]} : vector<2x256x577xf32> to vector<2x16x577xf32>
    %cst_49 = arith.constant 0.000000e+00 : f32
    %192 = vector.broadcast %cst_49 : f32 to vector<2x16x9xf32>
    %cst_50 = arith.constant 0.000000e+00 : f32
    %193 = vector.broadcast %cst_50 : f32 to vector<2x16x6xf32>
    %194 = tpu.concatenate %192, %191, %193 in 2 : vector<2x16x9xf32>, vector<2x16x577xf32>, vector<2x16x6xf32> -> vector<2x16x592xf32>
    %195 = arith.addf %190, %194 : vector<2x16x592xf32>
    %196 = vector.extract_strided_slice %142 {offsets = [0, 160, 0], sizes = [2, 16, 577], strides = [1, 1, 1]} : vector<2x256x577xf32> to vector<2x16x577xf32>
    %cst_51 = arith.constant 0.000000e+00 : f32
    %197 = vector.broadcast %cst_51 : f32 to vector<2x16x10xf32>
    %cst_52 = arith.constant 0.000000e+00 : f32
    %198 = vector.broadcast %cst_52 : f32 to vector<2x16x5xf32>
    %199 = tpu.concatenate %197, %196, %198 in 2 : vector<2x16x10xf32>, vector<2x16x577xf32>, vector<2x16x5xf32> -> vector<2x16x592xf32>
    %200 = arith.addf %195, %199 : vector<2x16x592xf32>
    %201 = vector.extract_strided_slice %142 {offsets = [0, 176, 0], sizes = [2, 16, 577], strides = [1, 1, 1]} : vector<2x256x577xf32> to vector<2x16x577xf32>
    %cst_53 = arith.constant 0.000000e+00 : f32
    %202 = vector.broadcast %cst_53 : f32 to vector<2x16x11xf32>
    %cst_54 = arith.constant 0.000000e+00 : f32
    %203 = vector.broadcast %cst_54 : f32 to vector<2x16x4xf32>
    %204 = tpu.concatenate %202, %201, %203 in 2 : vector<2x16x11xf32>, vector<2x16x577xf32>, vector<2x16x4xf32> -> vector<2x16x592xf32>
    %205 = arith.addf %200, %204 : vector<2x16x592xf32>
    %206 = vector.extract_strided_slice %142 {offsets = [0, 192, 0], sizes = [2, 16, 577], strides = [1, 1, 1]} : vector<2x256x577xf32> to vector<2x16x577xf32>
    %cst_55 = arith.constant 0.000000e+00 : f32
    %207 = vector.broadcast %cst_55 : f32 to vector<2x16x12xf32>
    %cst_56 = arith.constant 0.000000e+00 : f32
    %208 = vector.broadcast %cst_56 : f32 to vector<2x16x3xf32>
    %209 = tpu.concatenate %207, %206, %208 in 2 : vector<2x16x12xf32>, vector<2x16x577xf32>, vector<2x16x3xf32> -> vector<2x16x592xf32>
    %210 = arith.addf %205, %209 : vector<2x16x592xf32>
    %211 = vector.extract_strided_slice %142 {offsets = [0, 208, 0], sizes = [2, 16, 577], strides = [1, 1, 1]} : vector<2x256x577xf32> to vector<2x16x577xf32>
    %cst_57 = arith.constant 0.000000e+00 : f32
    %212 = vector.broadcast %cst_57 : f32 to vector<2x16x13xf32>
    %cst_58 = arith.constant 0.000000e+00 : f32
    %213 = vector.broadcast %cst_58 : f32 to vector<2x16x2xf32>
    %214 = tpu.concatenate %212, %211, %213 in 2 : vector<2x16x13xf32>, vector<2x16x577xf32>, vector<2x16x2xf32> -> vector<2x16x592xf32>
    %215 = arith.addf %210, %214 : vector<2x16x592xf32>
    %216 = vector.extract_strided_slice %142 {offsets = [0, 224, 0], sizes = [2, 16, 577], strides = [1, 1, 1]} : vector<2x256x577xf32> to vector<2x16x577xf32>
    %cst_59 = arith.constant 0.000000e+00 : f32
    %217 = vector.broadcast %cst_59 : f32 to vector<2x16x14xf32>
    %cst_60 = arith.constant 0.000000e+00 : f32
    %218 = vector.broadcast %cst_60 : f32 to vector<2x16x1xf32>
    %219 = tpu.concatenate %217, %216, %218 in 2 : vector<2x16x14xf32>, vector<2x16x577xf32>, vector<2x16x1xf32> -> vector<2x16x592xf32>
    %220 = arith.addf %215, %219 : vector<2x16x592xf32>
    %221 = vector.extract_strided_slice %142 {offsets = [0, 240, 0], sizes = [2, 16, 577], strides = [1, 1, 1]} : vector<2x256x577xf32> to vector<2x16x577xf32>
    %cst_61 = arith.constant 0.000000e+00 : f32
    %222 = vector.broadcast %cst_61 : f32 to vector<2x16x15xf32>
    %223 = tpu.concatenate %222, %221 in 2 : vector<2x16x15xf32>, vector<2x16x577xf32> -> vector<2x16x592xf32>
    %224 = arith.addf %220, %223 : vector<2x16x592xf32>
    %cst_62 = arith.constant 0.000000e+00 : f32
    %225 = vector.broadcast %cst_62 : f32 to vector<2x16x592xf32>
    %226 = arith.maximumf %224, %225 : vector<2x16x592xf32>
    %c0_63 = arith.constant 0 : index
    %c0_64 = arith.constant 0 : index
    %227 = vector.load %arg10[%c0_63, %c0_64] : memref<16x592xf32, #tpu.memory_space<vmem>>, vector<16x592xf32>
    %228 = vector.shape_cast %227 : vector<16x592xf32> to vector<1x16x592xf32>
    %c0_65 = arith.constant 0 : index
    %c0_66 = arith.constant 0 : index
    %229 = vector.load %arg11[%c0_65, %c0_66] : memref<16x592xf32, #tpu.memory_space<vmem>>, vector<16x592xf32>
    %230 = vector.shape_cast %229 : vector<16x592xf32> to vector<1x16x592xf32>
    %231 = arith.mulf %226, %226 : vector<2x16x592xf32>
    %cst_67 = arith.constant dense<0.000000e+00> : vector<2x16xf32>
    %232 = vector.multi_reduction <add>, %226, %cst_67 [2] : vector<2x16x592xf32> to vector<2x16xf32>
    %233 = vector.shape_cast %232 : vector<2x16xf32> to vector<2x16x1xf32>
    %cst_68 = arith.constant dense<0.000000e+00> : vector<2x16xf32>
    %234 = vector.multi_reduction <add>, %231, %cst_68 [2] : vector<2x16x592xf32> to vector<2x16xf32>
    %235 = vector.shape_cast %234 : vector<2x16xf32> to vector<2x16x1xf32>
    %cst_69 = arith.constant dense<0.000000e+00> : vector<2x1xf32>
    %236 = vector.multi_reduction <add>, %233, %cst_69 [1] : vector<2x16x1xf32> to vector<2x1xf32>
    %237 = vector.shape_cast %236 : vector<2x1xf32> to vector<2x1x1xf32>
    %cst_70 = arith.constant dense<0.000000e+00> : vector<2x1xf32>
    %238 = vector.multi_reduction <add>, %235, %cst_70 [1] : vector<2x16x1xf32> to vector<2x1xf32>
    %239 = vector.shape_cast %238 : vector<2x1xf32> to vector<2x1x1xf32>
    %cst_71 = arith.constant 1.05574327E-4 : f32
    %240 = vector.broadcast %cst_71 : f32 to vector<2x1x1xf32>
    %241 = arith.mulf %237, %240 : vector<2x1x1xf32>
    %cst_72 = arith.constant 1.05574327E-4 : f32
    %242 = vector.broadcast %cst_72 : f32 to vector<2x1x1xf32>
    %243 = arith.mulf %239, %242 : vector<2x1x1xf32>
    %244 = arith.mulf %241, %241 : vector<2x1x1xf32>
    %245 = arith.subf %243, %244 : vector<2x1x1xf32>
    %cst_73 = arith.constant 0.000000e+00 : f32
    %246 = vector.broadcast %cst_73 : f32 to vector<2x1x1xf32>
    %247 = arith.maximumf %245, %246 : vector<2x1x1xf32>
    %248 = vector.broadcast %241 : vector<2x1x1xf32> to vector<2x16x592xf32>
    %249 = arith.subf %226, %248 : vector<2x16x592xf32>
    %cst_74 = arith.constant 9.99999974E-6 : f32
    %250 = vector.broadcast %cst_74 : f32 to vector<2x1x1xf32>
    %251 = arith.addf %247, %250 : vector<2x1x1xf32>
    %252 = math.rsqrt %251 : vector<2x1x1xf32>
    %253 = vector.broadcast %252 : vector<2x1x1xf32> to vector<2x16x592xf32>
    %254 = arith.mulf %249, %253 : vector<2x16x592xf32>
    %255 = vector.broadcast %228 : vector<1x16x592xf32> to vector<2x16x592xf32>
    %256 = arith.mulf %254, %255 : vector<2x16x592xf32>
    %257 = vector.broadcast %230 : vector<1x16x592xf32> to vector<2x16x592xf32>
    %258 = arith.addf %256, %257 : vector<2x16x592xf32>
    %c0_75 = arith.constant 0 : index
    %c0_76 = arith.constant 0 : index
    %259 = vector.load %arg12[%c0_75, %c0_76] : memref<8x16xbf16, #tpu.memory_space<vmem>>, vector<8x16xbf16>
    %260 = arith.truncf %258 : vector<2x16x592xf32> to vector<2x16x592xbf16>
    %261 = vector.extract_strided_slice %260 {offsets = [0, 0, 0], sizes = [1, 16, 592], strides = [1, 1, 1]} : vector<2x16x592xbf16> to vector<1x16x592xbf16>
    %262 = vector.shape_cast %261 : vector<1x16x592xbf16> to vector<16x592xbf16>
    %cst_77 = arith.constant dense<0.000000e+00> : vector<8x592xf32>
    %263 = tpu.matmul %259, %262, %cst_77 {dimension_numbers = #tpu.dot_dimension_numbers<[1], [0], [0], [1], [0, 0, 1, 1], [], []>} : vector<8x16xbf16>, vector<16x592xbf16>, vector<8x592xf32> -> vector<8x592xf32>
    %264 = vector.extract_strided_slice %260 {offsets = [1, 0, 0], sizes = [1, 16, 592], strides = [1, 1, 1]} : vector<2x16x592xbf16> to vector<1x16x592xbf16>
    %265 = vector.shape_cast %264 : vector<1x16x592xbf16> to vector<16x592xbf16>
    %cst_78 = arith.constant dense<0.000000e+00> : vector<8x592xf32>
    %266 = tpu.matmul %259, %265, %cst_78 {dimension_numbers = #tpu.dot_dimension_numbers<[1], [0], [0], [1], [0, 0, 1, 1], [], []>} : vector<8x16xbf16>, vector<16x592xbf16>, vector<8x592xf32> -> vector<8x592xf32>
    %267 = vector.shape_cast %263 : vector<8x592xf32> to vector<1x8x592xf32>
    %268 = vector.shape_cast %266 : vector<8x592xf32> to vector<1x8x592xf32>
    %269 = tpu.concatenate %267, %268 in 0 : vector<1x8x592xf32>, vector<1x8x592xf32> -> vector<2x8x592xf32>
    %c0_79 = arith.constant 0 : index
    %c0_80 = arith.constant 0 : index
    %270 = vector.load %arg13[%c0_79, %c0_80] : memref<1x1xf32, #tpu.memory_space<vmem>>, vector<1x1xf32>
    %271 = vector.shape_cast %270 : vector<1x1xf32> to vector<1x1x1xf32>
    %272 = vector.shape_cast %271 : vector<1x1x1xf32> to vector<1x1x1xf32>
    %273 = vector.broadcast %272 : vector<1x1x1xf32> to vector<2x1x599xf32>
    %274 = vector.extract_strided_slice %269 {offsets = [0, 0, 0], sizes = [2, 1, 592], strides = [1, 1, 1]} : vector<2x8x592xf32> to vector<2x1x592xf32>
    %cst_81 = arith.constant 0.000000e+00 : f32
    %275 = vector.broadcast %cst_81 : f32 to vector<2x1x7xf32>
    %276 = tpu.concatenate %274, %275 in 2 : vector<2x1x592xf32>, vector<2x1x7xf32> -> vector<2x1x599xf32>
    %277 = arith.addf %273, %276 : vector<2x1x599xf32>
    %278 = vector.extract_strided_slice %269 {offsets = [0, 1, 0], sizes = [2, 1, 592], strides = [1, 1, 1]} : vector<2x8x592xf32> to vector<2x1x592xf32>
    %cst_82 = arith.constant 0.000000e+00 : f32
    %279 = vector.broadcast %cst_82 : f32 to vector<2x1x1xf32>
    %cst_83 = arith.constant 0.000000e+00 : f32
    %280 = vector.broadcast %cst_83 : f32 to vector<2x1x6xf32>
    %281 = tpu.concatenate %279, %278, %280 in 2 : vector<2x1x1xf32>, vector<2x1x592xf32>, vector<2x1x6xf32> -> vector<2x1x599xf32>
    %282 = arith.addf %277, %281 : vector<2x1x599xf32>
    %283 = vector.extract_strided_slice %269 {offsets = [0, 2, 0], sizes = [2, 1, 592], strides = [1, 1, 1]} : vector<2x8x592xf32> to vector<2x1x592xf32>
    %cst_84 = arith.constant 0.000000e+00 : f32
    %284 = vector.broadcast %cst_84 : f32 to vector<2x1x2xf32>
    %cst_85 = arith.constant 0.000000e+00 : f32
    %285 = vector.broadcast %cst_85 : f32 to vector<2x1x5xf32>
    %286 = tpu.concatenate %284, %283, %285 in 2 : vector<2x1x2xf32>, vector<2x1x592xf32>, vector<2x1x5xf32> -> vector<2x1x599xf32>
    %287 = arith.addf %282, %286 : vector<2x1x599xf32>
    %288 = vector.extract_strided_slice %269 {offsets = [0, 3, 0], sizes = [2, 1, 592], strides = [1, 1, 1]} : vector<2x8x592xf32> to vector<2x1x592xf32>
    %cst_86 = arith.constant 0.000000e+00 : f32
    %289 = vector.broadcast %cst_86 : f32 to vector<2x1x3xf32>
    %cst_87 = arith.constant 0.000000e+00 : f32
    %290 = vector.broadcast %cst_87 : f32 to vector<2x1x4xf32>
    %291 = tpu.concatenate %289, %288, %290 in 2 : vector<2x1x3xf32>, vector<2x1x592xf32>, vector<2x1x4xf32> -> vector<2x1x599xf32>
    %292 = arith.addf %287, %291 : vector<2x1x599xf32>
    %293 = vector.extract_strided_slice %269 {offsets = [0, 4, 0], sizes = [2, 1, 592], strides = [1, 1, 1]} : vector<2x8x592xf32> to vector<2x1x592xf32>
    %cst_88 = arith.constant 0.000000e+00 : f32
    %294 = vector.broadcast %cst_88 : f32 to vector<2x1x4xf32>
    %cst_89 = arith.constant 0.000000e+00 : f32
    %295 = vector.broadcast %cst_89 : f32 to vector<2x1x3xf32>
    %296 = tpu.concatenate %294, %293, %295 in 2 : vector<2x1x4xf32>, vector<2x1x592xf32>, vector<2x1x3xf32> -> vector<2x1x599xf32>
    %297 = arith.addf %292, %296 : vector<2x1x599xf32>
    %298 = vector.extract_strided_slice %269 {offsets = [0, 5, 0], sizes = [2, 1, 592], strides = [1, 1, 1]} : vector<2x8x592xf32> to vector<2x1x592xf32>
    %cst_90 = arith.constant 0.000000e+00 : f32
    %299 = vector.broadcast %cst_90 : f32 to vector<2x1x5xf32>
    %cst_91 = arith.constant 0.000000e+00 : f32
    %300 = vector.broadcast %cst_91 : f32 to vector<2x1x2xf32>
    %301 = tpu.concatenate %299, %298, %300 in 2 : vector<2x1x5xf32>, vector<2x1x592xf32>, vector<2x1x2xf32> -> vector<2x1x599xf32>
    %302 = arith.addf %297, %301 : vector<2x1x599xf32>
    %303 = vector.extract_strided_slice %269 {offsets = [0, 6, 0], sizes = [2, 1, 592], strides = [1, 1, 1]} : vector<2x8x592xf32> to vector<2x1x592xf32>
    %cst_92 = arith.constant 0.000000e+00 : f32
    %304 = vector.broadcast %cst_92 : f32 to vector<2x1x6xf32>
    %cst_93 = arith.constant 0.000000e+00 : f32
    %305 = vector.broadcast %cst_93 : f32 to vector<2x1x1xf32>
    %306 = tpu.concatenate %304, %303, %305 in 2 : vector<2x1x6xf32>, vector<2x1x592xf32>, vector<2x1x1xf32> -> vector<2x1x599xf32>
    %307 = arith.addf %302, %306 : vector<2x1x599xf32>
    %308 = vector.extract_strided_slice %269 {offsets = [0, 7, 0], sizes = [2, 1, 592], strides = [1, 1, 1]} : vector<2x8x592xf32> to vector<2x1x592xf32>
    %cst_94 = arith.constant 0.000000e+00 : f32
    %309 = vector.broadcast %cst_94 : f32 to vector<2x1x7xf32>
    %310 = tpu.concatenate %309, %308 in 2 : vector<2x1x7xf32>, vector<2x1x592xf32> -> vector<2x1x599xf32>
    %311 = arith.addf %307, %310 : vector<2x1x599xf32>
    %cst_95 = arith.constant dense<0.000000e+00> : vector<2x1xf32>
    %312 = vector.multi_reduction <add>, %311, %cst_95 [2] : vector<2x1x599xf32> to vector<2x1xf32>
    %313 = vector.shape_cast %312 : vector<2x1xf32> to vector<2x1x1xf32>
    %314 = arith.mulf %311, %311 : vector<2x1x599xf32>
    %cst_96 = arith.constant dense<0.000000e+00> : vector<2x1xf32>
    %315 = vector.multi_reduction <add>, %314, %cst_96 [2] : vector<2x1x599xf32> to vector<2x1xf32>
    %316 = vector.shape_cast %315 : vector<2x1xf32> to vector<2x1x1xf32>
    %cst_97 = arith.constant 0.00166944903 : f32
    %317 = vector.broadcast %cst_97 : f32 to vector<2x1x1xf32>
    %318 = arith.mulf %313, %317 : vector<2x1x1xf32>
    %cst_98 = arith.constant 0.00166944903 : f32
    %319 = vector.broadcast %cst_98 : f32 to vector<2x1x1xf32>
    %320 = arith.mulf %316, %319 : vector<2x1x1xf32>
    %321 = arith.mulf %318, %318 : vector<2x1x1xf32>
    %322 = arith.subf %320, %321 : vector<2x1x1xf32>
    %cst_99 = arith.constant 0.000000e+00 : f32
    %323 = vector.broadcast %cst_99 : f32 to vector<2x1x1xf32>
    %324 = arith.maximumf %322, %323 : vector<2x1x1xf32>
    %cst_100 = arith.constant 9.99999974E-6 : f32
    %325 = vector.broadcast %cst_100 : f32 to vector<2x1x1xf32>
    %326 = arith.addf %324, %325 : vector<2x1x1xf32>
    %327 = math.rsqrt %326 : vector<2x1x1xf32>
    %328 = vector.broadcast %318 : vector<2x1x1xf32> to vector<2x1x599xf32>
    %329 = arith.subf %311, %328 : vector<2x1x599xf32>
    %c0_101 = arith.constant 0 : index
    %c0_102 = arith.constant 0 : index
    %330 = vector.load %arg14[%c0_101, %c0_102] : memref<1x599xf32, #tpu.memory_space<vmem>>, vector<1x599xf32>
    %331 = vector.shape_cast %330 : vector<1x599xf32> to vector<1x1x599xf32>
    %332 = vector.broadcast %331 : vector<1x1x599xf32> to vector<2x1x599xf32>
    %333 = arith.mulf %329, %332 : vector<2x1x599xf32>
    %cst_103 = arith.constant dense<0.000000e+00> : vector<2x1xf32>
    %334 = vector.multi_reduction <add>, %333, %cst_103 [2] : vector<2x1x599xf32> to vector<2x1xf32>
    %335 = vector.shape_cast %334 : vector<2x1xf32> to vector<2x1x1xf32>
    %336 = arith.mulf %327, %335 : vector<2x1x1xf32>
    %c0_104 = arith.constant 0 : index
    %c0_105 = arith.constant 0 : index
    %337 = vector.load %arg15[%c0_104, %c0_105] : memref<1x1xf32, #tpu.memory_space<vmem>>, vector<1x1xf32>
    %338 = vector.shape_cast %337 : vector<1x1xf32> to vector<1x1x1xf32>
    %339 = vector.broadcast %338 : vector<1x1x1xf32> to vector<2x1x1xf32>
    %340 = arith.addf %336, %339 : vector<2x1x1xf32>
    %c0_106 = arith.constant 0 : index
    %c0_107 = arith.constant 0 : index
    %c0_108 = arith.constant 0 : index
    %341 = vector.load %arg16[%c0_106, %c0_107, %c0_108] : memref<2x1x1xf32, #tpu.memory_space<vmem>>, vector<2x1x1xf32>
    tpu.vector_store %arg16[%c0_106, %c0_107, %c0_108], %340 {strides = array<i32>} : memref<2x1x1xf32, #tpu.memory_space<vmem>>, vector<2x1x1xf32>,
    return
  }
  func.func @transform_0(%arg0: i32) -> (i32, i32, i32) {
    %c0_i32 = arith.constant 0 : i32
    %c0_i32_0 = arith.constant 0 : i32
    %c0_i32_1 = arith.constant 0 : i32
    return %arg0, %c0_i32, %c0_i32_0 : i32, i32, i32
  }
  func.func @transform_1(%arg0: i32) -> (i32, i32) {
    %c0_i32 = arith.constant 0 : i32
    %c0_i32_0 = arith.constant 0 : i32
    %c0_i32_1 = arith.constant 0 : i32
    return %c0_i32, %c0_i32_0 : i32, i32
  }
  func.func @transform_2(%arg0: i32) -> (i32, i32) {
    %c0_i32 = arith.constant 0 : i32
    %c0_i32_0 = arith.constant 0 : i32
    %c0_i32_1 = arith.constant 0 : i32
    return %c0_i32, %c0_i32_0 : i32, i32
  }
  func.func @transform_3(%arg0: i32) -> (i32, i32) {
    %c0_i32 = arith.constant 0 : i32
    %c0_i32_0 = arith.constant 0 : i32
    %c0_i32_1 = arith.constant 0 : i32
    return %c0_i32, %c0_i32_0 : i32, i32
  }
  func.func @transform_4(%arg0: i32) -> (i32, i32) {
    %c0_i32 = arith.constant 0 : i32
    %c0_i32_0 = arith.constant 0 : i32
    %c0_i32_1 = arith.constant 0 : i32
    return %c0_i32, %c0_i32_0 : i32, i32
  }
  func.func @transform_5(%arg0: i32) -> (i32, i32) {
    %c0_i32 = arith.constant 0 : i32
    %c0_i32_0 = arith.constant 0 : i32
    %c0_i32_1 = arith.constant 0 : i32
    return %c0_i32, %c0_i32_0 : i32, i32
  }
  func.func @transform_6(%arg0: i32) -> (i32, i32) {
    %c0_i32 = arith.constant 0 : i32
    %c0_i32_0 = arith.constant 0 : i32
    %c0_i32_1 = arith.constant 0 : i32
    return %c0_i32, %c0_i32_0 : i32, i32
  }
  func.func @transform_7(%arg0: i32) -> (i32, i32) {
    %c0_i32 = arith.constant 0 : i32
    %c0_i32_0 = arith.constant 0 : i32
    %c0_i32_1 = arith.constant 0 : i32
    return %c0_i32, %c0_i32_0 : i32, i32
  }
  func.func @transform_8(%arg0: i32) -> (i32, i32) {
    %c0_i32 = arith.constant 0 : i32
    %c0_i32_0 = arith.constant 0 : i32
    %c0_i32_1 = arith.constant 0 : i32
    return %c0_i32, %c0_i32_0 : i32, i32
  }
  func.func @transform_9(%arg0: i32) -> (i32, i32) {
    %c0_i32 = arith.constant 0 : i32
    %c0_i32_0 = arith.constant 0 : i32
    %c0_i32_1 = arith.constant 0 : i32
    return %c0_i32, %c0_i32_0 : i32, i32
  }
  func.func @transform_10(%arg0: i32) -> (i32, i32) {
    %c0_i32 = arith.constant 0 : i32
    %c0_i32_0 = arith.constant 0 : i32
    %c0_i32_1 = arith.constant 0 : i32
    return %c0_i32, %c0_i32_0 : i32, i32
  }
  func.func @transform_11(%arg0: i32) -> (i32, i32) {
    %c0_i32 = arith.constant 0 : i32
    %c0_i32_0 = arith.constant 0 : i32
    %c0_i32_1 = arith.constant 0 : i32
    return %c0_i32, %c0_i32_0 : i32, i32
  }
  func.func @transform_12(%arg0: i32) -> (i32, i32) {
    %c0_i32 = arith.constant 0 : i32
    %c0_i32_0 = arith.constant 0 : i32
    %c0_i32_1 = arith.constant 0 : i32
    return %c0_i32, %c0_i32_0 : i32, i32
  }
  func.func @transform_13(%arg0: i32) -> (i32, i32) {
    %c0_i32 = arith.constant 0 : i32
    %c0_i32_0 = arith.constant 0 : i32
    %c0_i32_1 = arith.constant 0 : i32
    return %c0_i32, %c0_i32_0 : i32, i32
  }
  func.func @transform_14(%arg0: i32) -> (i32, i32) {
    %c0_i32 = arith.constant 0 : i32
    %c0_i32_0 = arith.constant 0 : i32
    %c0_i32_1 = arith.constant 0 : i32
    return %c0_i32, %c0_i32_0 : i32, i32
  }
  func.func @transform_15(%arg0: i32) -> (i32, i32, i32) {
    %c0_i32 = arith.constant 0 : i32
    %c0_i32_0 = arith.constant 0 : i32
    %c0_i32_1 = arith.constant 0 : i32
    return %arg0, %c0_i32, %c0_i32_0 : i32, i32, i32
  }
}

</mosaic_0001>

<llo_original>
// kernel: tpu_custom_call.1
$region0: #{tpu_custom_call.1}
  #allocation0 [shape = 'u32[]', space=smem, size = 0x4, offset = 0x4, fixed_abs, tag = 'smem constant byte address 0x4 - core index']
  #allocation1 [shape = 'u32[144,128]{1,0:T(1,128)}', space=vmem, size = 0x12000, scoped, tag = 'internal scratch']
  #allocation2 [shape = 'f32[1,1]{1,0:T(1,128)S(1)}', space=vmem, size = 0x200, scoped, tag = 'scoped memory for tpu_custom_call.1']
  #allocation3 [shape = 'f32[1,1]{1,0:T(1,128)S(1)}', space=vmem, size = 0x200, scoped, tag = 'scoped memory for tpu_custom_call.1']
  %s0 = inlined_call_operand.hbm [shape: f32[2,1,599], index: 0, kind: input, shape index: {}]
  %s1 = inlined_call_operand.vmem [shape: f32[16,8], index: 1, kind: input, shape index: {}]
  %s2 = inlined_call_operand.vmem [shape: f32[16,1], index: 2, kind: input, shape index: {}]
  %s3 = inlined_call_operand.hbm [shape: bf16[32,256], index: 3, kind: input, shape index: {}]
  %s4 = inlined_call_operand.vmem [shape: f32[32,1], index: 4, kind: input, shape index: {}]
  %s5 = inlined_call_operand.vmem [shape: f32[32,577], index: 5, kind: input, shape index: {}]
  %s6 = inlined_call_operand.hbm [shape: f32[32,577], index: 6, kind: input, shape index: {}]
  %s7 = inlined_call_operand.vmem [shape: bf16[256,32], index: 7, kind: input, shape index: {}]
  %s8 = inlined_call_operand.vmem [shape: f32[16,1], index: 8, kind: input, shape index: {}]
  %s9 = inlined_call_operand.vmem [shape: f32[16,592], index: 9, kind: input, shape index: {}]
  %s10 = inlined_call_operand.hbm [shape: f32[16,592], index: 10, kind: input, shape index: {}]
  %s11 = inlined_call_operand.vmem [shape: bf16[8,16], index: 11, kind: input, shape index: {}]
  %s12 = inlined_call_operand.<no memory space> [shape: f32[1,1], index: 12, kind: input, shape index: {}]
  %s13 = inlined_call_operand.vmem [shape: f32[1,599], index: 13, kind: input, shape index: {}]
  %s14 = inlined_call_operand.<no memory space> [shape: f32[1,1], index: 14, kind: input, shape index: {}]
  %s15 = inlined_call_operand.vmem [shape: f32[2,1,1], index: 15, kind: output, shape index: {}]
  %s16 = sld [smem:[#allocation0]]
  $region86: #{tpu_custom_call.1} parent=0
    _
  %s18 = ssub.s32 1, %s16
  %s19 = scalar_select 0, %s18, %s16
  %v20 = vstv %s12
  %21 = vst [vmem:[#allocation2] sm:$0x1] %v20
  %v22 = vstv %s14
  %23 = vst [vmem:[#allocation3] sm:$0x1] %v22
  $region1: #{tpu_custom_call.1} parent=0
    #allocation4 [shape = 'u8[5120]{0}', space=vmem, size = 0x1400, scoped, tag = 'input window, operand 0, single buffered']
    #allocation5 [shape = 's32[1]{0}', space=sflag, size = 0x4, scoped, tag = 'scoped memory for tpu_custom_call.1']
    #allocation6 [shape = 'u8[16384]{0}', space=vmem, size = 0x4000, scoped, tag = 'input window, operand 3, single buffered']
    #allocation7 [shape = 's32[1]{0}', space=sflag, size = 0x4, scoped, tag = 'scoped memory for tpu_custom_call.1']
    #allocation8 [shape = 'u8[81920]{0}', space=vmem, size = 0x14000, scoped, tag = 'input window, operand 6, single buffered']
    #allocation9 [shape = 'u8[40960]{0}', space=vmem, size = 0xa000, scoped, tag = 'input window, operand 10, single buffered']
    #allocation10 [shape = 's32[1]{0}', space=sflag, size = 0x4, scoped, tag = 'scoped memory for tpu_custom_call.1']
    %24 = vsyncpa [#allocation5], 0
    %25 = vsyncpa [#allocation7], 0
    %26 = vsyncpa [#allocation10], 0
    // Predicated region
    $region2: #{tpu_custom_call.1} parent=1 // pred_check
      _
    $region3: #{tpu_custom_call.1} parent=1 // pred_check_branch
      %28 = sbr.rel (0) target = $region5
    $region4: #{tpu_custom_call.1} parent=1 // pred_region
      %s30 = ssub.s32 160, 160
      %31 = vsyncadd [#allocation5], %s30
      %s32 = sshll.u32 [#allocation4], 4
      %s33 = int_to_ptr.vmem [resolvable:$true] %s32
      %38 = dma.hbm_to_vmem [thread:$0]  %s0, 160, %s33, [#allocation5], 80, 80, 5
    $region5: #{tpu_custom_call.1} parent=1 // pred_fallthru
      _
    // Predicated region
    $region6: #{tpu_custom_call.1} parent=1 // pred_check
      _
    $region7: #{tpu_custom_call.1} parent=1 // pred_check_branch
      %40 = sbr.rel (0) target = $region9
    $region8: #{tpu_custom_call.1} parent=1 // pred_region
      _
    $region9: #{tpu_custom_call.1} parent=1 // pred_fallthru
      _
    // Predicated region
    $region10: #{tpu_custom_call.1} parent=1 // pred_check
      _
    $region11: #{tpu_custom_call.1} parent=1 // pred_check_branch
      %42 = sbr.rel (0) target = $region13
    $region12: #{tpu_custom_call.1} parent=1 // pred_region
      _
    $region13: #{tpu_custom_call.1} parent=1 // pred_fallthru
      _
    // Predicated region
    $region14: #{tpu_custom_call.1} parent=1 // pred_check
      _
    $region15: #{tpu_custom_call.1} parent=1 // pred_check_branch
      %44 = sbr.rel (0) target = $region17
    $region16: #{tpu_custom_call.1} parent=1 // pred_region
      %s46 = ssub.s32 512, 512
      %47 = vsyncadd [#allocation7], %s46
      %s48 = sshll.u32 [#allocation6], 4
      %s49 = int_to_ptr.vmem [resolvable:$true] %s48
      %54 = dma.hbm_to_vmem [thread:$0]  %s3, 512, %s49, [#allocation7], 128, 128, 8
    $region17: #{tpu_custom_call.1} parent=1 // pred_fallthru
      _
    // Predicated region
    $region18: #{tpu_custom_call.1} parent=1 // pred_check
      _
    $region19: #{tpu_custom_call.1} parent=1 // pred_check_branch
      %56 = sbr.rel (0) target = $region21
    $region20: #{tpu_custom_call.1} parent=1 // pred_region
      _
    $region21: #{tpu_custom_call.1} parent=1 // pred_fallthru
      _
    // Predicated region
    $region22: #{tpu_custom_call.1} parent=1 // pred_check
      _
    $region23: #{tpu_custom_call.1} parent=1 // pred_check_branch
      %58 = sbr.rel (0) target = $region25
    $region24: #{tpu_custom_call.1} parent=1 // pred_region
      _
    $region25: #{tpu_custom_call.1} parent=1 // pred_fallthru
      _
    // Predicated region
    $region26: #{tpu_custom_call.1} parent=1 // pred_check
      _
    $region27: #{tpu_custom_call.1} parent=1 // pred_check_branch
      %60 = sbr.rel (0) target = $region29
    $region28: #{tpu_custom_call.1} parent=1 // pred_region
      %s62 = ssub.s32 2560, 2560
      %63 = vsyncadd [#allocation7], %s62
      %s64 = sshll.u32 [#allocation8], 4
      %s65 = int_to_ptr.vmem [resolvable:$true] %s64
      %70 = dma.hbm_to_vmem [thread:$0]  %s6, 2560, %s65, [#allocation7], 640, 640, 40
    $region29: #{tpu_custom_call.1} parent=1 // pred_fallthru
      _
    // Predicated region
    $region30: #{tpu_custom_call.1} parent=1 // pred_check
      _
    $region31: #{tpu_custom_call.1} parent=1 // pred_check_branch
      %72 = sbr.rel (0) target = $region33
    $region32: #{tpu_custom_call.1} parent=1 // pred_region
      _
    $region33: #{tpu_custom_call.1} parent=1 // pred_fallthru
      _
    // Predicated region
    $region34: #{tpu_custom_call.1} parent=1 // pred_check
      _
    $region35: #{tpu_custom_call.1} parent=1 // pred_check_branch
      %74 = sbr.rel (0) target = $region37
    $region36: #{tpu_custom_call.1} parent=1 // pred_region
      _
    $region37: #{tpu_custom_call.1} parent=1 // pred_fallthru
      _
    // Predicated region
    $region38: #{tpu_custom_call.1} parent=1 // pred_check
      _
    $region39: #{tpu_custom_call.1} parent=1 // pred_check_branch
      %76 = sbr.rel (0) target = $region41
    $region40: #{tpu_custom_call.1} parent=1 // pred_region
      _
    $region41: #{tpu_custom_call.1} parent=1 // pred_fallthru
      _
    // Predicated region
    $region42: #{tpu_custom_call.1} parent=1 // pred_check
      _
    $region43: #{tpu_custom_call.1} parent=1 // pred_check_branch
      %78 = sbr.rel (0) target = $region45
    $region44: #{tpu_custom_call.1} parent=1 // pred_region
      %s80 = ssub.s32 1280, 1280
      %81 = vsyncadd [#allocation10], %s80
      %s82 = sshll.u32 [#allocation9], 4
      %s83 = int_to_ptr.vmem [resolvable:$true] %s82
      %88 = dma.hbm_to_vmem [thread:$0]  %s10, 1280, %s83, [#allocation10], 640, 640, 40
    $region45: #{tpu_custom_call.1} parent=1 // pred_fallthru
      _
    // Predicated region
    $region46: #{tpu_custom_call.1} parent=1 // pred_check
      _
    $region47: #{tpu_custom_call.1} parent=1 // pred_check_branch
      %90 = sbr.rel (0) target = $region49
    $region48: #{tpu_custom_call.1} parent=1 // pred_region
      _
    $region49: #{tpu_custom_call.1} parent=1 // pred_fallthru
      _
    // Predicated region
    $region50: #{tpu_custom_call.1} parent=1 // pred_check
      _
    $region51: #{tpu_custom_call.1} parent=1 // pred_check_branch
      %92 = sbr.rel (0) target = $region53
    $region52: #{tpu_custom_call.1} parent=1 // pred_region
      _
    $region53: #{tpu_custom_call.1} parent=1 // pred_fallthru
      _
    // Predicated region
    $region54: #{tpu_custom_call.1} parent=1 // pred_check
      _
    $region55: #{tpu_custom_call.1} parent=1 // pred_check_branch
      %94 = sbr.rel (0) target = $region57
    $region56: #{tpu_custom_call.1} parent=1 // pred_region
      _
    $region57: #{tpu_custom_call.1} parent=1 // pred_fallthru
      _
    // Predicated region
    $region58: #{tpu_custom_call.1} parent=1 // pred_check
      _
    $region59: #{tpu_custom_call.1} parent=1 // pred_check_branch
      %96 = sbr.rel (0) target = $region61
    $region60: #{tpu_custom_call.1} parent=1 // pred_region
      _
    $region61: #{tpu_custom_call.1} parent=1 // pred_fallthru
      _
    // Predicated region
    $region62: #{tpu_custom_call.1} parent=1 // pred_check
      _
    $region63: #{tpu_custom_call.1} parent=1 // pred_check_branch
      %98 = sbr.rel (0) target = $region65
    $region64: #{tpu_custom_call.1} parent=1 // pred_region
      %99 = dma.done [#allocation5], 160
    $region65: #{tpu_custom_call.1} parent=1 // pred_fallthru
      _
    // Predicated region
    $region66: #{tpu_custom_call.1} parent=1 // pred_check
      _
    $region67: #{tpu_custom_call.1} parent=1 // pred_check_branch
      %101 = sbr.rel (0) target = $region69
    $region68: #{tpu_custom_call.1} parent=1 // pred_region
      %102 = dma.done [#allocation7], 512
    $region69: #{tpu_custom_call.1} parent=1 // pred_fallthru
      _
    // Predicated region
    $region70: #{tpu_custom_call.1} parent=1 // pred_check
      _
    $region71: #{tpu_custom_call.1} parent=1 // pred_check_branch
      %104 = sbr.rel (0) target = $region73
    $region72: #{tpu_custom_call.1} parent=1 // pred_region
      %105 = dma.done [#allocation7], 2560
    $region73: #{tpu_custom_call.1} parent=1 // pred_fallthru
      _
    // Predicated region
    $region74: #{tpu_custom_call.1} parent=1 // pred_check
      _
    $region75: #{tpu_custom_call.1} parent=1 // pred_check_branch
      %107 = sbr.rel (0) target = $region77
    $region76: #{tpu_custom_call.1} parent=1 // pred_region
      %108 = dma.done [#allocation10], 1280
    $region77: #{tpu_custom_call.1} parent=1 // pred_fallthru
      _
    %v110 = vld [vmem:[#allocation4] sm:$0x1f]
    %v111 = vld [vmem:[#allocation4 + $0x5] sm:$0x1f]
    %v112 = vmax.f32 %v110, 0.0
    %v113 = vmax.f32 %v111, 0.0
    %v114 = vld [vmem:[%s1] sm:$0xff]
    %v115 = vld [vmem:[%s1 + $0x8] sm:$0xff]
    %v116 = vld [vmem:[%s2] sm:$0xff]
    %v117 = vld [vmem:[%s2 + $0x8] sm:$0xff]
    %119 = vset.pattern.permute.xlu0 0
    %120 = vperm.xlu0 %119, %v116
    %v121 = vpop.permute.xlu0 %120
    %124 = vset.pattern.permute.xlu0 0
    %125 = vperm.xlu0 %124, %v117
    %v126 = vpop.permute.xlu0 %125
    %v130 = vlaneseq
    %v131 = vshrl.u32 %v130, 7
    %v132 = vsub.s32 0, %v131
    %v133 = vrot.slane %v112, %v132
    %v134 = vlaneseq
    %v135 = vshrl.u32 %v134, 7
    %v136 = vsub.s32 1, %v135
    %v137 = vrot.slane %v112, %v136
    %v138 = vlaneseq
    %v139 = vshrl.u32 %v138, 7
    %v140 = vsub.s32 2, %v139
    %v141 = vrot.slane %v112, %v140
    %v142 = vlaneseq
    %v143 = vshrl.u32 %v142, 7
    %v144 = vsub.s32 3, %v143
    %v145 = vrot.slane %v112, %v144
    %v146 = vlaneseq
    %v147 = vshrl.u32 %v146, 7
    %v148 = vsub.s32 4, %v147
    %v149 = vrot.slane %v112, %v148
    %v150 = vlaneseq
    %v151 = vshrl.u32 %v150, 7
    %v152 = vsub.s32 0, %v151
    %v153 = vrot.slane %v113, %v152
    %v154 = vlaneseq
    %v155 = vshrl.u32 %v154, 7
    %v156 = vsub.s32 1, %v155
    %v157 = vrot.slane %v113, %v156
    %v158 = vlaneseq
    %v159 = vshrl.u32 %v158, 7
    %v160 = vsub.s32 2, %v159
    %v161 = vrot.slane %v113, %v160
    %v162 = vlaneseq
    %v163 = vshrl.u32 %v162, 7
    %v164 = vsub.s32 3, %v163
    %v165 = vrot.slane %v113, %v164
    %v166 = vlaneseq
    %v167 = vshrl.u32 %v166, 7
    %v168 = vsub.s32 4, %v167
    %v169 = vrot.slane %v113, %v168
    %181 = vset.pattern.permute.xlu0 0
    %182 = vperm.xlu0 %181, %v114
    %v183 = vpop.permute.xlu0 %182
    %186 = vset.pattern.permute.xlu0 0
    %187 = vperm.xlu0 %186, %v115
    %v188 = vpop.permute.xlu0 %187
    %v190 = vmul.f32 %v133, %v183
    %v191 = vmul.f32 %v137, %v183
    %v192 = vmul.f32 %v141, %v183
    %v193 = vmul.f32 %v145, %v183
    %v194 = vmul.f32 %v149, %v183
    %v195 = vmul.f32 %v133, %v188
    %v196 = vmul.f32 %v137, %v188
    %v197 = vmul.f32 %v141, %v188
    %v198 = vmul.f32 %v145, %v188
    %v199 = vmul.f32 %v149, %v188
    %v200 = vmul.f32 %v153, %v183
    %v201 = vmul.f32 %v157, %v183
    %v202 = vmul.f32 %v161, %v183
    %v203 = vmul.f32 %v165, %v183
    %v204 = vmul.f32 %v169, %v183
    %v205 = vmul.f32 %v153, %v188
    %v206 = vmul.f32 %v157, %v188
    %v207 = vmul.f32 %v161, %v188
    %v208 = vmul.f32 %v165, %v188
    %v209 = vmul.f32 %v169, %v188
    %v210 = vadd.f32 %v121, %v190
    %v211 = vadd.f32 %v121, %v191
    %v212 = vadd.f32 %v121, %v192
    %v213 = vadd.f32 %v121, %v193
    %v214 = vadd.f32 %v121, %v194
    %v215 = vadd.f32 %v126, %v195
    %v216 = vadd.f32 %v126, %v196
    %v217 = vadd.f32 %v126, %v197
    %v218 = vadd.f32 %v126, %v198
    %v219 = vadd.f32 %v126, %v199
    %v220 = vadd.f32 %v121, %v200
    %v221 = vadd.f32 %v121, %v201
    %v222 = vadd.f32 %v121, %v202
    %v223 = vadd.f32 %v121, %v203
    %v224 = vadd.f32 %v121, %v204
    %v225 = vadd.f32 %v126, %v205
    %v226 = vadd.f32 %v126, %v206
    %v227 = vadd.f32 %v126, %v207
    %v228 = vadd.f32 %v126, %v208
    %v229 = vadd.f32 %v126, %v209
    %230 = vset.pattern.permute.xlu0 1
    %231 = vperm.xlu0 %230, %v114
    %v232 = vpop.permute.xlu0 %231
    %234 = vset.pattern.permute.xlu0 1
    %235 = vperm.xlu0 %234, %v115
    %v236 = vpop.permute.xlu0 %235
    %v238 = vmul.f32 %v133, %v232
    %v239 = vmul.f32 %v137, %v232
    %v240 = vmul.f32 %v141, %v232
    %v241 = vmul.f32 %v145, %v232
    %v242 = vmul.f32 %v149, %v232
    %v243 = vmul.f32 %v133, %v236
    %v244 = vmul.f32 %v137, %v236
    %v245 = vmul.f32 %v141, %v236
    %v246 = vmul.f32 %v145, %v236
    %v247 = vmul.f32 %v149, %v236
    %v248 = vmul.f32 %v153, %v232
    %v249 = vmul.f32 %v157, %v232
    %v250 = vmul.f32 %v161, %v232
    %v251 = vmul.f32 %v165, %v232
    %v252 = vmul.f32 %v169, %v232
    %v253 = vmul.f32 %v153, %v236
    %v254 = vmul.f32 %v157, %v236
    %v255 = vmul.f32 %v161, %v236
    %v256 = vmul.f32 %v165, %v236
    %v257 = vmul.f32 %v169, %v236
    %278 = vrot.lane.b32.xlu0 %v238, 127
    %v279 = vpop.permute.xlu0 %278
    %280 = vrot.lane.b32.xlu0 %v239, 127
    %v281 = vpop.permute.xlu0 %280
    %282 = vrot.lane.b32.xlu0 %v240, 127
    %v283 = vpop.permute.xlu0 %282
    %284 = vrot.lane.b32.xlu0 %v241, 127
    %v285 = vpop.permute.xlu0 %284
    %286 = vrot.lane.b32.xlu0 %v242, 127
    %v287 = vpop.permute.xlu0 %286
    %288 = vrot.lane.b32.xlu0 %v243, 127
    %v289 = vpop.permute.xlu0 %288
    %290 = vrot.lane.b32.xlu0 %v244, 127
    %v291 = vpop.permute.xlu0 %290
    %292 = vrot.lane.b32.xlu0 %v245, 127
    %v293 = vpop.permute.xlu0 %292
    %294 = vrot.lane.b32.xlu0 %v246, 127
    %v295 = vpop.permute.xlu0 %294
    %296 = vrot.lane.b32.xlu0 %v247, 127
    %v297 = vpop.permute.xlu0 %296
    %298 = vrot.lane.b32.xlu0 %v248, 127
    %v299 = vpop.permute.xlu0 %298
    %300 = vrot.lane.b32.xlu0 %v249, 127
    %v301 = vpop.permute.xlu0 %300
    %302 = vrot.lane.b32.xlu0 %v250, 127
    %v303 = vpop.permute.xlu0 %302
    %304 = vrot.lane.b32.xlu0 %v251, 127
    %v305 = vpop.permute.xlu0 %304
    %306 = vrot.lane.b32.xlu0 %v252, 127
    %v307 = vpop.permute.xlu0 %306
    %308 = vrot.lane.b32.xlu0 %v253, 127
    %v309 = vpop.permute.xlu0 %308
    %310 = vrot.lane.b32.xlu0 %v254, 127
    %v311 = vpop.permute.xlu0 %310
    %312 = vrot.lane.b32.xlu0 %v255, 127
    %v313 = vpop.permute.xlu0 %312
    %314 = vrot.lane.b32.xlu0 %v256, 127
    %v315 = vpop.permute.xlu0 %314
    %316 = vrot.lane.b32.xlu0 %v257, 127
    %v317 = vpop.permute.xlu0 %316
    %vm318 = vcmask 1039360
    %v319 = vsel %vm318, %v279, %v281
    %v320 = vsel %vm318, %v281, %v283
    %v321 = vsel %vm318, %v283, %v285
    %v322 = vsel %vm318, %v285, %v287
    %v323 = vsel %vm318, %v289, %v291
    %v324 = vsel %vm318, %v291, %v293
    %v325 = vsel %vm318, %v293, %v295
    %v326 = vsel %vm318, %v295, %v297
    %v327 = vsel %vm318, %v299, %v301
    %v328 = vsel %vm318, %v301, %v303
    %v329 = vsel %vm318, %v303, %v305
    %v330 = vsel %vm318, %v305, %v307
    %v331 = vsel %vm318, %v309, %v311
    %v332 = vsel %vm318, %v311, %v313
    %v333 = vsel %vm318, %v313, %v315
    %v334 = vsel %vm318, %v315, %v317
    %v355 = vadd.f32 %v210, %v319
    %v356 = vadd.f32 %v211, %v320
    %v357 = vadd.f32 %v212, %v321
    %v358 = vadd.f32 %v213, %v322
    %v359 = vadd.f32 %v214, %v287
    %v360 = vadd.f32 %v215, %v323
    %v361 = vadd.f32 %v216, %v324
    %v362 = vadd.f32 %v217, %v325
    %v363 = vadd.f32 %v218, %v326
    %v364 = vadd.f32 %v219, %v297
    %v365 = vadd.f32 %v220, %v327
    %v366 = vadd.f32 %v221, %v328
    %v367 = vadd.f32 %v222, %v329
    %v368 = vadd.f32 %v223, %v330
    %v369 = vadd.f32 %v224, %v307
    %v370 = vadd.f32 %v225, %v331
    %v371 = vadd.f32 %v226, %v332
    %v372 = vadd.f32 %v227, %v333
    %v373 = vadd.f32 %v228, %v334
    %v374 = vadd.f32 %v229, %v317
    %375 = vset.pattern.permute.xlu0 2
    %376 = vperm.xlu0 %375, %v114
    %v377 = vpop.permute.xlu0 %376
    %379 = vset.pattern.permute.xlu0 2
    %380 = vperm.xlu0 %379, %v115
    %v381 = vpop.permute.xlu0 %380
    %v383 = vmul.f32 %v133, %v377
    %v384 = vmul.f32 %v137, %v377
    %v385 = vmul.f32 %v141, %v377
    %v386 = vmul.f32 %v145, %v377
    %v387 = vmul.f32 %v149, %v377
    %v388 = vmul.f32 %v133, %v381
    %v389 = vmul.f32 %v137, %v381
    %v390 = vmul.f32 %v141, %v381
    %v391 = vmul.f32 %v145, %v381
    %v392 = vmul.f32 %v149, %v381
    %v393 = vmul.f32 %v153, %v377
    %v394 = vmul.f32 %v157, %v377
    %v395 = vmul.f32 %v161, %v377
    %v396 = vmul.f32 %v165, %v377
    %v397 = vmul.f32 %v169, %v377
    %v398 = vmul.f32 %v153, %v381
    %v399 = vmul.f32 %v157, %v381
    %v400 = vmul.f32 %v161, %v381
    %v401 = vmul.f32 %v165, %v381
    %v402 = vmul.f32 %v169, %v381
    %423 = vrot.lane.b32.xlu0 %v383, 126
    %v424 = vpop.permute.xlu0 %423
    %425 = vrot.lane.b32.xlu0 %v384, 126
    %v426 = vpop.permute.xlu0 %425
    %427 = vrot.lane.b32.xlu0 %v385, 126
    %v428 = vpop.permute.xlu0 %427
    %429 = vrot.lane.b32.xlu0 %v386, 126
    %v430 = vpop.permute.xlu0 %429
    %431 = vrot.lane.b32.xlu0 %v387, 126
    %v432 = vpop.permute.xlu0 %431
    %433 = vrot.lane.b32.xlu0 %v388, 126
    %v434 = vpop.permute.xlu0 %433
    %435 = vrot.lane.b32.xlu0 %v389, 126
    %v436 = vpop.permute.xlu0 %435
    %437 = vrot.lane.b32.xlu0 %v390, 126
    %v438 = vpop.permute.xlu0 %437
    %439 = vrot.lane.b32.xlu0 %v391, 126
    %v440 = vpop.permute.xlu0 %439
    %441 = vrot.lane.b32.xlu0 %v392, 126
    %v442 = vpop.permute.xlu0 %441
    %443 = vrot.lane.b32.xlu0 %v393, 126
    %v444 = vpop.permute.xlu0 %443
    %445 = vrot.lane.b32.xlu0 %v394, 126
    %v446 = vpop.permute.xlu0 %445
    %447 = vrot.lane.b32.xlu0 %v395, 126
    %v448 = vpop.permute.xlu0 %447
    %449 = vrot.lane.b32.xlu0 %v396, 126
    %v450 = vpop.permute.xlu0 %449
    %451 = vrot.lane.b32.xlu0 %v397, 126
    %v452 = vpop.permute.xlu0 %451
    %453 = vrot.lane.b32.xlu0 %v398, 126
    %v454 = vpop.permute.xlu0 %453
    %455 = vrot.lane.b32.xlu0 %v399, 126
    %v456 = vpop.permute.xlu0 %455
    %457 = vrot.lane.b32.xlu0 %v400, 126
    %v458 = vpop.permute.xlu0 %457
    %459 = vrot.lane.b32.xlu0 %v401, 126
    %v460 = vpop.permute.xlu0 %459
    %461 = vrot.lane.b32.xlu0 %v402, 126
    %v462 = vpop.permute.xlu0 %461
    %vm463 = vcmask 1031168
    %v464 = vsel %vm463, %v424, %v426
    %v465 = vsel %vm463, %v426, %v428
    %v466 = vsel %vm463, %v428, %v430
    %v467 = vsel %vm463, %v430, %v432
    %v468 = vsel %vm463, %v434, %v436
    %v469 = vsel %vm463, %v436, %v438
    %v470 = vsel %vm463, %v438, %v440
    %v471 = vsel %vm463, %v440, %v442
    %v472 = vsel %vm463, %v444, %v446
    %v473 = vsel %vm463, %v446, %v448
    %v474 = vsel %vm463, %v448, %v450
    %v475 = vsel %vm463, %v450, %v452
    %v476 = vsel %vm463, %v454, %v456
    %v477 = vsel %vm463, %v456, %v458
    %v478 = vsel %vm463, %v458, %v460
    %v479 = vsel %vm463, %v460, %v462
    %v500 = vadd.f32 %v355, %v464
    %v501 = vadd.f32 %v356, %v465
    %v502 = vadd.f32 %v357, %v466
    %v503 = vadd.f32 %v358, %v467
    %v504 = vadd.f32 %v359, %v432
    %v505 = vadd.f32 %v360, %v468
    %v506 = vadd.f32 %v361, %v469
    %v507 = vadd.f32 %v362, %v470
    %v508 = vadd.f32 %v363, %v471
    %v509 = vadd.f32 %v364, %v442
    %v510 = vadd.f32 %v365, %v472
    %v511 = vadd.f32 %v366, %v473
    %v512 = vadd.f32 %v367, %v474
    %v513 = vadd.f32 %v368, %v475
    %v514 = vadd.f32 %v369, %v452
    %v515 = vadd.f32 %v370, %v476
    %v516 = vadd.f32 %v371, %v477
    %v517 = vadd.f32 %v372, %v478
    %v518 = vadd.f32 %v373, %v479
    %v519 = vadd.f32 %v374, %v462
    %520 = vset.pattern.permute.xlu0 3
    %521 = vperm.xlu0 %520, %v114
    %v522 = vpop.permute.xlu0 %521
    %524 = vset.pattern.permute.xlu0 3
    %525 = vperm.xlu0 %524, %v115
    %v526 = vpop.permute.xlu0 %525
    %v528 = vmul.f32 %v133, %v522
    %v529 = vmul.f32 %v137, %v522
    %v530 = vmul.f32 %v141, %v522
    %v531 = vmul.f32 %v145, %v522
    %v532 = vmul.f32 %v149, %v522
    %v533 = vmul.f32 %v133, %v526
    %v534 = vmul.f32 %v137, %v526
    %v535 = vmul.f32 %v141, %v526
    %v536 = vmul.f32 %v145, %v526
    %v537 = vmul.f32 %v149, %v526
    %v538 = vmul.f32 %v153, %v522
    %v539 = vmul.f32 %v157, %v522
    %v540 = vmul.f32 %v161, %v522
    %v541 = vmul.f32 %v165, %v522
    %v542 = vmul.f32 %v169, %v522
    %v543 = vmul.f32 %v153, %v526
    %v544 = vmul.f32 %v157, %v526
    %v545 = vmul.f32 %v161, %v526
    %v546 = vmul.f32 %v165, %v526
    %v547 = vmul.f32 %v169, %v526
    %568 = vrot.lane.b32.xlu0 %v528, 125
    %v569 = vpop.permute.xlu0 %568
    %570 = vrot.lane.b32.xlu0 %v529, 125
    %v571 = vpop.permute.xlu0 %570
    %572 = vrot.lane.b32.xlu0 %v530, 125
    %v573 = vpop.permute.xlu0 %572
    %574 = vrot.lane.b32.xlu0 %v531, 125
    %v575 = vpop.permute.xlu0 %574
    %576 = vrot.lane.b32.xlu0 %v532, 125
    %v577 = vpop.permute.xlu0 %576
    %578 = vrot.lane.b32.xlu0 %v533, 125
    %v579 = vpop.permute.xlu0 %578
    %580 = vrot.lane.b32.xlu0 %v534, 125
    %v581 = vpop.permute.xlu0 %580
    %582 = vrot.lane.b32.xlu0 %v535, 125
    %v583 = vpop.permute.xlu0 %582
    %584 = vrot.lane.b32.xlu0 %v536, 125
    %v585 = vpop.permute.xlu0 %584
    %586 = vrot.lane.b32.xlu0 %v537, 125
    %v587 = vpop.permute.xlu0 %586
    %588 = vrot.lane.b32.xlu0 %v538, 125
    %v589 = vpop.permute.xlu0 %588
    %590 = vrot.lane.b32.xlu0 %v539, 125
    %v591 = vpop.permute.xlu0 %590
    %592 = vrot.lane.b32.xlu0 %v540, 125
    %v593 = vpop.permute.xlu0 %592
    %594 = vrot.lane.b32.xlu0 %v541, 125
    %v595 = vpop.permute.xlu0 %594
    %596 = vrot.lane.b32.xlu0 %v542, 125
    %v597 = vpop.permute.xlu0 %596
    %598 = vrot.lane.b32.xlu0 %v543, 125
    %v599 = vpop.permute.xlu0 %598
    %600 = vrot.lane.b32.xlu0 %v544, 125
    %v601 = vpop.permute.xlu0 %600
    %602 = vrot.lane.b32.xlu0 %v545, 125
    %v603 = vpop.permute.xlu0 %602
    %604 = vrot.lane.b32.xlu0 %v546, 125
    %v605 = vpop.permute.xlu0 %604
    %606 = vrot.lane.b32.xlu0 %v547, 125
    %v607 = vpop.permute.xlu0 %606
    %vm608 = vcmask 1022976
    %v609 = vsel %vm608, %v569, %v571
    %v610 = vsel %vm608, %v571, %v573
    %v611 = vsel %vm608, %v573, %v575
    %v612 = vsel %vm608, %v575, %v577
    %v613 = vsel %vm608, %v579, %v581
    %v614 = vsel %vm608, %v581, %v583
    %v615 = vsel %vm608, %v583, %v585
    %v616 = vsel %vm608, %v585, %v587
    %v617 = vsel %vm608, %v589, %v591
    %v618 = vsel %vm608, %v591, %v593
    %v619 = vsel %vm608, %v593, %v595
    %v620 = vsel %vm608, %v595, %v597
    %v621 = vsel %vm608, %v599, %v601
    %v622 = vsel %vm608, %v601, %v603
    %v623 = vsel %vm608, %v603, %v605
    %v624 = vsel %vm608, %v605, %v607
    %v645 = vadd.f32 %v500, %v609
    %v646 = vadd.f32 %v501, %v610
    %v647 = vadd.f32 %v502, %v611
    %v648 = vadd.f32 %v503, %v612
    %v649 = vadd.f32 %v504, %v577
    %v650 = vadd.f32 %v505, %v613
    %v651 = vadd.f32 %v506, %v614
    %v652 = vadd.f32 %v507, %v615
    %v653 = vadd.f32 %v508, %v616
    %v654 = vadd.f32 %v509, %v587
    %v655 = vadd.f32 %v510, %v617
    %v656 = vadd.f32 %v511, %v618
    %v657 = vadd.f32 %v512, %v619
    %v658 = vadd.f32 %v513, %v620
    %v659 = vadd.f32 %v514, %v597
    %v660 = vadd.f32 %v515, %v621
    %v661 = vadd.f32 %v516, %v622
    %v662 = vadd.f32 %v517, %v623
    %v663 = vadd.f32 %v518, %v624
    %v664 = vadd.f32 %v519, %v607
    %665 = vset.pattern.permute.xlu0 4
    %666 = vperm.xlu0 %665, %v114
    %v667 = vpop.permute.xlu0 %666
    %669 = vset.pattern.permute.xlu0 4
    %670 = vperm.xlu0 %669, %v115
    %v671 = vpop.permute.xlu0 %670
    %v673 = vmul.f32 %v133, %v667
    %v674 = vmul.f32 %v137, %v667
    %v675 = vmul.f32 %v141, %v667
    %v676 = vmul.f32 %v145, %v667
    %v677 = vmul.f32 %v149, %v667
    %v678 = vmul.f32 %v133, %v671
    %v679 = vmul.f32 %v137, %v671
    %v680 = vmul.f32 %v141, %v671
    %v681 = vmul.f32 %v145, %v671
    %v682 = vmul.f32 %v149, %v671
    %v683 = vmul.f32 %v153, %v667
    %v684 = vmul.f32 %v157, %v667
    %v685 = vmul.f32 %v161, %v667
    %v686 = vmul.f32 %v165, %v667
    %v687 = vmul.f32 %v169, %v667
    %v688 = vmul.f32 %v153, %v671
    %v689 = vmul.f32 %v157, %v671
    %v690 = vmul.f32 %v161, %v671
    %v691 = vmul.f32 %v165, %v671
    %v692 = vmul.f32 %v169, %v671
    %713 = vrot.lane.b32.xlu0 %v673, 124
    %v714 = vpop.permute.xlu0 %713
    %715 = vrot.lane.b32.xlu0 %v674, 124
    %v716 = vpop.permute.xlu0 %715
    %717 = vrot.lane.b32.xlu0 %v675, 124
    %v718 = vpop.permute.xlu0 %717
    %719 = vrot.lane.b32.xlu0 %v676, 124
    %v720 = vpop.permute.xlu0 %719
    %721 = vrot.lane.b32.xlu0 %v677, 124
    %v722 = vpop.permute.xlu0 %721
    %723 = vrot.lane.b32.xlu0 %v678, 124
    %v724 = vpop.permute.xlu0 %723
    %725 = vrot.lane.b32.xlu0 %v679, 124
    %v726 = vpop.permute.xlu0 %725
    %727 = vrot.lane.b32.xlu0 %v680, 124
    %v728 = vpop.permute.xlu0 %727
    %729 = vrot.lane.b32.xlu0 %v681, 124
    %v730 = vpop.permute.xlu0 %729
    %731 = vrot.lane.b32.xlu0 %v682, 124
    %v732 = vpop.permute.xlu0 %731
    %733 = vrot.lane.b32.xlu0 %v683, 124
    %v734 = vpop.permute.xlu0 %733
    %735 = vrot.lane.b32.xlu0 %v684, 124
    %v736 = vpop.permute.xlu0 %735
    %737 = vrot.lane.b32.xlu0 %v685, 124
    %v738 = vpop.permute.xlu0 %737
    %739 = vrot.lane.b32.xlu0 %v686, 124
    %v740 = vpop.permute.xlu0 %739
    %741 = vrot.lane.b32.xlu0 %v687, 124
    %v742 = vpop.permute.xlu0 %741
    %743 = vrot.lane.b32.xlu0 %v688, 124
    %v744 = vpop.permute.xlu0 %743
    %745 = vrot.lane.b32.xlu0 %v689, 124
    %v746 = vpop.permute.xlu0 %745
    %747 = vrot.lane.b32.xlu0 %v690, 124
    %v748 = vpop.permute.xlu0 %747
    %749 = vrot.lane.b32.xlu0 %v691, 124
    %v750 = vpop.permute.xlu0 %749
    %751 = vrot.lane.b32.xlu0 %v692, 124
    %v752 = vpop.permute.xlu0 %751
    %vm753 = vcmask 1014784
    %v754 = vsel %vm753, %v714, %v716
    %v755 = vsel %vm753, %v716, %v718
    %v756 = vsel %vm753, %v718, %v720
    %v757 = vsel %vm753, %v720, %v722
    %v758 = vsel %vm753, %v724, %v726
    %v759 = vsel %vm753, %v726, %v728
    %v760 = vsel %vm753, %v728, %v730
    %v761 = vsel %vm753, %v730, %v732
    %v762 = vsel %vm753, %v734, %v736
    %v763 = vsel %vm753, %v736, %v738
    %v764 = vsel %vm753, %v738, %v740
    %v765 = vsel %vm753, %v740, %v742
    %v766 = vsel %vm753, %v744, %v746
    %v767 = vsel %vm753, %v746, %v748
    %v768 = vsel %vm753, %v748, %v750
    %v769 = vsel %vm753, %v750, %v752
    %v790 = vadd.f32 %v645, %v754
    %v791 = vadd.f32 %v646, %v755
    %v792 = vadd.f32 %v647, %v756
    %v793 = vadd.f32 %v648, %v757
    %v794 = vadd.f32 %v649, %v722
    %v795 = vadd.f32 %v650, %v758
    %v796 = vadd.f32 %v651, %v759
    %v797 = vadd.f32 %v652, %v760
    %v798 = vadd.f32 %v653, %v761
    %v799 = vadd.f32 %v654, %v732
    %v800 = vadd.f32 %v655, %v762
    %v801 = vadd.f32 %v656, %v763
    %v802 = vadd.f32 %v657, %v764
    %v803 = vadd.f32 %v658, %v765
    %v804 = vadd.f32 %v659, %v742
    %v805 = vadd.f32 %v660, %v766
    %v806 = vadd.f32 %v661, %v767
    %v807 = vadd.f32 %v662, %v768
    %v808 = vadd.f32 %v663, %v769
    %v809 = vadd.f32 %v664, %v752
    %810 = vset.pattern.permute.xlu0 5
    %811 = vperm.xlu0 %810, %v114
    %v812 = vpop.permute.xlu0 %811
    %814 = vset.pattern.permute.xlu0 5
    %815 = vperm.xlu0 %814, %v115
    %v816 = vpop.permute.xlu0 %815
    %v818 = vmul.f32 %v133, %v812
    %v819 = vmul.f32 %v137, %v812
    %v820 = vmul.f32 %v141, %v812
    %v821 = vmul.f32 %v145, %v812
    %v822 = vmul.f32 %v149, %v812
    %v823 = vmul.f32 %v133, %v816
    %v824 = vmul.f32 %v137, %v816
    %v825 = vmul.f32 %v141, %v816
    %v826 = vmul.f32 %v145, %v816
    %v827 = vmul.f32 %v149, %v816
    %v828 = vmul.f32 %v153, %v812
    %v829 = vmul.f32 %v157, %v812
    %v830 = vmul.f32 %v161, %v812
    %v831 = vmul.f32 %v165, %v812
    %v832 = vmul.f32 %v169, %v812
    %v833 = vmul.f32 %v153, %v816
    %v834 = vmul.f32 %v157, %v816
    %v835 = vmul.f32 %v161, %v816
    %v836 = vmul.f32 %v165, %v816
    %v837 = vmul.f32 %v169, %v816
    %858 = vrot.lane.b32.xlu0 %v818, 123
    %v859 = vpop.permute.xlu0 %858
    %860 = vrot.lane.b32.xlu0 %v819, 123
    %v861 = vpop.permute.xlu0 %860
    %862 = vrot.lane.b32.xlu0 %v820, 123
    %v863 = vpop.permute.xlu0 %862
    %864 = vrot.lane.b32.xlu0 %v821, 123
    %v865 = vpop.permute.xlu0 %864
    %866 = vrot.lane.b32.xlu0 %v822, 123
    %v867 = vpop.permute.xlu0 %866
    %868 = vrot.lane.b32.xlu0 %v823, 123
    %v869 = vpop.permute.xlu0 %868
    %870 = vrot.lane.b32.xlu0 %v824, 123
    %v871 = vpop.permute.xlu0 %870
    %872 = vrot.lane.b32.xlu0 %v825, 123
    %v873 = vpop.permute.xlu0 %872
    %874 = vrot.lane.b32.xlu0 %v826, 123
    %v875 = vpop.permute.xlu0 %874
    %876 = vrot.lane.b32.xlu0 %v827, 123
    %v877 = vpop.permute.xlu0 %876
    %878 = vrot.lane.b32.xlu0 %v828, 123
    %v879 = vpop.permute.xlu0 %878
    %880 = vrot.lane.b32.xlu0 %v829, 123
    %v881 = vpop.permute.xlu0 %880
    %882 = vrot.lane.b32.xlu0 %v830, 123
    %v883 = vpop.permute.xlu0 %882
    %884 = vrot.lane.b32.xlu0 %v831, 123
    %v885 = vpop.permute.xlu0 %884
    %886 = vrot.lane.b32.xlu0 %v832, 123
    %v887 = vpop.permute.xlu0 %886
    %888 = vrot.lane.b32.xlu0 %v833, 123
    %v889 = vpop.permute.xlu0 %888
    %890 = vrot.lane.b32.xlu0 %v834, 123
    %v891 = vpop.permute.xlu0 %890
    %892 = vrot.lane.b32.xlu0 %v835, 123
    %v893 = vpop.permute.xlu0 %892
    %894 = vrot.lane.b32.xlu0 %v836, 123
    %v895 = vpop.permute.xlu0 %894
    %896 = vrot.lane.b32.xlu0 %v837, 123
    %v897 = vpop.permute.xlu0 %896
    %vm898 = vcmask 1006592
    %v899 = vsel %vm898, %v859, %v861
    %v900 = vsel %vm898, %v861, %v863
    %v901 = vsel %vm898, %v863, %v865
    %v902 = vsel %vm898, %v865, %v867
    %v903 = vsel %vm898, %v869, %v871
    %v904 = vsel %vm898, %v871, %v873
    %v905 = vsel %vm898, %v873, %v875
    %v906 = vsel %vm898, %v875, %v877
    %v907 = vsel %vm898, %v879, %v881
    %v908 = vsel %vm898, %v881, %v883
    %v909 = vsel %vm898, %v883, %v885
    %v910 = vsel %vm898, %v885, %v887
    %v911 = vsel %vm898, %v889, %v891
    %v912 = vsel %vm898, %v891, %v893
    %v913 = vsel %vm898, %v893, %v895
    %v914 = vsel %vm898, %v895, %v897
    %v935 = vadd.f32 %v790, %v899
    %v936 = vadd.f32 %v791, %v900
    %v937 = vadd.f32 %v792, %v901
    %v938 = vadd.f32 %v793, %v902
    %v939 = vadd.f32 %v794, %v867
    %v940 = vadd.f32 %v795, %v903
    %v941 = vadd.f32 %v796, %v904
    %v942 = vadd.f32 %v797, %v905
    %v943 = vadd.f32 %v798, %v906
    %v944 = vadd.f32 %v799, %v877
    %v945 = vadd.f32 %v800, %v907
    %v946 = vadd.f32 %v801, %v908
    %v947 = vadd.f32 %v802, %v909
    %v948 = vadd.f32 %v803, %v910
    %v949 = vadd.f32 %v804, %v887
    %v950 = vadd.f32 %v805, %v911
    %v951 = vadd.f32 %v806, %v912
    %v952 = vadd.f32 %v807, %v913
    %v953 = vadd.f32 %v808, %v914
    %v954 = vadd.f32 %v809, %v897
    %955 = vset.pattern.permute.xlu0 6
    %956 = vperm.xlu0 %955, %v114
    %v957 = vpop.permute.xlu0 %956
    %959 = vset.pattern.permute.xlu0 6
    %960 = vperm.xlu0 %959, %v115
    %v961 = vpop.permute.xlu0 %960
    %v963 = vmul.f32 %v133, %v957
    %v964 = vmul.f32 %v137, %v957
    %v965 = vmul.f32 %v141, %v957
    %v966 = vmul.f32 %v145, %v957
    %v967 = vmul.f32 %v149, %v957
    %v968 = vmul.f32 %v133, %v961
    %v969 = vmul.f32 %v137, %v961
    %v970 = vmul.f32 %v141, %v961
    %v971 = vmul.f32 %v145, %v961
    %v972 = vmul.f32 %v149, %v961
    %v973 = vmul.f32 %v153, %v957
    %v974 = vmul.f32 %v157, %v957
    %v975 = vmul.f32 %v161, %v957
    %v976 = vmul.f32 %v165, %v957
    %v977 = vmul.f32 %v169, %v957
    %v978 = vmul.f32 %v153, %v961
    %v979 = vmul.f32 %v157, %v961
    %v980 = vmul.f32 %v161, %v961
    %v981 = vmul.f32 %v165, %v961
    %v982 = vmul.f32 %v169, %v961
    %1003 = vrot.lane.b32.xlu0 %v963, 122
    %v1004 = vpop.permute.xlu0 %1003
    %1005 = vrot.lane.b32.xlu0 %v964, 122
    %v1006 = vpop.permute.xlu0 %1005
    %1007 = vrot.lane.b32.xlu0 %v965, 122
    %v1008 = vpop.permute.xlu0 %1007
    %1009 = vrot.lane.b32.xlu0 %v966, 122
    %v1010 = vpop.permute.xlu0 %1009
    %1011 = vrot.lane.b32.xlu0 %v967, 122
    %v1012 = vpop.permute.xlu0 %1011
    %1013 = vrot.lane.b32.xlu0 %v968, 122
    %v1014 = vpop.permute.xlu0 %1013
    %1015 = vrot.lane.b32.xlu0 %v969, 122
    %v1016 = vpop.permute.xlu0 %1015
    %1017 = vrot.lane.b32.xlu0 %v970, 122
    %v1018 = vpop.permute.xlu0 %1017
    %1019 = vrot.lane.b32.xlu0 %v971, 122
    %v1020 = vpop.permute.xlu0 %1019
    %1021 = vrot.lane.b32.xlu0 %v972, 122
    %v1022 = vpop.permute.xlu0 %1021
    %1023 = vrot.lane.b32.xlu0 %v973, 122
    %v1024 = vpop.permute.xlu0 %1023
    %1025 = vrot.lane.b32.xlu0 %v974, 122
    %v1026 = vpop.permute.xlu0 %1025
    %1027 = vrot.lane.b32.xlu0 %v975, 122
    %v1028 = vpop.permute.xlu0 %1027
    %1029 = vrot.lane.b32.xlu0 %v976, 122
    %v1030 = vpop.permute.xlu0 %1029
    %1031 = vrot.lane.b32.xlu0 %v977, 122
    %v1032 = vpop.permute.xlu0 %1031
    %1033 = vrot.lane.b32.xlu0 %v978, 122
    %v1034 = vpop.permute.xlu0 %1033
    %1035 = vrot.lane.b32.xlu0 %v979, 122
    %v1036 = vpop.permute.xlu0 %1035
    %1037 = vrot.lane.b32.xlu0 %v980, 122
    %v1038 = vpop.permute.xlu0 %1037
    %1039 = vrot.lane.b32.xlu0 %v981, 122
    %v1040 = vpop.permute.xlu0 %1039
    %1041 = vrot.lane.b32.xlu0 %v982, 122
    %v1042 = vpop.permute.xlu0 %1041
    %vm1043 = vcmask 998400
    %v1044 = vsel %vm1043, %v1004, %v1006
    %v1045 = vsel %vm1043, %v1006, %v1008
    %v1046 = vsel %vm1043, %v1008, %v1010
    %v1047 = vsel %vm1043, %v1010, %v1012
    %v1048 = vsel %vm1043, %v1014, %v1016
    %v1049 = vsel %vm1043, %v1016, %v1018
    %v1050 = vsel %vm1043, %v1018, %v1020
    %v1051 = vsel %vm1043, %v1020, %v1022
    %v1052 = vsel %vm1043, %v1024, %v1026
    %v1053 = vsel %vm1043, %v1026, %v1028
    %v1054 = vsel %vm1043, %v1028, %v1030
    %v1055 = vsel %vm1043, %v1030, %v1032
    %v1056 = vsel %vm1043, %v1034, %v1036
    %v1057 = vsel %vm1043, %v1036, %v1038
    %v1058 = vsel %vm1043, %v1038, %v1040
    %v1059 = vsel %vm1043, %v1040, %v1042
    %v1080 = vadd.f32 %v935, %v1044
    %v1081 = vadd.f32 %v936, %v1045
    %v1082 = vadd.f32 %v937, %v1046
    %v1083 = vadd.f32 %v938, %v1047
    %v1084 = vadd.f32 %v939, %v1012
    %v1085 = vadd.f32 %v940, %v1048
    %v1086 = vadd.f32 %v941, %v1049
    %v1087 = vadd.f32 %v942, %v1050
    %v1088 = vadd.f32 %v943, %v1051
    %v1089 = vadd.f32 %v944, %v1022
    %v1090 = vadd.f32 %v945, %v1052
    %v1091 = vadd.f32 %v946, %v1053
    %v1092 = vadd.f32 %v947, %v1054
    %v1093 = vadd.f32 %v948, %v1055
    %v1094 = vadd.f32 %v949, %v1032
    %v1095 = vadd.f32 %v950, %v1056
    %v1096 = vadd.f32 %v951, %v1057
    %v1097 = vadd.f32 %v952, %v1058
    %v1098 = vadd.f32 %v953, %v1059
    %v1099 = vadd.f32 %v954, %v1042
    %1100 = vset.pattern.permute.xlu0 7
    %1101 = vperm.xlu0 %1100, %v114
    %v1102 = vpop.permute.xlu0 %1101
    %1104 = vset.pattern.permute.xlu0 7
    %1105 = vperm.xlu0 %1104, %v115
    %v1106 = vpop.permute.xlu0 %1105
    %v1108 = vmul.f32 %v133, %v1102
    %v1109 = vmul.f32 %v137, %v1102
    %v1110 = vmul.f32 %v141, %v1102
    %v1111 = vmul.f32 %v145, %v1102
    %v1112 = vmul.f32 %v149, %v1102
    %v1113 = vmul.f32 %v133, %v1106
    %v1114 = vmul.f32 %v137, %v1106
    %v1115 = vmul.f32 %v141, %v1106
    %v1116 = vmul.f32 %v145, %v1106
    %v1117 = vmul.f32 %v149, %v1106
    %v1118 = vmul.f32 %v153, %v1102
    %v1119 = vmul.f32 %v157, %v1102
    %v1120 = vmul.f32 %v161, %v1102
    %v1121 = vmul.f32 %v165, %v1102
    %v1122 = vmul.f32 %v169, %v1102
    %v1123 = vmul.f32 %v153, %v1106
    %v1124 = vmul.f32 %v157, %v1106
    %v1125 = vmul.f32 %v161, %v1106
    %v1126 = vmul.f32 %v165, %v1106
    %v1127 = vmul.f32 %v169, %v1106
    %1148 = vrot.lane.b32.xlu0 %v1108, 121
    %v1149 = vpop.permute.xlu0 %1148
    %1150 = vrot.lane.b32.xlu0 %v1109, 121
    %v1151 = vpop.permute.xlu0 %1150
    %1152 = vrot.lane.b32.xlu0 %v1110, 121
    %v1153 = vpop.permute.xlu0 %1152
    %1154 = vrot.lane.b32.xlu0 %v1111, 121
    %v1155 = vpop.permute.xlu0 %1154
    %1156 = vrot.lane.b32.xlu0 %v1112, 121
    %v1157 = vpop.permute.xlu0 %1156
    %1158 = vrot.lane.b32.xlu0 %v1113, 121
    %v1159 = vpop.permute.xlu0 %1158
    %1160 = vrot.lane.b32.xlu0 %v1114, 121
    %v1161 = vpop.permute.xlu0 %1160
    %1162 = vrot.lane.b32.xlu0 %v1115, 121
    %v1163 = vpop.permute.xlu0 %1162
    %1164 = vrot.lane.b32.xlu0 %v1116, 121
    %v1165 = vpop.permute.xlu0 %1164
    %1166 = vrot.lane.b32.xlu0 %v1117, 121
    %v1167 = vpop.permute.xlu0 %1166
    %1168 = vrot.lane.b32.xlu0 %v1118, 121
    %v1169 = vpop.permute.xlu0 %1168
    %1170 = vrot.lane.b32.xlu0 %v1119, 121
    %v1171 = vpop.permute.xlu0 %1170
    %1172 = vrot.lane.b32.xlu0 %v1120, 121
    %v1173 = vpop.permute.xlu0 %1172
    %1174 = vrot.lane.b32.xlu0 %v1121, 121
    %v1175 = vpop.permute.xlu0 %1174
    %1176 = vrot.lane.b32.xlu0 %v1122, 121
    %v1177 = vpop.permute.xlu0 %1176
    %1178 = vrot.lane.b32.xlu0 %v1123, 121
    %v1179 = vpop.permute.xlu0 %1178
    %1180 = vrot.lane.b32.xlu0 %v1124, 121
    %v1181 = vpop.permute.xlu0 %1180
    %1182 = vrot.lane.b32.xlu0 %v1125, 121
    %v1183 = vpop.permute.xlu0 %1182
    %1184 = vrot.lane.b32.xlu0 %v1126, 121
    %v1185 = vpop.permute.xlu0 %1184
    %1186 = vrot.lane.b32.xlu0 %v1127, 121
    %v1187 = vpop.permute.xlu0 %1186
    %vm1188 = vcmask 990208
    %v1189 = vsel %vm1188, %v1149, %v1151
    %v1190 = vsel %vm1188, %v1151, %v1153
    %v1191 = vsel %vm1188, %v1153, %v1155
    %v1192 = vsel %vm1188, %v1155, %v1157
    %v1193 = vsel %vm1188, %v1159, %v1161
    %v1194 = vsel %vm1188, %v1161, %v1163
    %v1195 = vsel %vm1188, %v1163, %v1165
    %v1196 = vsel %vm1188, %v1165, %v1167
    %v1197 = vsel %vm1188, %v1169, %v1171
    %v1198 = vsel %vm1188, %v1171, %v1173
    %v1199 = vsel %vm1188, %v1173, %v1175
    %v1200 = vsel %vm1188, %v1175, %v1177
    %v1201 = vsel %vm1188, %v1179, %v1181
    %v1202 = vsel %vm1188, %v1181, %v1183
    %v1203 = vsel %vm1188, %v1183, %v1185
    %v1204 = vsel %vm1188, %v1185, %v1187
    %v1225 = vadd.f32 %v1080, %v1189
    %v1226 = vadd.f32 %v1081, %v1190
    %v1227 = vadd.f32 %v1082, %v1191
    %v1228 = vadd.f32 %v1083, %v1192
    %v1229 = vadd.f32 %v1084, %v1157
    %v1230 = vadd.f32 %v1085, %v1193
    %v1231 = vadd.f32 %v1086, %v1194
    %v1232 = vadd.f32 %v1087, %v1195
    %v1233 = vadd.f32 %v1088, %v1196
    %v1234 = vadd.f32 %v1089, %v1167
    %v1235 = vadd.f32 %v1090, %v1197
    %v1236 = vadd.f32 %v1091, %v1198
    %v1237 = vadd.f32 %v1092, %v1199
    %v1238 = vadd.f32 %v1093, %v1200
    %v1239 = vadd.f32 %v1094, %v1177
    %v1240 = vadd.f32 %v1095, %v1201
    %v1241 = vadd.f32 %v1096, %v1202
    %v1242 = vadd.f32 %v1097, %v1203
    %v1243 = vadd.f32 %v1098, %v1204
    %v1244 = vadd.f32 %v1099, %v1187
    %v1245 = vmax.f32 %v1225, 0.0
    %v1246 = vmax.f32 %v1226, 0.0
    %v1247 = vmax.f32 %v1227, 0.0
    %v1248 = vmax.f32 %v1228, 0.0
    %v1249 = vmax.f32 %v1229, 0.0
    %v1250 = vmax.f32 %v1230, 0.0
    %v1251 = vmax.f32 %v1231, 0.0
    %v1252 = vmax.f32 %v1232, 0.0
    %v1253 = vmax.f32 %v1233, 0.0
    %v1254 = vmax.f32 %v1234, 0.0
    %v1255 = vmax.f32 %v1235, 0.0
    %v1256 = vmax.f32 %v1236, 0.0
    %v1257 = vmax.f32 %v1237, 0.0
    %v1258 = vmax.f32 %v1238, 0.0
    %v1259 = vmax.f32 %v1239, 0.0
    %v1260 = vmax.f32 %v1240, 0.0
    %v1261 = vmax.f32 %v1241, 0.0
    %v1262 = vmax.f32 %v1242, 0.0
    %v1263 = vmax.f32 %v1243, 0.0
    %v1264 = vmax.f32 %v1244, 0.0
    %v1265 = vpack.c.bf16 %v1250, %v1245
    %v1266 = vpack.c.bf16 %v1251, %v1246
    %v1267 = vpack.c.bf16 %v1252, %v1247
    %v1268 = vpack.c.bf16 %v1253, %v1248
    %v1269 = vpack.c.bf16 %v1254, %v1249
    %v1270 = vpack.c.bf16 %v1260, %v1255
    %v1271 = vpack.c.bf16 %v1261, %v1256
    %v1272 = vpack.c.bf16 %v1262, %v1257
    %v1273 = vpack.c.bf16 %v1263, %v1258
    %v1274 = vpack.c.bf16 %v1264, %v1259
    %1285 = vrot.lane.b32.xlu0 %v1265, 127
    %v1286 = vpop.permute.xlu0 %1285
    %1287 = vrot.lane.b32.xlu0 %v1266, 127
    %v1288 = vpop.permute.xlu0 %1287
    %1289 = vrot.lane.b32.xlu0 %v1267, 127
    %v1290 = vpop.permute.xlu0 %1289
    %1291 = vrot.lane.b32.xlu0 %v1268, 127
    %v1292 = vpop.permute.xlu0 %1291
    %1293 = vrot.lane.b32.xlu0 %v1269, 127
    %v1294 = vpop.permute.xlu0 %1293
    %1295 = vrot.lane.b32.xlu0 %v1270, 127
    %v1296 = vpop.permute.xlu0 %1295
    %1297 = vrot.lane.b32.xlu0 %v1271, 127
    %v1298 = vpop.permute.xlu0 %1297
    %1299 = vrot.lane.b32.xlu0 %v1272, 127
    %v1300 = vpop.permute.xlu0 %1299
    %1301 = vrot.lane.b32.xlu0 %v1273, 127
    %v1302 = vpop.permute.xlu0 %1301
    %1303 = vrot.lane.b32.xlu0 %v1274, 127
    %v1304 = vpop.permute.xlu0 %1303
    %vm1305 = vcmask 1039360
    %v1306 = vsel %vm1305, %v1286, %v1288
    %v1307 = vsel %vm1305, %v1288, %v1290
    %v1308 = vsel %vm1305, %v1290, %v1292
    %v1309 = vsel %vm1305, %v1292, %v1294
    %v1310 = vsel %vm1305, %v1296, %v1298
    %v1311 = vsel %vm1305, %v1298, %v1300
    %v1312 = vsel %vm1305, %v1300, %v1302
    %v1313 = vsel %vm1305, %v1302, %v1304
    %1324 = vrot.lane.b32.xlu0 %v1265, 126
    %v1325 = vpop.permute.xlu0 %1324
    %1326 = vrot.lane.b32.xlu0 %v1266, 126
    %v1327 = vpop.permute.xlu0 %1326
    %1328 = vrot.lane.b32.xlu0 %v1267, 126
    %v1329 = vpop.permute.xlu0 %1328
    %1330 = vrot.lane.b32.xlu0 %v1268, 126
    %v1331 = vpop.permute.xlu0 %1330
    %1332 = vrot.lane.b32.xlu0 %v1269, 126
    %v1333 = vpop.permute.xlu0 %1332
    %1334 = vrot.lane.b32.xlu0 %v1270, 126
    %v1335 = vpop.permute.xlu0 %1334
    %1336 = vrot.lane.b32.xlu0 %v1271, 126
    %v1337 = vpop.permute.xlu0 %1336
    %1338 = vrot.lane.b32.xlu0 %v1272, 126
    %v1339 = vpop.permute.xlu0 %1338
    %1340 = vrot.lane.b32.xlu0 %v1273, 126
    %v1341 = vpop.permute.xlu0 %1340
    %1342 = vrot.lane.b32.xlu0 %v1274, 126
    %v1343 = vpop.permute.xlu0 %1342
    %vm1344 = vcmask 1031168
    %v1345 = vsel %vm1344, %v1325, %v1327
    %v1346 = vsel %vm1344, %v1327, %v1329
    %v1347 = vsel %vm1344, %v1329, %v1331
    %v1348 = vsel %vm1344, %v1331, %v1333
    %v1349 = vsel %vm1344, %v1335, %v1337
    %v1350 = vsel %vm1344, %v1337, %v1339
    %v1351 = vsel %vm1344, %v1339, %v1341
    %v1352 = vsel %vm1344, %v1341, %v1343
    %1363 = vrot.lane.b32.xlu0 %v1265, 125
    %v1364 = vpop.permute.xlu0 %1363
    %1365 = vrot.lane.b32.xlu0 %v1266, 125
    %v1366 = vpop.permute.xlu0 %1365
    %1367 = vrot.lane.b32.xlu0 %v1267, 125
    %v1368 = vpop.permute.xlu0 %1367
    %1369 = vrot.lane.b32.xlu0 %v1268, 125
    %v1370 = vpop.permute.xlu0 %1369
    %1371 = vrot.lane.b32.xlu0 %v1269, 125
    %v1372 = vpop.permute.xlu0 %1371
    %1373 = vrot.lane.b32.xlu0 %v1270, 125
    %v1374 = vpop.permute.xlu0 %1373
    %1375 = vrot.lane.b32.xlu0 %v1271, 125
    %v1376 = vpop.permute.xlu0 %1375
    %1377 = vrot.lane.b32.xlu0 %v1272, 125
    %v1378 = vpop.permute.xlu0 %1377
    %1379 = vrot.lane.b32.xlu0 %v1273, 125
    %v1380 = vpop.permute.xlu0 %1379
    %1381 = vrot.lane.b32.xlu0 %v1274, 125
    %v1382 = vpop.permute.xlu0 %1381
    %vm1383 = vcmask 1022976
    %v1384 = vsel %vm1383, %v1364, %v1366
    %v1385 = vsel %vm1383, %v1366, %v1368
    %v1386 = vsel %vm1383, %v1368, %v1370
    %v1387 = vsel %vm1383, %v1370, %v1372
    %v1388 = vsel %vm1383, %v1374, %v1376
    %v1389 = vsel %vm1383, %v1376, %v1378
    %v1390 = vsel %vm1383, %v1378, %v1380
    %v1391 = vsel %vm1383, %v1380, %v1382
    %1402 = vrot.lane.b32.xlu0 %v1265, 124
    %v1403 = vpop.permute.xlu0 %1402
    %1404 = vrot.lane.b32.xlu0 %v1266, 124
    %v1405 = vpop.permute.xlu0 %1404
    %1406 = vrot.lane.b32.xlu0 %v1267, 124
    %v1407 = vpop.permute.xlu0 %1406
    %1408 = vrot.lane.b32.xlu0 %v1268, 124
    %v1409 = vpop.permute.xlu0 %1408
    %1410 = vrot.lane.b32.xlu0 %v1269, 124
    %v1411 = vpop.permute.xlu0 %1410
    %1412 = vrot.lane.b32.xlu0 %v1270, 124
    %v1413 = vpop.permute.xlu0 %1412
    %1414 = vrot.lane.b32.xlu0 %v1271, 124
    %v1415 = vpop.permute.xlu0 %1414
    %1416 = vrot.lane.b32.xlu0 %v1272, 124
    %v1417 = vpop.permute.xlu0 %1416
    %1418 = vrot.lane.b32.xlu0 %v1273, 124
    %v1419 = vpop.permute.xlu0 %1418
    %1420 = vrot.lane.b32.xlu0 %v1274, 124
    %v1421 = vpop.permute.xlu0 %1420
    %vm1422 = vcmask 1014784
    %v1423 = vsel %vm1422, %v1403, %v1405
    %v1424 = vsel %vm1422, %v1405, %v1407
    %v1425 = vsel %vm1422, %v1407, %v1409
    %v1426 = vsel %vm1422, %v1409, %v1411
    %v1427 = vsel %vm1422, %v1413, %v1415
    %v1428 = vsel %vm1422, %v1415, %v1417
    %v1429 = vsel %vm1422, %v1417, %v1419
    %v1430 = vsel %vm1422, %v1419, %v1421
    %1441 = vrot.lane.b32.xlu0 %v1265, 123
    %v1442 = vpop.permute.xlu0 %1441
    %1443 = vrot.lane.b32.xlu0 %v1266, 123
    %v1444 = vpop.permute.xlu0 %1443
    %1445 = vrot.lane.b32.xlu0 %v1267, 123
    %v1446 = vpop.permute.xlu0 %1445
    %1447 = vrot.lane.b32.xlu0 %v1268, 123
    %v1448 = vpop.permute.xlu0 %1447
    %1449 = vrot.lane.b32.xlu0 %v1269, 123
    %v1450 = vpop.permute.xlu0 %1449
    %1451 = vrot.lane.b32.xlu0 %v1270, 123
    %v1452 = vpop.permute.xlu0 %1451
    %1453 = vrot.lane.b32.xlu0 %v1271, 123
    %v1454 = vpop.permute.xlu0 %1453
    %1455 = vrot.lane.b32.xlu0 %v1272, 123
    %v1456 = vpop.permute.xlu0 %1455
    %1457 = vrot.lane.b32.xlu0 %v1273, 123
    %v1458 = vpop.permute.xlu0 %1457
    %1459 = vrot.lane.b32.xlu0 %v1274, 123
    %v1460 = vpop.permute.xlu0 %1459
    %vm1461 = vcmask 1006592
    %v1462 = vsel %vm1461, %v1442, %v1444
    %v1463 = vsel %vm1461, %v1444, %v1446
    %v1464 = vsel %vm1461, %v1446, %v1448
    %v1465 = vsel %vm1461, %v1448, %v1450
    %v1466 = vsel %vm1461, %v1452, %v1454
    %v1467 = vsel %vm1461, %v1454, %v1456
    %v1468 = vsel %vm1461, %v1456, %v1458
    %v1469 = vsel %vm1461, %v1458, %v1460
    %1480 = vrot.lane.b32.xlu0 %v1265, 122
    %v1481 = vpop.permute.xlu0 %1480
    %1482 = vrot.lane.b32.xlu0 %v1266, 122
    %v1483 = vpop.permute.xlu0 %1482
    %1484 = vrot.lane.b32.xlu0 %v1267, 122
    %v1485 = vpop.permute.xlu0 %1484
    %1486 = vrot.lane.b32.xlu0 %v1268, 122
    %v1487 = vpop.permute.xlu0 %1486
    %1488 = vrot.lane.b32.xlu0 %v1269, 122
    %v1489 = vpop.permute.xlu0 %1488
    %1490 = vrot.lane.b32.xlu0 %v1270, 122
    %v1491 = vpop.permute.xlu0 %1490
    %1492 = vrot.lane.b32.xlu0 %v1271, 122
    %v1493 = vpop.permute.xlu0 %1492
    %1494 = vrot.lane.b32.xlu0 %v1272, 122
    %v1495 = vpop.permute.xlu0 %1494
    %1496 = vrot.lane.b32.xlu0 %v1273, 122
    %v1497 = vpop.permute.xlu0 %1496
    %1498 = vrot.lane.b32.xlu0 %v1274, 122
    %v1499 = vpop.permute.xlu0 %1498
    %vm1500 = vcmask 998400
    %v1501 = vsel %vm1500, %v1481, %v1483
    %v1502 = vsel %vm1500, %v1483, %v1485
    %v1503 = vsel %vm1500, %v1485, %v1487
    %v1504 = vsel %vm1500, %v1487, %v1489
    %v1505 = vsel %vm1500, %v1491, %v1493
    %v1506 = vsel %vm1500, %v1493, %v1495
    %v1507 = vsel %vm1500, %v1495, %v1497
    %v1508 = vsel %vm1500, %v1497, %v1499
    %1519 = vrot.lane.b32.xlu0 %v1265, 121
    %v1520 = vpop.permute.xlu0 %1519
    %1521 = vrot.lane.b32.xlu0 %v1266, 121
    %v1522 = vpop.permute.xlu0 %1521
    %1523 = vrot.lane.b32.xlu0 %v1267, 121
    %v1524 = vpop.permute.xlu0 %1523
    %1525 = vrot.lane.b32.xlu0 %v1268, 121
    %v1526 = vpop.permute.xlu0 %1525
    %1527 = vrot.lane.b32.xlu0 %v1269, 121
    %v1528 = vpop.permute.xlu0 %1527
    %1529 = vrot.lane.b32.xlu0 %v1270, 121
    %v1530 = vpop.permute.xlu0 %1529
    %1531 = vrot.lane.b32.xlu0 %v1271, 121
    %v1532 = vpop.permute.xlu0 %1531
    %1533 = vrot.lane.b32.xlu0 %v1272, 121
    %v1534 = vpop.permute.xlu0 %1533
    %1535 = vrot.lane.b32.xlu0 %v1273, 121
    %v1536 = vpop.permute.xlu0 %1535
    %1537 = vrot.lane.b32.xlu0 %v1274, 121
    %v1538 = vpop.permute.xlu0 %1537
    %vm1539 = vcmask 990208
    %v1540 = vsel %vm1539, %v1520, %v1522
    %v1541 = vsel %vm1539, %v1522, %v1524
    %v1542 = vsel %vm1539, %v1524, %v1526
    %v1543 = vsel %vm1539, %v1526, %v1528
    %v1544 = vsel %vm1539, %v1530, %v1532
    %v1545 = vsel %vm1539, %v1532, %v1534
    %v1546 = vsel %vm1539, %v1534, %v1536
    %v1547 = vsel %vm1539, %v1536, %v1538
    %1558 = vrot.lane.b32.xlu0 %v1265, 120
    %v1559 = vpop.permute.xlu0 %1558
    %1560 = vrot.lane.b32.xlu0 %v1266, 120
    %v1561 = vpop.permute.xlu0 %1560
    %1562 = vrot.lane.b32.xlu0 %v1267, 120
    %v1563 = vpop.permute.xlu0 %1562
    %1564 = vrot.lane.b32.xlu0 %v1268, 120
    %v1565 = vpop.permute.xlu0 %1564
    %1566 = vrot.lane.b32.xlu0 %v1269, 120
    %v1567 = vpop.permute.xlu0 %1566
    %1568 = vrot.lane.b32.xlu0 %v1270, 120
    %v1569 = vpop.permute.xlu0 %1568
    %1570 = vrot.lane.b32.xlu0 %v1271, 120
    %v1571 = vpop.permute.xlu0 %1570
    %1572 = vrot.lane.b32.xlu0 %v1272, 120
    %v1573 = vpop.permute.xlu0 %1572
    %1574 = vrot.lane.b32.xlu0 %v1273, 120
    %v1575 = vpop.permute.xlu0 %1574
    %1576 = vrot.lane.b32.xlu0 %v1274, 120
    %v1577 = vpop.permute.xlu0 %1576
    %vm1578 = vcmask 982016
    %v1579 = vsel %vm1578, %v1559, %v1561
    %v1580 = vsel %vm1578, %v1561, %v1563
    %v1581 = vsel %vm1578, %v1563, %v1565
    %v1582 = vsel %vm1578, %v1565, %v1567
    %v1583 = vsel %vm1578, %v1569, %v1571
    %v1584 = vsel %vm1578, %v1571, %v1573
    %v1585 = vsel %vm1578, %v1573, %v1575
    %v1586 = vsel %vm1578, %v1575, %v1577
    %1597 = vrot.lane.b32.xlu0 %v1265, 119
    %v1598 = vpop.permute.xlu0 %1597
    %1599 = vrot.lane.b32.xlu0 %v1266, 119
    %v1600 = vpop.permute.xlu0 %1599
    %1601 = vrot.lane.b32.xlu0 %v1267, 119
    %v1602 = vpop.permute.xlu0 %1601
    %1603 = vrot.lane.b32.xlu0 %v1268, 119
    %v1604 = vpop.permute.xlu0 %1603
    %1605 = vrot.lane.b32.xlu0 %v1269, 119
    %v1606 = vpop.permute.xlu0 %1605
    %1607 = vrot.lane.b32.xlu0 %v1270, 119
    %v1608 = vpop.permute.xlu0 %1607
    %1609 = vrot.lane.b32.xlu0 %v1271, 119
    %v1610 = vpop.permute.xlu0 %1609
    %1611 = vrot.lane.b32.xlu0 %v1272, 119
    %v1612 = vpop.permute.xlu0 %1611
    %1613 = vrot.lane.b32.xlu0 %v1273, 119
    %v1614 = vpop.permute.xlu0 %1613
    %1615 = vrot.lane.b32.xlu0 %v1274, 119
    %v1616 = vpop.permute.xlu0 %1615
    %vm1617 = vcmask 973824
    %v1618 = vsel %vm1617, %v1598, %v1600
    %v1619 = vsel %vm1617, %v1600, %v1602
    %v1620 = vsel %vm1617, %v1602, %v1604
    %v1621 = vsel %vm1617, %v1604, %v1606
    %v1622 = vsel %vm1617, %v1608, %v1610
    %v1623 = vsel %vm1617, %v1610, %v1612
    %v1624 = vsel %vm1617, %v1612, %v1614
    %v1625 = vsel %vm1617, %v1614, %v1616
    %1636 = vrot.lane.b32.xlu0 %v1265, 118
    %v1637 = vpop.permute.xlu0 %1636
    %1638 = vrot.lane.b32.xlu0 %v1266, 118
    %v1639 = vpop.permute.xlu0 %1638
    %1640 = vrot.lane.b32.xlu0 %v1267, 118
    %v1641 = vpop.permute.xlu0 %1640
    %1642 = vrot.lane.b32.xlu0 %v1268, 118
    %v1643 = vpop.permute.xlu0 %1642
    %1644 = vrot.lane.b32.xlu0 %v1269, 118
    %v1645 = vpop.permute.xlu0 %1644
    %1646 = vrot.lane.b32.xlu0 %v1270, 118
    %v1647 = vpop.permute.xlu0 %1646
    %1648 = vrot.lane.b32.xlu0 %v1271, 118
    %v1649 = vpop.permute.xlu0 %1648
    %1650 = vrot.lane.b32.xlu0 %v1272, 118
    %v1651 = vpop.permute.xlu0 %1650
    %1652 = vrot.lane.b32.xlu0 %v1273, 118
    %v1653 = vpop.permute.xlu0 %1652
    %1654 = vrot.lane.b32.xlu0 %v1274, 118
    %v1655 = vpop.permute.xlu0 %1654
    %vm1656 = vcmask 965632
    %v1657 = vsel %vm1656, %v1637, %v1639
    %v1658 = vsel %vm1656, %v1639, %v1641
    %v1659 = vsel %vm1656, %v1641, %v1643
    %v1660 = vsel %vm1656, %v1643, %v1645
    %v1661 = vsel %vm1656, %v1647, %v1649
    %v1662 = vsel %vm1656, %v1649, %v1651
    %v1663 = vsel %vm1656, %v1651, %v1653
    %v1664 = vsel %vm1656, %v1653, %v1655
    %1675 = vrot.lane.b32.xlu0 %v1265, 117
    %v1676 = vpop.permute.xlu0 %1675
    %1677 = vrot.lane.b32.xlu0 %v1266, 117
    %v1678 = vpop.permute.xlu0 %1677
    %1679 = vrot.lane.b32.xlu0 %v1267, 117
    %v1680 = vpop.permute.xlu0 %1679
    %1681 = vrot.lane.b32.xlu0 %v1268, 117
    %v1682 = vpop.permute.xlu0 %1681
    %1683 = vrot.lane.b32.xlu0 %v1269, 117
    %v1684 = vpop.permute.xlu0 %1683
    %1685 = vrot.lane.b32.xlu0 %v1270, 117
    %v1686 = vpop.permute.xlu0 %1685
    %1687 = vrot.lane.b32.xlu0 %v1271, 117
    %v1688 = vpop.permute.xlu0 %1687
    %1689 = vrot.lane.b32.xlu0 %v1272, 117
    %v1690 = vpop.permute.xlu0 %1689
    %1691 = vrot.lane.b32.xlu0 %v1273, 117
    %v1692 = vpop.permute.xlu0 %1691
    %1693 = vrot.lane.b32.xlu0 %v1274, 117
    %v1694 = vpop.permute.xlu0 %1693
    %vm1695 = vcmask 957440
    %v1696 = vsel %vm1695, %v1676, %v1678
    %v1697 = vsel %vm1695, %v1678, %v1680
    %v1698 = vsel %vm1695, %v1680, %v1682
    %v1699 = vsel %vm1695, %v1682, %v1684
    %v1700 = vsel %vm1695, %v1686, %v1688
    %v1701 = vsel %vm1695, %v1688, %v1690
    %v1702 = vsel %vm1695, %v1690, %v1692
    %v1703 = vsel %vm1695, %v1692, %v1694
    %1714 = vrot.lane.b32.xlu0 %v1265, 116
    %v1715 = vpop.permute.xlu0 %1714
    %1716 = vrot.lane.b32.xlu0 %v1266, 116
    %v1717 = vpop.permute.xlu0 %1716
    %1718 = vrot.lane.b32.xlu0 %v1267, 116
    %v1719 = vpop.permute.xlu0 %1718
    %1720 = vrot.lane.b32.xlu0 %v1268, 116
    %v1721 = vpop.permute.xlu0 %1720
    %1722 = vrot.lane.b32.xlu0 %v1269, 116
    %v1723 = vpop.permute.xlu0 %1722
    %1724 = vrot.lane.b32.xlu0 %v1270, 116
    %v1725 = vpop.permute.xlu0 %1724
    %1726 = vrot.lane.b32.xlu0 %v1271, 116
    %v1727 = vpop.permute.xlu0 %1726
    %1728 = vrot.lane.b32.xlu0 %v1272, 116
    %v1729 = vpop.permute.xlu0 %1728
    %1730 = vrot.lane.b32.xlu0 %v1273, 116
    %v1731 = vpop.permute.xlu0 %1730
    %1732 = vrot.lane.b32.xlu0 %v1274, 116
    %v1733 = vpop.permute.xlu0 %1732
    %vm1734 = vcmask 949248
    %v1735 = vsel %vm1734, %v1715, %v1717
    %v1736 = vsel %vm1734, %v1717, %v1719
    %v1737 = vsel %vm1734, %v1719, %v1721
    %v1738 = vsel %vm1734, %v1721, %v1723
    %v1739 = vsel %vm1734, %v1725, %v1727
    %v1740 = vsel %vm1734, %v1727, %v1729
    %v1741 = vsel %vm1734, %v1729, %v1731
    %v1742 = vsel %vm1734, %v1731, %v1733
    %1753 = vrot.lane.b32.xlu0 %v1265, 115
    %v1754 = vpop.permute.xlu0 %1753
    %1755 = vrot.lane.b32.xlu0 %v1266, 115
    %v1756 = vpop.permute.xlu0 %1755
    %1757 = vrot.lane.b32.xlu0 %v1267, 115
    %v1758 = vpop.permute.xlu0 %1757
    %1759 = vrot.lane.b32.xlu0 %v1268, 115
    %v1760 = vpop.permute.xlu0 %1759
    %1761 = vrot.lane.b32.xlu0 %v1269, 115
    %v1762 = vpop.permute.xlu0 %1761
    %1763 = vrot.lane.b32.xlu0 %v1270, 115
    %v1764 = vpop.permute.xlu0 %1763
    %1765 = vrot.lane.b32.xlu0 %v1271, 115
    %v1766 = vpop.permute.xlu0 %1765
    %1767 = vrot.lane.b32.xlu0 %v1272, 115
    %v1768 = vpop.permute.xlu0 %1767
    %1769 = vrot.lane.b32.xlu0 %v1273, 115
    %v1770 = vpop.permute.xlu0 %1769
    %1771 = vrot.lane.b32.xlu0 %v1274, 115
    %v1772 = vpop.permute.xlu0 %1771
    %vm1773 = vcmask 941056
    %v1774 = vsel %vm1773, %v1754, %v1756
    %v1775 = vsel %vm1773, %v1756, %v1758
    %v1776 = vsel %vm1773, %v1758, %v1760
    %v1777 = vsel %vm1773, %v1760, %v1762
    %v1778 = vsel %vm1773, %v1764, %v1766
    %v1779 = vsel %vm1773, %v1766, %v1768
    %v1780 = vsel %vm1773, %v1768, %v1770
    %v1781 = vsel %vm1773, %v1770, %v1772
    %1792 = vrot.lane.b32.xlu0 %v1265, 114
    %v1793 = vpop.permute.xlu0 %1792
    %1794 = vrot.lane.b32.xlu0 %v1266, 114
    %v1795 = vpop.permute.xlu0 %1794
    %1796 = vrot.lane.b32.xlu0 %v1267, 114
    %v1797 = vpop.permute.xlu0 %1796
    %1798 = vrot.lane.b32.xlu0 %v1268, 114
    %v1799 = vpop.permute.xlu0 %1798
    %1800 = vrot.lane.b32.xlu0 %v1269, 114
    %v1801 = vpop.permute.xlu0 %1800
    %1802 = vrot.lane.b32.xlu0 %v1270, 114
    %v1803 = vpop.permute.xlu0 %1802
    %1804 = vrot.lane.b32.xlu0 %v1271, 114
    %v1805 = vpop.permute.xlu0 %1804
    %1806 = vrot.lane.b32.xlu0 %v1272, 114
    %v1807 = vpop.permute.xlu0 %1806
    %1808 = vrot.lane.b32.xlu0 %v1273, 114
    %v1809 = vpop.permute.xlu0 %1808
    %1810 = vrot.lane.b32.xlu0 %v1274, 114
    %v1811 = vpop.permute.xlu0 %1810
    %vm1812 = vcmask 932864
    %v1813 = vsel %vm1812, %v1793, %v1795
    %v1814 = vsel %vm1812, %v1795, %v1797
    %v1815 = vsel %vm1812, %v1797, %v1799
    %v1816 = vsel %vm1812, %v1799, %v1801
    %v1817 = vsel %vm1812, %v1803, %v1805
    %v1818 = vsel %vm1812, %v1805, %v1807
    %v1819 = vsel %vm1812, %v1807, %v1809
    %v1820 = vsel %vm1812, %v1809, %v1811
    %1831 = vrot.lane.b32.xlu0 %v1265, 113
    %v1832 = vpop.permute.xlu0 %1831
    %1833 = vrot.lane.b32.xlu0 %v1266, 113
    %v1834 = vpop.permute.xlu0 %1833
    %1835 = vrot.lane.b32.xlu0 %v1267, 113
    %v1836 = vpop.permute.xlu0 %1835
    %1837 = vrot.lane.b32.xlu0 %v1268, 113
    %v1838 = vpop.permute.xlu0 %1837
    %1839 = vrot.lane.b32.xlu0 %v1269, 113
    %v1840 = vpop.permute.xlu0 %1839
    %1841 = vrot.lane.b32.xlu0 %v1270, 113
    %v1842 = vpop.permute.xlu0 %1841
    %1843 = vrot.lane.b32.xlu0 %v1271, 113
    %v1844 = vpop.permute.xlu0 %1843
    %1845 = vrot.lane.b32.xlu0 %v1272, 113
    %v1846 = vpop.permute.xlu0 %1845
    %1847 = vrot.lane.b32.xlu0 %v1273, 113
    %v1848 = vpop.permute.xlu0 %1847
    %1849 = vrot.lane.b32.xlu0 %v1274, 113
    %v1850 = vpop.permute.xlu0 %1849
    %vm1851 = vcmask 924672
    %v1852 = vsel %vm1851, %v1832, %v1834
    %v1853 = vsel %vm1851, %v1834, %v1836
    %v1854 = vsel %vm1851, %v1836, %v1838
    %v1855 = vsel %vm1851, %v1838, %v1840
    %v1856 = vsel %vm1851, %v1842, %v1844
    %v1857 = vsel %vm1851, %v1844, %v1846
    %v1858 = vsel %vm1851, %v1846, %v1848
    %v1859 = vsel %vm1851, %v1848, %v1850
    %v1870 = vld [vmem:[#allocation6] sm:$0xff]
    %v1871 = vld [vmem:[#allocation6 + $0x8] sm:$0xff]
    %v1872 = vld [vmem:[#allocation6 + $0x10] sm:$0xff]
    %v1873 = vld [vmem:[#allocation6 + $0x18] sm:$0xff]
    %v1878 = vunpack.c.l.b16 %v1870
    %v1879 = vunpack.c.h.b16 %v1870
    %v1880 = vunpack.c.l.b16 %v1871
    %v1881 = vunpack.c.h.b16 %v1871
    %v1882 = vunpack.c.l.b16 %v1872
    %v1883 = vunpack.c.h.b16 %v1872
    %v1884 = vunpack.c.l.b16 %v1873
    %v1885 = vunpack.c.h.b16 %v1873
    %v1886 = vpack.c.b16 %v1880, %v1878
    %v1887 = vpack.c.b16 %v1881, %v1879
    %v1888 = vpack.c.b16 %v1884, %v1882
    %v1889 = vpack.c.b16 %v1885, %v1883
    %1894 = vmatprep.subr.bf16.mxu0 %v1266
    %1895 = vmatpush1.bf16.msra.mxu0 %v1265
    %1896 = vmatprep.subr.bf16.mxu0 %v1307
    %1897 = vmatpush1.bf16.msra.mxu0 %v1306
    %1898 = vmatprep.subr.bf16.mxu0 %v1346
    %1899 = vmatpush1.bf16.msra.mxu0 %v1345
    %1900 = vmatprep.subr.bf16.mxu0 %v1385
    %1901 = vmatpush1.bf16.msra.mxu0 %v1384
    %1902 = vmatprep.subr.bf16.mxu0 %v1424
    %1903 = vmatpush1.bf16.msra.mxu0 %v1423
    %1904 = vmatprep.subr.bf16.mxu0 %v1463
    %1905 = vmatpush1.bf16.msra.mxu0 %v1462
    %1906 = vmatprep.subr.bf16.mxu0 %v1502
    %1907 = vmatpush1.bf16.msra.mxu0 %v1501
    %1908 = vmatprep.subr.bf16.mxu0 %v1541
    %1909 = vmatpush1.bf16.msra.mxu0 %v1540
    %1910 = vmatprep.subr.bf16.mxu0 %v1580
    %1911 = vmatpush1.bf16.msra.mxu0 %v1579
    %1912 = vmatprep.subr.bf16.mxu0 %v1619
    %1913 = vmatpush1.bf16.msra.mxu0 %v1618
    %1914 = vmatprep.subr.bf16.mxu0 %v1658
    %1915 = vmatpush1.bf16.msra.mxu0 %v1657
    %1916 = vmatprep.subr.bf16.mxu0 %v1697
    %1917 = vmatpush1.bf16.msra.mxu0 %v1696
    %1918 = vmatprep.subr.bf16.mxu0 %v1736
    %1919 = vmatpush1.bf16.msra.mxu0 %v1735
    %1920 = vmatprep.subr.bf16.mxu0 %v1775
    %1921 = vmatpush1.bf16.msra.mxu0 %v1774
    %1922 = vmatprep.subr.bf16.mxu0 %v1814
    %1923 = vmatpush1.bf16.msra.mxu0 %v1813
    %1924 = vmatprep.subr.bf16.mxu0 %v1853
    %1925 = vmatpush1.bf16.msra.mxu0 %v1852
    %1926 = vmatprep.mubr.bf16.mxu0 %v1887
    %1927 = vmatmul.mubr.bf16.gmra.mrb[0].mxu0 %v1886
    %v1928 = vpop.f32.mrb[0].mxu0
    %v1929 = vadd.f32 0.0, %v1928
    %v1930 = vpop.f32.mrb[0].mxu0
    %v1931 = vadd.f32 0.0, %v1930
    %v1932 = vpop.f32.mrb[0].mxu0
    %v1933 = vadd.f32 0.0, %v1932
    %v1934 = vpop.f32.mrb[0].mxu0
    %v1935 = vadd.f32 0.0, %v1934
    %1936 = vmatprep.mubr.bf16.mxu0 %v1889
    %1937 = vmatmul.mubr.bf16.gmra.mrb[0].mxu0 %v1888
    %v1938 = vpop.f32.mrb[0].mxu0
    %v1939 = vadd.f32 0.0, %v1938
    %v1940 = vpop.f32.mrb[0].mxu0
    %v1941 = vadd.f32 0.0, %v1940
    %v1942 = vpop.f32.mrb[0].mxu0
    %v1943 = vadd.f32 0.0, %v1942
    %v1944 = vpop.f32.mrb[0].mxu0
    %v1945 = vadd.f32 0.0, %v1944
    %1946 = vdwg.mxu0
    %1947 = vmatprep.subr.bf16.mxu0 %v1268
    %1948 = vmatpush1.bf16.msra.mxu0 %v1267
    %1949 = vmatprep.subr.bf16.mxu0 %v1309
    %1950 = vmatpush1.bf16.msra.mxu0 %v1308
    %1951 = vmatprep.subr.bf16.mxu0 %v1348
    %1952 = vmatpush1.bf16.msra.mxu0 %v1347
    %1953 = vmatprep.subr.bf16.mxu0 %v1387
    %1954 = vmatpush1.bf16.msra.mxu0 %v1386
    %1955 = vmatprep.subr.bf16.mxu0 %v1426
    %1956 = vmatpush1.bf16.msra.mxu0 %v1425
    %1957 = vmatprep.subr.bf16.mxu0 %v1465
    %1958 = vmatpush1.bf16.msra.mxu0 %v1464
    %1959 = vmatprep.subr.bf16.mxu0 %v1504
    %1960 = vmatpush1.bf16.msra.mxu0 %v1503
    %1961 = vmatprep.subr.bf16.mxu0 %v1543
    %1962 = vmatpush1.bf16.msra.mxu0 %v1542
    %1963 = vmatprep.subr.bf16.mxu0 %v1582
    %1964 = vmatpush1.bf16.msra.mxu0 %v1581
    %1965 = vmatprep.subr.bf16.mxu0 %v1621
    %1966 = vmatpush1.bf16.msra.mxu0 %v1620
    %1967 = vmatprep.subr.bf16.mxu0 %v1660
    %1968 = vmatpush1.bf16.msra.mxu0 %v1659
    %1969 = vmatprep.subr.bf16.mxu0 %v1699
    %1970 = vmatpush1.bf16.msra.mxu0 %v1698
    %1971 = vmatprep.subr.bf16.mxu0 %v1738
    %1972 = vmatpush1.bf16.msra.mxu0 %v1737
    %1973 = vmatprep.subr.bf16.mxu0 %v1777
    %1974 = vmatpush1.bf16.msra.mxu0 %v1776
    %1975 = vmatprep.subr.bf16.mxu0 %v1816
    %1976 = vmatpush1.bf16.msra.mxu0 %v1815
    %1977 = vmatprep.subr.bf16.mxu0 %v1855
    %1978 = vmatpush1.bf16.msra.mxu0 %v1854
    %1979 = vmatprep.mubr.bf16.mxu0 %v1887
    %1980 = vmatmul.mubr.bf16.gmra.mrb[0].mxu0 %v1886
    %v1981 = vpop.f32.mrb[0].mxu0
    %v1982 = vadd.f32 0.0, %v1981
    %v1983 = vpop.f32.mrb[0].mxu0
    %v1984 = vadd.f32 0.0, %v1983
    %v1985 = vpop.f32.mrb[0].mxu0
    %v1986 = vadd.f32 0.0, %v1985
    %v1987 = vpop.f32.mrb[0].mxu0
    %v1988 = vadd.f32 0.0, %v1987
    %1989 = vmatprep.mubr.bf16.mxu0 %v1889
    %1990 = vmatmul.mubr.bf16.gmra.mrb[0].mxu0 %v1888
    %v1991 = vpop.f32.mrb[0].mxu0
    %v1992 = vadd.f32 0.0, %v1991
    %v1993 = vpop.f32.mrb[0].mxu0
    %v1994 = vadd.f32 0.0, %v1993
    %v1995 = vpop.f32.mrb[0].mxu0
    %v1996 = vadd.f32 0.0, %v1995
    %v1997 = vpop.f32.mrb[0].mxu0
    %v1998 = vadd.f32 0.0, %v1997
    %1999 = vdwg.mxu0
    %2000 = vmatprep.subr.bf16.mxu0 0
    %2001 = vmatpush1.bf16.msra.mxu0 %v1269
    %2002 = vmatprep.subr.bf16.mxu0 0
    %2003 = vmatpush1.bf16.msra.mxu0 %v1294
    %2004 = vmatprep.subr.bf16.mxu0 0
    %2005 = vmatpush1.bf16.msra.mxu0 %v1333
    %2006 = vmatprep.subr.bf16.mxu0 0
    %2007 = vmatpush1.bf16.msra.mxu0 %v1372
    %2008 = vmatprep.subr.bf16.mxu0 0
    %2009 = vmatpush1.bf16.msra.mxu0 %v1411
    %2010 = vmatprep.subr.bf16.mxu0 0
    %2011 = vmatpush1.bf16.msra.mxu0 %v1450
    %2012 = vmatprep.subr.bf16.mxu0 0
    %2013 = vmatpush1.bf16.msra.mxu0 %v1489
    %2014 = vmatprep.subr.bf16.mxu0 0
    %2015 = vmatpush1.bf16.msra.mxu0 %v1528
    %2016 = vmatprep.subr.bf16.mxu0 0
    %2017 = vmatpush1.bf16.msra.mxu0 %v1567
    %2018 = vmatprep.subr.bf16.mxu0 0
    %2019 = vmatpush1.bf16.msra.mxu0 %v1606
    %2020 = vmatprep.subr.bf16.mxu0 0
    %2021 = vmatpush1.bf16.msra.mxu0 %v1645
    %2022 = vmatprep.subr.bf16.mxu0 0
    %2023 = vmatpush1.bf16.msra.mxu0 %v1684
    %2024 = vmatprep.subr.bf16.mxu0 0
    %2025 = vmatpush1.bf16.msra.mxu0 %v1723
    %2026 = vmatprep.subr.bf16.mxu0 0
    %2027 = vmatpush1.bf16.msra.mxu0 %v1762
    %2028 = vmatprep.subr.bf16.mxu0 0
    %2029 = vmatpush1.bf16.msra.mxu0 %v1801
    %2030 = vmatprep.subr.bf16.mxu0 0
    %2031 = vmatpush1.bf16.msra.mxu0 %v1840
    %2032 = vmatprep.mubr.bf16.mxu0 %v1887
    %2033 = vmatmul.mubr.bf16.gmra.mrb[0].mxu0 %v1886
    %v2034 = vpop.f32.mrb[0].mxu0
    %v2035 = vadd.f32 0.0, %v2034
    %v2036 = vpop.f32.mrb[0].mxu0
    %v2037 = vpop.f32.mrb[0].mxu0
    %v2038 = vadd.f32 0.0, %v2037
    %v2039 = vpop.f32.mrb[0].mxu0
    %2040 = vmatprep.mubr.bf16.mxu0 %v1889
    %2041 = vmatmul.mubr.bf16.gmra.mrb[0].mxu0 %v1888
    %v2042 = vpop.f32.mrb[0].mxu0
    %v2043 = vadd.f32 0.0, %v2042
    %v2044 = vpop.f32.mrb[0].mxu0
    %v2045 = vpop.f32.mrb[0].mxu0
    %v2046 = vadd.f32 0.0, %v2045
    %v2047 = vpop.f32.mrb[0].mxu0
    %2048 = vdwg.mxu0
    %2049 = vmatprep.subr.bf16.mxu0 %v1271
    %2050 = vmatpush1.bf16.msra.mxu0 %v1270
    %2051 = vmatprep.subr.bf16.mxu0 %v1311
    %2052 = vmatpush1.bf16.msra.mxu0 %v1310
    %2053 = vmatprep.subr.bf16.mxu0 %v1350
    %2054 = vmatpush1.bf16.msra.mxu0 %v1349
    %2055 = vmatprep.subr.bf16.mxu0 %v1389
    %2056 = vmatpush1.bf16.msra.mxu0 %v1388
    %2057 = vmatprep.subr.bf16.mxu0 %v1428
    %2058 = vmatpush1.bf16.msra.mxu0 %v1427
    %2059 = vmatprep.subr.bf16.mxu0 %v1467
    %2060 = vmatpush1.bf16.msra.mxu0 %v1466
    %2061 = vmatprep.subr.bf16.mxu0 %v1506
    %2062 = vmatpush1.bf16.msra.mxu0 %v1505
    %2063 = vmatprep.subr.bf16.mxu0 %v1545
    %2064 = vmatpush1.bf16.msra.mxu0 %v1544
    %2065 = vmatprep.subr.bf16.mxu0 %v1584
    %2066 = vmatpush1.bf16.msra.mxu0 %v1583
    %2067 = vmatprep.subr.bf16.mxu0 %v1623
    %2068 = vmatpush1.bf16.msra.mxu0 %v1622
    %2069 = vmatprep.subr.bf16.mxu0 %v1662
    %2070 = vmatpush1.bf16.msra.mxu0 %v1661
    %2071 = vmatprep.subr.bf16.mxu0 %v1701
    %2072 = vmatpush1.bf16.msra.mxu0 %v1700
    %2073 = vmatprep.subr.bf16.mxu0 %v1740
    %2074 = vmatpush1.bf16.msra.mxu0 %v1739
    %2075 = vmatprep.subr.bf16.mxu0 %v1779
    %2076 = vmatpush1.bf16.msra.mxu0 %v1778
    %2077 = vmatprep.subr.bf16.mxu0 %v1818
    %2078 = vmatpush1.bf16.msra.mxu0 %v1817
    %2079 = vmatprep.subr.bf16.mxu0 %v1857
    %2080 = vmatpush1.bf16.msra.mxu0 %v1856
    %2081 = vmatprep.mubr.bf16.mxu0 %v1887
    %2082 = vmatmul.mubr.bf16.gmra.mrb[0].mxu0 %v1886
    %v2083 = vpop.f32.mrb[0].mxu0
    %v2084 = vadd.f32 0.0, %v2083
    %v2085 = vpop.f32.mrb[0].mxu0
    %v2086 = vadd.f32 0.0, %v2085
    %v2087 = vpop.f32.mrb[0].mxu0
    %v2088 = vadd.f32 0.0, %v2087
    %v2089 = vpop.f32.mrb[0].mxu0
    %v2090 = vadd.f32 0.0, %v2089
    %2091 = vmatprep.mubr.bf16.mxu0 %v1889
    %2092 = vmatmul.mubr.bf16.gmra.mrb[0].mxu0 %v1888
    %v2093 = vpop.f32.mrb[0].mxu0
    %v2094 = vadd.f32 0.0, %v2093
    %v2095 = vpop.f32.mrb[0].mxu0
    %v2096 = vadd.f32 0.0, %v2095
    %v2097 = vpop.f32.mrb[0].mxu0
    %v2098 = vadd.f32 0.0, %v2097
    %v2099 = vpop.f32.mrb[0].mxu0
    %v2100 = vadd.f32 0.0, %v2099
    %2101 = vdwg.mxu0
    %2102 = vmatprep.subr.bf16.mxu0 %v1273
    %2103 = vmatpush1.bf16.msra.mxu0 %v1272
    %2104 = vmatprep.subr.bf16.mxu0 %v1313
    %2105 = vmatpush1.bf16.msra.mxu0 %v1312
    %2106 = vmatprep.subr.bf16.mxu0 %v1352
    %2107 = vmatpush1.bf16.msra.mxu0 %v1351
    %2108 = vmatprep.subr.bf16.mxu0 %v1391
    %2109 = vmatpush1.bf16.msra.mxu0 %v1390
    %2110 = vmatprep.subr.bf16.mxu0 %v1430
    %2111 = vmatpush1.bf16.msra.mxu0 %v1429
    %2112 = vmatprep.subr.bf16.mxu0 %v1469
    %2113 = vmatpush1.bf16.msra.mxu0 %v1468
    %2114 = vmatprep.subr.bf16.mxu0 %v1508
    %2115 = vmatpush1.bf16.msra.mxu0 %v1507
    %2116 = vmatprep.subr.bf16.mxu0 %v1547
    %2117 = vmatpush1.bf16.msra.mxu0 %v1546
    %2118 = vmatprep.subr.bf16.mxu0 %v1586
    %2119 = vmatpush1.bf16.msra.mxu0 %v1585
    %2120 = vmatprep.subr.bf16.mxu0 %v1625
    %2121 = vmatpush1.bf16.msra.mxu0 %v1624
    %2122 = vmatprep.subr.bf16.mxu0 %v1664
    %2123 = vmatpush1.bf16.msra.mxu0 %v1663
    %2124 = vmatprep.subr.bf16.mxu0 %v1703
    %2125 = vmatpush1.bf16.msra.mxu0 %v1702
    %2126 = vmatprep.subr.bf16.mxu0 %v1742
    %2127 = vmatpush1.bf16.msra.mxu0 %v1741
    %2128 = vmatprep.subr.bf16.mxu0 %v1781
    %2129 = vmatpush1.bf16.msra.mxu0 %v1780
    %2130 = vmatprep.subr.bf16.mxu0 %v1820
    %2131 = vmatpush1.bf16.msra.mxu0 %v1819
    %2132 = vmatprep.subr.bf16.mxu0 %v1859
    %2133 = vmatpush1.bf16.msra.mxu0 %v1858
    %2134 = vmatprep.mubr.bf16.mxu0 %v1887
    %2135 = vmatmul.mubr.bf16.gmra.mrb[0].mxu0 %v1886
    %v2136 = vpop.f32.mrb[0].mxu0
    %v2137 = vadd.f32 0.0, %v2136
    %v2138 = vpop.f32.mrb[0].mxu0
    %v2139 = vadd.f32 0.0, %v2138
    %v2140 = vpop.f32.mrb[0].mxu0
    %v2141 = vadd.f32 0.0, %v2140
    %v2142 = vpop.f32.mrb[0].mxu0
    %v2143 = vadd.f32 0.0, %v2142
    %2144 = vmatprep.mubr.bf16.mxu0 %v1889
    %2145 = vmatmul.mubr.bf16.gmra.mrb[0].mxu0 %v1888
    %v2146 = vpop.f32.mrb[0].mxu0
    %v2147 = vadd.f32 0.0, %v2146
    %v2148 = vpop.f32.mrb[0].mxu0
    %v2149 = vadd.f32 0.0, %v2148
    %v2150 = vpop.f32.mrb[0].mxu0
    %v2151 = vadd.f32 0.0, %v2150
    %v2152 = vpop.f32.mrb[0].mxu0
    %v2153 = vadd.f32 0.0, %v2152
    %2154 = vdwg.mxu0
    %2155 = vmatprep.subr.bf16.mxu0 0
    %2156 = vmatpush1.bf16.msra.mxu0 %v1274
    %2157 = vmatprep.subr.bf16.mxu0 0
    %2158 = vmatpush1.bf16.msra.mxu0 %v1304
    %2159 = vmatprep.subr.bf16.mxu0 0
    %2160 = vmatpush1.bf16.msra.mxu0 %v1343
    %2161 = vmatprep.subr.bf16.mxu0 0
    %2162 = vmatpush1.bf16.msra.mxu0 %v1382
    %2163 = vmatprep.subr.bf16.mxu0 0
    %2164 = vmatpush1.bf16.msra.mxu0 %v1421
    %2165 = vmatprep.subr.bf16.mxu0 0
    %2166 = vmatpush1.bf16.msra.mxu0 %v1460
    %2167 = vmatprep.subr.bf16.mxu0 0
    %2168 = vmatpush1.bf16.msra.mxu0 %v1499
    %2169 = vmatprep.subr.bf16.mxu0 0
    %2170 = vmatpush1.bf16.msra.mxu0 %v1538
    %2171 = vmatprep.subr.bf16.mxu0 0
    %2172 = vmatpush1.bf16.msra.mxu0 %v1577
    %2173 = vmatprep.subr.bf16.mxu0 0
    %2174 = vmatpush1.bf16.msra.mxu0 %v1616
    %2175 = vmatprep.subr.bf16.mxu0 0
    %2176 = vmatpush1.bf16.msra.mxu0 %v1655
    %2177 = vmatprep.subr.bf16.mxu0 0
    %2178 = vmatpush1.bf16.msra.mxu0 %v1694
    %2179 = vmatprep.subr.bf16.mxu0 0
    %2180 = vmatpush1.bf16.msra.mxu0 %v1733
    %2181 = vmatprep.subr.bf16.mxu0 0
    %2182 = vmatpush1.bf16.msra.mxu0 %v1772
    %2183 = vmatprep.subr.bf16.mxu0 0
    %2184 = vmatpush1.bf16.msra.mxu0 %v1811
    %2185 = vmatprep.subr.bf16.mxu0 0
    %2186 = vmatpush1.bf16.msra.mxu0 %v1850
    %2187 = vmatprep.mubr.bf16.mxu0 %v1887
    %2188 = vmatmul.mubr.bf16.gmra.mrb[0].mxu0 %v1886
    %v2189 = vpop.f32.mrb[0].mxu0
    %v2190 = vadd.f32 0.0, %v2189
    %v2191 = vpop.f32.mrb[0].mxu0
    %v2192 = vpop.f32.mrb[0].mxu0
    %v2193 = vadd.f32 0.0, %v2192
    %v2194 = vpop.f32.mrb[0].mxu0
    %2195 = vmatprep.mubr.bf16.mxu0 %v1889
    %2196 = vmatmul.mubr.bf16.gmra.mrb[0].mxu0 %v1888
    %v2197 = vpop.f32.mrb[0].mxu0
    %v2198 = vadd.f32 0.0, %v2197
    %v2199 = vpop.f32.mrb[0].mxu0
    %v2200 = vpop.f32.mrb[0].mxu0
    %v2201 = vadd.f32 0.0, %v2200
    %v2202 = vpop.f32.mrb[0].mxu0
    %2203 = vdwg.mxu0
    %v2204 = vld [vmem:[%s4] sm:$0xff]
    %v2205 = vld [vmem:[%s4 + $0x8] sm:$0xff]
    %v2206 = vld [vmem:[%s4 + $0x10] sm:$0xff]
    %v2207 = vld [vmem:[%s4 + $0x18] sm:$0xff]
    %2209 = vset.pattern.permute.xlu0 0
    %2210 = vperm.xlu0 %2209, %v2204
    %v2211 = vpop.permute.xlu0 %2210
    %2214 = vset.pattern.permute.xlu0 0
    %2215 = vperm.xlu0 %2214, %v2205
    %v2216 = vpop.permute.xlu0 %2215
    %2219 = vset.pattern.permute.xlu0 0
    %2220 = vperm.xlu0 %2219, %v2206
    %v2221 = vpop.permute.xlu0 %2220
    %2224 = vset.pattern.permute.xlu0 0
    %2225 = vperm.xlu0 %2224, %v2207
    %v2226 = vpop.permute.xlu0 %2225
    %v2228 = vadd.f32 %v1929, %v2211
    %v2229 = vadd.f32 %v1931, %v2211
    %v2230 = vadd.f32 %v1982, %v2211
    %v2231 = vadd.f32 %v1984, %v2211
    %v2232 = vadd.f32 %v2035, %v2211
    %v2233 = vadd.f32 %v1933, %v2216
    %v2234 = vadd.f32 %v1935, %v2216
    %v2235 = vadd.f32 %v1986, %v2216
    %v2236 = vadd.f32 %v1988, %v2216
    %v2237 = vadd.f32 %v2038, %v2216
    %v2238 = vadd.f32 %v1939, %v2221
    %v2239 = vadd.f32 %v1941, %v2221
    %v2240 = vadd.f32 %v1992, %v2221
    %v2241 = vadd.f32 %v1994, %v2221
    %v2242 = vadd.f32 %v2043, %v2221
    %v2243 = vadd.f32 %v1943, %v2226
    %v2244 = vadd.f32 %v1945, %v2226
    %v2245 = vadd.f32 %v1996, %v2226
    %v2246 = vadd.f32 %v1998, %v2226
    %v2247 = vadd.f32 %v2046, %v2226
    %v2248 = vadd.f32 %v2084, %v2211
    %v2249 = vadd.f32 %v2086, %v2211
    %v2250 = vadd.f32 %v2137, %v2211
    %v2251 = vadd.f32 %v2139, %v2211
    %v2252 = vadd.f32 %v2190, %v2211
    %v2253 = vadd.f32 %v2088, %v2216
    %v2254 = vadd.f32 %v2090, %v2216
    %v2255 = vadd.f32 %v2141, %v2216
    %v2256 = vadd.f32 %v2143, %v2216
    %v2257 = vadd.f32 %v2193, %v2216
    %v2258 = vadd.f32 %v2094, %v2221
    %v2259 = vadd.f32 %v2096, %v2221
    %v2260 = vadd.f32 %v2147, %v2221
    %v2261 = vadd.f32 %v2149, %v2221
    %v2262 = vadd.f32 %v2198, %v2221
    %v2263 = vadd.f32 %v2098, %v2226
    %v2264 = vadd.f32 %v2100, %v2226
    %v2265 = vadd.f32 %v2151, %v2226
    %v2266 = vadd.f32 %v2153, %v2226
    %v2267 = vadd.f32 %v2201, %v2226
    %v2268 = vmax.f32 %v2228, 0.0
    %v2269 = vmax.f32 %v2229, 0.0
    %v2270 = vmax.f32 %v2230, 0.0
    %v2271 = vmax.f32 %v2231, 0.0
    %v2272 = vmax.f32 %v2232, 0.0
    %v2273 = vmax.f32 %v2233, 0.0
    %v2274 = vmax.f32 %v2234, 0.0
    %v2275 = vmax.f32 %v2235, 0.0
    %v2276 = vmax.f32 %v2236, 0.0
    %v2277 = vmax.f32 %v2237, 0.0
    %v2278 = vmax.f32 %v2238, 0.0
    %v2279 = vmax.f32 %v2239, 0.0
    %v2280 = vmax.f32 %v2240, 0.0
    %v2281 = vmax.f32 %v2241, 0.0
    %v2282 = vmax.f32 %v2242, 0.0
    %v2283 = vmax.f32 %v2243, 0.0
    %v2284 = vmax.f32 %v2244, 0.0
    %v2285 = vmax.f32 %v2245, 0.0
    %v2286 = vmax.f32 %v2246, 0.0
    %v2287 = vmax.f32 %v2247, 0.0
    %v2288 = vmax.f32 %v2248, 0.0
    %v2289 = vmax.f32 %v2249, 0.0
    %v2290 = vmax.f32 %v2250, 0.0
    %v2291 = vmax.f32 %v2251, 0.0
    %v2292 = vmax.f32 %v2252, 0.0
    %v2293 = vmax.f32 %v2253, 0.0
    %v2294 = vmax.f32 %v2254, 0.0
    %v2295 = vmax.f32 %v2255, 0.0
    %v2296 = vmax.f32 %v2256, 0.0
    %v2297 = vmax.f32 %v2257, 0.0
    %v2298 = vmax.f32 %v2258, 0.0
    %v2299 = vmax.f32 %v2259, 0.0
    %v2300 = vmax.f32 %v2260, 0.0
    %v2301 = vmax.f32 %v2261, 0.0
    %v2302 = vmax.f32 %v2262, 0.0
    %v2303 = vmax.f32 %v2263, 0.0
    %v2304 = vmax.f32 %v2264, 0.0
    %v2305 = vmax.f32 %v2265, 0.0
    %v2306 = vmax.f32 %v2266, 0.0
    %v2307 = vmax.f32 %v2267, 0.0
    %v2308 = vld [vmem:[%s5] sm:$0xff]
    %v2309 = vld [vmem:[%s5 + $0x8] sm:$0xff]
    %v2310 = vld [vmem:[%s5 + $0x10] sm:$0xff]
    %v2311 = vld [vmem:[%s5 + $0x18] sm:$0xff]
    %v2312 = vld [vmem:[%s5 + $0x20] sm:$0xff]
    %v2313 = vld [vmem:[%s5 + $0x28] sm:$0xff]
    %v2314 = vld [vmem:[%s5 + $0x30] sm:$0xff]
    %v2315 = vld [vmem:[%s5 + $0x38] sm:$0xff]
    %v2316 = vld [vmem:[%s5 + $0x40] sm:$0xff]
    %v2317 = vld [vmem:[%s5 + $0x48] sm:$0xff]
    %v2318 = vld [vmem:[%s5 + $0x50] sm:$0xff]
    %v2319 = vld [vmem:[%s5 + $0x58] sm:$0xff]
    %v2320 = vld [vmem:[%s5 + $0x60] sm:$0xff]
    %v2321 = vld [vmem:[%s5 + $0x68] sm:$0xff]
    %v2322 = vld [vmem:[%s5 + $0x70] sm:$0xff]
    %v2323 = vld [vmem:[%s5 + $0x78] sm:$0xff]
    %v2324 = vld [vmem:[%s5 + $0x80] sm:$0xff]
    %v2325 = vld [vmem:[%s5 + $0x88] sm:$0xff]
    %v2326 = vld [vmem:[%s5 + $0x90] sm:$0xff]
    %v2327 = vld [vmem:[%s5 + $0x98] sm:$0xff]
    %v2328 = vld [vmem:[#allocation8] sm:$0xff]
    %v2329 = vld [vmem:[#allocation8 + $0x8] sm:$0xff]
    %v2330 = vld [vmem:[#allocation8 + $0x10] sm:$0xff]
    %v2331 = vld [vmem:[#allocation8 + $0x18] sm:$0xff]
    %v2332 = vld [vmem:[#allocation8 + $0x20] sm:$0xff]
    %v2333 = vld [vmem:[#allocation8 + $0x28] sm:$0xff]
    %v2334 = vld [vmem:[#allocation8 + $0x30] sm:$0xff]
    %v2335 = vld [vmem:[#allocation8 + $0x38] sm:$0xff]
    %v2336 = vld [vmem:[#allocation8 + $0x40] sm:$0xff]
    %v2337 = vld [vmem:[#allocation8 + $0x48] sm:$0xff]
    %v2338 = vld [vmem:[#allocation8 + $0x50] sm:$0xff]
    %v2339 = vld [vmem:[#allocation8 + $0x58] sm:$0xff]
    %v2340 = vld [vmem:[#allocation8 + $0x60] sm:$0xff]
    %v2341 = vld [vmem:[#allocation8 + $0x68] sm:$0xff]
    %v2342 = vld [vmem:[#allocation8 + $0x70] sm:$0xff]
    %v2343 = vld [vmem:[#allocation8 + $0x78] sm:$0xff]
    %v2344 = vld [vmem:[#allocation8 + $0x80] sm:$0xff]
    %v2345 = vld [vmem:[#allocation8 + $0x88] sm:$0xff]
    %v2346 = vld [vmem:[#allocation8 + $0x90] sm:$0xff]
    %v2347 = vld [vmem:[#allocation8 + $0x98] sm:$0xff]
    %v2348 = vmul.f32 %v2268, %v2268
    %v2349 = vmul.f32 %v2269, %v2269
    %v2350 = vmul.f32 %v2270, %v2270
    %v2351 = vmul.f32 %v2271, %v2271
    %v2352 = vmul.f32 %v2272, %v2272
    %v2353 = vmul.f32 %v2273, %v2273
    %v2354 = vmul.f32 %v2274, %v2274
    %v2355 = vmul.f32 %v2275, %v2275
    %v2356 = vmul.f32 %v2276, %v2276
    %v2357 = vmul.f32 %v2277, %v2277
    %v2358 = vmul.f32 %v2278, %v2278
    %v2359 = vmul.f32 %v2279, %v2279
    %v2360 = vmul.f32 %v2280, %v2280
    %v2361 = vmul.f32 %v2281, %v2281
    %v2362 = vmul.f32 %v2282, %v2282
    %v2363 = vmul.f32 %v2283, %v2283
    %v2364 = vmul.f32 %v2284, %v2284
    %v2365 = vmul.f32 %v2285, %v2285
    %v2366 = vmul.f32 %v2286, %v2286
    %v2367 = vmul.f32 %v2287, %v2287
    %v2368 = vmul.f32 %v2288, %v2288
    %v2369 = vmul.f32 %v2289, %v2289
    %v2370 = vmul.f32 %v2290, %v2290
    %v2371 = vmul.f32 %v2291, %v2291
    %v2372 = vmul.f32 %v2292, %v2292
    %v2373 = vmul.f32 %v2293, %v2293
    %v2374 = vmul.f32 %v2294, %v2294
    %v2375 = vmul.f32 %v2295, %v2295
    %v2376 = vmul.f32 %v2296, %v2296
    %v2377 = vmul.f32 %v2297, %v2297
    %v2378 = vmul.f32 %v2298, %v2298
    %v2379 = vmul.f32 %v2299, %v2299
    %v2380 = vmul.f32 %v2300, %v2300
    %v2381 = vmul.f32 %v2301, %v2301
    %v2382 = vmul.f32 %v2302, %v2302
    %v2383 = vmul.f32 %v2303, %v2303
    %v2384 = vmul.f32 %v2304, %v2304
    %v2385 = vmul.f32 %v2305, %v2305
    %v2386 = vmul.f32 %v2306, %v2306
    %v2387 = vmul.f32 %v2307, %v2307
    %v2388 = vadd.f32 %v2268, %v2269
    %v2389 = vadd.f32 %v2388, %v2270
    %v2390 = vadd.f32 %v2389, %v2271
    %vm2391 = vcmask 531456
    %v2392 = vsel %vm2391, %v2272, 0.0
    %v2393 = vadd.f32 %v2390, %v2392
    %2394 = vadd.xlane.f32.xlu0 %v2393
    %v2395 = vpop.xlane.xlu0 %2394
    %v2396 = vadd.f32 %v2273, %v2274
    %v2397 = vadd.f32 %v2396, %v2275
    %v2398 = vadd.f32 %v2397, %v2276
    %v2399 = vsel %vm2391, %v2277, 0.0
    %v2400 = vadd.f32 %v2398, %v2399
    %2401 = vadd.xlane.f32.xlu0 %v2400
    %v2402 = vpop.xlane.xlu0 %2401
    %v2403 = vadd.f32 %v2278, %v2279
    %v2404 = vadd.f32 %v2403, %v2280
    %v2405 = vadd.f32 %v2404, %v2281
    %v2406 = vsel %vm2391, %v2282, 0.0
    %v2407 = vadd.f32 %v2405, %v2406
    %2408 = vadd.xlane.f32.xlu0 %v2407
    %v2409 = vpop.xlane.xlu0 %2408
    %v2410 = vadd.f32 %v2283, %v2284
    %v2411 = vadd.f32 %v2410, %v2285
    %v2412 = vadd.f32 %v2411, %v2286
    %v2413 = vsel %vm2391, %v2287, 0.0
    %v2414 = vadd.f32 %v2412, %v2413
    %2415 = vadd.xlane.f32.xlu0 %v2414
    %v2416 = vpop.xlane.xlu0 %2415
    %v2417 = vadd.f32 %v2288, %v2289
    %v2418 = vadd.f32 %v2417, %v2290
    %v2419 = vadd.f32 %v2418, %v2291
    %v2420 = vsel %vm2391, %v2292, 0.0
    %v2421 = vadd.f32 %v2419, %v2420
    %2422 = vadd.xlane.f32.xlu0 %v2421
    %v2423 = vpop.xlane.xlu0 %2422
    %v2424 = vadd.f32 %v2293, %v2294
    %v2425 = vadd.f32 %v2424, %v2295
    %v2426 = vadd.f32 %v2425, %v2296
    %v2427 = vsel %vm2391, %v2297, 0.0
    %v2428 = vadd.f32 %v2426, %v2427
    %2429 = vadd.xlane.f32.xlu0 %v2428
    %v2430 = vpop.xlane.xlu0 %2429
    %v2431 = vadd.f32 %v2298, %v2299
    %v2432 = vadd.f32 %v2431, %v2300
    %v2433 = vadd.f32 %v2432, %v2301
    %v2434 = vsel %vm2391, %v2302, 0.0
    %v2435 = vadd.f32 %v2433, %v2434
    %2436 = vadd.xlane.f32.xlu0 %v2435
    %v2437 = vpop.xlane.xlu0 %2436
    %v2438 = vadd.f32 %v2303, %v2304
    %v2439 = vadd.f32 %v2438, %v2305
    %v2440 = vadd.f32 %v2439, %v2306
    %v2441 = vsel %vm2391, %v2307, 0.0
    %v2442 = vadd.f32 %v2440, %v2441
    %2443 = vadd.xlane.f32.xlu0 %v2442
    %v2444 = vpop.xlane.xlu0 %2443
    %v2445 = vadd.f32 %v2348, %v2349
    %v2446 = vadd.f32 %v2445, %v2350
    %v2447 = vadd.f32 %v2446, %v2351
    %v2448 = vsel %vm2391, %v2352, 0.0
    %v2449 = vadd.f32 %v2447, %v2448
    %2450 = vadd.xlane.f32.xlu0 %v2449
    %v2451 = vpop.xlane.xlu0 %2450
    %v2452 = vadd.f32 %v2353, %v2354
    %v2453 = vadd.f32 %v2452, %v2355
    %v2454 = vadd.f32 %v2453, %v2356
    %v2455 = vsel %vm2391, %v2357, 0.0
    %v2456 = vadd.f32 %v2454, %v2455
    %2457 = vadd.xlane.f32.xlu0 %v2456
    %v2458 = vpop.xlane.xlu0 %2457
    %v2459 = vadd.f32 %v2358, %v2359
    %v2460 = vadd.f32 %v2459, %v2360
    %v2461 = vadd.f32 %v2460, %v2361
    %v2462 = vsel %vm2391, %v2362, 0.0
    %v2463 = vadd.f32 %v2461, %v2462
    %2464 = vadd.xlane.f32.xlu0 %v2463
    %v2465 = vpop.xlane.xlu0 %2464
    %v2466 = vadd.f32 %v2363, %v2364
    %v2467 = vadd.f32 %v2466, %v2365
    %v2468 = vadd.f32 %v2467, %v2366
    %v2469 = vsel %vm2391, %v2367, 0.0
    %v2470 = vadd.f32 %v2468, %v2469
    %2471 = vadd.xlane.f32.xlu0 %v2470
    %v2472 = vpop.xlane.xlu0 %2471
    %v2473 = vadd.f32 %v2368, %v2369
    %v2474 = vadd.f32 %v2473, %v2370
    %v2475 = vadd.f32 %v2474, %v2371
    %v2476 = vsel %vm2391, %v2372, 0.0
    %v2477 = vadd.f32 %v2475, %v2476
    %2478 = vadd.xlane.f32.xlu0 %v2477
    %v2479 = vpop.xlane.xlu0 %2478
    %v2480 = vadd.f32 %v2373, %v2374
    %v2481 = vadd.f32 %v2480, %v2375
    %v2482 = vadd.f32 %v2481, %v2376
    %v2483 = vsel %vm2391, %v2377, 0.0
    %v2484 = vadd.f32 %v2482, %v2483
    %2485 = vadd.xlane.f32.xlu0 %v2484
    %v2486 = vpop.xlane.xlu0 %2485
    %v2487 = vadd.f32 %v2378, %v2379
    %v2488 = vadd.f32 %v2487, %v2380
    %v2489 = vadd.f32 %v2488, %v2381
    %v2490 = vsel %vm2391, %v2382, 0.0
    %v2491 = vadd.f32 %v2489, %v2490
    %2492 = vadd.xlane.f32.xlu0 %v2491
    %v2493 = vpop.xlane.xlu0 %2492
    %v2494 = vadd.f32 %v2383, %v2384
    %v2495 = vadd.f32 %v2494, %v2385
    %v2496 = vadd.f32 %v2495, %v2386
    %v2497 = vsel %vm2391, %v2387, 0.0
    %v2498 = vadd.f32 %v2496, %v2497
    %2499 = vadd.xlane.f32.xlu0 %v2498
    %v2500 = vpop.xlane.xlu0 %2499
    %v2501 = vadd.f32 %v2395, %v2402
    %v2502 = vadd.f32 %v2501, %v2409
    %v2503 = vadd.f32 %v2502, %v2416
    %v2504 = vrot.slane %v2503, 4
    %v2505 = vadd.f32 %v2503, %v2504
    %v2506 = vrot.slane %v2505, 2
    %v2507 = vadd.f32 %v2505, %v2506
    %v2508 = vrot.slane %v2507, 1
    %v2509 = vadd.f32 %v2507, %v2508
    %v2510 = vadd.f32 %v2423, %v2430
    %v2511 = vadd.f32 %v2510, %v2437
    %v2512 = vadd.f32 %v2511, %v2444
    %v2513 = vrot.slane %v2512, 4
    %v2514 = vadd.f32 %v2512, %v2513
    %v2515 = vrot.slane %v2514, 2
    %v2516 = vadd.f32 %v2514, %v2515
    %v2517 = vrot.slane %v2516, 1
    %v2518 = vadd.f32 %v2516, %v2517
    %v2519 = vadd.f32 %v2451, %v2458
    %v2520 = vadd.f32 %v2519, %v2465
    %v2521 = vadd.f32 %v2520, %v2472
    %v2522 = vrot.slane %v2521, 4
    %v2523 = vadd.f32 %v2521, %v2522
    %v2524 = vrot.slane %v2523, 2
    %v2525 = vadd.f32 %v2523, %v2524
    %v2526 = vrot.slane %v2525, 1
    %v2527 = vadd.f32 %v2525, %v2526
    %v2528 = vadd.f32 %v2479, %v2486
    %v2529 = vadd.f32 %v2528, %v2493
    %v2530 = vadd.f32 %v2529, %v2500
    %v2531 = vrot.slane %v2530, 4
    %v2532 = vadd.f32 %v2530, %v2531
    %v2533 = vrot.slane %v2532, 2
    %v2534 = vadd.f32 %v2532, %v2533
    %v2535 = vrot.slane %v2534, 1
    %v2536 = vadd.f32 %v2534, %v2535
    %v2537 = vmul.f32 %v2509, 5.4159445e-05
    %v2538 = vmul.f32 %v2518, 5.4159445e-05
    %v2539 = vmul.f32 %v2527, 5.4159445e-05
    %v2540 = vmul.f32 %v2536, 5.4159445e-05
    %v2541 = vmul.f32 %v2537, %v2537
    %v2542 = vmul.f32 %v2538, %v2538
    %v2543 = vsub.f32 %v2539, %v2541
    %v2544 = vsub.f32 %v2540, %v2542
    %v2545 = vmax.f32 %v2543, 0.0
    %v2546 = vmax.f32 %v2544, 0.0
    %v2547 = vsub.f32 %v2268, %v2537
    %v2548 = vsub.f32 %v2269, %v2537
    %v2549 = vsub.f32 %v2270, %v2537
    %v2550 = vsub.f32 %v2271, %v2537
    %v2551 = vsub.f32 %v2272, %v2537
    %v2552 = vsub.f32 %v2273, %v2537
    %v2553 = vsub.f32 %v2274, %v2537
    %v2554 = vsub.f32 %v2275, %v2537
    %v2555 = vsub.f32 %v2276, %v2537
    %v2556 = vsub.f32 %v2277, %v2537
    %v2557 = vsub.f32 %v2278, %v2537
    %v2558 = vsub.f32 %v2279, %v2537
    %v2559 = vsub.f32 %v2280, %v2537
    %v2560 = vsub.f32 %v2281, %v2537
    %v2561 = vsub.f32 %v2282, %v2537
    %v2562 = vsub.f32 %v2283, %v2537
    %v2563 = vsub.f32 %v2284, %v2537
    %v2564 = vsub.f32 %v2285, %v2537
    %v2565 = vsub.f32 %v2286, %v2537
    %v2566 = vsub.f32 %v2287, %v2537
    %v2567 = vsub.f32 %v2288, %v2538
    %v2568 = vsub.f32 %v2289, %v2538
    %v2569 = vsub.f32 %v2290, %v2538
    %v2570 = vsub.f32 %v2291, %v2538
    %v2571 = vsub.f32 %v2292, %v2538
    %v2572 = vsub.f32 %v2293, %v2538
    %v2573 = vsub.f32 %v2294, %v2538
    %v2574 = vsub.f32 %v2295, %v2538
    %v2575 = vsub.f32 %v2296, %v2538
    %v2576 = vsub.f32 %v2297, %v2538
    %v2577 = vsub.f32 %v2298, %v2538
    %v2578 = vsub.f32 %v2299, %v2538
    %v2579 = vsub.f32 %v2300, %v2538
    %v2580 = vsub.f32 %v2301, %v2538
    %v2581 = vsub.f32 %v2302, %v2538
    %v2582 = vsub.f32 %v2303, %v2538
    %v2583 = vsub.f32 %v2304, %v2538
    %v2584 = vsub.f32 %v2305, %v2538
    %v2585 = vsub.f32 %v2306, %v2538
    %v2586 = vsub.f32 %v2307, %v2538
    %v2587 = vadd.f32 %v2545, 1e-05
    %v2588 = vadd.f32 %v2546, 1e-05
    %v2589 = vrsqrt.pop %v2587
    %v2590 = vrsqrt.pop %v2588
    %v2591 = vmul.f32 %v2547, %v2589
    %v2592 = vmul.f32 %v2548, %v2589
    %v2593 = vmul.f32 %v2549, %v2589
    %v2594 = vmul.f32 %v2550, %v2589
    %v2595 = vmul.f32 %v2551, %v2589
    %v2596 = vmul.f32 %v2552, %v2589
    %v2597 = vmul.f32 %v2553, %v2589
    %v2598 = vmul.f32 %v2554, %v2589
    %v2599 = vmul.f32 %v2555, %v2589
    %v2600 = vmul.f32 %v2556, %v2589
    %v2601 = vmul.f32 %v2557, %v2589
    %v2602 = vmul.f32 %v2558, %v2589
    %v2603 = vmul.f32 %v2559, %v2589
    %v2604 = vmul.f32 %v2560, %v2589
    %v2605 = vmul.f32 %v2561, %v2589
    %v2606 = vmul.f32 %v2562, %v2589
    %v2607 = vmul.f32 %v2563, %v2589
    %v2608 = vmul.f32 %v2564, %v2589
    %v2609 = vmul.f32 %v2565, %v2589
    %v2610 = vmul.f32 %v2566, %v2589
    %v2611 = vmul.f32 %v2567, %v2590
    %v2612 = vmul.f32 %v2568, %v2590
    %v2613 = vmul.f32 %v2569, %v2590
    %v2614 = vmul.f32 %v2570, %v2590
    %v2615 = vmul.f32 %v2571, %v2590
    %v2616 = vmul.f32 %v2572, %v2590
    %v2617 = vmul.f32 %v2573, %v2590
    %v2618 = vmul.f32 %v2574, %v2590
    %v2619 = vmul.f32 %v2575, %v2590
    %v2620 = vmul.f32 %v2576, %v2590
    %v2621 = vmul.f32 %v2577, %v2590
    %v2622 = vmul.f32 %v2578, %v2590
    %v2623 = vmul.f32 %v2579, %v2590
    %v2624 = vmul.f32 %v2580, %v2590
    %v2625 = vmul.f32 %v2581, %v2590
    %v2626 = vmul.f32 %v2582, %v2590
    %v2627 = vmul.f32 %v2583, %v2590
    %v2628 = vmul.f32 %v2584, %v2590
    %v2629 = vmul.f32 %v2585, %v2590
    %v2630 = vmul.f32 %v2586, %v2590
    %v2631 = vmul.f32 %v2591, %v2308
    %v2632 = vmul.f32 %v2592, %v2309
    %v2633 = vmul.f32 %v2593, %v2310
    %v2634 = vmul.f32 %v2594, %v2311
    %v2635 = vmul.f32 %v2595, %v2312
    %v2636 = vmul.f32 %v2596, %v2313
    %v2637 = vmul.f32 %v2597, %v2314
    %v2638 = vmul.f32 %v2598, %v2315
    %v2639 = vmul.f32 %v2599, %v2316
    %v2640 = vmul.f32 %v2600, %v2317
    %v2641 = vmul.f32 %v2601, %v2318
    %v2642 = vmul.f32 %v2602, %v2319
    %v2643 = vmul.f32 %v2603, %v2320
    %v2644 = vmul.f32 %v2604, %v2321
    %v2645 = vmul.f32 %v2605, %v2322
    %v2646 = vmul.f32 %v2606, %v2323
    %v2647 = vmul.f32 %v2607, %v2324
    %v2648 = vmul.f32 %v2608, %v2325
    %v2649 = vmul.f32 %v2609, %v2326
    %v2650 = vmul.f32 %v2610, %v2327
    %v2651 = vmul.f32 %v2611, %v2308
    %v2652 = vmul.f32 %v2612, %v2309
    %v2653 = vmul.f32 %v2613, %v2310
    %v2654 = vmul.f32 %v2614, %v2311
    %v2655 = vmul.f32 %v2615, %v2312
    %v2656 = vmul.f32 %v2616, %v2313
    %v2657 = vmul.f32 %v2617, %v2314
    %v2658 = vmul.f32 %v2618, %v2315
    %v2659 = vmul.f32 %v2619, %v2316
    %v2660 = vmul.f32 %v2620, %v2317
    %v2661 = vmul.f32 %v2621, %v2318
    %v2662 = vmul.f32 %v2622, %v2319
    %v2663 = vmul.f32 %v2623, %v2320
    %v2664 = vmul.f32 %v2624, %v2321
    %v2665 = vmul.f32 %v2625, %v2322
    %v2666 = vmul.f32 %v2626, %v2323
    %v2667 = vmul.f32 %v2627, %v2324
    %v2668 = vmul.f32 %v2628, %v2325
    %v2669 = vmul.f32 %v2629, %v2326
    %v2670 = vmul.f32 %v2630, %v2327
    %v2671 = vadd.f32 %v2631, %v2328
    %v2672 = vadd.f32 %v2632, %v2329
    %v2673 = vadd.f32 %v2633, %v2330
    %v2674 = vadd.f32 %v2634, %v2331
    %v2675 = vadd.f32 %v2635, %v2332
    %v2676 = vadd.f32 %v2636, %v2333
    %v2677 = vadd.f32 %v2637, %v2334
    %v2678 = vadd.f32 %v2638, %v2335
    %v2679 = vadd.f32 %v2639, %v2336
    %v2680 = vadd.f32 %v2640, %v2337
    %v2681 = vadd.f32 %v2641, %v2338
    %v2682 = vadd.f32 %v2642, %v2339
    %v2683 = vadd.f32 %v2643, %v2340
    %v2684 = vadd.f32 %v2644, %v2341
    %v2685 = vadd.f32 %v2645, %v2342
    %v2686 = vadd.f32 %v2646, %v2343
    %v2687 = vadd.f32 %v2647, %v2344
    %v2688 = vadd.f32 %v2648, %v2345
    %v2689 = vadd.f32 %v2649, %v2346
    %v2690 = vadd.f32 %v2650, %v2347
    %v2691 = vadd.f32 %v2651, %v2328
    %v2692 = vadd.f32 %v2652, %v2329
    %v2693 = vadd.f32 %v2653, %v2330
    %v2694 = vadd.f32 %v2654, %v2331
    %v2695 = vadd.f32 %v2655, %v2332
    %v2696 = vadd.f32 %v2656, %v2333
    %v2697 = vadd.f32 %v2657, %v2334
    %v2698 = vadd.f32 %v2658, %v2335
    %v2699 = vadd.f32 %v2659, %v2336
    %v2700 = vadd.f32 %v2660, %v2337
    %v2701 = vadd.f32 %v2661, %v2338
    %v2702 = vadd.f32 %v2662, %v2339
    %v2703 = vadd.f32 %v2663, %v2340
    %v2704 = vadd.f32 %v2664, %v2341
    %v2705 = vadd.f32 %v2665, %v2342
    %v2706 = vadd.f32 %v2666, %v2343
    %v2707 = vadd.f32 %v2667, %v2344
    %v2708 = vadd.f32 %v2668, %v2345
    %v2709 = vadd.f32 %v2669, %v2346
    %v2710 = vadd.f32 %v2670, %v2347
    %v2711 = vld [vmem:[%s7] sm:$0xf]
    %v2712 = vld [vmem:[%s7 + $0x4] sm:$0xf]
    %v2713 = vld [vmem:[%s7 + $0x8] sm:$0xf]
    %v2714 = vld [vmem:[%s7 + $0xc] sm:$0xf]
    %v2715 = vld [vmem:[%s7 + $0x10] sm:$0xf]
    %v2716 = vld [vmem:[%s7 + $0x14] sm:$0xf]
    %v2717 = vld [vmem:[%s7 + $0x18] sm:$0xf]
    %v2718 = vld [vmem:[%s7 + $0x1c] sm:$0xf]
    %v2719 = vld [vmem:[%s7 + $0x20] sm:$0xf]
    %v2720 = vld [vmem:[%s7 + $0x24] sm:$0xf]
    %v2721 = vld [vmem:[%s7 + $0x28] sm:$0xf]
    %v2722 = vld [vmem:[%s7 + $0x2c] sm:$0xf]
    %v2723 = vld [vmem:[%s7 + $0x30] sm:$0xf]
    %v2724 = vld [vmem:[%s7 + $0x34] sm:$0xf]
    %v2725 = vld [vmem:[%s7 + $0x38] sm:$0xf]
    %v2726 = vld [vmem:[%s7 + $0x3c] sm:$0xf]
    %v2727 = vld [vmem:[%s7 + $0x40] sm:$0xf]
    %v2728 = vld [vmem:[%s7 + $0x44] sm:$0xf]
    %v2729 = vld [vmem:[%s7 + $0x48] sm:$0xf]
    %v2730 = vld [vmem:[%s7 + $0x4c] sm:$0xf]
    %v2731 = vld [vmem:[%s7 + $0x50] sm:$0xf]
    %v2732 = vld [vmem:[%s7 + $0x54] sm:$0xf]
    %v2733 = vld [vmem:[%s7 + $0x58] sm:$0xf]
    %v2734 = vld [vmem:[%s7 + $0x5c] sm:$0xf]
    %v2735 = vld [vmem:[%s7 + $0x60] sm:$0xf]
    %v2736 = vld [vmem:[%s7 + $0x64] sm:$0xf]
    %v2737 = vld [vmem:[%s7 + $0x68] sm:$0xf]
    %v2738 = vld [vmem:[%s7 + $0x6c] sm:$0xf]
    %v2739 = vld [vmem:[%s7 + $0x70] sm:$0xf]
    %v2740 = vld [vmem:[%s7 + $0x74] sm:$0xf]
    %v2741 = vld [vmem:[%s7 + $0x78] sm:$0xf]
    %v2742 = vld [vmem:[%s7 + $0x7c] sm:$0xf]
    %v2743 = vpack.c.bf16 %v2676, %v2671
    %v2744 = vpack.c.bf16 %v2677, %v2672
    %v2745 = vpack.c.bf16 %v2678, %v2673
    %v2746 = vpack.c.bf16 %v2679, %v2674
    %v2747 = vpack.c.bf16 %v2680, %v2675
    %v2748 = vpack.c.bf16 %v2686, %v2681
    %v2749 = vpack.c.bf16 %v2687, %v2682
    %v2750 = vpack.c.bf16 %v2688, %v2683
    %v2751 = vpack.c.bf16 %v2689, %v2684
    %v2752 = vpack.c.bf16 %v2690, %v2685
    %v2753 = vpack.c.bf16 %v2696, %v2691
    %v2754 = vpack.c.bf16 %v2697, %v2692
    %v2755 = vpack.c.bf16 %v2698, %v2693
    %v2756 = vpack.c.bf16 %v2699, %v2694
    %v2757 = vpack.c.bf16 %v2700, %v2695
    %v2758 = vpack.c.bf16 %v2706, %v2701
    %v2759 = vpack.c.bf16 %v2707, %v2702
    %v2760 = vpack.c.bf16 %v2708, %v2703
    %v2761 = vpack.c.bf16 %v2709, %v2704
    %v2762 = vpack.c.bf16 %v2710, %v2705
    %v2795 = vunpack.c.l.b16 %v2711
    %v2796 = vunpack.c.l.b16 %v2712
    %v2797 = vunpack.c.l.b16 %v2713
    %v2798 = vunpack.c.l.b16 %v2714
    %v2799 = vunpack.c.l.b16 %v2715
    %v2800 = vunpack.c.l.b16 %v2716
    %v2801 = vunpack.c.l.b16 %v2717
    %v2802 = vunpack.c.l.b16 %v2718
    %v2803 = vunpack.c.l.b16 %v2719
    %v2804 = vunpack.c.l.b16 %v2720
    %v2805 = vunpack.c.l.b16 %v2721
    %v2806 = vunpack.c.l.b16 %v2722
    %v2807 = vunpack.c.l.b16 %v2723
    %v2808 = vunpack.c.l.b16 %v2724
    %v2809 = vunpack.c.l.b16 %v2725
    %v2810 = vunpack.c.l.b16 %v2726
    %v2811 = vunpack.c.l.b16 %v2727
    %v2812 = vunpack.c.l.b16 %v2728
    %v2813 = vunpack.c.l.b16 %v2729
    %v2814 = vunpack.c.l.b16 %v2730
    %v2815 = vunpack.c.l.b16 %v2731
    %v2816 = vunpack.c.l.b16 %v2732
    %v2817 = vunpack.c.l.b16 %v2733
    %v2818 = vunpack.c.l.b16 %v2734
    %v2819 = vunpack.c.l.b16 %v2735
    %v2820 = vunpack.c.l.b16 %v2736
    %v2821 = vunpack.c.l.b16 %v2737
    %v2822 = vunpack.c.l.b16 %v2738
    %v2823 = vunpack.c.l.b16 %v2739
    %v2824 = vunpack.c.l.b16 %v2740
    %v2825 = vunpack.c.l.b16 %v2741
    %v2826 = vunpack.c.l.b16 %v2742
    %v2827 = vpack.c.b16 %v2796, %v2795
    %v2828 = vpack.c.b16 %v2798, %v2797
    %v2829 = vpack.c.b16 %v2800, %v2799
    %v2830 = vpack.c.b16 %v2802, %v2801
    %v2831 = vpack.c.b16 %v2804, %v2803
    %v2832 = vpack.c.b16 %v2806, %v2805
    %v2833 = vpack.c.b16 %v2808, %v2807
    %v2834 = vpack.c.b16 %v2810, %v2809
    %v2835 = vpack.c.b16 %v2812, %v2811
    %v2836 = vpack.c.b16 %v2814, %v2813
    %v2837 = vpack.c.b16 %v2816, %v2815
    %v2838 = vpack.c.b16 %v2818, %v2817
    %v2839 = vpack.c.b16 %v2820, %v2819
    %v2840 = vpack.c.b16 %v2822, %v2821
    %v2841 = vpack.c.b16 %v2824, %v2823
    %v2842 = vpack.c.b16 %v2826, %v2825
    %vm2843 = vcmask 261120
    %v2845 = vsel %vm2843, %v2827, 0
    %v2848 = vsel %vm2843, %v2828, 0
    %v2851 = vsel %vm2843, %v2829, 0
    %v2854 = vsel %vm2843, %v2830, 0
    %v2857 = vsel %vm2843, %v2831, 0
    %v2860 = vsel %vm2843, %v2832, 0
    %v2863 = vsel %vm2843, %v2833, 0
    %v2866 = vsel %vm2843, %v2834, 0
    %v2869 = vsel %vm2843, %v2835, 0
    %v2872 = vsel %vm2843, %v2836, 0
    %v2875 = vsel %vm2843, %v2837, 0
    %v2878 = vsel %vm2843, %v2838, 0
    %v2881 = vsel %vm2843, %v2839, 0
    %v2884 = vsel %vm2843, %v2840, 0
    %v2887 = vsel %vm2843, %v2841, 0
    %v2890 = vsel %vm2843, %v2842, 0
    %2892 = vmatprep.subr.bf16.mxu0 %v2744
    %2893 = vmatpush1.bf16.msra.mxu0 %v2743
    %2894 = vmatprep.subr.bf16.mxu0 %v2749
    %2895 = vmatpush1.bf16.msra.mxu0 %v2748
    %2896 = vmatprep.subr.bf16.mxu0 0
    %2897 = vmatpush1.bf16.msra.mxu0 0
    %2898 = vmatprep.subr.bf16.mxu0 0
    %2899 = vmatpush1.bf16.msra.mxu0 0
    %2900 = vmatprep.subr.bf16.mxu0 0
    %2901 = vmatpush1.bf16.msra.mxu0 0
    %2902 = vmatprep.subr.bf16.mxu0 0
    %2903 = vmatpush1.bf16.msra.mxu0 0
    %2904 = vmatprep.subr.bf16.mxu0 0
    %2905 = vmatpush1.bf16.msra.mxu0 0
    %2906 = vmatprep.subr.bf16.mxu0 0
    %2907 = vmatpush1.bf16.msra.mxu0 0
    %2908 = vmatprep.subr.bf16.mxu0 0
    %2909 = vmatpush1.bf16.msra.mxu0 0
    %2910 = vmatprep.subr.bf16.mxu0 0
    %2911 = vmatpush1.bf16.msra.mxu0 0
    %2912 = vmatprep.subr.bf16.mxu0 0
    %2913 = vmatpush1.bf16.msra.mxu0 0
    %2914 = vmatprep.subr.bf16.mxu0 0
    %2915 = vmatpush1.bf16.msra.mxu0 0
    %2916 = vmatprep.subr.bf16.mxu0 0
    %2917 = vmatpush1.bf16.msra.mxu0 0
    %2918 = vmatprep.subr.bf16.mxu0 0
    %2919 = vmatpush1.bf16.msra.mxu0 0
    %2920 = vmatprep.subr.bf16.mxu0 0
    %2921 = vmatpush1.bf16.msra.mxu0 0
    %2922 = vmatprep.subr.bf16.mxu0 0
    %2923 = vmatpush1.bf16.msra.mxu0 0
    %2924 = vmatprep.mubr.bf16.mxu0 0
    %2925 = vmatmul.mubr.bf16.gmra.mrb[0].mxu0 %v2845
    %v2926 = vpop.f32.mrb[0].mxu0
    %v2927 = vadd.f32 0.0, %v2926
    %v2928 = vpop.f32.mrb[0].mxu0
    %v2929 = vadd.f32 0.0, %v2928
    %v2930 = vpop.f32.mrb[0].mxu0
    %v2931 = vadd.f32 0.0, %v2930
    %v2932 = vpop.f32.mrb[0].mxu0
    %v2933 = vadd.f32 0.0, %v2932
    %2934 = vmatprep.mubr.bf16.mxu0 0
    %2935 = vmatmul.mubr.bf16.gmra.mrb[0].mxu0 %v2848
    %v2936 = vpop.f32.mrb[0].mxu0
    %v2937 = vadd.f32 0.0, %v2936
    %v2938 = vpop.f32.mrb[0].mxu0
    %v2939 = vadd.f32 0.0, %v2938
    %v2940 = vpop.f32.mrb[0].mxu0
    %v2941 = vadd.f32 0.0, %v2940
    %v2942 = vpop.f32.mrb[0].mxu0
    %v2943 = vadd.f32 0.0, %v2942
    %2944 = vmatprep.mubr.bf16.mxu0 0
    %2945 = vmatmul.mubr.bf16.gmra.mrb[0].mxu0 %v2851
    %v2946 = vpop.f32.mrb[0].mxu0
    %v2947 = vadd.f32 0.0, %v2946
    %v2948 = vpop.f32.mrb[0].mxu0
    %v2949 = vadd.f32 0.0, %v2948
    %v2950 = vpop.f32.mrb[0].mxu0
    %v2951 = vadd.f32 0.0, %v2950
    %v2952 = vpop.f32.mrb[0].mxu0
    %v2953 = vadd.f32 0.0, %v2952
    %2954 = vmatprep.mubr.bf16.mxu0 0
    %2955 = vmatmul.mubr.bf16.gmra.mrb[0].mxu0 %v2854
    %v2956 = vpop.f32.mrb[0].mxu0
    %v2957 = vadd.f32 0.0, %v2956
    %v2958 = vpop.f32.mrb[0].mxu0
    %v2959 = vadd.f32 0.0, %v2958
    %v2960 = vpop.f32.mrb[0].mxu0
    %v2961 = vadd.f32 0.0, %v2960
    %v2962 = vpop.f32.mrb[0].mxu0
    %v2963 = vadd.f32 0.0, %v2962
    %2964 = vmatprep.mubr.bf16.mxu0 0
    %2965 = vmatmul.mubr.bf16.gmra.mrb[0].mxu0 %v2857
    %v2966 = vpop.f32.mrb[0].mxu0
    %v2967 = vadd.f32 0.0, %v2966
    %v2968 = vpop.f32.mrb[0].mxu0
    %v2969 = vadd.f32 0.0, %v2968
    %v2970 = vpop.f32.mrb[0].mxu0
    %v2971 = vadd.f32 0.0, %v2970
    %v2972 = vpop.f32.mrb[0].mxu0
    %v2973 = vadd.f32 0.0, %v2972
    %2974 = vmatprep.mubr.bf16.mxu0 0
    %2975 = vmatmul.mubr.bf16.gmra.mrb[0].mxu0 %v2860
    %v2976 = vpop.f32.mrb[0].mxu0
    %v2977 = vadd.f32 0.0, %v2976
    %v2978 = vpop.f32.mrb[0].mxu0
    %v2979 = vadd.f32 0.0, %v2978
    %v2980 = vpop.f32.mrb[0].mxu0
    %v2981 = vadd.f32 0.0, %v2980
    %v2982 = vpop.f32.mrb[0].mxu0
    %v2983 = vadd.f32 0.0, %v2982
    %2984 = vmatprep.mubr.bf16.mxu0 0
    %2985 = vmatmul.mubr.bf16.gmra.mrb[0].mxu0 %v2863
    %v2986 = vpop.f32.mrb[0].mxu0
    %v2987 = vadd.f32 0.0, %v2986
    %v2988 = vpop.f32.mrb[0].mxu0
    %v2989 = vadd.f32 0.0, %v2988
    %v2990 = vpop.f32.mrb[0].mxu0
    %v2991 = vadd.f32 0.0, %v2990
    %v2992 = vpop.f32.mrb[0].mxu0
    %v2993 = vadd.f32 0.0, %v2992
    %2994 = vmatprep.mubr.bf16.mxu0 0
    %2995 = vmatmul.mubr.bf16.gmra.mrb[0].mxu0 %v2866
    %v2996 = vpop.f32.mrb[0].mxu0
    %v2997 = vadd.f32 0.0, %v2996
    %v2998 = vpop.f32.mrb[0].mxu0
    %v2999 = vadd.f32 0.0, %v2998
    %v3000 = vpop.f32.mrb[0].mxu0
    %v3001 = vadd.f32 0.0, %v3000
    %v3002 = vpop.f32.mrb[0].mxu0
    %v3003 = vadd.f32 0.0, %v3002
    %3004 = vmatprep.mubr.bf16.mxu0 0
    %3005 = vmatmul.mubr.bf16.gmra.mrb[0].mxu0 %v2869
    %v3006 = vpop.f32.mrb[0].mxu0
    %v3007 = vadd.f32 0.0, %v3006
    %v3008 = vpop.f32.mrb[0].mxu0
    %v3009 = vadd.f32 0.0, %v3008
    %v3010 = vpop.f32.mrb[0].mxu0
    %v3011 = vadd.f32 0.0, %v3010
    %v3012 = vpop.f32.mrb[0].mxu0
    %v3013 = vadd.f32 0.0, %v3012
    %3014 = vmatprep.mubr.bf16.mxu0 0
    %3015 = vmatmul.mubr.bf16.gmra.mrb[0].mxu0 %v2872
    %v3016 = vpop.f32.mrb[0].mxu0
    %v3017 = vadd.f32 0.0, %v3016
    %v3018 = vpop.f32.mrb[0].mxu0
    %v3019 = vadd.f32 0.0, %v3018
    %v3020 = vpop.f32.mrb[0].mxu0
    %v3021 = vadd.f32 0.0, %v3020
    %v3022 = vpop.f32.mrb[0].mxu0
    %v3023 = vadd.f32 0.0, %v3022
    %3024 = vmatprep.mubr.bf16.mxu0 0
    %3025 = vmatmul.mubr.bf16.gmra.mrb[0].mxu0 %v2875
    %v3026 = vpop.f32.mrb[0].mxu0
    %v3027 = vadd.f32 0.0, %v3026
    %v3028 = vpop.f32.mrb[0].mxu0
    %v3029 = vadd.f32 0.0, %v3028
    %v3030 = vpop.f32.mrb[0].mxu0
    %v3031 = vadd.f32 0.0, %v3030
    %v3032 = vpop.f32.mrb[0].mxu0
    %v3033 = vadd.f32 0.0, %v3032
    %3034 = vmatprep.mubr.bf16.mxu0 0
    %3035 = vmatmul.mubr.bf16.gmra.mrb[0].mxu0 %v2878
    %v3036 = vpop.f32.mrb[0].mxu0
    %v3037 = vadd.f32 0.0, %v3036
    %v3038 = vpop.f32.mrb[0].mxu0
    %v3039 = vadd.f32 0.0, %v3038
    %v3040 = vpop.f32.mrb[0].mxu0
    %v3041 = vadd.f32 0.0, %v3040
    %v3042 = vpop.f32.mrb[0].mxu0
    %v3043 = vadd.f32 0.0, %v3042
    %3044 = vmatprep.mubr.bf16.mxu0 0
    %3045 = vmatmul.mubr.bf16.gmra.mrb[0].mxu0 %v2881
    %v3046 = vpop.f32.mrb[0].mxu0
    %v3047 = vadd.f32 0.0, %v3046
    %v3048 = vpop.f32.mrb[0].mxu0
    %v3049 = vadd.f32 0.0, %v3048
    %v3050 = vpop.f32.mrb[0].mxu0
    %v3051 = vadd.f32 0.0, %v3050
    %v3052 = vpop.f32.mrb[0].mxu0
    %v3053 = vadd.f32 0.0, %v3052
    %3054 = vmatprep.mubr.bf16.mxu0 0
    %3055 = vmatmul.mubr.bf16.gmra.mrb[0].mxu0 %v2884
    %v3056 = vpop.f32.mrb[0].mxu0
    %v3057 = vadd.f32 0.0, %v3056
    %v3058 = vpop.f32.mrb[0].mxu0
    %v3059 = vadd.f32 0.0, %v3058
    %v3060 = vpop.f32.mrb[0].mxu0
    %v3061 = vadd.f32 0.0, %v3060
    %v3062 = vpop.f32.mrb[0].mxu0
    %v3063 = vadd.f32 0.0, %v3062
    %3064 = vmatprep.mubr.bf16.mxu0 0
    %3065 = vmatmul.mubr.bf16.gmra.mrb[0].mxu0 %v2887
    %v3066 = vpop.f32.mrb[0].mxu0
    %v3067 = vadd.f32 0.0, %v3066
    %v3068 = vpop.f32.mrb[0].mxu0
    %v3069 = vadd.f32 0.0, %v3068
    %v3070 = vpop.f32.mrb[0].mxu0
    %v3071 = vadd.f32 0.0, %v3070
    %v3072 = vpop.f32.mrb[0].mxu0
    %v3073 = vadd.f32 0.0, %v3072
    %3074 = vmatprep.mubr.bf16.mxu0 0
    %3075 = vmatmul.mubr.bf16.gmra.mrb[0].mxu0 %v2890
    %v3076 = vpop.f32.mrb[0].mxu0
    %v3077 = vadd.f32 0.0, %v3076
    %v3078 = vpop.f32.mrb[0].mxu0
    %v3079 = vadd.f32 0.0, %v3078
    %v3080 = vpop.f32.mrb[0].mxu0
    %v3081 = vadd.f32 0.0, %v3080
    %v3082 = vpop.f32.mrb[0].mxu0
    %v3083 = vadd.f32 0.0, %v3082
    %3084 = vdwg.mxu0
    %3085 = vmatprep.subr.bf16.mxu0 %v2746
    %3086 = vmatpush1.bf16.msra.mxu0 %v2745
    %3087 = vmatprep.subr.bf16.mxu0 %v2751
    %3088 = vmatpush1.bf16.msra.mxu0 %v2750
    %3089 = vmatprep.subr.bf16.mxu0 0
    %3090 = vmatpush1.bf16.msra.mxu0 0
    %3091 = vmatprep.subr.bf16.mxu0 0
    %3092 = vmatpush1.bf16.msra.mxu0 0
    %3093 = vmatprep.subr.bf16.mxu0 0
    %3094 = vmatpush1.bf16.msra.mxu0 0
    %3095 = vmatprep.subr.bf16.mxu0 0
    %3096 = vmatpush1.bf16.msra.mxu0 0
    %3097 = vmatprep.subr.bf16.mxu0 0
    %3098 = vmatpush1.bf16.msra.mxu0 0
    %3099 = vmatprep.subr.bf16.mxu0 0
    %3100 = vmatpush1.bf16.msra.mxu0 0
    %3101 = vmatprep.subr.bf16.mxu0 0
    %3102 = vmatpush1.bf16.msra.mxu0 0
    %3103 = vmatprep.subr.bf16.mxu0 0
    %3104 = vmatpush1.bf16.msra.mxu0 0
    %3105 = vmatprep.subr.bf16.mxu0 0
    %3106 = vmatpush1.bf16.msra.mxu0 0
    %3107 = vmatprep.subr.bf16.mxu0 0
    %3108 = vmatpush1.bf16.msra.mxu0 0
    %3109 = vmatprep.subr.bf16.mxu0 0
    %3110 = vmatpush1.bf16.msra.mxu0 0
    %3111 = vmatprep.subr.bf16.mxu0 0
    %3112 = vmatpush1.bf16.msra.mxu0 0
    %3113 = vmatprep.subr.bf16.mxu0 0
    %3114 = vmatpush1.bf16.msra.mxu0 0
    %3115 = vmatprep.subr.bf16.mxu0 0
    %3116 = vmatpush1.bf16.msra.mxu0 0
    %3117 = vmatprep.mubr.bf16.mxu0 0
    %3118 = vmatmul.mubr.bf16.gmra.mrb[0].mxu0 %v2845
    %v3119 = vpop.f32.mrb[0].mxu0
    %v3120 = vadd.f32 0.0, %v3119
    %v3121 = vpop.f32.mrb[0].mxu0
    %v3122 = vadd.f32 0.0, %v3121
    %v3123 = vpop.f32.mrb[0].mxu0
    %v3124 = vadd.f32 0.0, %v3123
    %v3125 = vpop.f32.mrb[0].mxu0
    %v3126 = vadd.f32 0.0, %v3125
    %3127 = vmatprep.mubr.bf16.mxu0 0
    %3128 = vmatmul.mubr.bf16.gmra.mrb[0].mxu0 %v2848
    %v3129 = vpop.f32.mrb[0].mxu0
    %v3130 = vadd.f32 0.0, %v3129
    %v3131 = vpop.f32.mrb[0].mxu0
    %v3132 = vadd.f32 0.0, %v3131
    %v3133 = vpop.f32.mrb[0].mxu0
    %v3134 = vadd.f32 0.0, %v3133
    %v3135 = vpop.f32.mrb[0].mxu0
    %v3136 = vadd.f32 0.0, %v3135
    %3137 = vmatprep.mubr.bf16.mxu0 0
    %3138 = vmatmul.mubr.bf16.gmra.mrb[0].mxu0 %v2851
    %v3139 = vpop.f32.mrb[0].mxu0
    %v3140 = vadd.f32 0.0, %v3139
    %v3141 = vpop.f32.mrb[0].mxu0
    %v3142 = vadd.f32 0.0, %v3141
    %v3143 = vpop.f32.mrb[0].mxu0
    %v3144 = vadd.f32 0.0, %v3143
    %v3145 = vpop.f32.mrb[0].mxu0
    %v3146 = vadd.f32 0.0, %v3145
    %3147 = vmatprep.mubr.bf16.mxu0 0
    %3148 = vmatmul.mubr.bf16.gmra.mrb[0].mxu0 %v2854
    %v3149 = vpop.f32.mrb[0].mxu0
    %v3150 = vadd.f32 0.0, %v3149
    %v3151 = vpop.f32.mrb[0].mxu0
    %v3152 = vadd.f32 0.0, %v3151
    %v3153 = vpop.f32.mrb[0].mxu0
    %v3154 = vadd.f32 0.0, %v3153
    %v3155 = vpop.f32.mrb[0].mxu0
    %v3156 = vadd.f32 0.0, %v3155
    %3157 = vmatprep.mubr.bf16.mxu0 0
    %3158 = vmatmul.mubr.bf16.gmra.mrb[0].mxu0 %v2857
    %v3159 = vpop.f32.mrb[0].mxu0
    %v3160 = vadd.f32 0.0, %v3159
    %v3161 = vpop.f32.mrb[0].mxu0
    %v3162 = vadd.f32 0.0, %v3161
    %v3163 = vpop.f32.mrb[0].mxu0
    %v3164 = vadd.f32 0.0, %v3163
    %v3165 = vpop.f32.mrb[0].mxu0
    %v3166 = vadd.f32 0.0, %v3165
    %3167 = vmatprep.mubr.bf16.mxu0 0
    %3168 = vmatmul.mubr.bf16.gmra.mrb[0].mxu0 %v2860
    %v3169 = vpop.f32.mrb[0].mxu0
    %v3170 = vadd.f32 0.0, %v3169
    %v3171 = vpop.f32.mrb[0].mxu0
    %v3172 = vadd.f32 0.0, %v3171
    %v3173 = vpop.f32.mrb[0].mxu0
    %v3174 = vadd.f32 0.0, %v3173
    %v3175 = vpop.f32.mrb[0].mxu0
    %v3176 = vadd.f32 0.0, %v3175
    %3177 = vmatprep.mubr.bf16.mxu0 0
    %3178 = vmatmul.mubr.bf16.gmra.mrb[0].mxu0 %v2863
    %v3179 = vpop.f32.mrb[0].mxu0
    %v3180 = vadd.f32 0.0, %v3179
    %v3181 = vpop.f32.mrb[0].mxu0
    %v3182 = vadd.f32 0.0, %v3181
    %v3183 = vpop.f32.mrb[0].mxu0
    %v3184 = vadd.f32 0.0, %v3183
    %v3185 = vpop.f32.mrb[0].mxu0
    %v3186 = vadd.f32 0.0, %v3185
    %3187 = vmatprep.mubr.bf16.mxu0 0
    %3188 = vmatmul.mubr.bf16.gmra.mrb[0].mxu0 %v2866
    %v3189 = vpop.f32.mrb[0].mxu0
    %v3190 = vadd.f32 0.0, %v3189
    %v3191 = vpop.f32.mrb[0].mxu0
    %v3192 = vadd.f32 0.0, %v3191
    %v3193 = vpop.f32.mrb[0].mxu0
    %v3194 = vadd.f32 0.0, %v3193
    %v3195 = vpop.f32.mrb[0].mxu0
    %v3196 = vadd.f32 0.0, %v3195
    %3197 = vmatprep.mubr.bf16.mxu0 0
    %3198 = vmatmul.mubr.bf16.gmra.mrb[0].mxu0 %v2869
    %v3199 = vpop.f32.mrb[0].mxu0
    %v3200 = vadd.f32 0.0, %v3199
    %v3201 = vpop.f32.mrb[0].mxu0
    %v3202 = vadd.f32 0.0, %v3201
    %v3203 = vpop.f32.mrb[0].mxu0
    %v3204 = vadd.f32 0.0, %v3203
    %v3205 = vpop.f32.mrb[0].mxu0
    %v3206 = vadd.f32 0.0, %v3205
    %3207 = vmatprep.mubr.bf16.mxu0 0
    %3208 = vmatmul.mubr.bf16.gmra.mrb[0].mxu0 %v2872
    %v3209 = vpop.f32.mrb[0].mxu0
    %v3210 = vadd.f32 0.0, %v3209
    %v3211 = vpop.f32.mrb[0].mxu0
    %v3212 = vadd.f32 0.0, %v3211
    %v3213 = vpop.f32.mrb[0].mxu0
    %v3214 = vadd.f32 0.0, %v3213
    %v3215 = vpop.f32.mrb[0].mxu0
    %v3216 = vadd.f32 0.0, %v3215
    %3217 = vmatprep.mubr.bf16.mxu0 0
    %3218 = vmatmul.mubr.bf16.gmra.mrb[0].mxu0 %v2875
    %v3219 = vpop.f32.mrb[0].mxu0
    %v3220 = vadd.f32 0.0, %v3219
    %v3221 = vpop.f32.mrb[0].mxu0
    %v3222 = vadd.f32 0.0, %v3221
    %v3223 = vpop.f32.mrb[0].mxu0
    %v3224 = vadd.f32 0.0, %v3223
    %v3225 = vpop.f32.mrb[0].mxu0
    %v3226 = vadd.f32 0.0, %v3225
    %3227 = vmatprep.mubr.bf16.mxu0 0
    %3228 = vmatmul.mubr.bf16.gmra.mrb[0].mxu0 %v2878
    %v3229 = vpop.f32.mrb[0].mxu0
    %v3230 = vadd.f32 0.0, %v3229
    %v3231 = vpop.f32.mrb[0].mxu0
    %v3232 = vadd.f32 0.0, %v3231
    %v3233 = vpop.f32.mrb[0].mxu0
    %v3234 = vadd.f32 0.0, %v3233
    %v3235 = vpop.f32.mrb[0].mxu0
    %v3236 = vadd.f32 0.0, %v3235
    %3237 = vmatprep.mubr.bf16.mxu0 0
    %3238 = vmatmul.mubr.bf16.gmra.mrb[0].mxu0 %v2881
    %v3239 = vpop.f32.mrb[0].mxu0
    %v3240 = vadd.f32 0.0, %v3239
    %v3241 = vpop.f32.mrb[0].mxu0
    %v3242 = vadd.f32 0.0, %v3241
    %v3243 = vpop.f32.mrb[0].mxu0
    %v3244 = vadd.f32 0.0, %v3243
    %v3245 = vpop.f32.mrb[0].mxu0
    %v3246 = vadd.f32 0.0, %v3245
    %3247 = vmatprep.mubr.bf16.mxu0 0
    %3248 = vmatmul.mubr.bf16.gmra.mrb[0].mxu0 %v2884
    %v3249 = vpop.f32.mrb[0].mxu0
    %v3250 = vadd.f32 0.0, %v3249
    %v3251 = vpop.f32.mrb[0].mxu0
    %v3252 = vadd.f32 0.0, %v3251
    %v3253 = vpop.f32.mrb[0].mxu0
    %v3254 = vadd.f32 0.0, %v3253
    %v3255 = vpop.f32.mrb[0].mxu0
    %v3256 = vadd.f32 0.0, %v3255
    %3257 = vmatprep.mubr.bf16.mxu0 0
    %3258 = vmatmul.mubr.bf16.gmra.mrb[0].mxu0 %v2887
    %v3259 = vpop.f32.mrb[0].mxu0
    %v3260 = vadd.f32 0.0, %v3259
    %v3261 = vpop.f32.mrb[0].mxu0
    %v3262 = vadd.f32 0.0, %v3261
    %v3263 = vpop.f32.mrb[0].mxu0
    %v3264 = vadd.f32 0.0, %v3263
    %v3265 = vpop.f32.mrb[0].mxu0
    %v3266 = vadd.f32 0.0, %v3265
    %3267 = vmatprep.mubr.bf16.mxu0 0
    %3268 = vmatmul.mubr.bf16.gmra.mrb[0].mxu0 %v2890
    %v3269 = vpop.f32.mrb[0].mxu0
    %v3270 = vadd.f32 0.0, %v3269
    %v3271 = vpop.f32.mrb[0].mxu0
    %v3272 = vadd.f32 0.0, %v3271
    %v3273 = vpop.f32.mrb[0].mxu0
    %v3274 = vadd.f32 0.0, %v3273
    %v3275 = vpop.f32.mrb[0].mxu0
    %v3276 = vadd.f32 0.0, %v3275
    %3277 = vdwg.mxu0
    %3278 = vmatprep.subr.bf16.mxu0 0
    %3279 = vmatpush1.bf16.msra.mxu0 %v2747
    %3280 = vmatprep.subr.bf16.mxu0 0
    %3281 = vmatpush1.bf16.msra.mxu0 %v2752
    %3282 = vmatprep.subr.bf16.mxu0 0
    %3283 = vmatpush1.bf16.msra.mxu0 0
    %3284 = vmatprep.subr.bf16.mxu0 0
    %3285 = vmatpush1.bf16.msra.mxu0 0
    %3286 = vmatprep.subr.bf16.mxu0 0
    %3287 = vmatpush1.bf16.msra.mxu0 0
    %3288 = vmatprep.subr.bf16.mxu0 0
    %3289 = vmatpush1.bf16.msra.mxu0 0
    %3290 = vmatprep.subr.bf16.mxu0 0
    %3291 = vmatpush1.bf16.msra.mxu0 0
    %3292 = vmatprep.subr.bf16.mxu0 0
    %3293 = vmatpush1.bf16.msra.mxu0 0
    %3294 = vmatprep.subr.bf16.mxu0 0
    %3295 = vmatpush1.bf16.msra.mxu0 0
    %3296 = vmatprep.subr.bf16.mxu0 0
    %3297 = vmatpush1.bf16.msra.mxu0 0
    %3298 = vmatprep.subr.bf16.mxu0 0
    %3299 = vmatpush1.bf16.msra.mxu0 0
    %3300 = vmatprep.subr.bf16.mxu0 0
    %3301 = vmatpush1.bf16.msra.mxu0 0
    %3302 = vmatprep.subr.bf16.mxu0 0
    %3303 = vmatpush1.bf16.msra.mxu0 0
    %3304 = vmatprep.subr.bf16.mxu0 0
    %3305 = vmatpush1.bf16.msra.mxu0 0
    %3306 = vmatprep.subr.bf16.mxu0 0
    %3307 = vmatpush1.bf16.msra.mxu0 0
    %3308 = vmatprep.subr.bf16.mxu0 0
    %3309 = vmatpush1.bf16.msra.mxu0 0
    %3310 = vmatprep.mubr.bf16.mxu0 0
    %3311 = vmatmul.mubr.bf16.gmra.mrb[0].mxu0 %v2845
    %v3312 = vpop.f32.mrb[0].mxu0
    %v3313 = vadd.f32 0.0, %v3312
    %v3314 = vpop.f32.mrb[0].mxu0
    %v3315 = vpop.f32.mrb[0].mxu0
    %v3316 = vadd.f32 0.0, %v3315
    %v3317 = vpop.f32.mrb[0].mxu0
    %3318 = vmatprep.mubr.bf16.mxu0 0
    %3319 = vmatmul.mubr.bf16.gmra.mrb[0].mxu0 %v2848
    %v3320 = vpop.f32.mrb[0].mxu0
    %v3321 = vadd.f32 0.0, %v3320
    %v3322 = vpop.f32.mrb[0].mxu0
    %v3323 = vpop.f32.mrb[0].mxu0
    %v3324 = vadd.f32 0.0, %v3323
    %v3325 = vpop.f32.mrb[0].mxu0
    %3326 = vmatprep.mubr.bf16.mxu0 0
    %3327 = vmatmul.mubr.bf16.gmra.mrb[0].mxu0 %v2851
    %v3328 = vpop.f32.mrb[0].mxu0
    %v3329 = vadd.f32 0.0, %v3328
    %v3330 = vpop.f32.mrb[0].mxu0
    %v3331 = vpop.f32.mrb[0].mxu0
    %v3332 = vadd.f32 0.0, %v3331
    %v3333 = vpop.f32.mrb[0].mxu0
    %3334 = vmatprep.mubr.bf16.mxu0 0
    %3335 = vmatmul.mubr.bf16.gmra.mrb[0].mxu0 %v2854
    %v3336 = vpop.f32.mrb[0].mxu0
    %v3337 = vadd.f32 0.0, %v3336
    %v3338 = vpop.f32.mrb[0].mxu0
    %v3339 = vpop.f32.mrb[0].mxu0
    %v3340 = vadd.f32 0.0, %v3339
    %v3341 = vpop.f32.mrb[0].mxu0
    %3342 = vmatprep.mubr.bf16.mxu0 0
    %3343 = vmatmul.mubr.bf16.gmra.mrb[0].mxu0 %v2857
    %v3344 = vpop.f32.mrb[0].mxu0
    %v3345 = vadd.f32 0.0, %v3344
    %v3346 = vpop.f32.mrb[0].mxu0
    %v3347 = vpop.f32.mrb[0].mxu0
    %v3348 = vadd.f32 0.0, %v3347
    %v3349 = vpop.f32.mrb[0].mxu0
    %3350 = vmatprep.mubr.bf16.mxu0 0
    %3351 = vmatmul.mubr.bf16.gmra.mrb[0].mxu0 %v2860
    %v3352 = vpop.f32.mrb[0].mxu0
    %v3353 = vadd.f32 0.0, %v3352
    %v3354 = vpop.f32.mrb[0].mxu0
    %v3355 = vpop.f32.mrb[0].mxu0
    %v3356 = vadd.f32 0.0, %v3355
    %v3357 = vpop.f32.mrb[0].mxu0
    %3358 = vmatprep.mubr.bf16.mxu0 0
    %3359 = vmatmul.mubr.bf16.gmra.mrb[0].mxu0 %v2863
    %v3360 = vpop.f32.mrb[0].mxu0
    %v3361 = vadd.f32 0.0, %v3360
    %v3362 = vpop.f32.mrb[0].mxu0
    %v3363 = vpop.f32.mrb[0].mxu0
    %v3364 = vadd.f32 0.0, %v3363
    %v3365 = vpop.f32.mrb[0].mxu0
    %3366 = vmatprep.mubr.bf16.mxu0 0
    %3367 = vmatmul.mubr.bf16.gmra.mrb[0].mxu0 %v2866
    %v3368 = vpop.f32.mrb[0].mxu0
    %v3369 = vadd.f32 0.0, %v3368
    %v3370 = vpop.f32.mrb[0].mxu0
    %v3371 = vpop.f32.mrb[0].mxu0
    %v3372 = vadd.f32 0.0, %v3371
    %v3373 = vpop.f32.mrb[0].mxu0
    %3374 = vmatprep.mubr.bf16.mxu0 0
    %3375 = vmatmul.mubr.bf16.gmra.mrb[0].mxu0 %v2869
    %v3376 = vpop.f32.mrb[0].mxu0
    %v3377 = vadd.f32 0.0, %v3376
    %v3378 = vpop.f32.mrb[0].mxu0
    %v3379 = vpop.f32.mrb[0].mxu0
    %v3380 = vadd.f32 0.0, %v3379
    %v3381 = vpop.f32.mrb[0].mxu0
    %3382 = vmatprep.mubr.bf16.mxu0 0
    %3383 = vmatmul.mubr.bf16.gmra.mrb[0].mxu0 %v2872
    %v3384 = vpop.f32.mrb[0].mxu0
    %v3385 = vadd.f32 0.0, %v3384
    %v3386 = vpop.f32.mrb[0].mxu0
    %v3387 = vpop.f32.mrb[0].mxu0
    %v3388 = vadd.f32 0.0, %v3387
    %v3389 = vpop.f32.mrb[0].mxu0
    %3390 = vmatprep.mubr.bf16.mxu0 0
    %3391 = vmatmul.mubr.bf16.gmra.mrb[0].mxu0 %v2875
    %v3392 = vpop.f32.mrb[0].mxu0
    %v3393 = vadd.f32 0.0, %v3392
    %v3394 = vpop.f32.mrb[0].mxu0
    %v3395 = vpop.f32.mrb[0].mxu0
    %v3396 = vadd.f32 0.0, %v3395
    %v3397 = vpop.f32.mrb[0].mxu0
    %3398 = vmatprep.mubr.bf16.mxu0 0
    %3399 = vmatmul.mubr.bf16.gmra.mrb[0].mxu0 %v2878
    %v3400 = vpop.f32.mrb[0].mxu0
    %v3401 = vadd.f32 0.0, %v3400
    %v3402 = vpop.f32.mrb[0].mxu0
    %v3403 = vpop.f32.mrb[0].mxu0
    %v3404 = vadd.f32 0.0, %v3403
    %v3405 = vpop.f32.mrb[0].mxu0
    %3406 = vmatprep.mubr.bf16.mxu0 0
    %3407 = vmatmul.mubr.bf16.gmra.mrb[0].mxu0 %v2881
    %v3408 = vpop.f32.mrb[0].mxu0
    %v3409 = vadd.f32 0.0, %v3408
    %v3410 = vpop.f32.mrb[0].mxu0
    %v3411 = vpop.f32.mrb[0].mxu0
    %v3412 = vadd.f32 0.0, %v3411
    %v3413 = vpop.f32.mrb[0].mxu0
    %3414 = vmatprep.mubr.bf16.mxu0 0
    %3415 = vmatmul.mubr.bf16.gmra.mrb[0].mxu0 %v2884
    %v3416 = vpop.f32.mrb[0].mxu0
    %v3417 = vadd.f32 0.0, %v3416
    %v3418 = vpop.f32.mrb[0].mxu0
    %v3419 = vpop.f32.mrb[0].mxu0
    %v3420 = vadd.f32 0.0, %v3419
    %v3421 = vpop.f32.mrb[0].mxu0
    %3422 = vmatprep.mubr.bf16.mxu0 0
    %3423 = vmatmul.mubr.bf16.gmra.mrb[0].mxu0 %v2887
    %v3424 = vpop.f32.mrb[0].mxu0
    %v3425 = vadd.f32 0.0, %v3424
    %v3426 = vpop.f32.mrb[0].mxu0
    %v3427 = vpop.f32.mrb[0].mxu0
    %v3428 = vadd.f32 0.0, %v3427
    %v3429 = vpop.f32.mrb[0].mxu0
    %3430 = vmatprep.mubr.bf16.mxu0 0
    %3431 = vmatmul.mubr.bf16.gmra.mrb[0].mxu0 %v2890
    %v3432 = vpop.f32.mrb[0].mxu0
    %v3433 = vadd.f32 0.0, %v3432
    %v3434 = vpop.f32.mrb[0].mxu0
    %v3435 = vpop.f32.mrb[0].mxu0
    %v3436 = vadd.f32 0.0, %v3435
    %v3437 = vpop.f32.mrb[0].mxu0
    %3438 = vdwg.mxu0
    %3439 = vmatprep.subr.bf16.mxu0 %v2754
    %3440 = vmatpush1.bf16.msra.mxu0 %v2753
    %3441 = vmatprep.subr.bf16.mxu0 %v2759
    %3442 = vmatpush1.bf16.msra.mxu0 %v2758
    %3443 = vmatprep.subr.bf16.mxu0 0
    %3444 = vmatpush1.bf16.msra.mxu0 0
    %3445 = vmatprep.subr.bf16.mxu0 0
    %3446 = vmatpush1.bf16.msra.mxu0 0
    %3447 = vmatprep.subr.bf16.mxu0 0
    %3448 = vmatpush1.bf16.msra.mxu0 0
    %3449 = vmatprep.subr.bf16.mxu0 0
    %3450 = vmatpush1.bf16.msra.mxu0 0
    %3451 = vmatprep.subr.bf16.mxu0 0
    %3452 = vmatpush1.bf16.msra.mxu0 0
    %3453 = vmatprep.subr.bf16.mxu0 0
    %3454 = vmatpush1.bf16.msra.mxu0 0
    %3455 = vmatprep.subr.bf16.mxu0 0
    %3456 = vmatpush1.bf16.msra.mxu0 0
    %3457 = vmatprep.subr.bf16.mxu0 0
    %3458 = vmatpush1.bf16.msra.mxu0 0
    %3459 = vmatprep.subr.bf16.mxu0 0
    %3460 = vmatpush1.bf16.msra.mxu0 0
    %3461 = vmatprep.subr.bf16.mxu0 0
    %3462 = vmatpush1.bf16.msra.mxu0 0
    %3463 = vmatprep.subr.bf16.mxu0 0
    %3464 = vmatpush1.bf16.msra.mxu0 0
    %3465 = vmatprep.subr.bf16.mxu0 0
    %3466 = vmatpush1.bf16.msra.mxu0 0
    %3467 = vmatprep.subr.bf16.mxu0 0
    %3468 = vmatpush1.bf16.msra.mxu0 0
    %3469 = vmatprep.subr.bf16.mxu0 0
    %3470 = vmatpush1.bf16.msra.mxu0 0
    %3471 = vmatprep.mubr.bf16.mxu0 0
    %3472 = vmatmul.mubr.bf16.gmra.mrb[0].mxu0 %v2845
    %v3473 = vpop.f32.mrb[0].mxu0
    %v3474 = vadd.f32 0.0, %v3473
    %v3475 = vpop.f32.mrb[0].mxu0
    %v3476 = vadd.f32 0.0, %v3475
    %v3477 = vpop.f32.mrb[0].mxu0
    %v3478 = vadd.f32 0.0, %v3477
    %v3479 = vpop.f32.mrb[0].mxu0
    %v3480 = vadd.f32 0.0, %v3479
    %3481 = vmatprep.mubr.bf16.mxu0 0
    %3482 = vmatmul.mubr.bf16.gmra.mrb[0].mxu0 %v2848
    %v3483 = vpop.f32.mrb[0].mxu0
    %v3484 = vadd.f32 0.0, %v3483
    %v3485 = vpop.f32.mrb[0].mxu0
    %v3486 = vadd.f32 0.0, %v3485
    %v3487 = vpop.f32.mrb[0].mxu0
    %v3488 = vadd.f32 0.0, %v3487
    %v3489 = vpop.f32.mrb[0].mxu0
    %v3490 = vadd.f32 0.0, %v3489
    %3491 = vmatprep.mubr.bf16.mxu0 0
    %3492 = vmatmul.mubr.bf16.gmra.mrb[0].mxu0 %v2851
    %v3493 = vpop.f32.mrb[0].mxu0
    %v3494 = vadd.f32 0.0, %v3493
    %v3495 = vpop.f32.mrb[0].mxu0
    %v3496 = vadd.f32 0.0, %v3495
    %v3497 = vpop.f32.mrb[0].mxu0
    %v3498 = vadd.f32 0.0, %v3497
    %v3499 = vpop.f32.mrb[0].mxu0
    %v3500 = vadd.f32 0.0, %v3499
    %3501 = vmatprep.mubr.bf16.mxu0 0
    %3502 = vmatmul.mubr.bf16.gmra.mrb[0].mxu0 %v2854
    %v3503 = vpop.f32.mrb[0].mxu0
    %v3504 = vadd.f32 0.0, %v3503
    %v3505 = vpop.f32.mrb[0].mxu0
    %v3506 = vadd.f32 0.0, %v3505
    %v3507 = vpop.f32.mrb[0].mxu0
    %v3508 = vadd.f32 0.0, %v3507
    %v3509 = vpop.f32.mrb[0].mxu0
    %v3510 = vadd.f32 0.0, %v3509
    %3511 = vmatprep.mubr.bf16.mxu0 0
    %3512 = vmatmul.mubr.bf16.gmra.mrb[0].mxu0 %v2857
    %v3513 = vpop.f32.mrb[0].mxu0
    %v3514 = vadd.f32 0.0, %v3513
    %v3515 = vpop.f32.mrb[0].mxu0
    %v3516 = vadd.f32 0.0, %v3515
    %v3517 = vpop.f32.mrb[0].mxu0
    %v3518 = vadd.f32 0.0, %v3517
    %v3519 = vpop.f32.mrb[0].mxu0
    %v3520 = vadd.f32 0.0, %v3519
    %3521 = vmatprep.mubr.bf16.mxu0 0
    %3522 = vmatmul.mubr.bf16.gmra.mrb[0].mxu0 %v2860
    %v3523 = vpop.f32.mrb[0].mxu0
    %v3524 = vadd.f32 0.0, %v3523
    %v3525 = vpop.f32.mrb[0].mxu0
    %v3526 = vadd.f32 0.0, %v3525
    %v3527 = vpop.f32.mrb[0].mxu0
    %v3528 = vadd.f32 0.0, %v3527
    %v3529 = vpop.f32.mrb[0].mxu0
    %v3530 = vadd.f32 0.0, %v3529
    %3531 = vmatprep.mubr.bf16.mxu0 0
    %3532 = vmatmul.mubr.bf16.gmra.mrb[0].mxu0 %v2863
    %v3533 = vpop.f32.mrb[0].mxu0
    %v3534 = vadd.f32 0.0, %v3533
    %v3535 = vpop.f32.mrb[0].mxu0
    %v3536 = vadd.f32 0.0, %v3535
    %v3537 = vpop.f32.mrb[0].mxu0
    %v3538 = vadd.f32 0.0, %v3537
    %v3539 = vpop.f32.mrb[0].mxu0
    %v3540 = vadd.f32 0.0, %v3539
    %3541 = vmatprep.mubr.bf16.mxu0 0
    %3542 = vmatmul.mubr.bf16.gmra.mrb[0].mxu0 %v2866
    %v3543 = vpop.f32.mrb[0].mxu0
    %v3544 = vadd.f32 0.0, %v3543
    %v3545 = vpop.f32.mrb[0].mxu0
    %v3546 = vadd.f32 0.0, %v3545
    %v3547 = vpop.f32.mrb[0].mxu0
    %v3548 = vadd.f32 0.0, %v3547
    %v3549 = vpop.f32.mrb[0].mxu0
    %v3550 = vadd.f32 0.0, %v3549
    %3551 = vmatprep.mubr.bf16.mxu0 0
    %3552 = vmatmul.mubr.bf16.gmra.mrb[0].mxu0 %v2869
    %v3553 = vpop.f32.mrb[0].mxu0
    %v3554 = vadd.f32 0.0, %v3553
    %v3555 = vpop.f32.mrb[0].mxu0
    %v3556 = vadd.f32 0.0, %v3555
    %v3557 = vpop.f32.mrb[0].mxu0
    %v3558 = vadd.f32 0.0, %v3557
    %v3559 = vpop.f32.mrb[0].mxu0
    %v3560 = vadd.f32 0.0, %v3559
    %3561 = vmatprep.mubr.bf16.mxu0 0
    %3562 = vmatmul.mubr.bf16.gmra.mrb[0].mxu0 %v2872
    %v3563 = vpop.f32.mrb[0].mxu0
    %v3564 = vadd.f32 0.0, %v3563
    %v3565 = vpop.f32.mrb[0].mxu0
    %v3566 = vadd.f32 0.0, %v3565
    %v3567 = vpop.f32.mrb[0].mxu0
    %v3568 = vadd.f32 0.0, %v3567
    %v3569 = vpop.f32.mrb[0].mxu0
    %v3570 = vadd.f32 0.0, %v3569
    %3571 = vmatprep.mubr.bf16.mxu0 0
    %3572 = vmatmul.mubr.bf16.gmra.mrb[0].mxu0 %v2875
    %v3573 = vpop.f32.mrb[0].mxu0
    %v3574 = vadd.f32 0.0, %v3573
    %v3575 = vpop.f32.mrb[0].mxu0
    %v3576 = vadd.f32 0.0, %v3575
    %v3577 = vpop.f32.mrb[0].mxu0
    %v3578 = vadd.f32 0.0, %v3577
    %v3579 = vpop.f32.mrb[0].mxu0
    %v3580 = vadd.f32 0.0, %v3579
    %3581 = vmatprep.mubr.bf16.mxu0 0
    %3582 = vmatmul.mubr.bf16.gmra.mrb[0].mxu0 %v2878
    %v3583 = vpop.f32.mrb[0].mxu0
    %v3584 = vadd.f32 0.0, %v3583
    %v3585 = vpop.f32.mrb[0].mxu0
    %v3586 = vadd.f32 0.0, %v3585
    %v3587 = vpop.f32.mrb[0].mxu0
    %v3588 = vadd.f32 0.0, %v3587
    %v3589 = vpop.f32.mrb[0].mxu0
    %v3590 = vadd.f32 0.0, %v3589
    %3591 = vmatprep.mubr.bf16.mxu0 0
    %3592 = vmatmul.mubr.bf16.gmra.mrb[0].mxu0 %v2881
    %v3593 = vpop.f32.mrb[0].mxu0
    %v3594 = vadd.f32 0.0, %v3593
    %v3595 = vpop.f32.mrb[0].mxu0
    %v3596 = vadd.f32 0.0, %v3595
    %v3597 = vpop.f32.mrb[0].mxu0
    %v3598 = vadd.f32 0.0, %v3597
    %v3599 = vpop.f32.mrb[0].mxu0
    %v3600 = vadd.f32 0.0, %v3599
    %3601 = vmatprep.mubr.bf16.mxu0 0
    %3602 = vmatmul.mubr.bf16.gmra.mrb[0].mxu0 %v2884
    %v3603 = vpop.f32.mrb[0].mxu0
    %v3604 = vadd.f32 0.0, %v3603
    %v3605 = vpop.f32.mrb[0].mxu0
    %v3606 = vadd.f32 0.0, %v3605
    %v3607 = vpop.f32.mrb[0].mxu0
    %v3608 = vadd.f32 0.0, %v3607
    %v3609 = vpop.f32.mrb[0].mxu0
    %v3610 = vadd.f32 0.0, %v3609
    %3611 = vmatprep.mubr.bf16.mxu0 0
    %3612 = vmatmul.mubr.bf16.gmra.mrb[0].mxu0 %v2887
    %v3613 = vpop.f32.mrb[0].mxu0
    %v3614 = vadd.f32 0.0, %v3613
    %v3615 = vpop.f32.mrb[0].mxu0
    %v3616 = vadd.f32 0.0, %v3615
    %v3617 = vpop.f32.mrb[0].mxu0
    %v3618 = vadd.f32 0.0, %v3617
    %v3619 = vpop.f32.mrb[0].mxu0
    %v3620 = vadd.f32 0.0, %v3619
    %3621 = vmatprep.mubr.bf16.mxu0 0
    %3622 = vmatmul.mubr.bf16.gmra.mrb[0].mxu0 %v2890
    %v3623 = vpop.f32.mrb[0].mxu0
    %v3624 = vadd.f32 0.0, %v3623
    %v3625 = vpop.f32.mrb[0].mxu0
    %v3626 = vadd.f32 0.0, %v3625
    %v3627 = vpop.f32.mrb[0].mxu0
    %v3628 = vadd.f32 0.0, %v3627
    %v3629 = vpop.f32.mrb[0].mxu0
    %v3630 = vadd.f32 0.0, %v3629
    %3631 = vdwg.mxu0
    %3632 = vmatprep.subr.bf16.mxu0 %v2756
    %3633 = vmatpush1.bf16.msra.mxu0 %v2755
    %3634 = vmatprep.subr.bf16.mxu0 %v2761
    %3635 = vmatpush1.bf16.msra.mxu0 %v2760
    %3636 = vmatprep.subr.bf16.mxu0 0
    %3637 = vmatpush1.bf16.msra.mxu0 0
    %3638 = vmatprep.subr.bf16.mxu0 0
    %3639 = vmatpush1.bf16.msra.mxu0 0
    %3640 = vmatprep.subr.bf16.mxu0 0
    %3641 = vmatpush1.bf16.msra.mxu0 0
    %3642 = vmatprep.subr.bf16.mxu0 0
    %3643 = vmatpush1.bf16.msra.mxu0 0
    %3644 = vmatprep.subr.bf16.mxu0 0
    %3645 = vmatpush1.bf16.msra.mxu0 0
    %3646 = vmatprep.subr.bf16.mxu0 0
    %3647 = vmatpush1.bf16.msra.mxu0 0
    %3648 = vmatprep.subr.bf16.mxu0 0
    %3649 = vmatpush1.bf16.msra.mxu0 0
    %3650 = vmatprep.subr.bf16.mxu0 0
    %3651 = vmatpush1.bf16.msra.mxu0 0
    %3652 = vmatprep.subr.bf16.mxu0 0
    %3653 = vmatpush1.bf16.msra.mxu0 0
    %3654 = vmatprep.subr.bf16.mxu0 0
    %3655 = vmatpush1.bf16.msra.mxu0 0
    %3656 = vmatprep.subr.bf16.mxu0 0
    %3657 = vmatpush1.bf16.msra.mxu0 0
    %3658 = vmatprep.subr.bf16.mxu0 0
    %3659 = vmatpush1.bf16.msra.mxu0 0
    %3660 = vmatprep.subr.bf16.mxu0 0
    %3661 = vmatpush1.bf16.msra.mxu0 0
    %3662 = vmatprep.subr.bf16.mxu0 0
    %3663 = vmatpush1.bf16.msra.mxu0 0
    %3664 = vmatprep.mubr.bf16.mxu0 0
    %3665 = vmatmul.mubr.bf16.gmra.mrb[0].mxu0 %v2845
    %v3666 = vpop.f32.mrb[0].mxu0
    %v3667 = vadd.f32 0.0, %v3666
    %v3668 = vpop.f32.mrb[0].mxu0
    %v3669 = vadd.f32 0.0, %v3668
    %v3670 = vpop.f32.mrb[0].mxu0
    %v3671 = vadd.f32 0.0, %v3670
    %v3672 = vpop.f32.mrb[0].mxu0
    %v3673 = vadd.f32 0.0, %v3672
    %3674 = vmatprep.mubr.bf16.mxu0 0
    %3675 = vmatmul.mubr.bf16.gmra.mrb[0].mxu0 %v2848
    %v3676 = vpop.f32.mrb[0].mxu0
    %v3677 = vadd.f32 0.0, %v3676
    %v3678 = vpop.f32.mrb[0].mxu0
    %v3679 = vadd.f32 0.0, %v3678
    %v3680 = vpop.f32.mrb[0].mxu0
    %v3681 = vadd.f32 0.0, %v3680
    %v3682 = vpop.f32.mrb[0].mxu0
    %v3683 = vadd.f32 0.0, %v3682
    %3684 = vmatprep.mubr.bf16.mxu0 0
    %3685 = vmatmul.mubr.bf16.gmra.mrb[0].mxu0 %v2851
    %v3686 = vpop.f32.mrb[0].mxu0
    %v3687 = vadd.f32 0.0, %v3686
    %v3688 = vpop.f32.mrb[0].mxu0
    %v3689 = vadd.f32 0.0, %v3688
    %v3690 = vpop.f32.mrb[0].mxu0
    %v3691 = vadd.f32 0.0, %v3690
    %v3692 = vpop.f32.mrb[0].mxu0
    %v3693 = vadd.f32 0.0, %v3692
    %3694 = vmatprep.mubr.bf16.mxu0 0
    %3695 = vmatmul.mubr.bf16.gmra.mrb[0].mxu0 %v2854
    %v3696 = vpop.f32.mrb[0].mxu0
    %v3697 = vadd.f32 0.0, %v3696
    %v3698 = vpop.f32.mrb[0].mxu0
    %v3699 = vadd.f32 0.0, %v3698
    %v3700 = vpop.f32.mrb[0].mxu0
    %v3701 = vadd.f32 0.0, %v3700
    %v3702 = vpop.f32.mrb[0].mxu0
    %v3703 = vadd.f32 0.0, %v3702
    %3704 = vmatprep.mubr.bf16.mxu0 0
    %3705 = vmatmul.mubr.bf16.gmra.mrb[0].mxu0 %v2857
    %v3706 = vpop.f32.mrb[0].mxu0
    %v3707 = vadd.f32 0.0, %v3706
    %v3708 = vpop.f32.mrb[0].mxu0
    %v3709 = vadd.f32 0.0, %v3708
    %v3710 = vpop.f32.mrb[0].mxu0
    %v3711 = vadd.f32 0.0, %v3710
    %v3712 = vpop.f32.mrb[0].mxu0
    %v3713 = vadd.f32 0.0, %v3712
    %3714 = vmatprep.mubr.bf16.mxu0 0
    %3715 = vmatmul.mubr.bf16.gmra.mrb[0].mxu0 %v2860
    %v3716 = vpop.f32.mrb[0].mxu0
    %v3717 = vadd.f32 0.0, %v3716
    %v3718 = vpop.f32.mrb[0].mxu0
    %v3719 = vadd.f32 0.0, %v3718
    %v3720 = vpop.f32.mrb[0].mxu0
    %v3721 = vadd.f32 0.0, %v3720
    %v3722 = vpop.f32.mrb[0].mxu0
    %v3723 = vadd.f32 0.0, %v3722
    %3724 = vmatprep.mubr.bf16.mxu0 0
    %3725 = vmatmul.mubr.bf16.gmra.mrb[0].mxu0 %v2863
    %v3726 = vpop.f32.mrb[0].mxu0
    %v3727 = vadd.f32 0.0, %v3726
    %v3728 = vpop.f32.mrb[0].mxu0
    %v3729 = vadd.f32 0.0, %v3728
    %v3730 = vpop.f32.mrb[0].mxu0
    %v3731 = vadd.f32 0.0, %v3730
    %v3732 = vpop.f32.mrb[0].mxu0
    %v3733 = vadd.f32 0.0, %v3732
    %3734 = vmatprep.mubr.bf16.mxu0 0
    %3735 = vmatmul.mubr.bf16.gmra.mrb[0].mxu0 %v2866
    %v3736 = vpop.f32.mrb[0].mxu0
    %v3737 = vadd.f32 0.0, %v3736
    %v3738 = vpop.f32.mrb[0].mxu0
    %v3739 = vadd.f32 0.0, %v3738
    %v3740 = vpop.f32.mrb[0].mxu0
    %v3741 = vadd.f32 0.0, %v3740
    %v3742 = vpop.f32.mrb[0].mxu0
    %v3743 = vadd.f32 0.0, %v3742
    %3744 = vmatprep.mubr.bf16.mxu0 0
    %3745 = vmatmul.mubr.bf16.gmra.mrb[0].mxu0 %v2869
    %v3746 = vpop.f32.mrb[0].mxu0
    %v3747 = vadd.f32 0.0, %v3746
    %v3748 = vpop.f32.mrb[0].mxu0
    %v3749 = vadd.f32 0.0, %v3748
    %v3750 = vpop.f32.mrb[0].mxu0
    %v3751 = vadd.f32 0.0, %v3750
    %v3752 = vpop.f32.mrb[0].mxu0
    %v3753 = vadd.f32 0.0, %v3752
    %3754 = vmatprep.mubr.bf16.mxu0 0
    %3755 = vmatmul.mubr.bf16.gmra.mrb[0].mxu0 %v2872
    %v3756 = vpop.f32.mrb[0].mxu0
    %v3757 = vadd.f32 0.0, %v3756
    %v3758 = vpop.f32.mrb[0].mxu0
    %v3759 = vadd.f32 0.0, %v3758
    %v3760 = vpop.f32.mrb[0].mxu0
    %v3761 = vadd.f32 0.0, %v3760
    %v3762 = vpop.f32.mrb[0].mxu0
    %v3763 = vadd.f32 0.0, %v3762
    %3764 = vmatprep.mubr.bf16.mxu0 0
    %3765 = vmatmul.mubr.bf16.gmra.mrb[0].mxu0 %v2875
    %v3766 = vpop.f32.mrb[0].mxu0
    %v3767 = vadd.f32 0.0, %v3766
    %v3768 = vpop.f32.mrb[0].mxu0
    %v3769 = vadd.f32 0.0, %v3768
    %v3770 = vpop.f32.mrb[0].mxu0
    %v3771 = vadd.f32 0.0, %v3770
    %v3772 = vpop.f32.mrb[0].mxu0
    %v3773 = vadd.f32 0.0, %v3772
    %3774 = vmatprep.mubr.bf16.mxu0 0
    %3775 = vmatmul.mubr.bf16.gmra.mrb[0].mxu0 %v2878
    %v3776 = vpop.f32.mrb[0].mxu0
    %v3777 = vadd.f32 0.0, %v3776
    %v3778 = vpop.f32.mrb[0].mxu0
    %v3779 = vadd.f32 0.0, %v3778
    %v3780 = vpop.f32.mrb[0].mxu0
    %v3781 = vadd.f32 0.0, %v3780
    %v3782 = vpop.f32.mrb[0].mxu0
    %v3783 = vadd.f32 0.0, %v3782
    %3784 = vmatprep.mubr.bf16.mxu0 0
    %3785 = vmatmul.mubr.bf16.gmra.mrb[0].mxu0 %v2881
    %v3786 = vpop.f32.mrb[0].mxu0
    %v3787 = vadd.f32 0.0, %v3786
    %v3788 = vpop.f32.mrb[0].mxu0
    %v3789 = vadd.f32 0.0, %v3788
    %v3790 = vpop.f32.mrb[0].mxu0
    %v3791 = vadd.f32 0.0, %v3790
    %v3792 = vpop.f32.mrb[0].mxu0
    %v3793 = vadd.f32 0.0, %v3792
    %3794 = vmatprep.mubr.bf16.mxu0 0
    %3795 = vmatmul.mubr.bf16.gmra.mrb[0].mxu0 %v2884
    %v3796 = vpop.f32.mrb[0].mxu0
    %v3797 = vadd.f32 0.0, %v3796
    %v3798 = vpop.f32.mrb[0].mxu0
    %v3799 = vadd.f32 0.0, %v3798
    %v3800 = vpop.f32.mrb[0].mxu0
    %v3801 = vadd.f32 0.0, %v3800
    %v3802 = vpop.f32.mrb[0].mxu0
    %v3803 = vadd.f32 0.0, %v3802
    %3804 = vmatprep.mubr.bf16.mxu0 0
    %3805 = vmatmul.mubr.bf16.gmra.mrb[0].mxu0 %v2887
    %v3806 = vpop.f32.mrb[0].mxu0
    %v3807 = vadd.f32 0.0, %v3806
    %v3808 = vpop.f32.mrb[0].mxu0
    %v3809 = vadd.f32 0.0, %v3808
    %v3810 = vpop.f32.mrb[0].mxu0
    %v3811 = vadd.f32 0.0, %v3810
    %v3812 = vpop.f32.mrb[0].mxu0
    %v3813 = vadd.f32 0.0, %v3812
    %3814 = vmatprep.mubr.bf16.mxu0 0
    %3815 = vmatmul.mubr.bf16.gmra.mrb[0].mxu0 %v2890
    %v3816 = vpop.f32.mrb[0].mxu0
    %v3817 = vadd.f32 0.0, %v3816
    %v3818 = vpop.f32.mrb[0].mxu0
    %v3819 = vadd.f32 0.0, %v3818
    %v3820 = vpop.f32.mrb[0].mxu0
    %v3821 = vadd.f32 0.0, %v3820
    %v3822 = vpop.f32.mrb[0].mxu0
    %v3823 = vadd.f32 0.0, %v3822
    %3824 = vdwg.mxu0
    %3825 = vmatprep.subr.bf16.mxu0 0
    %3826 = vmatpush1.bf16.msra.mxu0 %v2757
    %3827 = vmatprep.subr.bf16.mxu0 0
    %3828 = vmatpush1.bf16.msra.mxu0 %v2762
    %3829 = vmatprep.subr.bf16.mxu0 0
    %3830 = vmatpush1.bf16.msra.mxu0 0
    %3831 = vmatprep.subr.bf16.mxu0 0
    %3832 = vmatpush1.bf16.msra.mxu0 0
    %3833 = vmatprep.subr.bf16.mxu0 0
    %3834 = vmatpush1.bf16.msra.mxu0 0
    %3835 = vmatprep.subr.bf16.mxu0 0
    %3836 = vmatpush1.bf16.msra.mxu0 0
    %3837 = vmatprep.subr.bf16.mxu0 0
    %3838 = vmatpush1.bf16.msra.mxu0 0
    %3839 = vmatprep.subr.bf16.mxu0 0
    %3840 = vmatpush1.bf16.msra.mxu0 0
    %3841 = vmatprep.subr.bf16.mxu0 0
    %3842 = vmatpush1.bf16.msra.mxu0 0
    %3843 = vmatprep.subr.bf16.mxu0 0
    %3844 = vmatpush1.bf16.msra.mxu0 0
    %3845 = vmatprep.subr.bf16.mxu0 0
    %3846 = vmatpush1.bf16.msra.mxu0 0
    %3847 = vmatprep.subr.bf16.mxu0 0
    %3848 = vmatpush1.bf16.msra.mxu0 0
    %3849 = vmatprep.subr.bf16.mxu0 0
    %3850 = vmatpush1.bf16.msra.mxu0 0
    %3851 = vmatprep.subr.bf16.mxu0 0
    %3852 = vmatpush1.bf16.msra.mxu0 0
    %3853 = vmatprep.subr.bf16.mxu0 0
    %3854 = vmatpush1.bf16.msra.mxu0 0
    %3855 = vmatprep.subr.bf16.mxu0 0
    %3856 = vmatpush1.bf16.msra.mxu0 0
    %3857 = vmatprep.mubr.bf16.mxu0 0
    %3858 = vmatmul.mubr.bf16.gmra.mrb[0].mxu0 %v2845
    %v3859 = vpop.f32.mrb[0].mxu0
    %v3860 = vadd.f32 0.0, %v3859
    %v3861 = vpop.f32.mrb[0].mxu0
    %v3862 = vpop.f32.mrb[0].mxu0
    %v3863 = vadd.f32 0.0, %v3862
    %v3864 = vpop.f32.mrb[0].mxu0
    %3865 = vmatprep.mubr.bf16.mxu0 0
    %3866 = vmatmul.mubr.bf16.gmra.mrb[0].mxu0 %v2848
    %v3867 = vpop.f32.mrb[0].mxu0
    %v3868 = vadd.f32 0.0, %v3867
    %v3869 = vpop.f32.mrb[0].mxu0
    %v3870 = vpop.f32.mrb[0].mxu0
    %v3871 = vadd.f32 0.0, %v3870
    %v3872 = vpop.f32.mrb[0].mxu0
    %3873 = vmatprep.mubr.bf16.mxu0 0
    %3874 = vmatmul.mubr.bf16.gmra.mrb[0].mxu0 %v2851
    %v3875 = vpop.f32.mrb[0].mxu0
    %v3876 = vadd.f32 0.0, %v3875
    %v3877 = vpop.f32.mrb[0].mxu0
    %v3878 = vpop.f32.mrb[0].mxu0
    %v3879 = vadd.f32 0.0, %v3878
    %v3880 = vpop.f32.mrb[0].mxu0
    %3881 = vmatprep.mubr.bf16.mxu0 0
    %3882 = vmatmul.mubr.bf16.gmra.mrb[0].mxu0 %v2854
    %v3883 = vpop.f32.mrb[0].mxu0
    %v3884 = vadd.f32 0.0, %v3883
    %v3885 = vpop.f32.mrb[0].mxu0
    %v3886 = vpop.f32.mrb[0].mxu0
    %v3887 = vadd.f32 0.0, %v3886
    %v3888 = vpop.f32.mrb[0].mxu0
    %3889 = vmatprep.mubr.bf16.mxu0 0
    %3890 = vmatmul.mubr.bf16.gmra.mrb[0].mxu0 %v2857
    %v3891 = vpop.f32.mrb[0].mxu0
    %v3892 = vadd.f32 0.0, %v3891
    %v3893 = vpop.f32.mrb[0].mxu0
    %v3894 = vpop.f32.mrb[0].mxu0
    %v3895 = vadd.f32 0.0, %v3894
    %v3896 = vpop.f32.mrb[0].mxu0
    %3897 = vmatprep.mubr.bf16.mxu0 0
    %3898 = vmatmul.mubr.bf16.gmra.mrb[0].mxu0 %v2860
    %v3899 = vpop.f32.mrb[0].mxu0
    %v3900 = vadd.f32 0.0, %v3899
    %v3901 = vpop.f32.mrb[0].mxu0
    %v3902 = vpop.f32.mrb[0].mxu0
    %v3903 = vadd.f32 0.0, %v3902
    %v3904 = vpop.f32.mrb[0].mxu0
    %3905 = vmatprep.mubr.bf16.mxu0 0
    %3906 = vmatmul.mubr.bf16.gmra.mrb[0].mxu0 %v2863
    %v3907 = vpop.f32.mrb[0].mxu0
    %v3908 = vadd.f32 0.0, %v3907
    %v3909 = vpop.f32.mrb[0].mxu0
    %v3910 = vpop.f32.mrb[0].mxu0
    %v3911 = vadd.f32 0.0, %v3910
    %v3912 = vpop.f32.mrb[0].mxu0
    %3913 = vmatprep.mubr.bf16.mxu0 0
    %3914 = vmatmul.mubr.bf16.gmra.mrb[0].mxu0 %v2866
    %v3915 = vpop.f32.mrb[0].mxu0
    %v3916 = vadd.f32 0.0, %v3915
    %v3917 = vpop.f32.mrb[0].mxu0
    %v3918 = vpop.f32.mrb[0].mxu0
    %v3919 = vadd.f32 0.0, %v3918
    %v3920 = vpop.f32.mrb[0].mxu0
    %3921 = vmatprep.mubr.bf16.mxu0 0
    %3922 = vmatmul.mubr.bf16.gmra.mrb[0].mxu0 %v2869
    %v3923 = vpop.f32.mrb[0].mxu0
    %v3924 = vadd.f32 0.0, %v3923
    %v3925 = vpop.f32.mrb[0].mxu0
    %v3926 = vpop.f32.mrb[0].mxu0
    %v3927 = vadd.f32 0.0, %v3926
    %v3928 = vpop.f32.mrb[0].mxu0
    %3929 = vmatprep.mubr.bf16.mxu0 0
    %3930 = vmatmul.mubr.bf16.gmra.mrb[0].mxu0 %v2872
    %v3931 = vpop.f32.mrb[0].mxu0
    %v3932 = vadd.f32 0.0, %v3931
    %v3933 = vpop.f32.mrb[0].mxu0
    %v3934 = vpop.f32.mrb[0].mxu0
    %v3935 = vadd.f32 0.0, %v3934
    %v3936 = vpop.f32.mrb[0].mxu0
    %3937 = vmatprep.mubr.bf16.mxu0 0
    %3938 = vmatmul.mubr.bf16.gmra.mrb[0].mxu0 %v2875
    %v3939 = vpop.f32.mrb[0].mxu0
    %v3940 = vadd.f32 0.0, %v3939
    %v3941 = vpop.f32.mrb[0].mxu0
    %v3942 = vpop.f32.mrb[0].mxu0
    %v3943 = vadd.f32 0.0, %v3942
    %v3944 = vpop.f32.mrb[0].mxu0
    %3945 = vmatprep.mubr.bf16.mxu0 0
    %3946 = vmatmul.mubr.bf16.gmra.mrb[0].mxu0 %v2878
    %v3947 = vpop.f32.mrb[0].mxu0
    %v3948 = vadd.f32 0.0, %v3947
    %v3949 = vpop.f32.mrb[0].mxu0
    %v3950 = vpop.f32.mrb[0].mxu0
    %v3951 = vadd.f32 0.0, %v3950
    %v3952 = vpop.f32.mrb[0].mxu0
    %3953 = vmatprep.mubr.bf16.mxu0 0
    %3954 = vmatmul.mubr.bf16.gmra.mrb[0].mxu0 %v2881
    %v3955 = vpop.f32.mrb[0].mxu0
    %v3956 = vadd.f32 0.0, %v3955
    %v3957 = vpop.f32.mrb[0].mxu0
    %v3958 = vpop.f32.mrb[0].mxu0
    %v3959 = vadd.f32 0.0, %v3958
    %v3960 = vpop.f32.mrb[0].mxu0
    %3961 = vmatprep.mubr.bf16.mxu0 0
    %3962 = vmatmul.mubr.bf16.gmra.mrb[0].mxu0 %v2884
    %v3963 = vpop.f32.mrb[0].mxu0
    %v3964 = vadd.f32 0.0, %v3963
    %v3965 = vpop.f32.mrb[0].mxu0
    %v3966 = vpop.f32.mrb[0].mxu0
    %v3967 = vadd.f32 0.0, %v3966
    %v3968 = vpop.f32.mrb[0].mxu0
    %3969 = vmatprep.mubr.bf16.mxu0 0
    %3970 = vmatmul.mubr.bf16.gmra.mrb[0].mxu0 %v2887
    %v3971 = vpop.f32.mrb[0].mxu0
    %v3972 = vadd.f32 0.0, %v3971
    %v3973 = vpop.f32.mrb[0].mxu0
    %v3974 = vpop.f32.mrb[0].mxu0
    %v3975 = vadd.f32 0.0, %v3974
    %v3976 = vpop.f32.mrb[0].mxu0
    %3977 = vmatprep.mubr.bf16.mxu0 0
    %3978 = vmatmul.mubr.bf16.gmra.mrb[0].mxu0 %v2890
    %v3979 = vpop.f32.mrb[0].mxu0
    %v3980 = vadd.f32 0.0, %v3979
    %v3981 = vpop.f32.mrb[0].mxu0
    %v3982 = vpop.f32.mrb[0].mxu0
    %v3983 = vadd.f32 0.0, %v3982
    %v3984 = vpop.f32.mrb[0].mxu0
    %3985 = vdwg.mxu0
    %v3986 = vld [vmem:[%s8] sm:$0xff]
    %v3987 = vld [vmem:[%s8 + $0x8] sm:$0xff]
    %3989 = vset.pattern.permute.xlu0 0
    %3990 = vperm.xlu0 %3989, %v3986
    %v3991 = vpop.permute.xlu0 %3990
    %3994 = vset.pattern.permute.xlu0 0
    %3995 = vperm.xlu0 %3994, %v3987
    %v3996 = vpop.permute.xlu0 %3995
    %v3998 = vsel %vm2391, %v3313, 0.0
    %v3999 = vsel %vm2391, %v3316, 0.0
    %v4000 = vsel %vm2391, %v3860, 0.0
    %v4001 = vsel %vm2391, %v3863, 0.0
    %v4002 = vadd.f32 %v3991, %v2927
    %v4003 = vadd.f32 %v3991, %v2929
    %v4004 = vadd.f32 %v3991, %v3120
    %v4005 = vadd.f32 %v3991, %v3122
    %v4006 = vadd.f32 %v3991, %v3998
    %v4007 = vadd.f32 %v3996, %v2931
    %v4008 = vadd.f32 %v3996, %v2933
    %v4009 = vadd.f32 %v3996, %v3124
    %v4010 = vadd.f32 %v3996, %v3126
    %v4011 = vadd.f32 %v3996, %v3999
    %v4012 = vadd.f32 %v3991, %v3474
    %v4013 = vadd.f32 %v3991, %v3476
    %v4014 = vadd.f32 %v3991, %v3667
    %v4015 = vadd.f32 %v3991, %v3669
    %v4016 = vadd.f32 %v3991, %v4000
    %v4017 = vadd.f32 %v3996, %v3478
    %v4018 = vadd.f32 %v3996, %v3480
    %v4019 = vadd.f32 %v3996, %v3671
    %v4020 = vadd.f32 %v3996, %v3673
    %v4021 = vadd.f32 %v3996, %v4001
    %4042 = vrot.lane.b32.xlu0 %v2937, 1
    %v4043 = vpop.permute.xlu0 %4042
    %4044 = vrot.lane.b32.xlu0 %v2939, 1
    %v4045 = vpop.permute.xlu0 %4044
    %4046 = vrot.lane.b32.xlu0 %v3130, 1
    %v4047 = vpop.permute.xlu0 %4046
    %4048 = vrot.lane.b32.xlu0 %v3132, 1
    %v4049 = vpop.permute.xlu0 %4048
    %4050 = vrot.lane.b32.xlu0 %v3321, 1
    %v4051 = vpop.permute.xlu0 %4050
    %4052 = vrot.lane.b32.xlu0 %v2941, 1
    %v4053 = vpop.permute.xlu0 %4052
    %4054 = vrot.lane.b32.xlu0 %v2943, 1
    %v4055 = vpop.permute.xlu0 %4054
    %4056 = vrot.lane.b32.xlu0 %v3134, 1
    %v4057 = vpop.permute.xlu0 %4056
    %4058 = vrot.lane.b32.xlu0 %v3136, 1
    %v4059 = vpop.permute.xlu0 %4058
    %4060 = vrot.lane.b32.xlu0 %v3324, 1
    %v4061 = vpop.permute.xlu0 %4060
    %4062 = vrot.lane.b32.xlu0 %v3484, 1
    %v4063 = vpop.permute.xlu0 %4062
    %4064 = vrot.lane.b32.xlu0 %v3486, 1
    %v4065 = vpop.permute.xlu0 %4064
    %4066 = vrot.lane.b32.xlu0 %v3677, 1
    %v4067 = vpop.permute.xlu0 %4066
    %4068 = vrot.lane.b32.xlu0 %v3679, 1
    %v4069 = vpop.permute.xlu0 %4068
    %4070 = vrot.lane.b32.xlu0 %v3868, 1
    %v4071 = vpop.permute.xlu0 %4070
    %4072 = vrot.lane.b32.xlu0 %v3488, 1
    %v4073 = vpop.permute.xlu0 %4072
    %4074 = vrot.lane.b32.xlu0 %v3490, 1
    %v4075 = vpop.permute.xlu0 %4074
    %4076 = vrot.lane.b32.xlu0 %v3681, 1
    %v4077 = vpop.permute.xlu0 %4076
    %4078 = vrot.lane.b32.xlu0 %v3683, 1
    %v4079 = vpop.permute.xlu0 %4078
    %4080 = vrot.lane.b32.xlu0 %v3871, 1
    %v4081 = vpop.permute.xlu0 %4080
    %vm4082 = vcmask 7168
    %v4083 = vsel %vm4082, %v4043, %v4045
    %v4084 = vsel %vm4082, %v4045, %v4047
    %v4085 = vsel %vm4082, %v4047, %v4049
    %v4086 = vsel %vm4082, %v4049, %v4051
    %v4087 = vsel %vm4082, %v4053, %v4055
    %v4088 = vsel %vm4082, %v4055, %v4057
    %v4089 = vsel %vm4082, %v4057, %v4059
    %v4090 = vsel %vm4082, %v4059, %v4061
    %v4091 = vsel %vm4082, %v4063, %v4065
    %v4092 = vsel %vm4082, %v4065, %v4067
    %v4093 = vsel %vm4082, %v4067, %v4069
    %v4094 = vsel %vm4082, %v4069, %v4071
    %v4095 = vsel %vm4082, %v4073, %v4075
    %v4096 = vsel %vm4082, %v4075, %v4077
    %v4097 = vsel %vm4082, %v4077, %v4079
    %v4098 = vsel %vm4082, %v4079, %v4081
    %v4119 = vsel %vm4082, 0.0, %v4043
    %v4120 = vsel %vm4082, 0.0, %v4053
    %v4121 = vsel %vm4082, 0.0, %v4063
    %v4122 = vsel %vm4082, 0.0, %v4073
    %vm4123 = vcmask 539648
    %v4124 = vsel %vm4123, %v4086, 0.0
    %v4125 = vsel %vm4123, %v4090, 0.0
    %v4126 = vsel %vm4123, %v4094, 0.0
    %v4127 = vsel %vm4123, %v4098, 0.0
    %v4128 = vadd.f32 %v4002, %v4119
    %v4129 = vadd.f32 %v4003, %v4083
    %v4130 = vadd.f32 %v4004, %v4084
    %v4131 = vadd.f32 %v4005, %v4085
    %v4132 = vadd.f32 %v4006, %v4124
    %v4133 = vadd.f32 %v4007, %v4120
    %v4134 = vadd.f32 %v4008, %v4087
    %v4135 = vadd.f32 %v4009, %v4088
    %v4136 = vadd.f32 %v4010, %v4089
    %v4137 = vadd.f32 %v4011, %v4125
    %v4138 = vadd.f32 %v4012, %v4121
    %v4139 = vadd.f32 %v4013, %v4091
    %v4140 = vadd.f32 %v4014, %v4092
    %v4141 = vadd.f32 %v4015, %v4093
    %v4142 = vadd.f32 %v4016, %v4126
    %v4143 = vadd.f32 %v4017, %v4122
    %v4144 = vadd.f32 %v4018, %v4095
    %v4145 = vadd.f32 %v4019, %v4096
    %v4146 = vadd.f32 %v4020, %v4097
    %v4147 = vadd.f32 %v4021, %v4127
    %4168 = vrot.lane.b32.xlu0 %v2947, 2
    %v4169 = vpop.permute.xlu0 %4168
    %4170 = vrot.lane.b32.xlu0 %v2949, 2
    %v4171 = vpop.permute.xlu0 %4170
    %4172 = vrot.lane.b32.xlu0 %v3140, 2
    %v4173 = vpop.permute.xlu0 %4172
    %4174 = vrot.lane.b32.xlu0 %v3142, 2
    %v4175 = vpop.permute.xlu0 %4174
    %4176 = vrot.lane.b32.xlu0 %v3329, 2
    %v4177 = vpop.permute.xlu0 %4176
    %4178 = vrot.lane.b32.xlu0 %v2951, 2
    %v4179 = vpop.permute.xlu0 %4178
    %4180 = vrot.lane.b32.xlu0 %v2953, 2
    %v4181 = vpop.permute.xlu0 %4180
    %4182 = vrot.lane.b32.xlu0 %v3144, 2
    %v4183 = vpop.permute.xlu0 %4182
    %4184 = vrot.lane.b32.xlu0 %v3146, 2
    %v4185 = vpop.permute.xlu0 %4184
    %4186 = vrot.lane.b32.xlu0 %v3332, 2
    %v4187 = vpop.permute.xlu0 %4186
    %4188 = vrot.lane.b32.xlu0 %v3494, 2
    %v4189 = vpop.permute.xlu0 %4188
    %4190 = vrot.lane.b32.xlu0 %v3496, 2
    %v4191 = vpop.permute.xlu0 %4190
    %4192 = vrot.lane.b32.xlu0 %v3687, 2
    %v4193 = vpop.permute.xlu0 %4192
    %4194 = vrot.lane.b32.xlu0 %v3689, 2
    %v4195 = vpop.permute.xlu0 %4194
    %4196 = vrot.lane.b32.xlu0 %v3876, 2
    %v4197 = vpop.permute.xlu0 %4196
    %4198 = vrot.lane.b32.xlu0 %v3498, 2
    %v4199 = vpop.permute.xlu0 %4198
    %4200 = vrot.lane.b32.xlu0 %v3500, 2
    %v4201 = vpop.permute.xlu0 %4200
    %4202 = vrot.lane.b32.xlu0 %v3691, 2
    %v4203 = vpop.permute.xlu0 %4202
    %4204 = vrot.lane.b32.xlu0 %v3693, 2
    %v4205 = vpop.permute.xlu0 %4204
    %4206 = vrot.lane.b32.xlu0 %v3879, 2
    %v4207 = vpop.permute.xlu0 %4206
    %vm4208 = vcmask 15360
    %v4209 = vsel %vm4208, %v4169, %v4171
    %v4210 = vsel %vm4208, %v4171, %v4173
    %v4211 = vsel %vm4208, %v4173, %v4175
    %v4212 = vsel %vm4208, %v4175, %v4177
    %v4213 = vsel %vm4208, %v4179, %v4181
    %v4214 = vsel %vm4208, %v4181, %v4183
    %v4215 = vsel %vm4208, %v4183, %v4185
    %v4216 = vsel %vm4208, %v4185, %v4187
    %v4217 = vsel %vm4208, %v4189, %v4191
    %v4218 = vsel %vm4208, %v4191, %v4193
    %v4219 = vsel %vm4208, %v4193, %v4195
    %v4220 = vsel %vm4208, %v4195, %v4197
    %v4221 = vsel %vm4208, %v4199, %v4201
    %v4222 = vsel %vm4208, %v4201, %v4203
    %v4223 = vsel %vm4208, %v4203, %v4205
    %v4224 = vsel %vm4208, %v4205, %v4207
    %v4245 = vsel %vm4208, 0.0, %v4169
    %v4246 = vsel %vm4208, 0.0, %v4179
    %v4247 = vsel %vm4208, 0.0, %v4189
    %v4248 = vsel %vm4208, 0.0, %v4199
    %vm4249 = vcmask 547840
    %v4250 = vsel %vm4249, %v4212, 0.0
    %v4251 = vsel %vm4249, %v4216, 0.0
    %v4252 = vsel %vm4249, %v4220, 0.0
    %v4253 = vsel %vm4249, %v4224, 0.0
    %v4254 = vadd.f32 %v4128, %v4245
    %v4255 = vadd.f32 %v4129, %v4209
    %v4256 = vadd.f32 %v4130, %v4210
    %v4257 = vadd.f32 %v4131, %v4211
    %v4258 = vadd.f32 %v4132, %v4250
    %v4259 = vadd.f32 %v4133, %v4246
    %v4260 = vadd.f32 %v4134, %v4213
    %v4261 = vadd.f32 %v4135, %v4214
    %v4262 = vadd.f32 %v4136, %v4215
    %v4263 = vadd.f32 %v4137, %v4251
    %v4264 = vadd.f32 %v4138, %v4247
    %v4265 = vadd.f32 %v4139, %v4217
    %v4266 = vadd.f32 %v4140, %v4218
    %v4267 = vadd.f32 %v4141, %v4219
    %v4268 = vadd.f32 %v4142, %v4252
    %v4269 = vadd.f32 %v4143, %v4248
    %v4270 = vadd.f32 %v4144, %v4221
    %v4271 = vadd.f32 %v4145, %v4222
    %v4272 = vadd.f32 %v4146, %v4223
    %v4273 = vadd.f32 %v4147, %v4253
    %4294 = vrot.lane.b32.xlu0 %v2957, 3
    %v4295 = vpop.permute.xlu0 %4294
    %4296 = vrot.lane.b32.xlu0 %v2959, 3
    %v4297 = vpop.permute.xlu0 %4296
    %4298 = vrot.lane.b32.xlu0 %v3150, 3
    %v4299 = vpop.permute.xlu0 %4298
    %4300 = vrot.lane.b32.xlu0 %v3152, 3
    %v4301 = vpop.permute.xlu0 %4300
    %4302 = vrot.lane.b32.xlu0 %v3337, 3
    %v4303 = vpop.permute.xlu0 %4302
    %4304 = vrot.lane.b32.xlu0 %v2961, 3
    %v4305 = vpop.permute.xlu0 %4304
    %4306 = vrot.lane.b32.xlu0 %v2963, 3
    %v4307 = vpop.permute.xlu0 %4306
    %4308 = vrot.lane.b32.xlu0 %v3154, 3
    %v4309 = vpop.permute.xlu0 %4308
    %4310 = vrot.lane.b32.xlu0 %v3156, 3
    %v4311 = vpop.permute.xlu0 %4310
    %4312 = vrot.lane.b32.xlu0 %v3340, 3
    %v4313 = vpop.permute.xlu0 %4312
    %4314 = vrot.lane.b32.xlu0 %v3504, 3
    %v4315 = vpop.permute.xlu0 %4314
    %4316 = vrot.lane.b32.xlu0 %v3506, 3
    %v4317 = vpop.permute.xlu0 %4316
    %4318 = vrot.lane.b32.xlu0 %v3697, 3
    %v4319 = vpop.permute.xlu0 %4318
    %4320 = vrot.lane.b32.xlu0 %v3699, 3
    %v4321 = vpop.permute.xlu0 %4320
    %4322 = vrot.lane.b32.xlu0 %v3884, 3
    %v4323 = vpop.permute.xlu0 %4322
    %4324 = vrot.lane.b32.xlu0 %v3508, 3
    %v4325 = vpop.permute.xlu0 %4324
    %4326 = vrot.lane.b32.xlu0 %v3510, 3
    %v4327 = vpop.permute.xlu0 %4326
    %4328 = vrot.lane.b32.xlu0 %v3701, 3
    %v4329 = vpop.permute.xlu0 %4328
    %4330 = vrot.lane.b32.xlu0 %v3703, 3
    %v4331 = vpop.permute.xlu0 %4330
    %4332 = vrot.lane.b32.xlu0 %v3887, 3
    %v4333 = vpop.permute.xlu0 %4332
    %vm4334 = vcmask 23552
    %v4335 = vsel %vm4334, %v4295, %v4297
    %v4336 = vsel %vm4334, %v4297, %v4299
    %v4337 = vsel %vm4334, %v4299, %v4301
    %v4338 = vsel %vm4334, %v4301, %v4303
    %v4339 = vsel %vm4334, %v4305, %v4307
    %v4340 = vsel %vm4334, %v4307, %v4309
    %v4341 = vsel %vm4334, %v4309, %v4311
    %v4342 = vsel %vm4334, %v4311, %v4313
    %v4343 = vsel %vm4334, %v4315, %v4317
    %v4344 = vsel %vm4334, %v4317, %v4319
    %v4345 = vsel %vm4334, %v4319, %v4321
    %v4346 = vsel %vm4334, %v4321, %v4323
    %v4347 = vsel %vm4334, %v4325, %v4327
    %v4348 = vsel %vm4334, %v4327, %v4329
    %v4349 = vsel %vm4334, %v4329, %v4331
    %v4350 = vsel %vm4334, %v4331, %v4333
    %v4371 = vsel %vm4334, 0.0, %v4295
    %v4372 = vsel %vm4334, 0.0, %v4305
    %v4373 = vsel %vm4334, 0.0, %v4315
    %v4374 = vsel %vm4334, 0.0, %v4325
    %vm4375 = vcmask 556032
    %v4376 = vsel %vm4375, %v4338, 0.0
    %v4377 = vsel %vm4375, %v4342, 0.0
    %v4378 = vsel %vm4375, %v4346, 0.0
    %v4379 = vsel %vm4375, %v4350, 0.0
    %v4380 = vadd.f32 %v4254, %v4371
    %v4381 = vadd.f32 %v4255, %v4335
    %v4382 = vadd.f32 %v4256, %v4336
    %v4383 = vadd.f32 %v4257, %v4337
    %v4384 = vadd.f32 %v4258, %v4376
    %v4385 = vadd.f32 %v4259, %v4372
    %v4386 = vadd.f32 %v4260, %v4339
    %v4387 = vadd.f32 %v4261, %v4340
    %v4388 = vadd.f32 %v4262, %v4341
    %v4389 = vadd.f32 %v4263, %v4377
    %v4390 = vadd.f32 %v4264, %v4373
    %v4391 = vadd.f32 %v4265, %v4343
    %v4392 = vadd.f32 %v4266, %v4344
    %v4393 = vadd.f32 %v4267, %v4345
    %v4394 = vadd.f32 %v4268, %v4378
    %v4395 = vadd.f32 %v4269, %v4374
    %v4396 = vadd.f32 %v4270, %v4347
    %v4397 = vadd.f32 %v4271, %v4348
    %v4398 = vadd.f32 %v4272, %v4349
    %v4399 = vadd.f32 %v4273, %v4379
    %4420 = vrot.lane.b32.xlu0 %v2967, 4
    %v4421 = vpop.permute.xlu0 %4420
    %4422 = vrot.lane.b32.xlu0 %v2969, 4
    %v4423 = vpop.permute.xlu0 %4422
    %4424 = vrot.lane.b32.xlu0 %v3160, 4
    %v4425 = vpop.permute.xlu0 %4424
    %4426 = vrot.lane.b32.xlu0 %v3162, 4
    %v4427 = vpop.permute.xlu0 %4426
    %4428 = vrot.lane.b32.xlu0 %v3345, 4
    %v4429 = vpop.permute.xlu0 %4428
    %4430 = vrot.lane.b32.xlu0 %v2971, 4
    %v4431 = vpop.permute.xlu0 %4430
    %4432 = vrot.lane.b32.xlu0 %v2973, 4
    %v4433 = vpop.permute.xlu0 %4432
    %4434 = vrot.lane.b32.xlu0 %v3164, 4
    %v4435 = vpop.permute.xlu0 %4434
    %4436 = vrot.lane.b32.xlu0 %v3166, 4
    %v4437 = vpop.permute.xlu0 %4436
    %4438 = vrot.lane.b32.xlu0 %v3348, 4
    %v4439 = vpop.permute.xlu0 %4438
    %4440 = vrot.lane.b32.xlu0 %v3514, 4
    %v4441 = vpop.permute.xlu0 %4440
    %4442 = vrot.lane.b32.xlu0 %v3516, 4
    %v4443 = vpop.permute.xlu0 %4442
    %4444 = vrot.lane.b32.xlu0 %v3707, 4
    %v4445 = vpop.permute.xlu0 %4444
    %4446 = vrot.lane.b32.xlu0 %v3709, 4
    %v4447 = vpop.permute.xlu0 %4446
    %4448 = vrot.lane.b32.xlu0 %v3892, 4
    %v4449 = vpop.permute.xlu0 %4448
    %4450 = vrot.lane.b32.xlu0 %v3518, 4
    %v4451 = vpop.permute.xlu0 %4450
    %4452 = vrot.lane.b32.xlu0 %v3520, 4
    %v4453 = vpop.permute.xlu0 %4452
    %4454 = vrot.lane.b32.xlu0 %v3711, 4
    %v4455 = vpop.permute.xlu0 %4454
    %4456 = vrot.lane.b32.xlu0 %v3713, 4
    %v4457 = vpop.permute.xlu0 %4456
    %4458 = vrot.lane.b32.xlu0 %v3895, 4
    %v4459 = vpop.permute.xlu0 %4458
    %vm4460 = vcmask 31744
    %v4461 = vsel %vm4460, %v4421, %v4423
    %v4462 = vsel %vm4460, %v4423, %v4425
    %v4463 = vsel %vm4460, %v4425, %v4427
    %v4464 = vsel %vm4460, %v4427, %v4429
    %v4465 = vsel %vm4460, %v4431, %v4433
    %v4466 = vsel %vm4460, %v4433, %v4435
    %v4467 = vsel %vm4460, %v4435, %v4437
    %v4468 = vsel %vm4460, %v4437, %v4439
    %v4469 = vsel %vm4460, %v4441, %v4443
    %v4470 = vsel %vm4460, %v4443, %v4445
    %v4471 = vsel %vm4460, %v4445, %v4447
    %v4472 = vsel %vm4460, %v4447, %v4449
    %v4473 = vsel %vm4460, %v4451, %v4453
    %v4474 = vsel %vm4460, %v4453, %v4455
    %v4475 = vsel %vm4460, %v4455, %v4457
    %v4476 = vsel %vm4460, %v4457, %v4459
    %v4497 = vsel %vm4460, 0.0, %v4421
    %v4498 = vsel %vm4460, 0.0, %v4431
    %v4499 = vsel %vm4460, 0.0, %v4441
    %v4500 = vsel %vm4460, 0.0, %v4451
    %vm4501 = vcmask 564224
    %v4502 = vsel %vm4501, %v4464, 0.0
    %v4503 = vsel %vm4501, %v4468, 0.0
    %v4504 = vsel %vm4501, %v4472, 0.0
    %v4505 = vsel %vm4501, %v4476, 0.0
    %v4506 = vadd.f32 %v4380, %v4497
    %v4507 = vadd.f32 %v4381, %v4461
    %v4508 = vadd.f32 %v4382, %v4462
    %v4509 = vadd.f32 %v4383, %v4463
    %v4510 = vadd.f32 %v4384, %v4502
    %v4511 = vadd.f32 %v4385, %v4498
    %v4512 = vadd.f32 %v4386, %v4465
    %v4513 = vadd.f32 %v4387, %v4466
    %v4514 = vadd.f32 %v4388, %v4467
    %v4515 = vadd.f32 %v4389, %v4503
    %v4516 = vadd.f32 %v4390, %v4499
    %v4517 = vadd.f32 %v4391, %v4469
    %v4518 = vadd.f32 %v4392, %v4470
    %v4519 = vadd.f32 %v4393, %v4471
    %v4520 = vadd.f32 %v4394, %v4504
    %v4521 = vadd.f32 %v4395, %v4500
    %v4522 = vadd.f32 %v4396, %v4473
    %v4523 = vadd.f32 %v4397, %v4474
    %v4524 = vadd.f32 %v4398, %v4475
    %v4525 = vadd.f32 %v4399, %v4505
    %4546 = vrot.lane.b32.xlu0 %v2977, 5
    %v4547 = vpop.permute.xlu0 %4546
    %4548 = vrot.lane.b32.xlu0 %v2979, 5
    %v4549 = vpop.permute.xlu0 %4548
    %4550 = vrot.lane.b32.xlu0 %v3170, 5
    %v4551 = vpop.permute.xlu0 %4550
    %4552 = vrot.lane.b32.xlu0 %v3172, 5
    %v4553 = vpop.permute.xlu0 %4552
    %4554 = vrot.lane.b32.xlu0 %v3353, 5
    %v4555 = vpop.permute.xlu0 %4554
    %4556 = vrot.lane.b32.xlu0 %v2981, 5
    %v4557 = vpop.permute.xlu0 %4556
    %4558 = vrot.lane.b32.xlu0 %v2983, 5
    %v4559 = vpop.permute.xlu0 %4558
    %4560 = vrot.lane.b32.xlu0 %v3174, 5
    %v4561 = vpop.permute.xlu0 %4560
    %4562 = vrot.lane.b32.xlu0 %v3176, 5
    %v4563 = vpop.permute.xlu0 %4562
    %4564 = vrot.lane.b32.xlu0 %v3356, 5
    %v4565 = vpop.permute.xlu0 %4564
    %4566 = vrot.lane.b32.xlu0 %v3524, 5
    %v4567 = vpop.permute.xlu0 %4566
    %4568 = vrot.lane.b32.xlu0 %v3526, 5
    %v4569 = vpop.permute.xlu0 %4568
    %4570 = vrot.lane.b32.xlu0 %v3717, 5
    %v4571 = vpop.permute.xlu0 %4570
    %4572 = vrot.lane.b32.xlu0 %v3719, 5
    %v4573 = vpop.permute.xlu0 %4572
    %4574 = vrot.lane.b32.xlu0 %v3900, 5
    %v4575 = vpop.permute.xlu0 %4574
    %4576 = vrot.lane.b32.xlu0 %v3528, 5
    %v4577 = vpop.permute.xlu0 %4576
    %4578 = vrot.lane.b32.xlu0 %v3530, 5
    %v4579 = vpop.permute.xlu0 %4578
    %4580 = vrot.lane.b32.xlu0 %v3721, 5
    %v4581 = vpop.permute.xlu0 %4580
    %4582 = vrot.lane.b32.xlu0 %v3723, 5
    %v4583 = vpop.permute.xlu0 %4582
    %4584 = vrot.lane.b32.xlu0 %v3903, 5
    %v4585 = vpop.permute.xlu0 %4584
    %vm4586 = vcmask 39936
    %v4587 = vsel %vm4586, %v4547, %v4549
    %v4588 = vsel %vm4586, %v4549, %v4551
    %v4589 = vsel %vm4586, %v4551, %v4553
    %v4590 = vsel %vm4586, %v4553, %v4555
    %v4591 = vsel %vm4586, %v4557, %v4559
    %v4592 = vsel %vm4586, %v4559, %v4561
    %v4593 = vsel %vm4586, %v4561, %v4563
    %v4594 = vsel %vm4586, %v4563, %v4565
    %v4595 = vsel %vm4586, %v4567, %v4569
    %v4596 = vsel %vm4586, %v4569, %v4571
    %v4597 = vsel %vm4586, %v4571, %v4573
    %v4598 = vsel %vm4586, %v4573, %v4575
    %v4599 = vsel %vm4586, %v4577, %v4579
    %v4600 = vsel %vm4586, %v4579, %v4581
    %v4601 = vsel %vm4586, %v4581, %v4583
    %v4602 = vsel %vm4586, %v4583, %v4585
    %v4623 = vsel %vm4586, 0.0, %v4547
    %v4624 = vsel %vm4586, 0.0, %v4557
    %v4625 = vsel %vm4586, 0.0, %v4567
    %v4626 = vsel %vm4586, 0.0, %v4577
    %vm4627 = vcmask 572416
    %v4628 = vsel %vm4627, %v4590, 0.0
    %v4629 = vsel %vm4627, %v4594, 0.0
    %v4630 = vsel %vm4627, %v4598, 0.0
    %v4631 = vsel %vm4627, %v4602, 0.0
    %v4632 = vadd.f32 %v4506, %v4623
    %v4633 = vadd.f32 %v4507, %v4587
    %v4634 = vadd.f32 %v4508, %v4588
    %v4635 = vadd.f32 %v4509, %v4589
    %v4636 = vadd.f32 %v4510, %v4628
    %v4637 = vadd.f32 %v4511, %v4624
    %v4638 = vadd.f32 %v4512, %v4591
    %v4639 = vadd.f32 %v4513, %v4592
    %v4640 = vadd.f32 %v4514, %v4593
    %v4641 = vadd.f32 %v4515, %v4629
    %v4642 = vadd.f32 %v4516, %v4625
    %v4643 = vadd.f32 %v4517, %v4595
    %v4644 = vadd.f32 %v4518, %v4596
    %v4645 = vadd.f32 %v4519, %v4597
    %v4646 = vadd.f32 %v4520, %v4630
    %v4647 = vadd.f32 %v4521, %v4626
    %v4648 = vadd.f32 %v4522, %v4599
    %v4649 = vadd.f32 %v4523, %v4600
    %v4650 = vadd.f32 %v4524, %v4601
    %v4651 = vadd.f32 %v4525, %v4631
    %4672 = vrot.lane.b32.xlu0 %v2987, 6
    %v4673 = vpop.permute.xlu0 %4672
    %4674 = vrot.lane.b32.xlu0 %v2989, 6
    %v4675 = vpop.permute.xlu0 %4674
    %4676 = vrot.lane.b32.xlu0 %v3180, 6
    %v4677 = vpop.permute.xlu0 %4676
    %4678 = vrot.lane.b32.xlu0 %v3182, 6
    %v4679 = vpop.permute.xlu0 %4678
    %4680 = vrot.lane.b32.xlu0 %v3361, 6
    %v4681 = vpop.permute.xlu0 %4680
    %4682 = vrot.lane.b32.xlu0 %v2991, 6
    %v4683 = vpop.permute.xlu0 %4682
    %4684 = vrot.lane.b32.xlu0 %v2993, 6
    %v4685 = vpop.permute.xlu0 %4684
    %4686 = vrot.lane.b32.xlu0 %v3184, 6
    %v4687 = vpop.permute.xlu0 %4686
    %4688 = vrot.lane.b32.xlu0 %v3186, 6
    %v4689 = vpop.permute.xlu0 %4688
    %4690 = vrot.lane.b32.xlu0 %v3364, 6
    %v4691 = vpop.permute.xlu0 %4690
    %4692 = vrot.lane.b32.xlu0 %v3534, 6
    %v4693 = vpop.permute.xlu0 %4692
    %4694 = vrot.lane.b32.xlu0 %v3536, 6
    %v4695 = vpop.permute.xlu0 %4694
    %4696 = vrot.lane.b32.xlu0 %v3727, 6
    %v4697 = vpop.permute.xlu0 %4696
    %4698 = vrot.lane.b32.xlu0 %v3729, 6
    %v4699 = vpop.permute.xlu0 %4698
    %4700 = vrot.lane.b32.xlu0 %v3908, 6
    %v4701 = vpop.permute.xlu0 %4700
    %4702 = vrot.lane.b32.xlu0 %v3538, 6
    %v4703 = vpop.permute.xlu0 %4702
    %4704 = vrot.lane.b32.xlu0 %v3540, 6
    %v4705 = vpop.permute.xlu0 %4704
    %4706 = vrot.lane.b32.xlu0 %v3731, 6
    %v4707 = vpop.permute.xlu0 %4706
    %4708 = vrot.lane.b32.xlu0 %v3733, 6
    %v4709 = vpop.permute.xlu0 %4708
    %4710 = vrot.lane.b32.xlu0 %v3911, 6
    %v4711 = vpop.permute.xlu0 %4710
    %vm4712 = vcmask 48128
    %v4713 = vsel %vm4712, %v4673, %v4675
    %v4714 = vsel %vm4712, %v4675, %v4677
    %v4715 = vsel %vm4712, %v4677, %v4679
    %v4716 = vsel %vm4712, %v4679, %v4681
    %v4717 = vsel %vm4712, %v4683, %v4685
    %v4718 = vsel %vm4712, %v4685, %v4687
    %v4719 = vsel %vm4712, %v4687, %v4689
    %v4720 = vsel %vm4712, %v4689, %v4691
    %v4721 = vsel %vm4712, %v4693, %v4695
    %v4722 = vsel %vm4712, %v4695, %v4697
    %v4723 = vsel %vm4712, %v4697, %v4699
    %v4724 = vsel %vm4712, %v4699, %v4701
    %v4725 = vsel %vm4712, %v4703, %v4705
    %v4726 = vsel %vm4712, %v4705, %v4707
    %v4727 = vsel %vm4712, %v4707, %v4709
    %v4728 = vsel %vm4712, %v4709, %v4711
    %v4749 = vsel %vm4712, 0.0, %v4673
    %v4750 = vsel %vm4712, 0.0, %v4683
    %v4751 = vsel %vm4712, 0.0, %v4693
    %v4752 = vsel %vm4712, 0.0, %v4703
    %vm4753 = vcmask 580608
    %v4754 = vsel %vm4753, %v4716, 0.0
    %v4755 = vsel %vm4753, %v4720, 0.0
    %v4756 = vsel %vm4753, %v4724, 0.0
    %v4757 = vsel %vm4753, %v4728, 0.0
    %v4758 = vadd.f32 %v4632, %v4749
    %v4759 = vadd.f32 %v4633, %v4713
    %v4760 = vadd.f32 %v4634, %v4714
    %v4761 = vadd.f32 %v4635, %v4715
    %v4762 = vadd.f32 %v4636, %v4754
    %v4763 = vadd.f32 %v4637, %v4750
    %v4764 = vadd.f32 %v4638, %v4717
    %v4765 = vadd.f32 %v4639, %v4718
    %v4766 = vadd.f32 %v4640, %v4719
    %v4767 = vadd.f32 %v4641, %v4755
    %v4768 = vadd.f32 %v4642, %v4751
    %v4769 = vadd.f32 %v4643, %v4721
    %v4770 = vadd.f32 %v4644, %v4722
    %v4771 = vadd.f32 %v4645, %v4723
    %v4772 = vadd.f32 %v4646, %v4756
    %v4773 = vadd.f32 %v4647, %v4752
    %v4774 = vadd.f32 %v4648, %v4725
    %v4775 = vadd.f32 %v4649, %v4726
    %v4776 = vadd.f32 %v4650, %v4727
    %v4777 = vadd.f32 %v4651, %v4757
    %4798 = vrot.lane.b32.xlu0 %v2997, 7
    %v4799 = vpop.permute.xlu0 %4798
    %4800 = vrot.lane.b32.xlu0 %v2999, 7
    %v4801 = vpop.permute.xlu0 %4800
    %4802 = vrot.lane.b32.xlu0 %v3190, 7
    %v4803 = vpop.permute.xlu0 %4802
    %4804 = vrot.lane.b32.xlu0 %v3192, 7
    %v4805 = vpop.permute.xlu0 %4804
    %4806 = vrot.lane.b32.xlu0 %v3369, 7
    %v4807 = vpop.permute.xlu0 %4806
    %4808 = vrot.lane.b32.xlu0 %v3001, 7
    %v4809 = vpop.permute.xlu0 %4808
    %4810 = vrot.lane.b32.xlu0 %v3003, 7
    %v4811 = vpop.permute.xlu0 %4810
    %4812 = vrot.lane.b32.xlu0 %v3194, 7
    %v4813 = vpop.permute.xlu0 %4812
    %4814 = vrot.lane.b32.xlu0 %v3196, 7
    %v4815 = vpop.permute.xlu0 %4814
    %4816 = vrot.lane.b32.xlu0 %v3372, 7
    %v4817 = vpop.permute.xlu0 %4816
    %4818 = vrot.lane.b32.xlu0 %v3544, 7
    %v4819 = vpop.permute.xlu0 %4818
    %4820 = vrot.lane.b32.xlu0 %v3546, 7
    %v4821 = vpop.permute.xlu0 %4820
    %4822 = vrot.lane.b32.xlu0 %v3737, 7
    %v4823 = vpop.permute.xlu0 %4822
    %4824 = vrot.lane.b32.xlu0 %v3739, 7
    %v4825 = vpop.permute.xlu0 %4824
    %4826 = vrot.lane.b32.xlu0 %v3916, 7
    %v4827 = vpop.permute.xlu0 %4826
    %4828 = vrot.lane.b32.xlu0 %v3548, 7
    %v4829 = vpop.permute.xlu0 %4828
    %4830 = vrot.lane.b32.xlu0 %v3550, 7
    %v4831 = vpop.permute.xlu0 %4830
    %4832 = vrot.lane.b32.xlu0 %v3741, 7
    %v4833 = vpop.permute.xlu0 %4832
    %4834 = vrot.lane.b32.xlu0 %v3743, 7
    %v4835 = vpop.permute.xlu0 %4834
    %4836 = vrot.lane.b32.xlu0 %v3919, 7
    %v4837 = vpop.permute.xlu0 %4836
    %vm4838 = vcmask 56320
    %v4839 = vsel %vm4838, %v4799, %v4801
    %v4840 = vsel %vm4838, %v4801, %v4803
    %v4841 = vsel %vm4838, %v4803, %v4805
    %v4842 = vsel %vm4838, %v4805, %v4807
    %v4843 = vsel %vm4838, %v4809, %v4811
    %v4844 = vsel %vm4838, %v4811, %v4813
    %v4845 = vsel %vm4838, %v4813, %v4815
    %v4846 = vsel %vm4838, %v4815, %v4817
    %v4847 = vsel %vm4838, %v4819, %v4821
    %v4848 = vsel %vm4838, %v4821, %v4823
    %v4849 = vsel %vm4838, %v4823, %v4825
    %v4850 = vsel %vm4838, %v4825, %v4827
    %v4851 = vsel %vm4838, %v4829, %v4831
    %v4852 = vsel %vm4838, %v4831, %v4833
    %v4853 = vsel %vm4838, %v4833, %v4835
    %v4854 = vsel %vm4838, %v4835, %v4837
    %v4875 = vsel %vm4838, 0.0, %v4799
    %v4876 = vsel %vm4838, 0.0, %v4809
    %v4877 = vsel %vm4838, 0.0, %v4819
    %v4878 = vsel %vm4838, 0.0, %v4829
    %vm4879 = vcmask 588800
    %v4880 = vsel %vm4879, %v4842, 0.0
    %v4881 = vsel %vm4879, %v4846, 0.0
    %v4882 = vsel %vm4879, %v4850, 0.0
    %v4883 = vsel %vm4879, %v4854, 0.0
    %v4884 = vadd.f32 %v4758, %v4875
    %v4885 = vadd.f32 %v4759, %v4839
    %v4886 = vadd.f32 %v4760, %v4840
    %v4887 = vadd.f32 %v4761, %v4841
    %v4888 = vadd.f32 %v4762, %v4880
    %v4889 = vadd.f32 %v4763, %v4876
    %v4890 = vadd.f32 %v4764, %v4843
    %v4891 = vadd.f32 %v4765, %v4844
    %v4892 = vadd.f32 %v4766, %v4845
    %v4893 = vadd.f32 %v4767, %v4881
    %v4894 = vadd.f32 %v4768, %v4877
    %v4895 = vadd.f32 %v4769, %v4847
    %v4896 = vadd.f32 %v4770, %v4848
    %v4897 = vadd.f32 %v4771, %v4849
    %v4898 = vadd.f32 %v4772, %v4882
    %v4899 = vadd.f32 %v4773, %v4878
    %v4900 = vadd.f32 %v4774, %v4851
    %v4901 = vadd.f32 %v4775, %v4852
    %v4902 = vadd.f32 %v4776, %v4853
    %v4903 = vadd.f32 %v4777, %v4883
    %4924 = vrot.lane.b32.xlu0 %v3007, 8
    %v4925 = vpop.permute.xlu0 %4924
    %4926 = vrot.lane.b32.xlu0 %v3009, 8
    %v4927 = vpop.permute.xlu0 %4926
    %4928 = vrot.lane.b32.xlu0 %v3200, 8
    %v4929 = vpop.permute.xlu0 %4928
    %4930 = vrot.lane.b32.xlu0 %v3202, 8
    %v4931 = vpop.permute.xlu0 %4930
    %4932 = vrot.lane.b32.xlu0 %v3377, 8
    %v4933 = vpop.permute.xlu0 %4932
    %4934 = vrot.lane.b32.xlu0 %v3011, 8
    %v4935 = vpop.permute.xlu0 %4934
    %4936 = vrot.lane.b32.xlu0 %v3013, 8
    %v4937 = vpop.permute.xlu0 %4936
    %4938 = vrot.lane.b32.xlu0 %v3204, 8
    %v4939 = vpop.permute.xlu0 %4938
    %4940 = vrot.lane.b32.xlu0 %v3206, 8
    %v4941 = vpop.permute.xlu0 %4940
    %4942 = vrot.lane.b32.xlu0 %v3380, 8
    %v4943 = vpop.permute.xlu0 %4942
    %4944 = vrot.lane.b32.xlu0 %v3554, 8
    %v4945 = vpop.permute.xlu0 %4944
    %4946 = vrot.lane.b32.xlu0 %v3556, 8
    %v4947 = vpop.permute.xlu0 %4946
    %4948 = vrot.lane.b32.xlu0 %v3747, 8
    %v4949 = vpop.permute.xlu0 %4948
    %4950 = vrot.lane.b32.xlu0 %v3749, 8
    %v4951 = vpop.permute.xlu0 %4950
    %4952 = vrot.lane.b32.xlu0 %v3924, 8
    %v4953 = vpop.permute.xlu0 %4952
    %4954 = vrot.lane.b32.xlu0 %v3558, 8
    %v4955 = vpop.permute.xlu0 %4954
    %4956 = vrot.lane.b32.xlu0 %v3560, 8
    %v4957 = vpop.permute.xlu0 %4956
    %4958 = vrot.lane.b32.xlu0 %v3751, 8
    %v4959 = vpop.permute.xlu0 %4958
    %4960 = vrot.lane.b32.xlu0 %v3753, 8
    %v4961 = vpop.permute.xlu0 %4960
    %4962 = vrot.lane.b32.xlu0 %v3927, 8
    %v4963 = vpop.permute.xlu0 %4962
    %vm4964 = vcmask 64512
    %v4965 = vsel %vm4964, %v4925, %v4927
    %v4966 = vsel %vm4964, %v4927, %v4929
    %v4967 = vsel %vm4964, %v4929, %v4931
    %v4968 = vsel %vm4964, %v4931, %v4933
    %v4969 = vsel %vm4964, %v4935, %v4937
    %v4970 = vsel %vm4964, %v4937, %v4939
    %v4971 = vsel %vm4964, %v4939, %v4941
    %v4972 = vsel %vm4964, %v4941, %v4943
    %v4973 = vsel %vm4964, %v4945, %v4947
    %v4974 = vsel %vm4964, %v4947, %v4949
    %v4975 = vsel %vm4964, %v4949, %v4951
    %v4976 = vsel %vm4964, %v4951, %v4953
    %v4977 = vsel %vm4964, %v4955, %v4957
    %v4978 = vsel %vm4964, %v4957, %v4959
    %v4979 = vsel %vm4964, %v4959, %v4961
    %v4980 = vsel %vm4964, %v4961, %v4963
    %v5001 = vsel %vm4964, 0.0, %v4925
    %v5002 = vsel %vm4964, 0.0, %v4935
    %v5003 = vsel %vm4964, 0.0, %v4945
    %v5004 = vsel %vm4964, 0.0, %v4955
    %vm5005 = vcmask 596992
    %v5006 = vsel %vm5005, %v4968, 0.0
    %v5007 = vsel %vm5005, %v4972, 0.0
    %v5008 = vsel %vm5005, %v4976, 0.0
    %v5009 = vsel %vm5005, %v4980, 0.0
    %v5010 = vadd.f32 %v4884, %v5001
    %v5011 = vadd.f32 %v4885, %v4965
    %v5012 = vadd.f32 %v4886, %v4966
    %v5013 = vadd.f32 %v4887, %v4967
    %v5014 = vadd.f32 %v4888, %v5006
    %v5015 = vadd.f32 %v4889, %v5002
    %v5016 = vadd.f32 %v4890, %v4969
    %v5017 = vadd.f32 %v4891, %v4970
    %v5018 = vadd.f32 %v4892, %v4971
    %v5019 = vadd.f32 %v4893, %v5007
    %v5020 = vadd.f32 %v4894, %v5003
    %v5021 = vadd.f32 %v4895, %v4973
    %v5022 = vadd.f32 %v4896, %v4974
    %v5023 = vadd.f32 %v4897, %v4975
    %v5024 = vadd.f32 %v4898, %v5008
    %v5025 = vadd.f32 %v4899, %v5004
    %v5026 = vadd.f32 %v4900, %v4977
    %v5027 = vadd.f32 %v4901, %v4978
    %v5028 = vadd.f32 %v4902, %v4979
    %v5029 = vadd.f32 %v4903, %v5009
    %5050 = vrot.lane.b32.xlu0 %v3017, 9
    %v5051 = vpop.permute.xlu0 %5050
    %5052 = vrot.lane.b32.xlu0 %v3019, 9
    %v5053 = vpop.permute.xlu0 %5052
    %5054 = vrot.lane.b32.xlu0 %v3210, 9
    %v5055 = vpop.permute.xlu0 %5054
    %5056 = vrot.lane.b32.xlu0 %v3212, 9
    %v5057 = vpop.permute.xlu0 %5056
    %5058 = vrot.lane.b32.xlu0 %v3385, 9
    %v5059 = vpop.permute.xlu0 %5058
    %5060 = vrot.lane.b32.xlu0 %v3021, 9
    %v5061 = vpop.permute.xlu0 %5060
    %5062 = vrot.lane.b32.xlu0 %v3023, 9
    %v5063 = vpop.permute.xlu0 %5062
    %5064 = vrot.lane.b32.xlu0 %v3214, 9
    %v5065 = vpop.permute.xlu0 %5064
    %5066 = vrot.lane.b32.xlu0 %v3216, 9
    %v5067 = vpop.permute.xlu0 %5066
    %5068 = vrot.lane.b32.xlu0 %v3388, 9
    %v5069 = vpop.permute.xlu0 %5068
    %5070 = vrot.lane.b32.xlu0 %v3564, 9
    %v5071 = vpop.permute.xlu0 %5070
    %5072 = vrot.lane.b32.xlu0 %v3566, 9
    %v5073 = vpop.permute.xlu0 %5072
    %5074 = vrot.lane.b32.xlu0 %v3757, 9
    %v5075 = vpop.permute.xlu0 %5074
    %5076 = vrot.lane.b32.xlu0 %v3759, 9
    %v5077 = vpop.permute.xlu0 %5076
    %5078 = vrot.lane.b32.xlu0 %v3932, 9
    %v5079 = vpop.permute.xlu0 %5078
    %5080 = vrot.lane.b32.xlu0 %v3568, 9
    %v5081 = vpop.permute.xlu0 %5080
    %5082 = vrot.lane.b32.xlu0 %v3570, 9
    %v5083 = vpop.permute.xlu0 %5082
    %5084 = vrot.lane.b32.xlu0 %v3761, 9
    %v5085 = vpop.permute.xlu0 %5084
    %5086 = vrot.lane.b32.xlu0 %v3763, 9
    %v5087 = vpop.permute.xlu0 %5086
    %5088 = vrot.lane.b32.xlu0 %v3935, 9
    %v5089 = vpop.permute.xlu0 %5088
    %vm5090 = vcmask 72704
    %v5091 = vsel %vm5090, %v5051, %v5053
    %v5092 = vsel %vm5090, %v5053, %v5055
    %v5093 = vsel %vm5090, %v5055, %v5057
    %v5094 = vsel %vm5090, %v5057, %v5059
    %v5095 = vsel %vm5090, %v5061, %v5063
    %v5096 = vsel %vm5090, %v5063, %v5065
    %v5097 = vsel %vm5090, %v5065, %v5067
    %v5098 = vsel %vm5090, %v5067, %v5069
    %v5099 = vsel %vm5090, %v5071, %v5073
    %v5100 = vsel %vm5090, %v5073, %v5075
    %v5101 = vsel %vm5090, %v5075, %v5077
    %v5102 = vsel %vm5090, %v5077, %v5079
    %v5103 = vsel %vm5090, %v5081, %v5083
    %v5104 = vsel %vm5090, %v5083, %v5085
    %v5105 = vsel %vm5090, %v5085, %v5087
    %v5106 = vsel %vm5090, %v5087, %v5089
    %v5127 = vsel %vm5090, 0.0, %v5051
    %v5128 = vsel %vm5090, 0.0, %v5061
    %v5129 = vsel %vm5090, 0.0, %v5071
    %v5130 = vsel %vm5090, 0.0, %v5081
    %vm5131 = vcmask 605184
    %v5132 = vsel %vm5131, %v5094, 0.0
    %v5133 = vsel %vm5131, %v5098, 0.0
    %v5134 = vsel %vm5131, %v5102, 0.0
    %v5135 = vsel %vm5131, %v5106, 0.0
    %v5136 = vadd.f32 %v5010, %v5127
    %v5137 = vadd.f32 %v5011, %v5091
    %v5138 = vadd.f32 %v5012, %v5092
    %v5139 = vadd.f32 %v5013, %v5093
    %v5140 = vadd.f32 %v5014, %v5132
    %v5141 = vadd.f32 %v5015, %v5128
    %v5142 = vadd.f32 %v5016, %v5095
    %v5143 = vadd.f32 %v5017, %v5096
    %v5144 = vadd.f32 %v5018, %v5097
    %v5145 = vadd.f32 %v5019, %v5133
    %v5146 = vadd.f32 %v5020, %v5129
    %v5147 = vadd.f32 %v5021, %v5099
    %v5148 = vadd.f32 %v5022, %v5100
    %v5149 = vadd.f32 %v5023, %v5101
    %v5150 = vadd.f32 %v5024, %v5134
    %v5151 = vadd.f32 %v5025, %v5130
    %v5152 = vadd.f32 %v5026, %v5103
    %v5153 = vadd.f32 %v5027, %v5104
    %v5154 = vadd.f32 %v5028, %v5105
    %v5155 = vadd.f32 %v5029, %v5135
    %5176 = vrot.lane.b32.xlu0 %v3027, 10
    %v5177 = vpop.permute.xlu0 %5176
    %5178 = vrot.lane.b32.xlu0 %v3029, 10
    %v5179 = vpop.permute.xlu0 %5178
    %5180 = vrot.lane.b32.xlu0 %v3220, 10
    %v5181 = vpop.permute.xlu0 %5180
    %5182 = vrot.lane.b32.xlu0 %v3222, 10
    %v5183 = vpop.permute.xlu0 %5182
    %5184 = vrot.lane.b32.xlu0 %v3393, 10
    %v5185 = vpop.permute.xlu0 %5184
    %5186 = vrot.lane.b32.xlu0 %v3031, 10
    %v5187 = vpop.permute.xlu0 %5186
    %5188 = vrot.lane.b32.xlu0 %v3033, 10
    %v5189 = vpop.permute.xlu0 %5188
    %5190 = vrot.lane.b32.xlu0 %v3224, 10
    %v5191 = vpop.permute.xlu0 %5190
    %5192 = vrot.lane.b32.xlu0 %v3226, 10
    %v5193 = vpop.permute.xlu0 %5192
    %5194 = vrot.lane.b32.xlu0 %v3396, 10
    %v5195 = vpop.permute.xlu0 %5194
    %5196 = vrot.lane.b32.xlu0 %v3574, 10
    %v5197 = vpop.permute.xlu0 %5196
    %5198 = vrot.lane.b32.xlu0 %v3576, 10
    %v5199 = vpop.permute.xlu0 %5198
    %5200 = vrot.lane.b32.xlu0 %v3767, 10
    %v5201 = vpop.permute.xlu0 %5200
    %5202 = vrot.lane.b32.xlu0 %v3769, 10
    %v5203 = vpop.permute.xlu0 %5202
    %5204 = vrot.lane.b32.xlu0 %v3940, 10
    %v5205 = vpop.permute.xlu0 %5204
    %5206 = vrot.lane.b32.xlu0 %v3578, 10
    %v5207 = vpop.permute.xlu0 %5206
    %5208 = vrot.lane.b32.xlu0 %v3580, 10
    %v5209 = vpop.permute.xlu0 %5208
    %5210 = vrot.lane.b32.xlu0 %v3771, 10
    %v5211 = vpop.permute.xlu0 %5210
    %5212 = vrot.lane.b32.xlu0 %v3773, 10
    %v5213 = vpop.permute.xlu0 %5212
    %5214 = vrot.lane.b32.xlu0 %v3943, 10
    %v5215 = vpop.permute.xlu0 %5214
    %vm5216 = vcmask 80896
    %v5217 = vsel %vm5216, %v5177, %v5179
    %v5218 = vsel %vm5216, %v5179, %v5181
    %v5219 = vsel %vm5216, %v5181, %v5183
    %v5220 = vsel %vm5216, %v5183, %v5185
    %v5221 = vsel %vm5216, %v5187, %v5189
    %v5222 = vsel %vm5216, %v5189, %v5191
    %v5223 = vsel %vm5216, %v5191, %v5193
    %v5224 = vsel %vm5216, %v5193, %v5195
    %v5225 = vsel %vm5216, %v5197, %v5199
    %v5226 = vsel %vm5216, %v5199, %v5201
    %v5227 = vsel %vm5216, %v5201, %v5203
    %v5228 = vsel %vm5216, %v5203, %v5205
    %v5229 = vsel %vm5216, %v5207, %v5209
    %v5230 = vsel %vm5216, %v5209, %v5211
    %v5231 = vsel %vm5216, %v5211, %v5213
    %v5232 = vsel %vm5216, %v5213, %v5215
    %v5253 = vsel %vm5216, 0.0, %v5177
    %v5254 = vsel %vm5216, 0.0, %v5187
    %v5255 = vsel %vm5216, 0.0, %v5197
    %v5256 = vsel %vm5216, 0.0, %v5207
    %vm5257 = vcmask 613376
    %v5258 = vsel %vm5257, %v5220, 0.0
    %v5259 = vsel %vm5257, %v5224, 0.0
    %v5260 = vsel %vm5257, %v5228, 0.0
    %v5261 = vsel %vm5257, %v5232, 0.0
    %v5262 = vadd.f32 %v5136, %v5253
    %v5263 = vadd.f32 %v5137, %v5217
    %v5264 = vadd.f32 %v5138, %v5218
    %v5265 = vadd.f32 %v5139, %v5219
    %v5266 = vadd.f32 %v5140, %v5258
    %v5267 = vadd.f32 %v5141, %v5254
    %v5268 = vadd.f32 %v5142, %v5221
    %v5269 = vadd.f32 %v5143, %v5222
    %v5270 = vadd.f32 %v5144, %v5223
    %v5271 = vadd.f32 %v5145, %v5259
    %v5272 = vadd.f32 %v5146, %v5255
    %v5273 = vadd.f32 %v5147, %v5225
    %v5274 = vadd.f32 %v5148, %v5226
    %v5275 = vadd.f32 %v5149, %v5227
    %v5276 = vadd.f32 %v5150, %v5260
    %v5277 = vadd.f32 %v5151, %v5256
    %v5278 = vadd.f32 %v5152, %v5229
    %v5279 = vadd.f32 %v5153, %v5230
    %v5280 = vadd.f32 %v5154, %v5231
    %v5281 = vadd.f32 %v5155, %v5261
    %5302 = vrot.lane.b32.xlu0 %v3037, 11
    %v5303 = vpop.permute.xlu0 %5302
    %5304 = vrot.lane.b32.xlu0 %v3039, 11
    %v5305 = vpop.permute.xlu0 %5304
    %5306 = vrot.lane.b32.xlu0 %v3230, 11
    %v5307 = vpop.permute.xlu0 %5306
    %5308 = vrot.lane.b32.xlu0 %v3232, 11
    %v5309 = vpop.permute.xlu0 %5308
    %5310 = vrot.lane.b32.xlu0 %v3401, 11
    %v5311 = vpop.permute.xlu0 %5310
    %5312 = vrot.lane.b32.xlu0 %v3041, 11
    %v5313 = vpop.permute.xlu0 %5312
    %5314 = vrot.lane.b32.xlu0 %v3043, 11
    %v5315 = vpop.permute.xlu0 %5314
    %5316 = vrot.lane.b32.xlu0 %v3234, 11
    %v5317 = vpop.permute.xlu0 %5316
    %5318 = vrot.lane.b32.xlu0 %v3236, 11
    %v5319 = vpop.permute.xlu0 %5318
    %5320 = vrot.lane.b32.xlu0 %v3404, 11
    %v5321 = vpop.permute.xlu0 %5320
    %5322 = vrot.lane.b32.xlu0 %v3584, 11
    %v5323 = vpop.permute.xlu0 %5322
    %5324 = vrot.lane.b32.xlu0 %v3586, 11
    %v5325 = vpop.permute.xlu0 %5324
    %5326 = vrot.lane.b32.xlu0 %v3777, 11
    %v5327 = vpop.permute.xlu0 %5326
    %5328 = vrot.lane.b32.xlu0 %v3779, 11
    %v5329 = vpop.permute.xlu0 %5328
    %5330 = vrot.lane.b32.xlu0 %v3948, 11
    %v5331 = vpop.permute.xlu0 %5330
    %5332 = vrot.lane.b32.xlu0 %v3588, 11
    %v5333 = vpop.permute.xlu0 %5332
    %5334 = vrot.lane.b32.xlu0 %v3590, 11
    %v5335 = vpop.permute.xlu0 %5334
    %5336 = vrot.lane.b32.xlu0 %v3781, 11
    %v5337 = vpop.permute.xlu0 %5336
    %5338 = vrot.lane.b32.xlu0 %v3783, 11
    %v5339 = vpop.permute.xlu0 %5338
    %5340 = vrot.lane.b32.xlu0 %v3951, 11
    %v5341 = vpop.permute.xlu0 %5340
    %vm5342 = vcmask 89088
    %v5343 = vsel %vm5342, %v5303, %v5305
    %v5344 = vsel %vm5342, %v5305, %v5307
    %v5345 = vsel %vm5342, %v5307, %v5309
    %v5346 = vsel %vm5342, %v5309, %v5311
    %v5347 = vsel %vm5342, %v5313, %v5315
    %v5348 = vsel %vm5342, %v5315, %v5317
    %v5349 = vsel %vm5342, %v5317, %v5319
    %v5350 = vsel %vm5342, %v5319, %v5321
    %v5351 = vsel %vm5342, %v5323, %v5325
    %v5352 = vsel %vm5342, %v5325, %v5327
    %v5353 = vsel %vm5342, %v5327, %v5329
    %v5354 = vsel %vm5342, %v5329, %v5331
    %v5355 = vsel %vm5342, %v5333, %v5335
    %v5356 = vsel %vm5342, %v5335, %v5337
    %v5357 = vsel %vm5342, %v5337, %v5339
    %v5358 = vsel %vm5342, %v5339, %v5341
    %v5379 = vsel %vm5342, 0.0, %v5303
    %v5380 = vsel %vm5342, 0.0, %v5313
    %v5381 = vsel %vm5342, 0.0, %v5323
    %v5382 = vsel %vm5342, 0.0, %v5333
    %vm5383 = vcmask 621568
    %v5384 = vsel %vm5383, %v5346, 0.0
    %v5385 = vsel %vm5383, %v5350, 0.0
    %v5386 = vsel %vm5383, %v5354, 0.0
    %v5387 = vsel %vm5383, %v5358, 0.0
    %v5388 = vadd.f32 %v5262, %v5379
    %v5389 = vadd.f32 %v5263, %v5343
    %v5390 = vadd.f32 %v5264, %v5344
    %v5391 = vadd.f32 %v5265, %v5345
    %v5392 = vadd.f32 %v5266, %v5384
    %v5393 = vadd.f32 %v5267, %v5380
    %v5394 = vadd.f32 %v5268, %v5347
    %v5395 = vadd.f32 %v5269, %v5348
    %v5396 = vadd.f32 %v5270, %v5349
    %v5397 = vadd.f32 %v5271, %v5385
    %v5398 = vadd.f32 %v5272, %v5381
    %v5399 = vadd.f32 %v5273, %v5351
    %v5400 = vadd.f32 %v5274, %v5352
    %v5401 = vadd.f32 %v5275, %v5353
    %v5402 = vadd.f32 %v5276, %v5386
    %v5403 = vadd.f32 %v5277, %v5382
    %v5404 = vadd.f32 %v5278, %v5355
    %v5405 = vadd.f32 %v5279, %v5356
    %v5406 = vadd.f32 %v5280, %v5357
    %v5407 = vadd.f32 %v5281, %v5387
    %5428 = vrot.lane.b32.xlu0 %v3047, 12
    %v5429 = vpop.permute.xlu0 %5428
    %5430 = vrot.lane.b32.xlu0 %v3049, 12
    %v5431 = vpop.permute.xlu0 %5430
    %5432 = vrot.lane.b32.xlu0 %v3240, 12
    %v5433 = vpop.permute.xlu0 %5432
    %5434 = vrot.lane.b32.xlu0 %v3242, 12
    %v5435 = vpop.permute.xlu0 %5434
    %5436 = vrot.lane.b32.xlu0 %v3409, 12
    %v5437 = vpop.permute.xlu0 %5436
    %5438 = vrot.lane.b32.xlu0 %v3051, 12
    %v5439 = vpop.permute.xlu0 %5438
    %5440 = vrot.lane.b32.xlu0 %v3053, 12
    %v5441 = vpop.permute.xlu0 %5440
    %5442 = vrot.lane.b32.xlu0 %v3244, 12
    %v5443 = vpop.permute.xlu0 %5442
    %5444 = vrot.lane.b32.xlu0 %v3246, 12
    %v5445 = vpop.permute.xlu0 %5444
    %5446 = vrot.lane.b32.xlu0 %v3412, 12
    %v5447 = vpop.permute.xlu0 %5446
    %5448 = vrot.lane.b32.xlu0 %v3594, 12
    %v5449 = vpop.permute.xlu0 %5448
    %5450 = vrot.lane.b32.xlu0 %v3596, 12
    %v5451 = vpop.permute.xlu0 %5450
    %5452 = vrot.lane.b32.xlu0 %v3787, 12
    %v5453 = vpop.permute.xlu0 %5452
    %5454 = vrot.lane.b32.xlu0 %v3789, 12
    %v5455 = vpop.permute.xlu0 %5454
    %5456 = vrot.lane.b32.xlu0 %v3956, 12
    %v5457 = vpop.permute.xlu0 %5456
    %5458 = vrot.lane.b32.xlu0 %v3598, 12
    %v5459 = vpop.permute.xlu0 %5458
    %5460 = vrot.lane.b32.xlu0 %v3600, 12
    %v5461 = vpop.permute.xlu0 %5460
    %5462 = vrot.lane.b32.xlu0 %v3791, 12
    %v5463 = vpop.permute.xlu0 %5462
    %5464 = vrot.lane.b32.xlu0 %v3793, 12
    %v5465 = vpop.permute.xlu0 %5464
    %5466 = vrot.lane.b32.xlu0 %v3959, 12
    %v5467 = vpop.permute.xlu0 %5466
    %vm5468 = vcmask 97280
    %v5469 = vsel %vm5468, %v5429, %v5431
    %v5470 = vsel %vm5468, %v5431, %v5433
    %v5471 = vsel %vm5468, %v5433, %v5435
    %v5472 = vsel %vm5468, %v5435, %v5437
    %v5473 = vsel %vm5468, %v5439, %v5441
    %v5474 = vsel %vm5468, %v5441, %v5443
    %v5475 = vsel %vm5468, %v5443, %v5445
    %v5476 = vsel %vm5468, %v5445, %v5447
    %v5477 = vsel %vm5468, %v5449, %v5451
    %v5478 = vsel %vm5468, %v5451, %v5453
    %v5479 = vsel %vm5468, %v5453, %v5455
    %v5480 = vsel %vm5468, %v5455, %v5457
    %v5481 = vsel %vm5468, %v5459, %v5461
    %v5482 = vsel %vm5468, %v5461, %v5463
    %v5483 = vsel %vm5468, %v5463, %v5465
    %v5484 = vsel %vm5468, %v5465, %v5467
    %v5505 = vsel %vm5468, 0.0, %v5429
    %v5506 = vsel %vm5468, 0.0, %v5439
    %v5507 = vsel %vm5468, 0.0, %v5449
    %v5508 = vsel %vm5468, 0.0, %v5459
    %vm5509 = vcmask 629760
    %v5510 = vsel %vm5509, %v5472, 0.0
    %v5511 = vsel %vm5509, %v5476, 0.0
    %v5512 = vsel %vm5509, %v5480, 0.0
    %v5513 = vsel %vm5509, %v5484, 0.0
    %v5514 = vadd.f32 %v5388, %v5505
    %v5515 = vadd.f32 %v5389, %v5469
    %v5516 = vadd.f32 %v5390, %v5470
    %v5517 = vadd.f32 %v5391, %v5471
    %v5518 = vadd.f32 %v5392, %v5510
    %v5519 = vadd.f32 %v5393, %v5506
    %v5520 = vadd.f32 %v5394, %v5473
    %v5521 = vadd.f32 %v5395, %v5474
    %v5522 = vadd.f32 %v5396, %v5475
    %v5523 = vadd.f32 %v5397, %v5511
    %v5524 = vadd.f32 %v5398, %v5507
    %v5525 = vadd.f32 %v5399, %v5477
    %v5526 = vadd.f32 %v5400, %v5478
    %v5527 = vadd.f32 %v5401, %v5479
    %v5528 = vadd.f32 %v5402, %v5512
    %v5529 = vadd.f32 %v5403, %v5508
    %v5530 = vadd.f32 %v5404, %v5481
    %v5531 = vadd.f32 %v5405, %v5482
    %v5532 = vadd.f32 %v5406, %v5483
    %v5533 = vadd.f32 %v5407, %v5513
    %5554 = vrot.lane.b32.xlu0 %v3057, 13
    %v5555 = vpop.permute.xlu0 %5554
    %5556 = vrot.lane.b32.xlu0 %v3059, 13
    %v5557 = vpop.permute.xlu0 %5556
    %5558 = vrot.lane.b32.xlu0 %v3250, 13
    %v5559 = vpop.permute.xlu0 %5558
    %5560 = vrot.lane.b32.xlu0 %v3252, 13
    %v5561 = vpop.permute.xlu0 %5560
    %5562 = vrot.lane.b32.xlu0 %v3417, 13
    %v5563 = vpop.permute.xlu0 %5562
    %5564 = vrot.lane.b32.xlu0 %v3061, 13
    %v5565 = vpop.permute.xlu0 %5564
    %5566 = vrot.lane.b32.xlu0 %v3063, 13
    %v5567 = vpop.permute.xlu0 %5566
    %5568 = vrot.lane.b32.xlu0 %v3254, 13
    %v5569 = vpop.permute.xlu0 %5568
    %5570 = vrot.lane.b32.xlu0 %v3256, 13
    %v5571 = vpop.permute.xlu0 %5570
    %5572 = vrot.lane.b32.xlu0 %v3420, 13
    %v5573 = vpop.permute.xlu0 %5572
    %5574 = vrot.lane.b32.xlu0 %v3604, 13
    %v5575 = vpop.permute.xlu0 %5574
    %5576 = vrot.lane.b32.xlu0 %v3606, 13
    %v5577 = vpop.permute.xlu0 %5576
    %5578 = vrot.lane.b32.xlu0 %v3797, 13
    %v5579 = vpop.permute.xlu0 %5578
    %5580 = vrot.lane.b32.xlu0 %v3799, 13
    %v5581 = vpop.permute.xlu0 %5580
    %5582 = vrot.lane.b32.xlu0 %v3964, 13
    %v5583 = vpop.permute.xlu0 %5582
    %5584 = vrot.lane.b32.xlu0 %v3608, 13
    %v5585 = vpop.permute.xlu0 %5584
    %5586 = vrot.lane.b32.xlu0 %v3610, 13
    %v5587 = vpop.permute.xlu0 %5586
    %5588 = vrot.lane.b32.xlu0 %v3801, 13
    %v5589 = vpop.permute.xlu0 %5588
    %5590 = vrot.lane.b32.xlu0 %v3803, 13
    %v5591 = vpop.permute.xlu0 %5590
    %5592 = vrot.lane.b32.xlu0 %v3967, 13
    %v5593 = vpop.permute.xlu0 %5592
    %vm5594 = vcmask 105472
    %v5595 = vsel %vm5594, %v5555, %v5557
    %v5596 = vsel %vm5594, %v5557, %v5559
    %v5597 = vsel %vm5594, %v5559, %v5561
    %v5598 = vsel %vm5594, %v5561, %v5563
    %v5599 = vsel %vm5594, %v5565, %v5567
    %v5600 = vsel %vm5594, %v5567, %v5569
    %v5601 = vsel %vm5594, %v5569, %v5571
    %v5602 = vsel %vm5594, %v5571, %v5573
    %v5603 = vsel %vm5594, %v5575, %v5577
    %v5604 = vsel %vm5594, %v5577, %v5579
    %v5605 = vsel %vm5594, %v5579, %v5581
    %v5606 = vsel %vm5594, %v5581, %v5583
    %v5607 = vsel %vm5594, %v5585, %v5587
    %v5608 = vsel %vm5594, %v5587, %v5589
    %v5609 = vsel %vm5594, %v5589, %v5591
    %v5610 = vsel %vm5594, %v5591, %v5593
    %v5631 = vsel %vm5594, 0.0, %v5555
    %v5632 = vsel %vm5594, 0.0, %v5565
    %v5633 = vsel %vm5594, 0.0, %v5575
    %v5634 = vsel %vm5594, 0.0, %v5585
    %vm5635 = vcmask 637952
    %v5636 = vsel %vm5635, %v5598, 0.0
    %v5637 = vsel %vm5635, %v5602, 0.0
    %v5638 = vsel %vm5635, %v5606, 0.0
    %v5639 = vsel %vm5635, %v5610, 0.0
    %v5640 = vadd.f32 %v5514, %v5631
    %v5641 = vadd.f32 %v5515, %v5595
    %v5642 = vadd.f32 %v5516, %v5596
    %v5643 = vadd.f32 %v5517, %v5597
    %v5644 = vadd.f32 %v5518, %v5636
    %v5645 = vadd.f32 %v5519, %v5632
    %v5646 = vadd.f32 %v5520, %v5599
    %v5647 = vadd.f32 %v5521, %v5600
    %v5648 = vadd.f32 %v5522, %v5601
    %v5649 = vadd.f32 %v5523, %v5637
    %v5650 = vadd.f32 %v5524, %v5633
    %v5651 = vadd.f32 %v5525, %v5603
    %v5652 = vadd.f32 %v5526, %v5604
    %v5653 = vadd.f32 %v5527, %v5605
    %v5654 = vadd.f32 %v5528, %v5638
    %v5655 = vadd.f32 %v5529, %v5634
    %v5656 = vadd.f32 %v5530, %v5607
    %v5657 = vadd.f32 %v5531, %v5608
    %v5658 = vadd.f32 %v5532, %v5609
    %v5659 = vadd.f32 %v5533, %v5639
    %5680 = vrot.lane.b32.xlu0 %v3067, 14
    %v5681 = vpop.permute.xlu0 %5680
    %5682 = vrot.lane.b32.xlu0 %v3069, 14
    %v5683 = vpop.permute.xlu0 %5682
    %5684 = vrot.lane.b32.xlu0 %v3260, 14
    %v5685 = vpop.permute.xlu0 %5684
    %5686 = vrot.lane.b32.xlu0 %v3262, 14
    %v5687 = vpop.permute.xlu0 %5686
    %5688 = vrot.lane.b32.xlu0 %v3425, 14
    %v5689 = vpop.permute.xlu0 %5688
    %5690 = vrot.lane.b32.xlu0 %v3071, 14
    %v5691 = vpop.permute.xlu0 %5690
    %5692 = vrot.lane.b32.xlu0 %v3073, 14
    %v5693 = vpop.permute.xlu0 %5692
    %5694 = vrot.lane.b32.xlu0 %v3264, 14
    %v5695 = vpop.permute.xlu0 %5694
    %5696 = vrot.lane.b32.xlu0 %v3266, 14
    %v5697 = vpop.permute.xlu0 %5696
    %5698 = vrot.lane.b32.xlu0 %v3428, 14
    %v5699 = vpop.permute.xlu0 %5698
    %5700 = vrot.lane.b32.xlu0 %v3614, 14
    %v5701 = vpop.permute.xlu0 %5700
    %5702 = vrot.lane.b32.xlu0 %v3616, 14
    %v5703 = vpop.permute.xlu0 %5702
    %5704 = vrot.lane.b32.xlu0 %v3807, 14
    %v5705 = vpop.permute.xlu0 %5704
    %5706 = vrot.lane.b32.xlu0 %v3809, 14
    %v5707 = vpop.permute.xlu0 %5706
    %5708 = vrot.lane.b32.xlu0 %v3972, 14
    %v5709 = vpop.permute.xlu0 %5708
    %5710 = vrot.lane.b32.xlu0 %v3618, 14
    %v5711 = vpop.permute.xlu0 %5710
    %5712 = vrot.lane.b32.xlu0 %v3620, 14
    %v5713 = vpop.permute.xlu0 %5712
    %5714 = vrot.lane.b32.xlu0 %v3811, 14
    %v5715 = vpop.permute.xlu0 %5714
    %5716 = vrot.lane.b32.xlu0 %v3813, 14
    %v5717 = vpop.permute.xlu0 %5716
    %5718 = vrot.lane.b32.xlu0 %v3975, 14
    %v5719 = vpop.permute.xlu0 %5718
    %vm5720 = vcmask 113664
    %v5721 = vsel %vm5720, %v5681, %v5683
    %v5722 = vsel %vm5720, %v5683, %v5685
    %v5723 = vsel %vm5720, %v5685, %v5687
    %v5724 = vsel %vm5720, %v5687, %v5689
    %v5725 = vsel %vm5720, %v5691, %v5693
    %v5726 = vsel %vm5720, %v5693, %v5695
    %v5727 = vsel %vm5720, %v5695, %v5697
    %v5728 = vsel %vm5720, %v5697, %v5699
    %v5729 = vsel %vm5720, %v5701, %v5703
    %v5730 = vsel %vm5720, %v5703, %v5705
    %v5731 = vsel %vm5720, %v5705, %v5707
    %v5732 = vsel %vm5720, %v5707, %v5709
    %v5733 = vsel %vm5720, %v5711, %v5713
    %v5734 = vsel %vm5720, %v5713, %v5715
    %v5735 = vsel %vm5720, %v5715, %v5717
    %v5736 = vsel %vm5720, %v5717, %v5719
    %v5757 = vsel %vm5720, 0.0, %v5681
    %v5758 = vsel %vm5720, 0.0, %v5691
    %v5759 = vsel %vm5720, 0.0, %v5701
    %v5760 = vsel %vm5720, 0.0, %v5711
    %vm5761 = vcmask 646144
    %v5762 = vsel %vm5761, %v5724, 0.0
    %v5763 = vsel %vm5761, %v5728, 0.0
    %v5764 = vsel %vm5761, %v5732, 0.0
    %v5765 = vsel %vm5761, %v5736, 0.0
    %v5766 = vadd.f32 %v5640, %v5757
    %v5767 = vadd.f32 %v5641, %v5721
    %v5768 = vadd.f32 %v5642, %v5722
    %v5769 = vadd.f32 %v5643, %v5723
    %v5770 = vadd.f32 %v5644, %v5762
    %v5771 = vadd.f32 %v5645, %v5758
    %v5772 = vadd.f32 %v5646, %v5725
    %v5773 = vadd.f32 %v5647, %v5726
    %v5774 = vadd.f32 %v5648, %v5727
    %v5775 = vadd.f32 %v5649, %v5763
    %v5776 = vadd.f32 %v5650, %v5759
    %v5777 = vadd.f32 %v5651, %v5729
    %v5778 = vadd.f32 %v5652, %v5730
    %v5779 = vadd.f32 %v5653, %v5731
    %v5780 = vadd.f32 %v5654, %v5764
    %v5781 = vadd.f32 %v5655, %v5760
    %v5782 = vadd.f32 %v5656, %v5733
    %v5783 = vadd.f32 %v5657, %v5734
    %v5784 = vadd.f32 %v5658, %v5735
    %v5785 = vadd.f32 %v5659, %v5765
    %5806 = vrot.lane.b32.xlu0 %v3077, 15
    %v5807 = vpop.permute.xlu0 %5806
    %5808 = vrot.lane.b32.xlu0 %v3079, 15
    %v5809 = vpop.permute.xlu0 %5808
    %5810 = vrot.lane.b32.xlu0 %v3270, 15
    %v5811 = vpop.permute.xlu0 %5810
    %5812 = vrot.lane.b32.xlu0 %v3272, 15
    %v5813 = vpop.permute.xlu0 %5812
    %5814 = vrot.lane.b32.xlu0 %v3433, 15
    %v5815 = vpop.permute.xlu0 %5814
    %5816 = vrot.lane.b32.xlu0 %v3081, 15
    %v5817 = vpop.permute.xlu0 %5816
    %5818 = vrot.lane.b32.xlu0 %v3083, 15
    %v5819 = vpop.permute.xlu0 %5818
    %5820 = vrot.lane.b32.xlu0 %v3274, 15
    %v5821 = vpop.permute.xlu0 %5820
    %5822 = vrot.lane.b32.xlu0 %v3276, 15
    %v5823 = vpop.permute.xlu0 %5822
    %5824 = vrot.lane.b32.xlu0 %v3436, 15
    %v5825 = vpop.permute.xlu0 %5824
    %5826 = vrot.lane.b32.xlu0 %v3624, 15
    %v5827 = vpop.permute.xlu0 %5826
    %5828 = vrot.lane.b32.xlu0 %v3626, 15
    %v5829 = vpop.permute.xlu0 %5828
    %5830 = vrot.lane.b32.xlu0 %v3817, 15
    %v5831 = vpop.permute.xlu0 %5830
    %5832 = vrot.lane.b32.xlu0 %v3819, 15
    %v5833 = vpop.permute.xlu0 %5832
    %5834 = vrot.lane.b32.xlu0 %v3980, 15
    %v5835 = vpop.permute.xlu0 %5834
    %5836 = vrot.lane.b32.xlu0 %v3628, 15
    %v5837 = vpop.permute.xlu0 %5836
    %5838 = vrot.lane.b32.xlu0 %v3630, 15
    %v5839 = vpop.permute.xlu0 %5838
    %5840 = vrot.lane.b32.xlu0 %v3821, 15
    %v5841 = vpop.permute.xlu0 %5840
    %5842 = vrot.lane.b32.xlu0 %v3823, 15
    %v5843 = vpop.permute.xlu0 %5842
    %5844 = vrot.lane.b32.xlu0 %v3983, 15
    %v5845 = vpop.permute.xlu0 %5844
    %vm5846 = vcmask 121856
    %v5847 = vsel %vm5846, %v5807, %v5809
    %v5848 = vsel %vm5846, %v5809, %v5811
    %v5849 = vsel %vm5846, %v5811, %v5813
    %v5850 = vsel %vm5846, %v5813, %v5815
    %v5851 = vsel %vm5846, %v5817, %v5819
    %v5852 = vsel %vm5846, %v5819, %v5821
    %v5853 = vsel %vm5846, %v5821, %v5823
    %v5854 = vsel %vm5846, %v5823, %v5825
    %v5855 = vsel %vm5846, %v5827, %v5829
    %v5856 = vsel %vm5846, %v5829, %v5831
    %v5857 = vsel %vm5846, %v5831, %v5833
    %v5858 = vsel %vm5846, %v5833, %v5835
    %v5859 = vsel %vm5846, %v5837, %v5839
    %v5860 = vsel %vm5846, %v5839, %v5841
    %v5861 = vsel %vm5846, %v5841, %v5843
    %v5862 = vsel %vm5846, %v5843, %v5845
    %v5883 = vsel %vm5846, 0.0, %v5807
    %v5884 = vsel %vm5846, 0.0, %v5817
    %v5885 = vsel %vm5846, 0.0, %v5827
    %v5886 = vsel %vm5846, 0.0, %v5837
    %v5887 = vadd.f32 %v5766, %v5883
    %v5888 = vadd.f32 %v5767, %v5847
    %v5889 = vadd.f32 %v5768, %v5848
    %v5890 = vadd.f32 %v5769, %v5849
    %v5891 = vadd.f32 %v5770, %v5850
    %v5892 = vadd.f32 %v5771, %v5884
    %v5893 = vadd.f32 %v5772, %v5851
    %v5894 = vadd.f32 %v5773, %v5852
    %v5895 = vadd.f32 %v5774, %v5853
    %v5896 = vadd.f32 %v5775, %v5854
    %v5897 = vadd.f32 %v5776, %v5885
    %v5898 = vadd.f32 %v5777, %v5855
    %v5899 = vadd.f32 %v5778, %v5856
    %v5900 = vadd.f32 %v5779, %v5857
    %v5901 = vadd.f32 %v5780, %v5858
    %v5902 = vadd.f32 %v5781, %v5886
    %v5903 = vadd.f32 %v5782, %v5859
    %v5904 = vadd.f32 %v5783, %v5860
    %v5905 = vadd.f32 %v5784, %v5861
    %v5906 = vadd.f32 %v5785, %v5862
    %v5907 = vmax.f32 %v5887, 0.0
    %v5908 = vmax.f32 %v5888, 0.0
    %v5909 = vmax.f32 %v5889, 0.0
    %v5910 = vmax.f32 %v5890, 0.0
    %v5911 = vmax.f32 %v5891, 0.0
    %v5912 = vmax.f32 %v5892, 0.0
    %v5913 = vmax.f32 %v5893, 0.0
    %v5914 = vmax.f32 %v5894, 0.0
    %v5915 = vmax.f32 %v5895, 0.0
    %v5916 = vmax.f32 %v5896, 0.0
    %v5917 = vmax.f32 %v5897, 0.0
    %v5918 = vmax.f32 %v5898, 0.0
    %v5919 = vmax.f32 %v5899, 0.0
    %v5920 = vmax.f32 %v5900, 0.0
    %v5921 = vmax.f32 %v5901, 0.0
    %v5922 = vmax.f32 %v5902, 0.0
    %v5923 = vmax.f32 %v5903, 0.0
    %v5924 = vmax.f32 %v5904, 0.0
    %v5925 = vmax.f32 %v5905, 0.0
    %v5926 = vmax.f32 %v5906, 0.0
    %v5927 = vld [vmem:[%s9] sm:$0xff]
    %v5928 = vld [vmem:[%s9 + $0x8] sm:$0xff]
    %v5929 = vld [vmem:[%s9 + $0x10] sm:$0xff]
    %v5930 = vld [vmem:[%s9 + $0x18] sm:$0xff]
    %v5931 = vld [vmem:[%s9 + $0x20] sm:$0xff]
    %v5932 = vld [vmem:[%s9 + $0x28] sm:$0xff]
    %v5933 = vld [vmem:[%s9 + $0x30] sm:$0xff]
    %v5934 = vld [vmem:[%s9 + $0x38] sm:$0xff]
    %v5935 = vld [vmem:[%s9 + $0x40] sm:$0xff]
    %v5936 = vld [vmem:[%s9 + $0x48] sm:$0xff]
    %v5937 = vld [vmem:[#allocation9] sm:$0xff]
    %v5938 = vld [vmem:[#allocation9 + $0x8] sm:$0xff]
    %v5939 = vld [vmem:[#allocation9 + $0x10] sm:$0xff]
    %v5940 = vld [vmem:[#allocation9 + $0x18] sm:$0xff]
    %v5941 = vld [vmem:[#allocation9 + $0x20] sm:$0xff]
    %v5942 = vld [vmem:[#allocation9 + $0x28] sm:$0xff]
    %v5943 = vld [vmem:[#allocation9 + $0x30] sm:$0xff]
    %v5944 = vld [vmem:[#allocation9 + $0x38] sm:$0xff]
    %v5945 = vld [vmem:[#allocation9 + $0x40] sm:$0xff]
    %v5946 = vld [vmem:[#allocation9 + $0x48] sm:$0xff]
    %v5947 = vmul.f32 %v5907, %v5907
    %v5948 = vmul.f32 %v5908, %v5908
    %v5949 = vmul.f32 %v5909, %v5909
    %v5950 = vmul.f32 %v5910, %v5910
    %v5951 = vmul.f32 %v5911, %v5911
    %v5952 = vmul.f32 %v5912, %v5912
    %v5953 = vmul.f32 %v5913, %v5913
    %v5954 = vmul.f32 %v5914, %v5914
    %v5955 = vmul.f32 %v5915, %v5915
    %v5956 = vmul.f32 %v5916, %v5916
    %v5957 = vmul.f32 %v5917, %v5917
    %v5958 = vmul.f32 %v5918, %v5918
    %v5959 = vmul.f32 %v5919, %v5919
    %v5960 = vmul.f32 %v5920, %v5920
    %v5961 = vmul.f32 %v5921, %v5921
    %v5962 = vmul.f32 %v5922, %v5922
    %v5963 = vmul.f32 %v5923, %v5923
    %v5964 = vmul.f32 %v5924, %v5924
    %v5965 = vmul.f32 %v5925, %v5925
    %v5966 = vmul.f32 %v5926, %v5926
    %v5967 = vadd.f32 %v5907, %v5908
    %v5968 = vadd.f32 %v5967, %v5909
    %v5969 = vadd.f32 %v5968, %v5910
    %vm5970 = vcmask 654336
    %v5971 = vsel %vm5970, %v5911, 0.0
    %v5972 = vadd.f32 %v5969, %v5971
    %5973 = vadd.xlane.f32.xlu0 %v5972
    %v5974 = vpop.xlane.xlu0 %5973
    %v5975 = vadd.f32 %v5912, %v5913
    %v5976 = vadd.f32 %v5975, %v5914
    %v5977 = vadd.f32 %v5976, %v5915
    %v5978 = vsel %vm5970, %v5916, 0.0
    %v5979 = vadd.f32 %v5977, %v5978
    %5980 = vadd.xlane.f32.xlu0 %v5979
    %v5981 = vpop.xlane.xlu0 %5980
    %v5982 = vadd.f32 %v5917, %v5918
    %v5983 = vadd.f32 %v5982, %v5919
    %v5984 = vadd.f32 %v5983, %v5920
    %v5985 = vsel %vm5970, %v5921, 0.0
    %v5986 = vadd.f32 %v5984, %v5985
    %5987 = vadd.xlane.f32.xlu0 %v5986
    %v5988 = vpop.xlane.xlu0 %5987
    %v5989 = vadd.f32 %v5922, %v5923
    %v5990 = vadd.f32 %v5989, %v5924
    %v5991 = vadd.f32 %v5990, %v5925
    %v5992 = vsel %vm5970, %v5926, 0.0
    %v5993 = vadd.f32 %v5991, %v5992
    %5994 = vadd.xlane.f32.xlu0 %v5993
    %v5995 = vpop.xlane.xlu0 %5994
    %v5996 = vadd.f32 %v5947, %v5948
    %v5997 = vadd.f32 %v5996, %v5949
    %v5998 = vadd.f32 %v5997, %v5950
    %v5999 = vsel %vm5970, %v5951, 0.0
    %v6000 = vadd.f32 %v5998, %v5999
    %6001 = vadd.xlane.f32.xlu0 %v6000
    %v6002 = vpop.xlane.xlu0 %6001
    %v6003 = vadd.f32 %v5952, %v5953
    %v6004 = vadd.f32 %v6003, %v5954
    %v6005 = vadd.f32 %v6004, %v5955
    %v6006 = vsel %vm5970, %v5956, 0.0
    %v6007 = vadd.f32 %v6005, %v6006
    %6008 = vadd.xlane.f32.xlu0 %v6007
    %v6009 = vpop.xlane.xlu0 %6008
    %v6010 = vadd.f32 %v5957, %v5958
    %v6011 = vadd.f32 %v6010, %v5959
    %v6012 = vadd.f32 %v6011, %v5960
    %v6013 = vsel %vm5970, %v5961, 0.0
    %v6014 = vadd.f32 %v6012, %v6013
    %6015 = vadd.xlane.f32.xlu0 %v6014
    %v6016 = vpop.xlane.xlu0 %6015
    %v6017 = vadd.f32 %v5962, %v5963
    %v6018 = vadd.f32 %v6017, %v5964
    %v6019 = vadd.f32 %v6018, %v5965
    %v6020 = vsel %vm5970, %v5966, 0.0
    %v6021 = vadd.f32 %v6019, %v6020
    %6022 = vadd.xlane.f32.xlu0 %v6021
    %v6023 = vpop.xlane.xlu0 %6022
    %v6024 = vadd.f32 %v5974, %v5981
    %v6025 = vrot.slane %v6024, 4
    %v6026 = vadd.f32 %v6024, %v6025
    %v6027 = vrot.slane %v6026, 2
    %v6028 = vadd.f32 %v6026, %v6027
    %v6029 = vrot.slane %v6028, 1
    %v6030 = vadd.f32 %v6028, %v6029
    %v6031 = vadd.f32 %v5988, %v5995
    %v6032 = vrot.slane %v6031, 4
    %v6033 = vadd.f32 %v6031, %v6032
    %v6034 = vrot.slane %v6033, 2
    %v6035 = vadd.f32 %v6033, %v6034
    %v6036 = vrot.slane %v6035, 1
    %v6037 = vadd.f32 %v6035, %v6036
    %v6038 = vadd.f32 %v6002, %v6009
    %v6039 = vrot.slane %v6038, 4
    %v6040 = vadd.f32 %v6038, %v6039
    %v6041 = vrot.slane %v6040, 2
    %v6042 = vadd.f32 %v6040, %v6041
    %v6043 = vrot.slane %v6042, 1
    %v6044 = vadd.f32 %v6042, %v6043
    %v6045 = vadd.f32 %v6016, %v6023
    %v6046 = vrot.slane %v6045, 4
    %v6047 = vadd.f32 %v6045, %v6046
    %v6048 = vrot.slane %v6047, 2
    %v6049 = vadd.f32 %v6047, %v6048
    %v6050 = vrot.slane %v6049, 1
    %v6051 = vadd.f32 %v6049, %v6050
    %v6052 = vmul.f32 %v6030, 0.00010557433
    %v6053 = vmul.f32 %v6037, 0.00010557433
    %v6054 = vmul.f32 %v6044, 0.00010557433
    %v6055 = vmul.f32 %v6051, 0.00010557433
    %v6056 = vmul.f32 %v6052, %v6052
    %v6057 = vmul.f32 %v6053, %v6053
    %v6058 = vsub.f32 %v6054, %v6056
    %v6059 = vsub.f32 %v6055, %v6057
    %v6060 = vmax.f32 %v6058, 0.0
    %v6061 = vmax.f32 %v6059, 0.0
    %v6062 = vsub.f32 %v5907, %v6052
    %v6063 = vsub.f32 %v5908, %v6052
    %v6064 = vsub.f32 %v5909, %v6052
    %v6065 = vsub.f32 %v5910, %v6052
    %v6066 = vsub.f32 %v5911, %v6052
    %v6067 = vsub.f32 %v5912, %v6052
    %v6068 = vsub.f32 %v5913, %v6052
    %v6069 = vsub.f32 %v5914, %v6052
    %v6070 = vsub.f32 %v5915, %v6052
    %v6071 = vsub.f32 %v5916, %v6052
    %v6072 = vsub.f32 %v5917, %v6053
    %v6073 = vsub.f32 %v5918, %v6053
    %v6074 = vsub.f32 %v5919, %v6053
    %v6075 = vsub.f32 %v5920, %v6053
    %v6076 = vsub.f32 %v5921, %v6053
    %v6077 = vsub.f32 %v5922, %v6053
    %v6078 = vsub.f32 %v5923, %v6053
    %v6079 = vsub.f32 %v5924, %v6053
    %v6080 = vsub.f32 %v5925, %v6053
    %v6081 = vsub.f32 %v5926, %v6053
    %v6082 = vadd.f32 %v6060, 1e-05
    %v6083 = vadd.f32 %v6061, 1e-05
    %v6084 = vrsqrt.pop %v6082
    %v6085 = vrsqrt.pop %v6083
    %v6086 = vmul.f32 %v6062, %v6084
    %v6087 = vmul.f32 %v6063, %v6084
    %v6088 = vmul.f32 %v6064, %v6084
    %v6089 = vmul.f32 %v6065, %v6084
    %v6090 = vmul.f32 %v6066, %v6084
    %v6091 = vmul.f32 %v6067, %v6084
    %v6092 = vmul.f32 %v6068, %v6084
    %v6093 = vmul.f32 %v6069, %v6084
    %v6094 = vmul.f32 %v6070, %v6084
    %v6095 = vmul.f32 %v6071, %v6084
    %v6096 = vmul.f32 %v6072, %v6085
    %v6097 = vmul.f32 %v6073, %v6085
    %v6098 = vmul.f32 %v6074, %v6085
    %v6099 = vmul.f32 %v6075, %v6085
    %v6100 = vmul.f32 %v6076, %v6085
    %v6101 = vmul.f32 %v6077, %v6085
    %v6102 = vmul.f32 %v6078, %v6085
    %v6103 = vmul.f32 %v6079, %v6085
    %v6104 = vmul.f32 %v6080, %v6085
    %v6105 = vmul.f32 %v6081, %v6085
    %v6106 = vmul.f32 %v6086, %v5927
    %v6107 = vmul.f32 %v6087, %v5928
    %v6108 = vmul.f32 %v6088, %v5929
    %v6109 = vmul.f32 %v6089, %v5930
    %v6110 = vmul.f32 %v6090, %v5931
    %v6111 = vmul.f32 %v6091, %v5932
    %v6112 = vmul.f32 %v6092, %v5933
    %v6113 = vmul.f32 %v6093, %v5934
    %v6114 = vmul.f32 %v6094, %v5935
    %v6115 = vmul.f32 %v6095, %v5936
    %v6116 = vmul.f32 %v6096, %v5927
    %v6117 = vmul.f32 %v6097, %v5928
    %v6118 = vmul.f32 %v6098, %v5929
    %v6119 = vmul.f32 %v6099, %v5930
    %v6120 = vmul.f32 %v6100, %v5931
    %v6121 = vmul.f32 %v6101, %v5932
    %v6122 = vmul.f32 %v6102, %v5933
    %v6123 = vmul.f32 %v6103, %v5934
    %v6124 = vmul.f32 %v6104, %v5935
    %v6125 = vmul.f32 %v6105, %v5936
    %v6126 = vadd.f32 %v6106, %v5937
    %v6127 = vadd.f32 %v6107, %v5938
    %v6128 = vadd.f32 %v6108, %v5939
    %v6129 = vadd.f32 %v6109, %v5940
    %v6130 = vadd.f32 %v6110, %v5941
    %v6131 = vadd.f32 %v6111, %v5942
    %v6132 = vadd.f32 %v6112, %v5943
    %v6133 = vadd.f32 %v6113, %v5944
    %v6134 = vadd.f32 %v6114, %v5945
    %v6135 = vadd.f32 %v6115, %v5946
    %v6136 = vadd.f32 %v6116, %v5937
    %v6137 = vadd.f32 %v6117, %v5938
    %v6138 = vadd.f32 %v6118, %v5939
    %v6139 = vadd.f32 %v6119, %v5940
    %v6140 = vadd.f32 %v6120, %v5941
    %v6141 = vadd.f32 %v6121, %v5942
    %v6142 = vadd.f32 %v6122, %v5943
    %v6143 = vadd.f32 %v6123, %v5944
    %v6144 = vadd.f32 %v6124, %v5945
    %v6145 = vadd.f32 %v6125, %v5946
    %v6146 = vld [vmem:[%s11] sm:$0xf]
    %v6147 = vpack.c.bf16 %v6131, %v6126
    %v6148 = vpack.c.bf16 %v6132, %v6127
    %v6149 = vpack.c.bf16 %v6133, %v6128
    %v6150 = vpack.c.bf16 %v6134, %v6129
    %v6151 = vpack.c.bf16 %v6135, %v6130
    %v6152 = vpack.c.bf16 %v6141, %v6136
    %v6153 = vpack.c.bf16 %v6142, %v6137
    %v6154 = vpack.c.bf16 %v6143, %v6138
    %v6155 = vpack.c.bf16 %v6144, %v6139
    %v6156 = vpack.c.bf16 %v6145, %v6140
    %vm6157 = vcmask 130048
    %v6159 = vsel %vm6157, %v6146, 0
    %6161 = vmatprep.subr.bf16.mxu0 %v6148
    %6162 = vmatpush1.bf16.msra.mxu0 %v6147
    %6163 = vmatprep.subr.bf16.mxu0 0
    %6164 = vmatpush1.bf16.msra.mxu0 0
    %6165 = vmatprep.subr.bf16.mxu0 0
    %6166 = vmatpush1.bf16.msra.mxu0 0
    %6167 = vmatprep.subr.bf16.mxu0 0
    %6168 = vmatpush1.bf16.msra.mxu0 0
    %6169 = vmatprep.subr.bf16.mxu0 0
    %6170 = vmatpush1.bf16.msra.mxu0 0
    %6171 = vmatprep.subr.bf16.mxu0 0
    %6172 = vmatpush1.bf16.msra.mxu0 0
    %6173 = vmatprep.subr.bf16.mxu0 0
    %6174 = vmatpush1.bf16.msra.mxu0 0
    %6175 = vmatprep.subr.bf16.mxu0 0
    %6176 = vmatpush1.bf16.msra.mxu0 0
    %6177 = vmatprep.subr.bf16.mxu0 0
    %6178 = vmatpush1.bf16.msra.mxu0 0
    %6179 = vmatprep.subr.bf16.mxu0 0
    %6180 = vmatpush1.bf16.msra.mxu0 0
    %6181 = vmatprep.subr.bf16.mxu0 0
    %6182 = vmatpush1.bf16.msra.mxu0 0
    %6183 = vmatprep.subr.bf16.mxu0 0
    %6184 = vmatpush1.bf16.msra.mxu0 0
    %6185 = vmatprep.subr.bf16.mxu0 0
    %6186 = vmatpush1.bf16.msra.mxu0 0
    %6187 = vmatprep.subr.bf16.mxu0 0
    %6188 = vmatpush1.bf16.msra.mxu0 0
    %6189 = vmatprep.subr.bf16.mxu0 0
    %6190 = vmatpush1.bf16.msra.mxu0 0
    %6191 = vmatprep.subr.bf16.mxu0 0
    %6192 = vmatpush1.bf16.msra.mxu0 0
    %6193 = vmatprep.mubr.bf16.mxu0 0
    %6194 = vmatmul.mubr.bf16.gmra.mrb[0].mxu0 %v6159
    %v6195 = vpop.f32.mrb[0].mxu0
    %v6196 = vadd.f32 0.0, %v6195
    %v6197 = vpop.f32.mrb[0].mxu0
    %v6198 = vadd.f32 0.0, %v6197
    %v6199 = vpop.f32.mrb[0].mxu0
    %v6200 = vpop.f32.mrb[0].mxu0
    %6201 = vdwg.mxu0
    %6202 = vmatprep.subr.bf16.mxu0 %v6150
    %6203 = vmatpush1.bf16.msra.mxu0 %v6149
    %6204 = vmatprep.subr.bf16.mxu0 0
    %6205 = vmatpush1.bf16.msra.mxu0 0
    %6206 = vmatprep.subr.bf16.mxu0 0
    %6207 = vmatpush1.bf16.msra.mxu0 0
    %6208 = vmatprep.subr.bf16.mxu0 0
    %6209 = vmatpush1.bf16.msra.mxu0 0
    %6210 = vmatprep.subr.bf16.mxu0 0
    %6211 = vmatpush1.bf16.msra.mxu0 0
    %6212 = vmatprep.subr.bf16.mxu0 0
    %6213 = vmatpush1.bf16.msra.mxu0 0
    %6214 = vmatprep.subr.bf16.mxu0 0
    %6215 = vmatpush1.bf16.msra.mxu0 0
    %6216 = vmatprep.subr.bf16.mxu0 0
    %6217 = vmatpush1.bf16.msra.mxu0 0
    %6218 = vmatprep.subr.bf16.mxu0 0
    %6219 = vmatpush1.bf16.msra.mxu0 0
    %6220 = vmatprep.subr.bf16.mxu0 0
    %6221 = vmatpush1.bf16.msra.mxu0 0
    %6222 = vmatprep.subr.bf16.mxu0 0
    %6223 = vmatpush1.bf16.msra.mxu0 0
    %6224 = vmatprep.subr.bf16.mxu0 0
    %6225 = vmatpush1.bf16.msra.mxu0 0
    %6226 = vmatprep.subr.bf16.mxu0 0
    %6227 = vmatpush1.bf16.msra.mxu0 0
    %6228 = vmatprep.subr.bf16.mxu0 0
    %6229 = vmatpush1.bf16.msra.mxu0 0
    %6230 = vmatprep.subr.bf16.mxu0 0
    %6231 = vmatpush1.bf16.msra.mxu0 0
    %6232 = vmatprep.subr.bf16.mxu0 0
    %6233 = vmatpush1.bf16.msra.mxu0 0
    %6234 = vmatprep.mubr.bf16.mxu0 0
    %6235 = vmatmul.mubr.bf16.gmra.mrb[0].mxu0 %v6159
    %v6236 = vpop.f32.mrb[0].mxu0
    %v6237 = vadd.f32 0.0, %v6236
    %v6238 = vpop.f32.mrb[0].mxu0
    %v6239 = vadd.f32 0.0, %v6238
    %v6240 = vpop.f32.mrb[0].mxu0
    %v6241 = vpop.f32.mrb[0].mxu0
    %6242 = vdwg.mxu0
    %6243 = vmatprep.subr.bf16.mxu0 0
    %6244 = vmatpush1.bf16.msra.mxu0 %v6151
    %6245 = vmatprep.subr.bf16.mxu0 0
    %6246 = vmatpush1.bf16.msra.mxu0 0
    %6247 = vmatprep.subr.bf16.mxu0 0
    %6248 = vmatpush1.bf16.msra.mxu0 0
    %6249 = vmatprep.subr.bf16.mxu0 0
    %6250 = vmatpush1.bf16.msra.mxu0 0
    %6251 = vmatprep.subr.bf16.mxu0 0
    %6252 = vmatpush1.bf16.msra.mxu0 0
    %6253 = vmatprep.subr.bf16.mxu0 0
    %6254 = vmatpush1.bf16.msra.mxu0 0
    %6255 = vmatprep.subr.bf16.mxu0 0
    %6256 = vmatpush1.bf16.msra.mxu0 0
    %6257 = vmatprep.subr.bf16.mxu0 0
    %6258 = vmatpush1.bf16.msra.mxu0 0
    %6259 = vmatprep.subr.bf16.mxu0 0
    %6260 = vmatpush1.bf16.msra.mxu0 0
    %6261 = vmatprep.subr.bf16.mxu0 0
    %6262 = vmatpush1.bf16.msra.mxu0 0
    %6263 = vmatprep.subr.bf16.mxu0 0
    %6264 = vmatpush1.bf16.msra.mxu0 0
    %6265 = vmatprep.subr.bf16.mxu0 0
    %6266 = vmatpush1.bf16.msra.mxu0 0
    %6267 = vmatprep.subr.bf16.mxu0 0
    %6268 = vmatpush1.bf16.msra.mxu0 0
    %6269 = vmatprep.subr.bf16.mxu0 0
    %6270 = vmatpush1.bf16.msra.mxu0 0
    %6271 = vmatprep.subr.bf16.mxu0 0
    %6272 = vmatpush1.bf16.msra.mxu0 0
    %6273 = vmatprep.subr.bf16.mxu0 0
    %6274 = vmatpush1.bf16.msra.mxu0 0
    %6275 = vmatprep.mubr.bf16.mxu0 0
    %6276 = vmatmul.mubr.bf16.gmra.mrb[0].mxu0 %v6159
    %v6277 = vpop.f32.mrb[0].mxu0
    %v6278 = vadd.f32 0.0, %v6277
    %v6279 = vpop.f32.mrb[0].mxu0
    %v6280 = vpop.f32.mrb[0].mxu0
    %v6281 = vpop.f32.mrb[0].mxu0
    %6282 = vdwg.mxu0
    %6283 = vmatprep.subr.bf16.mxu0 %v6153
    %6284 = vmatpush1.bf16.msra.mxu0 %v6152
    %6285 = vmatprep.subr.bf16.mxu0 0
    %6286 = vmatpush1.bf16.msra.mxu0 0
    %6287 = vmatprep.subr.bf16.mxu0 0
    %6288 = vmatpush1.bf16.msra.mxu0 0
    %6289 = vmatprep.subr.bf16.mxu0 0
    %6290 = vmatpush1.bf16.msra.mxu0 0
    %6291 = vmatprep.subr.bf16.mxu0 0
    %6292 = vmatpush1.bf16.msra.mxu0 0
    %6293 = vmatprep.subr.bf16.mxu0 0
    %6294 = vmatpush1.bf16.msra.mxu0 0
    %6295 = vmatprep.subr.bf16.mxu0 0
    %6296 = vmatpush1.bf16.msra.mxu0 0
    %6297 = vmatprep.subr.bf16.mxu0 0
    %6298 = vmatpush1.bf16.msra.mxu0 0
    %6299 = vmatprep.subr.bf16.mxu0 0
    %6300 = vmatpush1.bf16.msra.mxu0 0
    %6301 = vmatprep.subr.bf16.mxu0 0
    %6302 = vmatpush1.bf16.msra.mxu0 0
    %6303 = vmatprep.subr.bf16.mxu0 0
    %6304 = vmatpush1.bf16.msra.mxu0 0
    %6305 = vmatprep.subr.bf16.mxu0 0
    %6306 = vmatpush1.bf16.msra.mxu0 0
    %6307 = vmatprep.subr.bf16.mxu0 0
    %6308 = vmatpush1.bf16.msra.mxu0 0
    %6309 = vmatprep.subr.bf16.mxu0 0
    %6310 = vmatpush1.bf16.msra.mxu0 0
    %6311 = vmatprep.subr.bf16.mxu0 0
    %6312 = vmatpush1.bf16.msra.mxu0 0
    %6313 = vmatprep.subr.bf16.mxu0 0
    %6314 = vmatpush1.bf16.msra.mxu0 0
    %6315 = vmatprep.mubr.bf16.mxu0 0
    %6316 = vmatmul.mubr.bf16.gmra.mrb[0].mxu0 %v6159
    %v6317 = vpop.f32.mrb[0].mxu0
    %v6318 = vadd.f32 0.0, %v6317
    %v6319 = vpop.f32.mrb[0].mxu0
    %v6320 = vadd.f32 0.0, %v6319
    %v6321 = vpop.f32.mrb[0].mxu0
    %v6322 = vpop.f32.mrb[0].mxu0
    %6323 = vdwg.mxu0
    %6324 = vmatprep.subr.bf16.mxu0 %v6155
    %6325 = vmatpush1.bf16.msra.mxu0 %v6154
    %6326 = vmatprep.subr.bf16.mxu0 0
    %6327 = vmatpush1.bf16.msra.mxu0 0
    %6328 = vmatprep.subr.bf16.mxu0 0
    %6329 = vmatpush1.bf16.msra.mxu0 0
    %6330 = vmatprep.subr.bf16.mxu0 0
    %6331 = vmatpush1.bf16.msra.mxu0 0
    %6332 = vmatprep.subr.bf16.mxu0 0
    %6333 = vmatpush1.bf16.msra.mxu0 0
    %6334 = vmatprep.subr.bf16.mxu0 0
    %6335 = vmatpush1.bf16.msra.mxu0 0
    %6336 = vmatprep.subr.bf16.mxu0 0
    %6337 = vmatpush1.bf16.msra.mxu0 0
    %6338 = vmatprep.subr.bf16.mxu0 0
    %6339 = vmatpush1.bf16.msra.mxu0 0
    %6340 = vmatprep.subr.bf16.mxu0 0
    %6341 = vmatpush1.bf16.msra.mxu0 0
    %6342 = vmatprep.subr.bf16.mxu0 0
    %6343 = vmatpush1.bf16.msra.mxu0 0
    %6344 = vmatprep.subr.bf16.mxu0 0
    %6345 = vmatpush1.bf16.msra.mxu0 0
    %6346 = vmatprep.subr.bf16.mxu0 0
    %6347 = vmatpush1.bf16.msra.mxu0 0
    %6348 = vmatprep.subr.bf16.mxu0 0
    %6349 = vmatpush1.bf16.msra.mxu0 0
    %6350 = vmatprep.subr.bf16.mxu0 0
    %6351 = vmatpush1.bf16.msra.mxu0 0
    %6352 = vmatprep.subr.bf16.mxu0 0
    %6353 = vmatpush1.bf16.msra.mxu0 0
    %6354 = vmatprep.subr.bf16.mxu0 0
    %6355 = vmatpush1.bf16.msra.mxu0 0
    %6356 = vmatprep.mubr.bf16.mxu0 0
    %6357 = vmatmul.mubr.bf16.gmra.mrb[0].mxu0 %v6159
    %v6358 = vpop.f32.mrb[0].mxu0
    %v6359 = vadd.f32 0.0, %v6358
    %v6360 = vpop.f32.mrb[0].mxu0
    %v6361 = vadd.f32 0.0, %v6360
    %v6362 = vpop.f32.mrb[0].mxu0
    %v6363 = vpop.f32.mrb[0].mxu0
    %6364 = vdwg.mxu0
    %6365 = vmatprep.subr.bf16.mxu0 0
    %6366 = vmatpush1.bf16.msra.mxu0 %v6156
    %6367 = vmatprep.subr.bf16.mxu0 0
    %6368 = vmatpush1.bf16.msra.mxu0 0
    %6369 = vmatprep.subr.bf16.mxu0 0
    %6370 = vmatpush1.bf16.msra.mxu0 0
    %6371 = vmatprep.subr.bf16.mxu0 0
    %6372 = vmatpush1.bf16.msra.mxu0 0
    %6373 = vmatprep.subr.bf16.mxu0 0
    %6374 = vmatpush1.bf16.msra.mxu0 0
    %6375 = vmatprep.subr.bf16.mxu0 0
    %6376 = vmatpush1.bf16.msra.mxu0 0
    %6377 = vmatprep.subr.bf16.mxu0 0
    %6378 = vmatpush1.bf16.msra.mxu0 0
    %6379 = vmatprep.subr.bf16.mxu0 0
    %6380 = vmatpush1.bf16.msra.mxu0 0
    %6381 = vmatprep.subr.bf16.mxu0 0
    %6382 = vmatpush1.bf16.msra.mxu0 0
    %6383 = vmatprep.subr.bf16.mxu0 0
    %6384 = vmatpush1.bf16.msra.mxu0 0
    %6385 = vmatprep.subr.bf16.mxu0 0
    %6386 = vmatpush1.bf16.msra.mxu0 0
    %6387 = vmatprep.subr.bf16.mxu0 0
    %6388 = vmatpush1.bf16.msra.mxu0 0
    %6389 = vmatprep.subr.bf16.mxu0 0
    %6390 = vmatpush1.bf16.msra.mxu0 0
    %6391 = vmatprep.subr.bf16.mxu0 0
    %6392 = vmatpush1.bf16.msra.mxu0 0
    %6393 = vmatprep.subr.bf16.mxu0 0
    %6394 = vmatpush1.bf16.msra.mxu0 0
    %6395 = vmatprep.subr.bf16.mxu0 0
    %6396 = vmatpush1.bf16.msra.mxu0 0
    %6397 = vmatprep.mubr.bf16.mxu0 0
    %6398 = vmatmul.mubr.bf16.gmra.mrb[0].mxu0 %v6159
    %v6399 = vpop.f32.mrb[0].mxu0
    %v6400 = vadd.f32 0.0, %v6399
    %v6401 = vpop.f32.mrb[0].mxu0
    %v6402 = vpop.f32.mrb[0].mxu0
    %v6403 = vpop.f32.mrb[0].mxu0
    %6404 = vdwg.mxu0
    %v6405 = vld [vmem:[#allocation2] sm:$0x1]
    %6407 = vset.pattern.permute.xlu0 0
    %6408 = vperm.xlu0 %6407, %v6405
    %v6409 = vpop.permute.xlu0 %6408
    %v6411 = vlaneseq
    %v6412 = vshrl.u32 %v6411, 7
    %v6413 = vsub.s32 0, %v6412
    %v6414 = vrot.slane %v6409, %v6413
    %v6415 = vsel %vm5970, %v6278, 0.0
    %v6416 = vsel %vm5970, %v6400, 0.0
    %v6417 = vadd.f32 %v6414, %v6196
    %v6418 = vadd.f32 %v6414, %v6198
    %v6419 = vadd.f32 %v6414, %v6237
    %v6420 = vadd.f32 %v6414, %v6239
    %v6421 = vadd.f32 %v6414, %v6415
    %v6422 = vadd.f32 %v6414, %v6318
    %v6423 = vadd.f32 %v6414, %v6320
    %v6424 = vadd.f32 %v6414, %v6359
    %v6425 = vadd.f32 %v6414, %v6361
    %v6426 = vadd.f32 %v6414, %v6416
    %v6437 = vrot.slane %v6196, 1
    %v6438 = vrot.slane %v6198, 1
    %v6439 = vrot.slane %v6237, 1
    %v6440 = vrot.slane %v6239, 1
    %v6441 = vrot.slane %v6278, 1
    %v6442 = vrot.slane %v6318, 1
    %v6443 = vrot.slane %v6320, 1
    %v6444 = vrot.slane %v6359, 1
    %v6445 = vrot.slane %v6361, 1
    %v6446 = vrot.slane %v6400, 1
    %6447 = vrot.lane.b32.xlu0 %v6437, 1
    %v6448 = vpop.permute.xlu0 %6447
    %6449 = vrot.lane.b32.xlu0 %v6438, 1
    %v6450 = vpop.permute.xlu0 %6449
    %6451 = vrot.lane.b32.xlu0 %v6439, 1
    %v6452 = vpop.permute.xlu0 %6451
    %6453 = vrot.lane.b32.xlu0 %v6440, 1
    %v6454 = vpop.permute.xlu0 %6453
    %6455 = vrot.lane.b32.xlu0 %v6441, 1
    %v6456 = vpop.permute.xlu0 %6455
    %6457 = vrot.lane.b32.xlu0 %v6442, 1
    %v6458 = vpop.permute.xlu0 %6457
    %6459 = vrot.lane.b32.xlu0 %v6443, 1
    %v6460 = vpop.permute.xlu0 %6459
    %6461 = vrot.lane.b32.xlu0 %v6444, 1
    %v6462 = vpop.permute.xlu0 %6461
    %6463 = vrot.lane.b32.xlu0 %v6445, 1
    %v6464 = vpop.permute.xlu0 %6463
    %6465 = vrot.lane.b32.xlu0 %v6446, 1
    %v6466 = vpop.permute.xlu0 %6465
    %v6467 = vsel %vm4082, %v6448, %v6450
    %v6468 = vsel %vm4082, %v6450, %v6452
    %v6469 = vsel %vm4082, %v6452, %v6454
    %v6470 = vsel %vm4082, %v6454, %v6456
    %v6471 = vsel %vm4082, %v6458, %v6460
    %v6472 = vsel %vm4082, %v6460, %v6462
    %v6473 = vsel %vm4082, %v6462, %v6464
    %v6474 = vsel %vm4082, %v6464, %v6466
    %v6485 = vsel %vm4082, 0.0, %v6448
    %v6486 = vsel %vm4082, 0.0, %v6458
    %vm6487 = vcmask 662528
    %v6488 = vsel %vm6487, %v6470, 0.0
    %v6489 = vsel %vm6487, %v6474, 0.0
    %v6490 = vadd.f32 %v6417, %v6485
    %v6491 = vadd.f32 %v6418, %v6467
    %v6492 = vadd.f32 %v6419, %v6468
    %v6493 = vadd.f32 %v6420, %v6469
    %v6494 = vadd.f32 %v6421, %v6488
    %v6495 = vadd.f32 %v6422, %v6486
    %v6496 = vadd.f32 %v6423, %v6471
    %v6497 = vadd.f32 %v6424, %v6472
    %v6498 = vadd.f32 %v6425, %v6473
    %v6499 = vadd.f32 %v6426, %v6489
    %v6500 = vrot.slane %v6196, 2
    %v6501 = vrot.slane %v6198, 2
    %v6502 = vrot.slane %v6237, 2
    %v6503 = vrot.slane %v6239, 2
    %v6504 = vrot.slane %v6278, 2
    %v6505 = vrot.slane %v6318, 2
    %v6506 = vrot.slane %v6320, 2
    %v6507 = vrot.slane %v6359, 2
    %v6508 = vrot.slane %v6361, 2
    %v6509 = vrot.slane %v6400, 2
    %6510 = vrot.lane.b32.xlu0 %v6500, 2
    %v6511 = vpop.permute.xlu0 %6510
    %6512 = vrot.lane.b32.xlu0 %v6501, 2
    %v6513 = vpop.permute.xlu0 %6512
    %6514 = vrot.lane.b32.xlu0 %v6502, 2
    %v6515 = vpop.permute.xlu0 %6514
    %6516 = vrot.lane.b32.xlu0 %v6503, 2
    %v6517 = vpop.permute.xlu0 %6516
    %6518 = vrot.lane.b32.xlu0 %v6504, 2
    %v6519 = vpop.permute.xlu0 %6518
    %6520 = vrot.lane.b32.xlu0 %v6505, 2
    %v6521 = vpop.permute.xlu0 %6520
    %6522 = vrot.lane.b32.xlu0 %v6506, 2
    %v6523 = vpop.permute.xlu0 %6522
    %6524 = vrot.lane.b32.xlu0 %v6507, 2
    %v6525 = vpop.permute.xlu0 %6524
    %6526 = vrot.lane.b32.xlu0 %v6508, 2
    %v6527 = vpop.permute.xlu0 %6526
    %6528 = vrot.lane.b32.xlu0 %v6509, 2
    %v6529 = vpop.permute.xlu0 %6528
    %v6530 = vsel %vm4208, %v6511, %v6513
    %v6531 = vsel %vm4208, %v6513, %v6515
    %v6532 = vsel %vm4208, %v6515, %v6517
    %v6533 = vsel %vm4208, %v6517, %v6519
    %v6534 = vsel %vm4208, %v6521, %v6523
    %v6535 = vsel %vm4208, %v6523, %v6525
    %v6536 = vsel %vm4208, %v6525, %v6527
    %v6537 = vsel %vm4208, %v6527, %v6529
    %v6548 = vsel %vm4208, 0.0, %v6511
    %v6549 = vsel %vm4208, 0.0, %v6521
    %vm6550 = vcmask 670720
    %v6551 = vsel %vm6550, %v6533, 0.0
    %v6552 = vsel %vm6550, %v6537, 0.0
    %v6553 = vadd.f32 %v6490, %v6548
    %v6554 = vadd.f32 %v6491, %v6530
    %v6555 = vadd.f32 %v6492, %v6531
    %v6556 = vadd.f32 %v6493, %v6532
    %v6557 = vadd.f32 %v6494, %v6551
    %v6558 = vadd.f32 %v6495, %v6549
    %v6559 = vadd.f32 %v6496, %v6534
    %v6560 = vadd.f32 %v6497, %v6535
    %v6561 = vadd.f32 %v6498, %v6536
    %v6562 = vadd.f32 %v6499, %v6552
    %v6563 = vrot.slane %v6196, 3
    %v6564 = vrot.slane %v6198, 3
    %v6565 = vrot.slane %v6237, 3
    %v6566 = vrot.slane %v6239, 3
    %v6567 = vrot.slane %v6278, 3
    %v6568 = vrot.slane %v6318, 3
    %v6569 = vrot.slane %v6320, 3
    %v6570 = vrot.slane %v6359, 3
    %v6571 = vrot.slane %v6361, 3
    %v6572 = vrot.slane %v6400, 3
    %6573 = vrot.lane.b32.xlu0 %v6563, 3
    %v6574 = vpop.permute.xlu0 %6573
    %6575 = vrot.lane.b32.xlu0 %v6564, 3
    %v6576 = vpop.permute.xlu0 %6575
    %6577 = vrot.lane.b32.xlu0 %v6565, 3
    %v6578 = vpop.permute.xlu0 %6577
    %6579 = vrot.lane.b32.xlu0 %v6566, 3
    %v6580 = vpop.permute.xlu0 %6579
    %6581 = vrot.lane.b32.xlu0 %v6567, 3
    %v6582 = vpop.permute.xlu0 %6581
    %6583 = vrot.lane.b32.xlu0 %v6568, 3
    %v6584 = vpop.permute.xlu0 %6583
    %6585 = vrot.lane.b32.xlu0 %v6569, 3
    %v6586 = vpop.permute.xlu0 %6585
    %6587 = vrot.lane.b32.xlu0 %v6570, 3
    %v6588 = vpop.permute.xlu0 %6587
    %6589 = vrot.lane.b32.xlu0 %v6571, 3
    %v6590 = vpop.permute.xlu0 %6589
    %6591 = vrot.lane.b32.xlu0 %v6572, 3
    %v6592 = vpop.permute.xlu0 %6591
    %v6593 = vsel %vm4334, %v6574, %v6576
    %v6594 = vsel %vm4334, %v6576, %v6578
    %v6595 = vsel %vm4334, %v6578, %v6580
    %v6596 = vsel %vm4334, %v6580, %v6582
    %v6597 = vsel %vm4334, %v6584, %v6586
    %v6598 = vsel %vm4334, %v6586, %v6588
    %v6599 = vsel %vm4334, %v6588, %v6590
    %v6600 = vsel %vm4334, %v6590, %v6592
    %v6611 = vsel %vm4334, 0.0, %v6574
    %v6612 = vsel %vm4334, 0.0, %v6584
    %vm6613 = vcmask 678912
    %v6614 = vsel %vm6613, %v6596, 0.0
    %v6615 = vsel %vm6613, %v6600, 0.0
    %v6616 = vadd.f32 %v6553, %v6611
    %v6617 = vadd.f32 %v6554, %v6593
    %v6618 = vadd.f32 %v6555, %v6594
    %v6619 = vadd.f32 %v6556, %v6595
    %v6620 = vadd.f32 %v6557, %v6614
    %v6621 = vadd.f32 %v6558, %v6612
    %v6622 = vadd.f32 %v6559, %v6597
    %v6623 = vadd.f32 %v6560, %v6598
    %v6624 = vadd.f32 %v6561, %v6599
    %v6625 = vadd.f32 %v6562, %v6615
    %v6626 = vrot.slane %v6196, 4
    %v6627 = vrot.slane %v6198, 4
    %v6628 = vrot.slane %v6237, 4
    %v6629 = vrot.slane %v6239, 4
    %v6630 = vrot.slane %v6278, 4
    %v6631 = vrot.slane %v6318, 4
    %v6632 = vrot.slane %v6320, 4
    %v6633 = vrot.slane %v6359, 4
    %v6634 = vrot.slane %v6361, 4
    %v6635 = vrot.slane %v6400, 4
    %6636 = vrot.lane.b32.xlu0 %v6626, 4
    %v6637 = vpop.permute.xlu0 %6636
    %6638 = vrot.lane.b32.xlu0 %v6627, 4
    %v6639 = vpop.permute.xlu0 %6638
    %6640 = vrot.lane.b32.xlu0 %v6628, 4
    %v6641 = vpop.permute.xlu0 %6640
    %6642 = vrot.lane.b32.xlu0 %v6629, 4
    %v6643 = vpop.permute.xlu0 %6642
    %6644 = vrot.lane.b32.xlu0 %v6630, 4
    %v6645 = vpop.permute.xlu0 %6644
    %6646 = vrot.lane.b32.xlu0 %v6631, 4
    %v6647 = vpop.permute.xlu0 %6646
    %6648 = vrot.lane.b32.xlu0 %v6632, 4
    %v6649 = vpop.permute.xlu0 %6648
    %6650 = vrot.lane.b32.xlu0 %v6633, 4
    %v6651 = vpop.permute.xlu0 %6650
    %6652 = vrot.lane.b32.xlu0 %v6634, 4
    %v6653 = vpop.permute.xlu0 %6652
    %6654 = vrot.lane.b32.xlu0 %v6635, 4
    %v6655 = vpop.permute.xlu0 %6654
    %v6656 = vsel %vm4460, %v6637, %v6639
    %v6657 = vsel %vm4460, %v6639, %v6641
    %v6658 = vsel %vm4460, %v6641, %v6643
    %v6659 = vsel %vm4460, %v6643, %v6645
    %v6660 = vsel %vm4460, %v6647, %v6649
    %v6661 = vsel %vm4460, %v6649, %v6651
    %v6662 = vsel %vm4460, %v6651, %v6653
    %v6663 = vsel %vm4460, %v6653, %v6655
    %v6674 = vsel %vm4460, 0.0, %v6637
    %v6675 = vsel %vm4460, 0.0, %v6647
    %vm6676 = vcmask 687104
    %v6677 = vsel %vm6676, %v6659, 0.0
    %v6678 = vsel %vm6676, %v6663, 0.0
    %v6679 = vadd.f32 %v6616, %v6674
    %v6680 = vadd.f32 %v6617, %v6656
    %v6681 = vadd.f32 %v6618, %v6657
    %v6682 = vadd.f32 %v6619, %v6658
    %v6683 = vadd.f32 %v6620, %v6677
    %v6684 = vadd.f32 %v6621, %v6675
    %v6685 = vadd.f32 %v6622, %v6660
    %v6686 = vadd.f32 %v6623, %v6661
    %v6687 = vadd.f32 %v6624, %v6662
    %v6688 = vadd.f32 %v6625, %v6678
    %v6689 = vrot.slane %v6196, 5
    %v6690 = vrot.slane %v6198, 5
    %v6691 = vrot.slane %v6237, 5
    %v6692 = vrot.slane %v6239, 5
    %v6693 = vrot.slane %v6278, 5
    %v6694 = vrot.slane %v6318, 5
    %v6695 = vrot.slane %v6320, 5
    %v6696 = vrot.slane %v6359, 5
    %v6697 = vrot.slane %v6361, 5
    %v6698 = vrot.slane %v6400, 5
    %6699 = vrot.lane.b32.xlu0 %v6689, 5
    %v6700 = vpop.permute.xlu0 %6699
    %6701 = vrot.lane.b32.xlu0 %v6690, 5
    %v6702 = vpop.permute.xlu0 %6701
    %6703 = vrot.lane.b32.xlu0 %v6691, 5
    %v6704 = vpop.permute.xlu0 %6703
    %6705 = vrot.lane.b32.xlu0 %v6692, 5
    %v6706 = vpop.permute.xlu0 %6705
    %6707 = vrot.lane.b32.xlu0 %v6693, 5
    %v6708 = vpop.permute.xlu0 %6707
    %6709 = vrot.lane.b32.xlu0 %v6694, 5
    %v6710 = vpop.permute.xlu0 %6709
    %6711 = vrot.lane.b32.xlu0 %v6695, 5
    %v6712 = vpop.permute.xlu0 %6711
    %6713 = vrot.lane.b32.xlu0 %v6696, 5
    %v6714 = vpop.permute.xlu0 %6713
    %6715 = vrot.lane.b32.xlu0 %v6697, 5
    %v6716 = vpop.permute.xlu0 %6715
    %6717 = vrot.lane.b32.xlu0 %v6698, 5
    %v6718 = vpop.permute.xlu0 %6717
    %v6719 = vsel %vm4586, %v6700, %v6702
    %v6720 = vsel %vm4586, %v6702, %v6704
    %v6721 = vsel %vm4586, %v6704, %v6706
    %v6722 = vsel %vm4586, %v6706, %v6708
    %v6723 = vsel %vm4586, %v6710, %v6712
    %v6724 = vsel %vm4586, %v6712, %v6714
    %v6725 = vsel %vm4586, %v6714, %v6716
    %v6726 = vsel %vm4586, %v6716, %v6718
    %v6737 = vsel %vm4586, 0.0, %v6700
    %v6738 = vsel %vm4586, 0.0, %v6710
    %vm6739 = vcmask 695296
    %v6740 = vsel %vm6739, %v6722, 0.0
    %v6741 = vsel %vm6739, %v6726, 0.0
    %v6742 = vadd.f32 %v6679, %v6737
    %v6743 = vadd.f32 %v6680, %v6719
    %v6744 = vadd.f32 %v6681, %v6720
    %v6745 = vadd.f32 %v6682, %v6721
    %v6746 = vadd.f32 %v6683, %v6740
    %v6747 = vadd.f32 %v6684, %v6738
    %v6748 = vadd.f32 %v6685, %v6723
    %v6749 = vadd.f32 %v6686, %v6724
    %v6750 = vadd.f32 %v6687, %v6725
    %v6751 = vadd.f32 %v6688, %v6741
    %v6752 = vrot.slane %v6196, 6
    %v6753 = vrot.slane %v6198, 6
    %v6754 = vrot.slane %v6237, 6
    %v6755 = vrot.slane %v6239, 6
    %v6756 = vrot.slane %v6278, 6
    %v6757 = vrot.slane %v6318, 6
    %v6758 = vrot.slane %v6320, 6
    %v6759 = vrot.slane %v6359, 6
    %v6760 = vrot.slane %v6361, 6
    %v6761 = vrot.slane %v6400, 6
    %6762 = vrot.lane.b32.xlu0 %v6752, 6
    %v6763 = vpop.permute.xlu0 %6762
    %6764 = vrot.lane.b32.xlu0 %v6753, 6
    %v6765 = vpop.permute.xlu0 %6764
    %6766 = vrot.lane.b32.xlu0 %v6754, 6
    %v6767 = vpop.permute.xlu0 %6766
    %6768 = vrot.lane.b32.xlu0 %v6755, 6
    %v6769 = vpop.permute.xlu0 %6768
    %6770 = vrot.lane.b32.xlu0 %v6756, 6
    %v6771 = vpop.permute.xlu0 %6770
    %6772 = vrot.lane.b32.xlu0 %v6757, 6
    %v6773 = vpop.permute.xlu0 %6772
    %6774 = vrot.lane.b32.xlu0 %v6758, 6
    %v6775 = vpop.permute.xlu0 %6774
    %6776 = vrot.lane.b32.xlu0 %v6759, 6
    %v6777 = vpop.permute.xlu0 %6776
    %6778 = vrot.lane.b32.xlu0 %v6760, 6
    %v6779 = vpop.permute.xlu0 %6778
    %6780 = vrot.lane.b32.xlu0 %v6761, 6
    %v6781 = vpop.permute.xlu0 %6780
    %v6782 = vsel %vm4712, %v6763, %v6765
    %v6783 = vsel %vm4712, %v6765, %v6767
    %v6784 = vsel %vm4712, %v6767, %v6769
    %v6785 = vsel %vm4712, %v6769, %v6771
    %v6786 = vsel %vm4712, %v6773, %v6775
    %v6787 = vsel %vm4712, %v6775, %v6777
    %v6788 = vsel %vm4712, %v6777, %v6779
    %v6789 = vsel %vm4712, %v6779, %v6781
    %v6800 = vsel %vm4712, 0.0, %v6763
    %v6801 = vsel %vm4712, 0.0, %v6773
    %vm6802 = vcmask 703488
    %v6803 = vsel %vm6802, %v6785, 0.0
    %v6804 = vsel %vm6802, %v6789, 0.0
    %v6805 = vadd.f32 %v6742, %v6800
    %v6806 = vadd.f32 %v6743, %v6782
    %v6807 = vadd.f32 %v6744, %v6783
    %v6808 = vadd.f32 %v6745, %v6784
    %v6809 = vadd.f32 %v6746, %v6803
    %v6810 = vadd.f32 %v6747, %v6801
    %v6811 = vadd.f32 %v6748, %v6786
    %v6812 = vadd.f32 %v6749, %v6787
    %v6813 = vadd.f32 %v6750, %v6788
    %v6814 = vadd.f32 %v6751, %v6804
    %v6815 = vrot.slane %v6196, 7
    %v6816 = vrot.slane %v6198, 7
    %v6817 = vrot.slane %v6237, 7
    %v6818 = vrot.slane %v6239, 7
    %v6819 = vrot.slane %v6278, 7
    %v6820 = vrot.slane %v6318, 7
    %v6821 = vrot.slane %v6320, 7
    %v6822 = vrot.slane %v6359, 7
    %v6823 = vrot.slane %v6361, 7
    %v6824 = vrot.slane %v6400, 7
    %6825 = vrot.lane.b32.xlu0 %v6815, 7
    %v6826 = vpop.permute.xlu0 %6825
    %6827 = vrot.lane.b32.xlu0 %v6816, 7
    %v6828 = vpop.permute.xlu0 %6827
    %6829 = vrot.lane.b32.xlu0 %v6817, 7
    %v6830 = vpop.permute.xlu0 %6829
    %6831 = vrot.lane.b32.xlu0 %v6818, 7
    %v6832 = vpop.permute.xlu0 %6831
    %6833 = vrot.lane.b32.xlu0 %v6819, 7
    %v6834 = vpop.permute.xlu0 %6833
    %6835 = vrot.lane.b32.xlu0 %v6820, 7
    %v6836 = vpop.permute.xlu0 %6835
    %6837 = vrot.lane.b32.xlu0 %v6821, 7
    %v6838 = vpop.permute.xlu0 %6837
    %6839 = vrot.lane.b32.xlu0 %v6822, 7
    %v6840 = vpop.permute.xlu0 %6839
    %6841 = vrot.lane.b32.xlu0 %v6823, 7
    %v6842 = vpop.permute.xlu0 %6841
    %6843 = vrot.lane.b32.xlu0 %v6824, 7
    %v6844 = vpop.permute.xlu0 %6843
    %v6845 = vsel %vm4838, %v6826, %v6828
    %v6846 = vsel %vm4838, %v6828, %v6830
    %v6847 = vsel %vm4838, %v6830, %v6832
    %v6848 = vsel %vm4838, %v6832, %v6834
    %v6849 = vsel %vm4838, %v6836, %v6838
    %v6850 = vsel %vm4838, %v6838, %v6840
    %v6851 = vsel %vm4838, %v6840, %v6842
    %v6852 = vsel %vm4838, %v6842, %v6844
    %v6863 = vsel %vm4838, 0.0, %v6826
    %v6864 = vsel %vm4838, 0.0, %v6836
    %v6865 = vadd.f32 %v6805, %v6863
    %v6866 = vadd.f32 %v6806, %v6845
    %v6867 = vadd.f32 %v6807, %v6846
    %v6868 = vadd.f32 %v6808, %v6847
    %v6869 = vadd.f32 %v6809, %v6848
    %v6870 = vadd.f32 %v6810, %v6864
    %v6871 = vadd.f32 %v6811, %v6849
    %v6872 = vadd.f32 %v6812, %v6850
    %v6873 = vadd.f32 %v6813, %v6851
    %v6874 = vadd.f32 %v6814, %v6852
    %vm6875 = vcmask 1040384
    %v6876 = vsel %vm6875, %v6865, 0.0
    %v6877 = vsel %vm6875, %v6866, 0.0
    %v6878 = vadd.f32 %v6876, %v6877
    %v6879 = vsel %vm6875, %v6867, 0.0
    %v6880 = vadd.f32 %v6878, %v6879
    %v6881 = vsel %vm6875, %v6868, 0.0
    %v6882 = vadd.f32 %v6880, %v6881
    %vm6883 = vcmask 704512
    %v6884 = vsel %vm6883, %v6869, 0.0
    %v6885 = vadd.f32 %v6882, %v6884
    %6886 = vadd.xlane.f32.xlu0 %v6885
    %v6887 = vpop.xlane.xlu0 %6886
    %v6888 = vsel %vm6875, %v6870, 0.0
    %v6889 = vsel %vm6875, %v6871, 0.0
    %v6890 = vadd.f32 %v6888, %v6889
    %v6891 = vsel %vm6875, %v6872, 0.0
    %v6892 = vadd.f32 %v6890, %v6891
    %v6893 = vsel %vm6875, %v6873, 0.0
    %v6894 = vadd.f32 %v6892, %v6893
    %v6895 = vsel %vm6883, %v6874, 0.0
    %v6896 = vadd.f32 %v6894, %v6895
    %6897 = vadd.xlane.f32.xlu0 %v6896
    %v6898 = vpop.xlane.xlu0 %6897
    %v6899 = vmul.f32 %v6865, %v6865
    %v6900 = vmul.f32 %v6866, %v6866
    %v6901 = vmul.f32 %v6867, %v6867
    %v6902 = vmul.f32 %v6868, %v6868
    %v6903 = vmul.f32 %v6869, %v6869
    %v6904 = vmul.f32 %v6870, %v6870
    %v6905 = vmul.f32 %v6871, %v6871
    %v6906 = vmul.f32 %v6872, %v6872
    %v6907 = vmul.f32 %v6873, %v6873
    %v6908 = vmul.f32 %v6874, %v6874
    %v6909 = vsel %vm6875, %v6899, 0.0
    %v6910 = vsel %vm6875, %v6900, 0.0
    %v6911 = vadd.f32 %v6909, %v6910
    %v6912 = vsel %vm6875, %v6901, 0.0
    %v6913 = vadd.f32 %v6911, %v6912
    %v6914 = vsel %vm6875, %v6902, 0.0
    %v6915 = vadd.f32 %v6913, %v6914
    %v6916 = vsel %vm6883, %v6903, 0.0
    %v6917 = vadd.f32 %v6915, %v6916
    %6918 = vadd.xlane.f32.xlu0 %v6917
    %v6919 = vpop.xlane.xlu0 %6918
    %v6920 = vsel %vm6875, %v6904, 0.0
    %v6921 = vsel %vm6875, %v6905, 0.0
    %v6922 = vadd.f32 %v6920, %v6921
    %v6923 = vsel %vm6875, %v6906, 0.0
    %v6924 = vadd.f32 %v6922, %v6923
    %v6925 = vsel %vm6875, %v6907, 0.0
    %v6926 = vadd.f32 %v6924, %v6925
    %v6927 = vsel %vm6883, %v6908, 0.0
    %v6928 = vadd.f32 %v6926, %v6927
    %6929 = vadd.xlane.f32.xlu0 %v6928
    %v6930 = vpop.xlane.xlu0 %6929
    %v6931 = vmul.f32 %v6887, 0.001669449
    %v6932 = vmul.f32 %v6898, 0.001669449
    %v6933 = vmul.f32 %v6919, 0.001669449
    %v6934 = vmul.f32 %v6930, 0.001669449
    %v6935 = vmul.f32 %v6931, %v6931
    %v6936 = vmul.f32 %v6932, %v6932
    %v6937 = vsub.f32 %v6933, %v6935
    %v6938 = vsub.f32 %v6934, %v6936
    %v6939 = vmax.f32 %v6937, 0.0
    %v6940 = vmax.f32 %v6938, 0.0
    %v6941 = vadd.f32 %v6939, 1e-05
    %v6942 = vadd.f32 %v6940, 1e-05
    %v6943 = vrsqrt.pop %v6941
    %v6944 = vrsqrt.pop %v6942
    %v6945 = vsub.f32 %v6865, %v6931
    %v6946 = vsub.f32 %v6866, %v6931
    %v6947 = vsub.f32 %v6867, %v6931
    %v6948 = vsub.f32 %v6868, %v6931
    %v6949 = vsub.f32 %v6869, %v6931
    %v6950 = vsub.f32 %v6870, %v6932
    %v6951 = vsub.f32 %v6871, %v6932
    %v6952 = vsub.f32 %v6872, %v6932
    %v6953 = vsub.f32 %v6873, %v6932
    %v6954 = vsub.f32 %v6874, %v6932
    %v6955 = vld [vmem:[%s13] sm:$0x1f]
    %v6957 = vlaneseq
    %v6958 = vshrl.u32 %v6957, 7
    %v6959 = vsub.s32 0, %v6958
    %v6960 = vrot.slane %v6955, %v6959
    %v6961 = vlaneseq
    %v6962 = vshrl.u32 %v6961, 7
    %v6963 = vsub.s32 1, %v6962
    %v6964 = vrot.slane %v6955, %v6963
    %v6965 = vlaneseq
    %v6966 = vshrl.u32 %v6965, 7
    %v6967 = vsub.s32 2, %v6966
    %v6968 = vrot.slane %v6955, %v6967
    %v6969 = vlaneseq
    %v6970 = vshrl.u32 %v6969, 7
    %v6971 = vsub.s32 3, %v6970
    %v6972 = vrot.slane %v6955, %v6971
    %v6973 = vlaneseq
    %v6974 = vshrl.u32 %v6973, 7
    %v6975 = vsub.s32 4, %v6974
    %v6976 = vrot.slane %v6955, %v6975
    %v6982 = vmul.f32 %v6945, %v6960
    %v6983 = vmul.f32 %v6946, %v6964
    %v6984 = vmul.f32 %v6947, %v6968
    %v6985 = vmul.f32 %v6948, %v6972
    %v6986 = vmul.f32 %v6949, %v6976
    %v6987 = vmul.f32 %v6950, %v6960
    %v6988 = vmul.f32 %v6951, %v6964
    %v6989 = vmul.f32 %v6952, %v6968
    %v6990 = vmul.f32 %v6953, %v6972
    %v6991 = vmul.f32 %v6954, %v6976
    %v6992 = vsel %vm6875, %v6982, 0.0
    %v6993 = vsel %vm6875, %v6983, 0.0
    %v6994 = vadd.f32 %v6992, %v6993
    %v6995 = vsel %vm6875, %v6984, 0.0
    %v6996 = vadd.f32 %v6994, %v6995
    %v6997 = vsel %vm6875, %v6985, 0.0
    %v6998 = vadd.f32 %v6996, %v6997
    %v6999 = vsel %vm6883, %v6986, 0.0
    %v7000 = vadd.f32 %v6998, %v6999
    %7001 = vadd.xlane.f32.xlu0 %v7000
    %v7002 = vpop.xlane.xlu0 %7001
    %v7003 = vsel %vm6875, %v6987, 0.0
    %v7004 = vsel %vm6875, %v6988, 0.0
    %v7005 = vadd.f32 %v7003, %v7004
    %v7006 = vsel %vm6875, %v6989, 0.0
    %v7007 = vadd.f32 %v7005, %v7006
    %v7008 = vsel %vm6875, %v6990, 0.0
    %v7009 = vadd.f32 %v7007, %v7008
    %v7010 = vsel %vm6883, %v6991, 0.0
    %v7011 = vadd.f32 %v7009, %v7010
    %7012 = vadd.xlane.f32.xlu0 %v7011
    %v7013 = vpop.xlane.xlu0 %7012
    %v7014 = vmul.f32 %v6943, %v7002
    %v7015 = vmul.f32 %v6944, %v7013
    %v7016 = vld [vmem:[#allocation3] sm:$0x1]
    %v7017 = vadd.f32 %v7014, %v7016
    %v7018 = vadd.f32 %v7015, %v7016
    %vm7019 = vcmask 0
    %7020 = vst.msk [vmem:[%s15] sm:$0x1] %vm7019, %v7017
    %7021 = vst.msk [vmem:[%s15 + $0x1] sm:$0x1] %vm7019, %v7018
    // Predicated region
    $region78: #{tpu_custom_call.1} parent=1 // pred_check
      _
    $region79: #{tpu_custom_call.1} parent=1 // pred_check_branch
      %7023 = sbr.rel (0) target = $region81
    $region80: #{tpu_custom_call.1} parent=1 // pred_region
      _
    $region81: #{tpu_custom_call.1} parent=1 // pred_fallthru
      _
    // Predicated region
    $region82: #{tpu_custom_call.1} parent=1 // pred_check
      _
    $region83: #{tpu_custom_call.1} parent=1 // pred_check_branch
      %7025 = sbr.rel (0) target = $region85
    $region84: #{tpu_custom_call.1} parent=1 // pred_region
      _
    $region85: #{tpu_custom_call.1} parent=1 // pred_fallthru
      _
    %7026 = vsyncpa [#allocation5], 1
    %7027 = vsyncpa [#allocation7], 1
    %7028 = vsyncpa [#allocation10], 1

</llo_original>
